<compile_context>
chip_gen: v7x
topology: tpu7x:2x2x1
jax: 0.10.0
libtpu: 0.0.40
codegen_flags: <defaults>
</compile_context>

<pallas_src>
import math
from functools import partial

import jax
import jax.numpy as jnp
from jax import lax
from jax.experimental import pallas as pl
from jax.experimental.pallas import tpu as pltpu


# ----------------------------- shared math (kernel + reference) -------------

def _layernorm(x, g, b, eps=1e-5):
    mu = jnp.mean(x, axis=-1, keepdims=True)
    var = jnp.mean(jnp.square(x - mu), axis=-1, keepdims=True)
    return (x - mu) * lax.rsqrt(var + eps) * g + b


def _gelu(x):
    # exact (erf-based) GELU == torch.nn.GELU() default
    return 0.5 * x * (1.0 + lax.erf(x * (1.0 / math.sqrt(2.0))))


def _softmax_tpu(x):
    # kernel-side: EUP approx reciprocal + VPU multiply
    m = jnp.max(x, axis=-1, keepdims=True)
    e = jnp.exp(x - m)
    return e * pl.reciprocal(jnp.sum(e, axis=-1, keepdims=True), approx=True)


def _softmax_exact(x):
    m = jnp.max(x, axis=-1, keepdims=True)
    e = jnp.exp(x - m)
    return e / jnp.sum(e, axis=-1, keepdims=True)


def _mm(x, w, b=None):
    # bf16 operands on the MXU, f32 accumulation; bias add in f32.
    y = jnp.dot(x.astype(w.dtype), w, preferred_element_type=jnp.float32)
    return y if b is None else y + b


def _split_heads(y, batch, seq, n_head):
    # (B*S, D) -> (B*S, H, dh) -> (H, B*S, dh) -> (H*B, S, dh)
    # The last reshape is a pure row-major regrouping (no data movement).
    m, d = y.shape
    dh = d // n_head
    return y.reshape(m, n_head, dh).transpose(1, 0, 2).reshape(
        n_head * batch, seq, dh)


def _merge_heads(o, batch, seq, n_head):
    # (H*B, S, dh) -> (H, B*S, dh) -> (B*S, H, dh) -> (B*S, D)
    _, _, dh = o.shape
    m = batch * seq
    return o.reshape(n_head, m, dh).transpose(1, 0, 2).reshape(m, n_head * dh)


def _attention(q2, k2, v2, mask_add, batch, n_head, softmax_fn):
    """Batched (head x batch) attention. q2: (B*Sq, D); k2, v2: (B*Sk, D)."""
    mq, d = q2.shape
    sq = mq // batch
    sk = k2.shape[0] // batch
    dh = d // n_head
    cdt = jnp.bfloat16  # matmul-operand dtype (f32 accumulation)

    qh = _split_heads(q2, batch, sq, n_head)   # (H*B, Sq, dh)
    kh = _split_heads(k2, batch, sk, n_head)   # (H*B, Sk, dh)
    vh = _split_heads(v2, batch, sk, n_head)   # (H*B, Sk, dh)

    s = jnp.einsum('bqd,bkd->bqk', qh.astype(cdt), kh.astype(cdt),
                   preferred_element_type=jnp.float32)
    s = s * (1.0 / math.sqrt(dh)) + mask_add[None, :, :]
    p = softmax_fn(s)
    o = jnp.einsum('bqk,bkd->bqd', p.astype(cdt), vh.astype(cdt),
                   preferred_element_type=jnp.float32)
    return _merge_heads(o, batch, sq, n_head)  # (B*Sq, D)


def _decoder_layer_math(x0, enc, trg_add, src_add,
                        sa_qkv_w, sa_qkv_b, sa_o_w, sa_o_b,
                        ca_qkv_w, ca_qkv_b, ca_o_w, ca_o_b,
                        w1, b1, w2, b2, ln_g, ln_b,
                        batch, n_head, softmax_fn):
    d = x0.shape[-1]

    # self-attention (fused QKV) + (dropout == identity) + residual + norm1
    qkv = _mm(x0, sa_qkv_w, sa_qkv_b)
    a = _attention(qkv[:, :d], qkv[:, d:2 * d], qkv[:, 2 * d:],
                   trg_add, batch, n_head, softmax_fn)
    x = _mm(a, sa_o_w, sa_o_b)
    x = _layernorm(x + x0, ln_g[0], ln_b[0])

    # encoder-decoder attention (Q proj + fused KV proj) + residual + norm2
    res = x
    q = _mm(x, ca_qkv_w[:, :d], ca_qkv_b[:, :d])
    kv = _mm(enc, ca_qkv_w[:, d:], ca_qkv_b[:, d:])
    a = _attention(q, kv[:, :d], kv[:, d:], src_add, batch, n_head, softmax_fn)
    x = _mm(a, ca_o_w, ca_o_b)
    x = _layernorm(x + res, ln_g[1], ln_b[1])

    # PositionwiseFeedForward: linear1 -> GELU -> (dropout) -> linear2 -> GELU
    # (GELU after BOTH linears matches the PyTorch spec), then residual+norm3.
    res = x
    h = _gelu(_mm(x, w1, b1))
    y = _gelu(_mm(h, w2, b2))
    return _layernorm(y + res, ln_g[2], ln_b[2])


# ------------------------------- Pallas kernel -------------------------------

def decoder_stack_kernel(dec_ref, enc_ref, trg_add_ref, src_add_ref,
                         sa_qkv_w_ref, sa_qkv_b_ref, sa_o_w_ref, sa_o_b_ref,
                         ca_qkv_w_ref, ca_qkv_b_ref, ca_o_w_ref, ca_o_b_ref,
                         w1_ref, b1_ref, w2_ref, b2_ref,
                         ln_g_ref, ln_b_ref,
                         out_ref, x_carry, *, n_head, batch):
    l = pl.program_id(0)

    # Initialize the VMEM-resident activation carry (all batch elements) once.
    @pl.when(l == 0)
    def _():
        x_carry[...] = dec_ref[...].astype(jnp.float32)

    x0 = x_carry[...]          # (B*Sq, D) f32
    enc = enc_ref[...]         # (B*Sk, D) bf16 (cast hoisted to the wrapper)

    x = _decoder_layer_math(
        x0, enc, trg_add_ref[...], src_add_ref[...],
        sa_qkv_w_ref[0], sa_qkv_b_ref[0], sa_o_w_ref[0], sa_o_b_ref[0],
        ca_qkv_w_ref[0], ca_qkv_b_ref[0], ca_o_w_ref[0], ca_o_b_ref[0],
        w1_ref[0], b1_ref[0], w2_ref[0], b2_ref[0],
        ln_g_ref[0], ln_b_ref[0],
        batch, n_head, _softmax_tpu)

    x_carry[...] = x

    @pl.when(l == pl.num_programs(0) - 1)
    def _():
        out_ref[...] = x.astype(out_ref.dtype)


def _vmem_limit_bytes(B, Sq, Sk, D, H, n_head, w_itemsize):
    # per-layer weight tiles (double-buffered by the pipeline)
    w_elems = 2 * D * 3 * D + 2 * D * D + D * H + H * D
    bias_bytes = (2 * 3 * D + 2 * D + H + D + 2 * 3 * D) * 4
    per_layer = w_elems * w_itemsize + bias_bytes
    # resident activations / masks / output / carry
    resident = (2 * B * Sq * D + B * Sk * D) * 4 + (Sq * Sq + Sq * Sk) * 4 \
        + B * Sq * D * 4
    # transient working set (qkv, ffn hidden, scores + probs in f32)
    work = B * Sq * max(3 * D, H) * 4 + 2 * n_head * B * Sq * max(Sq, Sk) * 4
    est = 2 * per_layer + resident + work
    try:
        cap = pltpu.get_tpu_info().vmem_capacity_bytes
    except Exception:
        cap = 64 * 1024 * 1024   # conservative (v7x physical VMEM per core)
    return int(min(max(2 * est, 32 * 1024 * 1024), int(0.75 * cap)))


def decoder_forward(dec, enc, trg_mask, src_mask, params, n_head):
    """Run the whole decoder stack in a single pallas_call, grid = (layers,)."""
    B, Sq, D = dec.shape
    Sk = enc.shape[1]
    L = params["sa_qkv_w"].shape[0]
    H = params["w1"].shape[-1]

    dec2 = dec.reshape(B * Sq, D)
    enc2 = enc.reshape(B * Sk, D).astype(jnp.bfloat16)   # hoisted cast
    # additive f32 masks computed once outside the kernel
    trg_add = (trg_mask.astype(jnp.float32) - 1.0) * 1e9
    src_add = (src_mask.astype(jnp.float32) - 1.0) * 1e9

    def per_layer(*shape):
        shape = tuple(shape)
        zeros = (0,) * len(shape)
        return pl.BlockSpec((1,) + shape, lambda l: (l,) + zeros)

    def resident(*shape):
        shape = tuple(shape)
        zeros = (0,) * len(shape)
        return pl.BlockSpec(shape, lambda l: zeros)

    vmem_limit = _vmem_limit_bytes(
        B, Sq, Sk, D, H, n_head, params["sa_qkv_w"].dtype.itemsize)

    out2 = pl.pallas_call(
        partial(decoder_stack_kernel, n_head=n_head, batch=B),
        out_shape=jax.ShapeDtypeStruct((B * Sq, D), dec.dtype),
        grid=(L,),
        in_specs=[
            resident(B * Sq, D),         # dec (flattened)
            resident(B * Sk, D),         # enc (flattened, bf16, VMEM-resident)
            resident(Sq, Sq),            # additive target mask
            resident(Sq, Sk),            # additive source mask
            per_layer(D, 3 * D),         # self-attn fused QKV weight (bf16)
            per_layer(1, 3 * D),         # self-attn fused QKV bias
            per_layer(D, D),             # self-attn output weight (bf16)
            per_layer(1, D),             # self-attn output bias
            per_layer(D, 3 * D),         # cross-attn fused QKV weight (bf16)
            per_layer(1, 3 * D),         # cross-attn fused QKV bias
            per_layer(D, D),             # cross-attn output weight (bf16)
            per_layer(1, D),             # cross-attn output bias
            per_layer(D, H),             # ffn linear1 W (bf16)
            per_layer(1, H),             # ffn linear1 b
            per_layer(H, D),             # ffn linear2 W (bf16)
            per_layer(1, D),             # ffn linear2 b
            per_layer(3, D),             # layernorm gammas (norm1..3)
            per_layer(3, D),             # layernorm betas  (norm1..3)
        ],
        out_specs=resident(B * Sq, D),
        scratch_shapes=[pltpu.VMEM((B * Sq, D), jnp.float32)],
        compiler_params=pltpu.CompilerParams(
            dimension_semantics=("arbitrary",),
            vmem_limit_bytes=vmem_limit),
    )(dec2, enc2, trg_add, src_add,
      params["sa_qkv_w"], params["sa_qkv_b"], params["sa_o_w"], params["sa_o_b"],
      params["ca_qkv_w"], params["ca_qkv_b"], params["ca_o_w"], params["ca_o_b"],
      params["w1"], params["b1"], params["w2"], params["b2"],
      params["ln_g"], params["ln_b"])
    return out2.reshape(B, Sq, D)


# --------------------------- params / reference ------------------------------

def init_decoder_params(key, num_layers, d_model, ffn_hidden):
    L, D, H = num_layers, d_model, ffn_hidden
    ks = jax.random.split(key, 12)
    s = 0.05
    wdt = jnp.bfloat16   # weights in bf16; biases / LN params stay f32

    def w(k, shape):
        return (jax.random.normal(k, shape, jnp.float32) * s).astype(wdt)

    def b(k, shape):
        return jax.random.normal(k, shape, jnp.float32) * 0.01

    return {
        "sa_qkv_w": w(ks[0], (L, D, 3 * D)),
        "sa_qkv_b": b(ks[1], (L, 1, 3 * D)),
        "sa_o_w":   w(ks[2], (L, D, D)),
        "sa_o_b":   b(ks[3], (L, 1, D)),
        "ca_qkv_w": w(ks[4], (L, D, 3 * D)),
        "ca_qkv_b": b(ks[5], (L, 1, 3 * D)),
        "ca_o_w":   w(ks[6], (L, D, D)),
        "ca_o_b":   b(ks[7], (L, 1, D)),
        "w1": w(ks[8], (L, D, H)),
        "b1": b(ks[9], (L, 1, H)),
        "w2": w(ks[10], (L, H, D)),
        "b2": b(ks[11], (L, 1, D)),
        "ln_g": jnp.ones((L, 3, D), jnp.float32),
        "ln_b": jnp.zeros((L, 3, D), jnp.float32),
    }


def decoder_ref(dec, enc, trg_mask, src_mask, params, n_head):
    """Pure-JAX reference: same math (bf16 matmul operands, f32 accumulation,
    f32 LayerNorm/softmax/GELU) but exact softmax division."""
    B, Sq, D = dec.shape
    Sk = enc.shape[1]
    L = params["sa_qkv_w"].shape[0]
    trg_add = (trg_mask.astype(jnp.float32) - 1.0) * 1e9
    src_add = (src_mask.astype(jnp.float32) - 1.0) * 1e9

    x = dec.reshape(B * Sq, D).astype(jnp.float32)
    e = enc.reshape(B * Sk, D).astype(jnp.bfloat16)
    for l in range(L):
        x = _decoder_layer_math(
            x, e, trg_add, src_add,
            params["sa_qkv_w"][l], params["sa_qkv_b"][l],
            params["sa_o_w"][l], params["sa_o_b"][l],
            params["ca_qkv_w"][l], params["ca_qkv_b"][l],
            params["ca_o_w"][l], params["ca_o_b"][l],
            params["w1"][l], params["b1"][l],
            params["w2"][l], params["b2"][l],
            params["ln_g"][l], params["ln_b"][l],
            B, n_head, _softmax_exact)
    return x.reshape(B, Sq, D)


# ----------------------------------- main ------------------------------------

if __name__ == "__main__":
    B, Sq, Sk = 2, 8, 8
    d_model, n_head, ffn_hidden, num_layers = 32, 8, 64, 2

    key = jax.random.PRNGKey(0)
    k_dec, k_enc, k_par = jax.random.split(key, 3)
    dec = jax.random.normal(k_dec, (B, Sq, d_model), jnp.float32)
    enc = jax.random.normal(k_enc, (B, Sk, d_model), jnp.float32)
    # causal target mask, all-ones source mask (1 = keep, 0 = masked)
    trg_mask = jnp.tril(jnp.ones((Sq, Sq), jnp.float32))
    src_mask = jnp.ones((Sq, Sk), jnp.float32)

    params = init_decoder_params(k_par, num_layers, d_model, ffn_hidden)

    out = decoder_forward(dec, enc, trg_mask, src_mask, params, n_head)
    out = jax.block_until_ready(out)

    ref = jax.block_until_ready(
        decoder_ref(dec, enc, trg_mask, src_mask, params, n_head))
    assert out.shape == (B, Sq, d_model)
    err = jnp.max(jnp.abs(out - ref))
    assert jnp.allclose(out, ref, rtol=1e-2, atol=1e-2), f"max abs err {err}"

    print("KERNEL_OK")
</pallas_src>

<mosaic_0001>
module attributes {stable_mosaic.version = 11 : i64} {
  func.func @decoder_stack_kernel(%arg0: i32, %arg1: memref<16x32xf32, #tpu.memory_space<vmem>>, %arg2: memref<16x32xbf16, #tpu.memory_space<vmem>>, %arg3: memref<8x8xf32, #tpu.memory_space<vmem>>, %arg4: memref<8x8xf32, #tpu.memory_space<vmem>>, %arg5: memref<1x32x96xbf16, #tpu.memory_space<vmem>>, %arg6: memref<1x1x96xf32, #tpu.memory_space<vmem>>, %arg7: memref<1x32x32xbf16, #tpu.memory_space<vmem>>, %arg8: memref<1x1x32xf32, #tpu.memory_space<vmem>>, %arg9: memref<1x32x96xbf16, #tpu.memory_space<vmem>>, %arg10: memref<1x1x96xf32, #tpu.memory_space<vmem>>, %arg11: memref<1x32x32xbf16, #tpu.memory_space<vmem>>, %arg12: memref<1x1x32xf32, #tpu.memory_space<vmem>>, %arg13: memref<1x32x64xbf16, #tpu.memory_space<vmem>>, %arg14: memref<1x1x64xf32, #tpu.memory_space<vmem>>, %arg15: memref<1x64x32xbf16, #tpu.memory_space<vmem>>, %arg16: memref<1x1x32xf32, #tpu.memory_space<vmem>>, %arg17: memref<1x3x32xf32, #tpu.memory_space<vmem>>, %arg18: memref<1x3x32xf32, #tpu.memory_space<vmem>>, %arg19: memref<16x32xf32, #tpu.memory_space<vmem>>, %arg20: memref<16x32xf32, #tpu.memory_space<vmem>>) attributes {dimension_semantics = [#tpu.dimension_semantics<arbitrary>], iteration_bounds = array<i64: 2>, scalar_prefetch = 0 : i64, scratch_operands = 1 : i64, tpu.core_type = #tpu.core_type<tc>, window_params = [{pipeline_mode = #tpu.pipeline_mode<synchronous>, transform_indices = @transform_0, window_bounds = array<i64: 16, 32>}, {pipeline_mode = #tpu.pipeline_mode<synchronous>, transform_indices = @transform_1, window_bounds = array<i64: 16, 32>}, {pipeline_mode = #tpu.pipeline_mode<synchronous>, transform_indices = @transform_2, window_bounds = array<i64: 8, 8>}, {pipeline_mode = #tpu.pipeline_mode<synchronous>, transform_indices = @transform_3, window_bounds = array<i64: 8, 8>}, {transform_indices = @transform_4, window_bounds = array<i64: 1, 32, 96>}, {transform_indices = @transform_5, window_bounds = array<i64: 1, 1, 96>}, {transform_indices = @transform_6, window_bounds = array<i64: 1, 32, 32>}, {transform_indices = @transform_7, window_bounds = array<i64: 1, 1, 32>}, {transform_indices = @transform_8, window_bounds = array<i64: 1, 32, 96>}, {transform_indices = @transform_9, window_bounds = array<i64: 1, 1, 96>}, {transform_indices = @transform_10, window_bounds = array<i64: 1, 32, 32>}, {transform_indices = @transform_11, window_bounds = array<i64: 1, 1, 32>}, {transform_indices = @transform_12, window_bounds = array<i64: 1, 32, 64>}, {transform_indices = @transform_13, window_bounds = array<i64: 1, 1, 64>}, {transform_indices = @transform_14, window_bounds = array<i64: 1, 64, 32>}, {transform_indices = @transform_15, window_bounds = array<i64: 1, 1, 32>}, {transform_indices = @transform_16, window_bounds = array<i64: 1, 3, 32>}, {transform_indices = @transform_17, window_bounds = array<i64: 1, 3, 32>}, {pipeline_mode = #tpu.pipeline_mode<synchronous>, transform_indices = @transform_18, window_bounds = array<i64: 16, 32>}]} {
    %c0_i32 = arith.constant 0 : i32
    %0 = arith.cmpi eq, %arg0, %c0_i32 : i32
    %1 = arith.extui %0 : i1 to i32
    %c0_i32_0 = arith.constant 0 : i32
    %2 = arith.cmpi ne, %1, %c0_i32_0 : i32
    scf.if %2 {
      %c0_90 = arith.constant 0 : index
      %c0_91 = arith.constant 0 : index
      %244 = vector.load %arg1[%c0_90, %c0_91] : memref<16x32xf32, #tpu.memory_space<vmem>>, vector<16x32xf32>
      %c0_92 = arith.constant 0 : index
      %c0_93 = arith.constant 0 : index
      %245 = vector.load %arg20[%c0_92, %c0_93] : memref<16x32xf32, #tpu.memory_space<vmem>>, vector<16x32xf32>
      tpu.vector_store %arg20[%c0_92, %c0_93], %244 {strides = array<i32>} : memref<16x32xf32, #tpu.memory_space<vmem>>, vector<16x32xf32>,
    } else {
    }
    %c0 = arith.constant 0 : index
    %c0_1 = arith.constant 0 : index
    %3 = vector.load %arg20[%c0, %c0_1] : memref<16x32xf32, #tpu.memory_space<vmem>>, vector<16x32xf32>
    %c0_2 = arith.constant 0 : index
    %c0_3 = arith.constant 0 : index
    %4 = vector.load %arg2[%c0_2, %c0_3] : memref<16x32xbf16, #tpu.memory_space<vmem>>, vector<16x32xbf16>
    %c0_4 = arith.constant 0 : index
    %c0_5 = arith.constant 0 : index
    %5 = vector.load %arg3[%c0_4, %c0_5] : memref<8x8xf32, #tpu.memory_space<vmem>>, vector<8x8xf32>
    %c0_6 = arith.constant 0 : index
    %c0_7 = arith.constant 0 : index
    %6 = vector.load %arg4[%c0_6, %c0_7] : memref<8x8xf32, #tpu.memory_space<vmem>>, vector<8x8xf32>
    %c0_8 = arith.constant 0 : index
    %c0_9 = arith.constant 0 : index
    %c0_10 = arith.constant 0 : index
    %7 = vector.load %arg5[%c0_8, %c0_9, %c0_10] : memref<1x32x96xbf16, #tpu.memory_space<vmem>>, vector<1x32x96xbf16>
    %8 = vector.shape_cast %7 : vector<1x32x96xbf16> to vector<32x96xbf16>
    %c0_11 = arith.constant 0 : index
    %c0_12 = arith.constant 0 : index
    %c0_13 = arith.constant 0 : index
    %9 = vector.load %arg6[%c0_11, %c0_12, %c0_13] : memref<1x1x96xf32, #tpu.memory_space<vmem>>, vector<1x1x96xf32>
    %10 = vector.shape_cast %9 : vector<1x1x96xf32> to vector<1x96xf32>
    %c0_14 = arith.constant 0 : index
    %c0_15 = arith.constant 0 : index
    %c0_16 = arith.constant 0 : index
    %11 = vector.load %arg7[%c0_14, %c0_15, %c0_16] : memref<1x32x32xbf16, #tpu.memory_space<vmem>>, vector<1x32x32xbf16>
    %12 = vector.shape_cast %11 : vector<1x32x32xbf16> to vector<32x32xbf16>
    %c0_17 = arith.constant 0 : index
    %c0_18 = arith.constant 0 : index
    %c0_19 = arith.constant 0 : index
    %13 = vector.load %arg8[%c0_17, %c0_18, %c0_19] : memref<1x1x32xf32, #tpu.memory_space<vmem>>, vector<1x1x32xf32>
    %14 = vector.shape_cast %13 : vector<1x1x32xf32> to vector<1x32xf32>
    %c0_20 = arith.constant 0 : index
    %c0_21 = arith.constant 0 : index
    %c0_22 = arith.constant 0 : index
    %15 = vector.load %arg9[%c0_20, %c0_21, %c0_22] : memref<1x32x96xbf16, #tpu.memory_space<vmem>>, vector<1x32x96xbf16>
    %16 = vector.shape_cast %15 : vector<1x32x96xbf16> to vector<32x96xbf16>
    %c0_23 = arith.constant 0 : index
    %c0_24 = arith.constant 0 : index
    %c0_25 = arith.constant 0 : index
    %17 = vector.load %arg10[%c0_23, %c0_24, %c0_25] : memref<1x1x96xf32, #tpu.memory_space<vmem>>, vector<1x1x96xf32>
    %18 = vector.shape_cast %17 : vector<1x1x96xf32> to vector<1x96xf32>
    %c0_26 = arith.constant 0 : index
    %c0_27 = arith.constant 0 : index
    %c0_28 = arith.constant 0 : index
    %19 = vector.load %arg11[%c0_26, %c0_27, %c0_28] : memref<1x32x32xbf16, #tpu.memory_space<vmem>>, vector<1x32x32xbf16>
    %20 = vector.shape_cast %19 : vector<1x32x32xbf16> to vector<32x32xbf16>
    %c0_29 = arith.constant 0 : index
    %c0_30 = arith.constant 0 : index
    %c0_31 = arith.constant 0 : index
    %21 = vector.load %arg12[%c0_29, %c0_30, %c0_31] : memref<1x1x32xf32, #tpu.memory_space<vmem>>, vector<1x1x32xf32>
    %22 = vector.shape_cast %21 : vector<1x1x32xf32> to vector<1x32xf32>
    %c0_32 = arith.constant 0 : index
    %c0_33 = arith.constant 0 : index
    %c0_34 = arith.constant 0 : index
    %23 = vector.load %arg13[%c0_32, %c0_33, %c0_34] : memref<1x32x64xbf16, #tpu.memory_space<vmem>>, vector<1x32x64xbf16>
    %24 = vector.shape_cast %23 : vector<1x32x64xbf16> to vector<32x64xbf16>
    %c0_35 = arith.constant 0 : index
    %c0_36 = arith.constant 0 : index
    %c0_37 = arith.constant 0 : index
    %25 = vector.load %arg14[%c0_35, %c0_36, %c0_37] : memref<1x1x64xf32, #tpu.memory_space<vmem>>, vector<1x1x64xf32>
    %26 = vector.shape_cast %25 : vector<1x1x64xf32> to vector<1x64xf32>
    %c0_38 = arith.constant 0 : index
    %c0_39 = arith.constant 0 : index
    %c0_40 = arith.constant 0 : index
    %27 = vector.load %arg15[%c0_38, %c0_39, %c0_40] : memref<1x64x32xbf16, #tpu.memory_space<vmem>>, vector<1x64x32xbf16>
    %28 = vector.shape_cast %27 : vector<1x64x32xbf16> to vector<64x32xbf16>
    %c0_41 = arith.constant 0 : index
    %c0_42 = arith.constant 0 : index
    %c0_43 = arith.constant 0 : index
    %29 = vector.load %arg16[%c0_41, %c0_42, %c0_43] : memref<1x1x32xf32, #tpu.memory_space<vmem>>, vector<1x1x32xf32>
    %30 = vector.shape_cast %29 : vector<1x1x32xf32> to vector<1x32xf32>
    %c0_44 = arith.constant 0 : index
    %c0_45 = arith.constant 0 : index
    %c0_46 = arith.constant 0 : index
    %31 = vector.load %arg17[%c0_44, %c0_45, %c0_46] : memref<1x3x32xf32, #tpu.memory_space<vmem>>, vector<1x3x32xf32>
    %32 = vector.shape_cast %31 : vector<1x3x32xf32> to vector<3x32xf32>
    %c0_47 = arith.constant 0 : index
    %c0_48 = arith.constant 0 : index
    %c0_49 = arith.constant 0 : index
    %33 = vector.load %arg18[%c0_47, %c0_48, %c0_49] : memref<1x3x32xf32, #tpu.memory_space<vmem>>, vector<1x3x32xf32>
    %34 = vector.shape_cast %33 : vector<1x3x32xf32> to vector<3x32xf32>
    %35 = arith.truncf %3 : vector<16x32xf32> to vector<16x32xbf16>
    %cst = arith.constant dense<0.000000e+00> : vector<16x96xf32>
    %36 = tpu.matmul %35, %8, %cst {dimension_numbers = #tpu.dot_dimension_numbers<[1], [0], [0], [1], [0, 0, 1, 1], [], []>} : vector<16x32xbf16>, vector<32x96xbf16>, vector<16x96xf32> -> vector<16x96xf32>
    %37 = vector.broadcast %10 : vector<1x96xf32> to vector<16x96xf32>
    %38 = arith.addf %36, %37 : vector<16x96xf32>
    %39 = vector.extract_strided_slice %38 {offsets = [0, 0], sizes = [16, 32], strides = [1, 1]} : vector<16x96xf32> to vector<16x32xf32>
    %40 = vector.extract_strided_slice %38 {offsets = [0, 32], sizes = [16, 32], strides = [1, 1]} : vector<16x96xf32> to vector<16x32xf32>
    %41 = vector.extract_strided_slice %38 {offsets = [0, 64], sizes = [16, 32], strides = [1, 1]} : vector<16x96xf32> to vector<16x32xf32>
    %42 = vector.shape_cast %39 : vector<16x32xf32> to vector<16x8x4xf32>
    %43 = tpu.transpose %42, [1, 0, 2] : vector<16x8x4xf32> -> vector<8x16x4xf32>
    %44 = vector.shape_cast %43 : vector<8x16x4xf32> to vector<16x8x4xf32>
    %45 = vector.shape_cast %40 : vector<16x32xf32> to vector<16x8x4xf32>
    %46 = tpu.transpose %45, [1, 0, 2] : vector<16x8x4xf32> -> vector<8x16x4xf32>
    %47 = vector.shape_cast %46 : vector<8x16x4xf32> to vector<16x8x4xf32>
    %48 = vector.shape_cast %41 : vector<16x32xf32> to vector<16x8x4xf32>
    %49 = tpu.transpose %48, [1, 0, 2] : vector<16x8x4xf32> -> vector<8x16x4xf32>
    %50 = vector.shape_cast %49 : vector<8x16x4xf32> to vector<16x8x4xf32>
    %51 = arith.truncf %44 : vector<16x8x4xf32> to vector<16x8x4xbf16>
    %52 = arith.truncf %47 : vector<16x8x4xf32> to vector<16x8x4xbf16>
    "tpu.trace_start"() <{level = 10 : i32, message = "bqd,bkd->bqk"}> : () -> ()
    %cst_50 = arith.constant dense<0.000000e+00> : vector<16x8x8xf32>
    %53 = tpu.matmul %51, %52, %cst_50 {dimension_numbers = #tpu.dot_dimension_numbers<[2], [2], [1], [1], [0, 0, 0, 1, 1, 1], [0], [0]>} : vector<16x8x4xbf16>, vector<16x8x4xbf16>, vector<16x8x8xf32> -> vector<16x8x8xf32>
    "tpu.trace_stop"() : () -> ()
    %cst_51 = arith.constant 5.000000e-01 : f32
    %54 = vector.broadcast %cst_51 : f32 to vector<16x8x8xf32>
    %55 = arith.mulf %53, %54 : vector<16x8x8xf32>
    %56 = vector.shape_cast %5 : vector<8x8xf32> to vector<1x8x8xf32>
    %57 = vector.broadcast %56 : vector<1x8x8xf32> to vector<16x8x8xf32>
    %58 = arith.addf %55, %57 : vector<16x8x8xf32>
    %cst_52 = arith.constant dense<0xFF800000> : vector<16x8xf32>
    %59 = vector.multi_reduction <maximumf>, %58, %cst_52 [2] : vector<16x8x8xf32> to vector<16x8xf32>
    %60 = vector.shape_cast %59 : vector<16x8xf32> to vector<16x8x1xf32>
    %61 = vector.broadcast %60 : vector<16x8x1xf32> to vector<16x8x8xf32>
    %62 = arith.subf %58, %61 : vector<16x8x8xf32>
    %63 = math.exp %62 : vector<16x8x8xf32>
    %cst_53 = arith.constant dense<0.000000e+00> : vector<16x8xf32>
    %64 = vector.multi_reduction <add>, %63, %cst_53 [2] : vector<16x8x8xf32> to vector<16x8xf32>
    %65 = vector.shape_cast %64 : vector<16x8xf32> to vector<16x8x1xf32>
    %66 = tpu.reciprocal %65 {approx = true} : vector<16x8x1xf32> -> vector<16x8x1xf32>
    %67 = vector.broadcast %66 : vector<16x8x1xf32> to vector<16x8x8xf32>
    %68 = arith.mulf %63, %67 : vector<16x8x8xf32>
    %69 = arith.truncf %68 : vector<16x8x8xf32> to vector<16x8x8xbf16>
    %70 = arith.truncf %50 : vector<16x8x4xf32> to vector<16x8x4xbf16>
    "tpu.trace_start"() <{level = 10 : i32, message = "bqk,bkd->bqd"}> : () -> ()
    %cst_54 = arith.constant dense<0.000000e+00> : vector<16x8x4xf32>
    %71 = tpu.matmul %69, %70, %cst_54 {dimension_numbers = #tpu.dot_dimension_numbers<[2], [1], [1], [2], [0, 0, 0, 1, 1, 2], [0], [0]>} : vector<16x8x8xbf16>, vector<16x8x4xbf16>, vector<16x8x4xf32> -> vector<16x8x4xf32>
    "tpu.trace_stop"() : () -> ()
    %72 = vector.shape_cast %71 : vector<16x8x4xf32> to vector<8x16x4xf32>
    %73 = tpu.transpose %72, [1, 0, 2] : vector<8x16x4xf32> -> vector<16x8x4xf32>
    %74 = vector.shape_cast %73 : vector<16x8x4xf32> to vector<16x32xf32>
    %75 = arith.truncf %74 : vector<16x32xf32> to vector<16x32xbf16>
    %cst_55 = arith.constant dense<0.000000e+00> : vector<16x32xf32>
    %76 = tpu.matmul %75, %12, %cst_55 {dimension_numbers = #tpu.dot_dimension_numbers<[1], [0], [0], [1], [0, 0, 1, 1], [], []>} : vector<16x32xbf16>, vector<32x32xbf16>, vector<16x32xf32> -> vector<16x32xf32>
    %77 = vector.broadcast %14 : vector<1x32xf32> to vector<16x32xf32>
    %78 = arith.addf %76, %77 : vector<16x32xf32>
    %79 = arith.addf %78, %3 : vector<16x32xf32>
    %80 = vector.extract_strided_slice %32 {offsets = [0, 0], sizes = [1, 32], strides = [1, 1]} : vector<3x32xf32> to vector<1x32xf32>
    %81 = vector.shape_cast %80 : vector<1x32xf32> to vector<32xf32>
    %82 = vector.extract_strided_slice %34 {offsets = [0, 0], sizes = [1, 32], strides = [1, 1]} : vector<3x32xf32> to vector<1x32xf32>
    %83 = vector.shape_cast %82 : vector<1x32xf32> to vector<32xf32>
    %cst_56 = arith.constant dense<0.000000e+00> : vector<16xf32>
    %84 = vector.multi_reduction <add>, %79, %cst_56 [1] : vector<16x32xf32> to vector<16xf32>
    %85 = vector.shape_cast %84 : vector<16xf32> to vector<16x1xf32>
    %cst_57 = arith.constant 3.200000e+01 : f32
    %86 = vector.broadcast %cst_57 : f32 to vector<16x1xf32>
    %87 = arith.divf %85, %86 : vector<16x1xf32>
    %88 = vector.broadcast %87 : vector<16x1xf32> to vector<16x32xf32>
    %89 = arith.subf %79, %88 : vector<16x32xf32>
    %90 = arith.mulf %89, %89 : vector<16x32xf32>
    %cst_58 = arith.constant dense<0.000000e+00> : vector<16xf32>
    %91 = vector.multi_reduction <add>, %90, %cst_58 [1] : vector<16x32xf32> to vector<16xf32>
    %92 = vector.shape_cast %91 : vector<16xf32> to vector<16x1xf32>
    %cst_59 = arith.constant 3.200000e+01 : f32
    %93 = vector.broadcast %cst_59 : f32 to vector<16x1xf32>
    %94 = arith.divf %92, %93 : vector<16x1xf32>
    %95 = vector.broadcast %87 : vector<16x1xf32> to vector<16x32xf32>
    %96 = arith.subf %79, %95 : vector<16x32xf32>
    %cst_60 = arith.constant 9.99999974E-6 : f32
    %97 = vector.broadcast %cst_60 : f32 to vector<16x1xf32>
    %98 = arith.addf %94, %97 : vector<16x1xf32>
    %99 = math.rsqrt %98 : vector<16x1xf32>
    %100 = vector.broadcast %99 : vector<16x1xf32> to vector<16x32xf32>
    %101 = arith.mulf %96, %100 : vector<16x32xf32>
    %102 = vector.shape_cast %81 : vector<32xf32> to vector<1x32xf32>
    %103 = vector.broadcast %102 : vector<1x32xf32> to vector<16x32xf32>
    %104 = arith.mulf %101, %103 : vector<16x32xf32>
    %105 = vector.shape_cast %83 : vector<32xf32> to vector<1x32xf32>
    %106 = vector.broadcast %105 : vector<1x32xf32> to vector<16x32xf32>
    %107 = arith.addf %104, %106 : vector<16x32xf32>
    %108 = vector.extract_strided_slice %16 {offsets = [0, 0], sizes = [32, 32], strides = [1, 1]} : vector<32x96xbf16> to vector<32x32xbf16>
    %109 = vector.extract_strided_slice %18 {offsets = [0, 0], sizes = [1, 32], strides = [1, 1]} : vector<1x96xf32> to vector<1x32xf32>
    %110 = arith.truncf %107 : vector<16x32xf32> to vector<16x32xbf16>
    %cst_61 = arith.constant dense<0.000000e+00> : vector<16x32xf32>
    %111 = tpu.matmul %110, %108, %cst_61 {dimension_numbers = #tpu.dot_dimension_numbers<[1], [0], [0], [1], [0, 0, 1, 1], [], []>} : vector<16x32xbf16>, vector<32x32xbf16>, vector<16x32xf32> -> vector<16x32xf32>
    %112 = vector.broadcast %109 : vector<1x32xf32> to vector<16x32xf32>
    %113 = arith.addf %111, %112 : vector<16x32xf32>
    %114 = vector.extract_strided_slice %16 {offsets = [0, 32], sizes = [32, 64], strides = [1, 1]} : vector<32x96xbf16> to vector<32x64xbf16>
    %115 = vector.extract_strided_slice %18 {offsets = [0, 32], sizes = [1, 64], strides = [1, 1]} : vector<1x96xf32> to vector<1x64xf32>
    %cst_62 = arith.constant dense<0.000000e+00> : vector<16x64xf32>
    %116 = tpu.matmul %4, %114, %cst_62 {dimension_numbers = #tpu.dot_dimension_numbers<[1], [0], [0], [1], [0, 0, 1, 1], [], []>} : vector<16x32xbf16>, vector<32x64xbf16>, vector<16x64xf32> -> vector<16x64xf32>
    %117 = vector.broadcast %115 : vector<1x64xf32> to vector<16x64xf32>
    %118 = arith.addf %116, %117 : vector<16x64xf32>
    %119 = vector.extract_strided_slice %118 {offsets = [0, 0], sizes = [16, 32], strides = [1, 1]} : vector<16x64xf32> to vector<16x32xf32>
    %120 = vector.extract_strided_slice %118 {offsets = [0, 32], sizes = [16, 32], strides = [1, 1]} : vector<16x64xf32> to vector<16x32xf32>
    %121 = vector.shape_cast %113 : vector<16x32xf32> to vector<16x8x4xf32>
    %122 = tpu.transpose %121, [1, 0, 2] : vector<16x8x4xf32> -> vector<8x16x4xf32>
    %123 = vector.shape_cast %122 : vector<8x16x4xf32> to vector<16x8x4xf32>
    %124 = vector.shape_cast %119 : vector<16x32xf32> to vector<16x8x4xf32>
    %125 = tpu.transpose %124, [1, 0, 2] : vector<16x8x4xf32> -> vector<8x16x4xf32>
    %126 = vector.shape_cast %125 : vector<8x16x4xf32> to vector<16x8x4xf32>
    %127 = vector.shape_cast %120 : vector<16x32xf32> to vector<16x8x4xf32>
    %128 = tpu.transpose %127, [1, 0, 2] : vector<16x8x4xf32> -> vector<8x16x4xf32>
    %129 = vector.shape_cast %128 : vector<8x16x4xf32> to vector<16x8x4xf32>
    %130 = arith.truncf %123 : vector<16x8x4xf32> to vector<16x8x4xbf16>
    %131 = arith.truncf %126 : vector<16x8x4xf32> to vector<16x8x4xbf16>
    "tpu.trace_start"() <{level = 10 : i32, message = "bqd,bkd->bqk"}> : () -> ()
    %cst_63 = arith.constant dense<0.000000e+00> : vector<16x8x8xf32>
    %132 = tpu.matmul %130, %131, %cst_63 {dimension_numbers = #tpu.dot_dimension_numbers<[2], [2], [1], [1], [0, 0, 0, 1, 1, 1], [0], [0]>} : vector<16x8x4xbf16>, vector<16x8x4xbf16>, vector<16x8x8xf32> -> vector<16x8x8xf32>
    "tpu.trace_stop"() : () -> ()
    %cst_64 = arith.constant 5.000000e-01 : f32
    %133 = vector.broadcast %cst_64 : f32 to vector<16x8x8xf32>
    %134 = arith.mulf %132, %133 : vector<16x8x8xf32>
    %135 = vector.shape_cast %6 : vector<8x8xf32> to vector<1x8x8xf32>
    %136 = vector.broadcast %135 : vector<1x8x8xf32> to vector<16x8x8xf32>
    %137 = arith.addf %134, %136 : vector<16x8x8xf32>
    %cst_65 = arith.constant dense<0xFF800000> : vector<16x8xf32>
    %138 = vector.multi_reduction <maximumf>, %137, %cst_65 [2] : vector<16x8x8xf32> to vector<16x8xf32>
    %139 = vector.shape_cast %138 : vector<16x8xf32> to vector<16x8x1xf32>
    %140 = vector.broadcast %139 : vector<16x8x1xf32> to vector<16x8x8xf32>
    %141 = arith.subf %137, %140 : vector<16x8x8xf32>
    %142 = math.exp %141 : vector<16x8x8xf32>
    %cst_66 = arith.constant dense<0.000000e+00> : vector<16x8xf32>
    %143 = vector.multi_reduction <add>, %142, %cst_66 [2] : vector<16x8x8xf32> to vector<16x8xf32>
    %144 = vector.shape_cast %143 : vector<16x8xf32> to vector<16x8x1xf32>
    %145 = tpu.reciprocal %144 {approx = true} : vector<16x8x1xf32> -> vector<16x8x1xf32>
    %146 = vector.broadcast %145 : vector<16x8x1xf32> to vector<16x8x8xf32>
    %147 = arith.mulf %142, %146 : vector<16x8x8xf32>
    %148 = arith.truncf %147 : vector<16x8x8xf32> to vector<16x8x8xbf16>
    %149 = arith.truncf %129 : vector<16x8x4xf32> to vector<16x8x4xbf16>
    "tpu.trace_start"() <{level = 10 : i32, message = "bqk,bkd->bqd"}> : () -> ()
    %cst_67 = arith.constant dense<0.000000e+00> : vector<16x8x4xf32>
    %150 = tpu.matmul %148, %149, %cst_67 {dimension_numbers = #tpu.dot_dimension_numbers<[2], [1], [1], [2], [0, 0, 0, 1, 1, 2], [0], [0]>} : vector<16x8x8xbf16>, vector<16x8x4xbf16>, vector<16x8x4xf32> -> vector<16x8x4xf32>
    "tpu.trace_stop"() : () -> ()
    %151 = vector.shape_cast %150 : vector<16x8x4xf32> to vector<8x16x4xf32>
    %152 = tpu.transpose %151, [1, 0, 2] : vector<8x16x4xf32> -> vector<16x8x4xf32>
    %153 = vector.shape_cast %152 : vector<16x8x4xf32> to vector<16x32xf32>
    %154 = arith.truncf %153 : vector<16x32xf32> to vector<16x32xbf16>
    %cst_68 = arith.constant dense<0.000000e+00> : vector<16x32xf32>
    %155 = tpu.matmul %154, %20, %cst_68 {dimension_numbers = #tpu.dot_dimension_numbers<[1], [0], [0], [1], [0, 0, 1, 1], [], []>} : vector<16x32xbf16>, vector<32x32xbf16>, vector<16x32xf32> -> vector<16x32xf32>
    %156 = vector.broadcast %22 : vector<1x32xf32> to vector<16x32xf32>
    %157 = arith.addf %155, %156 : vector<16x32xf32>
    %158 = arith.addf %157, %107 : vector<16x32xf32>
    %159 = vector.extract_strided_slice %32 {offsets = [1, 0], sizes = [1, 32], strides = [1, 1]} : vector<3x32xf32> to vector<1x32xf32>
    %160 = vector.shape_cast %159 : vector<1x32xf32> to vector<32xf32>
    %161 = vector.extract_strided_slice %34 {offsets = [1, 0], sizes = [1, 32], strides = [1, 1]} : vector<3x32xf32> to vector<1x32xf32>
    %162 = vector.shape_cast %161 : vector<1x32xf32> to vector<32xf32>
    %cst_69 = arith.constant dense<0.000000e+00> : vector<16xf32>
    %163 = vector.multi_reduction <add>, %158, %cst_69 [1] : vector<16x32xf32> to vector<16xf32>
    %164 = vector.shape_cast %163 : vector<16xf32> to vector<16x1xf32>
    %cst_70 = arith.constant 3.200000e+01 : f32
    %165 = vector.broadcast %cst_70 : f32 to vector<16x1xf32>
    %166 = arith.divf %164, %165 : vector<16x1xf32>
    %167 = vector.broadcast %166 : vector<16x1xf32> to vector<16x32xf32>
    %168 = arith.subf %158, %167 : vector<16x32xf32>
    %169 = arith.mulf %168, %168 : vector<16x32xf32>
    %cst_71 = arith.constant dense<0.000000e+00> : vector<16xf32>
    %170 = vector.multi_reduction <add>, %169, %cst_71 [1] : vector<16x32xf32> to vector<16xf32>
    %171 = vector.shape_cast %170 : vector<16xf32> to vector<16x1xf32>
    %cst_72 = arith.constant 3.200000e+01 : f32
    %172 = vector.broadcast %cst_72 : f32 to vector<16x1xf32>
    %173 = arith.divf %171, %172 : vector<16x1xf32>
    %174 = vector.broadcast %166 : vector<16x1xf32> to vector<16x32xf32>
    %175 = arith.subf %158, %174 : vector<16x32xf32>
    %cst_73 = arith.constant 9.99999974E-6 : f32
    %176 = vector.broadcast %cst_73 : f32 to vector<16x1xf32>
    %177 = arith.addf %173, %176 : vector<16x1xf32>
    %178 = math.rsqrt %177 : vector<16x1xf32>
    %179 = vector.broadcast %178 : vector<16x1xf32> to vector<16x32xf32>
    %180 = arith.mulf %175, %179 : vector<16x32xf32>
    %181 = vector.shape_cast %160 : vector<32xf32> to vector<1x32xf32>
    %182 = vector.broadcast %181 : vector<1x32xf32> to vector<16x32xf32>
    %183 = arith.mulf %180, %182 : vector<16x32xf32>
    %184 = vector.shape_cast %162 : vector<32xf32> to vector<1x32xf32>
    %185 = vector.broadcast %184 : vector<1x32xf32> to vector<16x32xf32>
    %186 = arith.addf %183, %185 : vector<16x32xf32>
    %187 = arith.truncf %186 : vector<16x32xf32> to vector<16x32xbf16>
    %cst_74 = arith.constant dense<0.000000e+00> : vector<16x64xf32>
    %188 = tpu.matmul %187, %24, %cst_74 {dimension_numbers = #tpu.dot_dimension_numbers<[1], [0], [0], [1], [0, 0, 1, 1], [], []>} : vector<16x32xbf16>, vector<32x64xbf16>, vector<16x64xf32> -> vector<16x64xf32>
    %189 = vector.broadcast %26 : vector<1x64xf32> to vector<16x64xf32>
    %190 = arith.addf %188, %189 : vector<16x64xf32>
    %cst_75 = arith.constant 5.000000e-01 : f32
    %191 = vector.broadcast %cst_75 : f32 to vector<16x64xf32>
    %192 = arith.mulf %191, %190 : vector<16x64xf32>
    %cst_76 = arith.constant 0.707106769 : f32
    %193 = vector.broadcast %cst_76 : f32 to vector<16x64xf32>
    %194 = arith.mulf %190, %193 : vector<16x64xf32>
    %195 = math.erf %194 : vector<16x64xf32>
    %cst_77 = arith.constant 1.000000e+00 : f32
    %196 = vector.broadcast %cst_77 : f32 to vector<16x64xf32>
    %197 = arith.addf %196, %195 : vector<16x64xf32>
    %198 = arith.mulf %192, %197 : vector<16x64xf32>
    %199 = arith.truncf %198 : vector<16x64xf32> to vector<16x64xbf16>
    %cst_78 = arith.constant dense<0.000000e+00> : vector<16x32xf32>
    %200 = tpu.matmul %199, %28, %cst_78 {dimension_numbers = #tpu.dot_dimension_numbers<[1], [0], [0], [1], [0, 0, 1, 1], [], []>} : vector<16x64xbf16>, vector<64x32xbf16>, vector<16x32xf32> -> vector<16x32xf32>
    %201 = vector.broadcast %30 : vector<1x32xf32> to vector<16x32xf32>
    %202 = arith.addf %200, %201 : vector<16x32xf32>
    %cst_79 = arith.constant 5.000000e-01 : f32
    %203 = vector.broadcast %cst_79 : f32 to vector<16x32xf32>
    %204 = arith.mulf %203, %202 : vector<16x32xf32>
    %cst_80 = arith.constant 0.707106769 : f32
    %205 = vector.broadcast %cst_80 : f32 to vector<16x32xf32>
    %206 = arith.mulf %202, %205 : vector<16x32xf32>
    %207 = math.erf %206 : vector<16x32xf32>
    %cst_81 = arith.constant 1.000000e+00 : f32
    %208 = vector.broadcast %cst_81 : f32 to vector<16x32xf32>
    %209 = arith.addf %208, %207 : vector<16x32xf32>
    %210 = arith.mulf %204, %209 : vector<16x32xf32>
    %211 = arith.addf %210, %186 : vector<16x32xf32>
    %212 = vector.extract_strided_slice %32 {offsets = [2, 0], sizes = [1, 32], strides = [1, 1]} : vector<3x32xf32> to vector<1x32xf32>
    %213 = vector.shape_cast %212 : vector<1x32xf32> to vector<32xf32>
    %214 = vector.extract_strided_slice %34 {offsets = [2, 0], sizes = [1, 32], strides = [1, 1]} : vector<3x32xf32> to vector<1x32xf32>
    %215 = vector.shape_cast %214 : vector<1x32xf32> to vector<32xf32>
    %cst_82 = arith.constant dense<0.000000e+00> : vector<16xf32>
    %216 = vector.multi_reduction <add>, %211, %cst_82 [1] : vector<16x32xf32> to vector<16xf32>
    %217 = vector.shape_cast %216 : vector<16xf32> to vector<16x1xf32>
    %cst_83 = arith.constant 3.200000e+01 : f32
    %218 = vector.broadcast %cst_83 : f32 to vector<16x1xf32>
    %219 = arith.divf %217, %218 : vector<16x1xf32>
    %220 = vector.broadcast %219 : vector<16x1xf32> to vector<16x32xf32>
    %221 = arith.subf %211, %220 : vector<16x32xf32>
    %222 = arith.mulf %221, %221 : vector<16x32xf32>
    %cst_84 = arith.constant dense<0.000000e+00> : vector<16xf32>
    %223 = vector.multi_reduction <add>, %222, %cst_84 [1] : vector<16x32xf32> to vector<16xf32>
    %224 = vector.shape_cast %223 : vector<16xf32> to vector<16x1xf32>
    %cst_85 = arith.constant 3.200000e+01 : f32
    %225 = vector.broadcast %cst_85 : f32 to vector<16x1xf32>
    %226 = arith.divf %224, %225 : vector<16x1xf32>
    %227 = vector.broadcast %219 : vector<16x1xf32> to vector<16x32xf32>
    %228 = arith.subf %211, %227 : vector<16x32xf32>
    %cst_86 = arith.constant 9.99999974E-6 : f32
    %229 = vector.broadcast %cst_86 : f32 to vector<16x1xf32>
    %230 = arith.addf %226, %229 : vector<16x1xf32>
    %231 = math.rsqrt %230 : vector<16x1xf32>
    %232 = vector.broadcast %231 : vector<16x1xf32> to vector<16x32xf32>
    %233 = arith.mulf %228, %232 : vector<16x32xf32>
    %234 = vector.shape_cast %213 : vector<32xf32> to vector<1x32xf32>
    %235 = vector.broadcast %234 : vector<1x32xf32> to vector<16x32xf32>
    %236 = arith.mulf %233, %235 : vector<16x32xf32>
    %237 = vector.shape_cast %215 : vector<32xf32> to vector<1x32xf32>
    %238 = vector.broadcast %237 : vector<1x32xf32> to vector<16x32xf32>
    %239 = arith.addf %236, %238 : vector<16x32xf32>
    %c0_87 = arith.constant 0 : index
    %c0_88 = arith.constant 0 : index
    %240 = vector.load %arg20[%c0_87, %c0_88] : memref<16x32xf32, #tpu.memory_space<vmem>>, vector<16x32xf32>
    tpu.vector_store %arg20[%c0_87, %c0_88], %239 {strides = array<i32>} : memref<16x32xf32, #tpu.memory_space<vmem>>, vector<16x32xf32>,
    %c1_i32 = arith.constant 1 : i32
    %241 = arith.cmpi eq, %arg0, %c1_i32 : i32
    %242 = arith.extui %241 : i1 to i32
    %c0_i32_89 = arith.constant 0 : i32
    %243 = arith.cmpi ne, %242, %c0_i32_89 : i32
    scf.if %243 {
      %c0_90 = arith.constant 0 : index
      %c0_91 = arith.constant 0 : index
      %244 = vector.load %arg19[%c0_90, %c0_91] : memref<16x32xf32, #tpu.memory_space<vmem>>, vector<16x32xf32>
      tpu.vector_store %arg19[%c0_90, %c0_91], %239 {strides = array<i32>} : memref<16x32xf32, #tpu.memory_space<vmem>>, vector<16x32xf32>,
    } else {
    }
    return
  }
  func.func @transform_0(%arg0: i32) -> (i32, i32) {
    %c0_i32 = arith.constant 0 : i32
    %c0_i32_0 = arith.constant 0 : i32
    %c0_i32_1 = arith.constant 0 : i32
    return %c0_i32, %c0_i32_0 : i32, i32
  }
  func.func @transform_1(%arg0: i32) -> (i32, i32) {
    %c0_i32 = arith.constant 0 : i32
    %c0_i32_0 = arith.constant 0 : i32
    %c0_i32_1 = arith.constant 0 : i32
    return %c0_i32, %c0_i32_0 : i32, i32
  }
  func.func @transform_2(%arg0: i32) -> (i32, i32) {
    %c0_i32 = arith.constant 0 : i32
    %c0_i32_0 = arith.constant 0 : i32
    %c0_i32_1 = arith.constant 0 : i32
    return %c0_i32, %c0_i32_0 : i32, i32
  }
  func.func @transform_3(%arg0: i32) -> (i32, i32) {
    %c0_i32 = arith.constant 0 : i32
    %c0_i32_0 = arith.constant 0 : i32
    %c0_i32_1 = arith.constant 0 : i32
    return %c0_i32, %c0_i32_0 : i32, i32
  }
  func.func @transform_4(%arg0: i32) -> (i32, i32, i32) {
    %c0_i32 = arith.constant 0 : i32
    %c0_i32_0 = arith.constant 0 : i32
    %c0_i32_1 = arith.constant 0 : i32
    return %arg0, %c0_i32, %c0_i32_0 : i32, i32, i32
  }
  func.func @transform_5(%arg0: i32) -> (i32, i32, i32) {
    %c0_i32 = arith.constant 0 : i32
    %c0_i32_0 = arith.constant 0 : i32
    %c0_i32_1 = arith.constant 0 : i32
    return %arg0, %c0_i32, %c0_i32_0 : i32, i32, i32
  }
  func.func @transform_6(%arg0: i32) -> (i32, i32, i32) {
    %c0_i32 = arith.constant 0 : i32
    %c0_i32_0 = arith.constant 0 : i32
    %c0_i32_1 = arith.constant 0 : i32
    return %arg0, %c0_i32, %c0_i32_0 : i32, i32, i32
  }
  func.func @transform_7(%arg0: i32) -> (i32, i32, i32) {
    %c0_i32 = arith.constant 0 : i32
    %c0_i32_0 = arith.constant 0 : i32
    %c0_i32_1 = arith.constant 0 : i32
    return %arg0, %c0_i32, %c0_i32_0 : i32, i32, i32
  }
  func.func @transform_8(%arg0: i32) -> (i32, i32, i32) {
    %c0_i32 = arith.constant 0 : i32
    %c0_i32_0 = arith.constant 0 : i32
    %c0_i32_1 = arith.constant 0 : i32
    return %arg0, %c0_i32, %c0_i32_0 : i32, i32, i32
  }
  func.func @transform_9(%arg0: i32) -> (i32, i32, i32) {
    %c0_i32 = arith.constant 0 : i32
    %c0_i32_0 = arith.constant 0 : i32
    %c0_i32_1 = arith.constant 0 : i32
    return %arg0, %c0_i32, %c0_i32_0 : i32, i32, i32
  }
  func.func @transform_10(%arg0: i32) -> (i32, i32, i32) {
    %c0_i32 = arith.constant 0 : i32
    %c0_i32_0 = arith.constant 0 : i32
    %c0_i32_1 = arith.constant 0 : i32
    return %arg0, %c0_i32, %c0_i32_0 : i32, i32, i32
  }
  func.func @transform_11(%arg0: i32) -> (i32, i32, i32) {
    %c0_i32 = arith.constant 0 : i32
    %c0_i32_0 = arith.constant 0 : i32
    %c0_i32_1 = arith.constant 0 : i32
    return %arg0, %c0_i32, %c0_i32_0 : i32, i32, i32
  }
  func.func @transform_12(%arg0: i32) -> (i32, i32, i32) {
    %c0_i32 = arith.constant 0 : i32
    %c0_i32_0 = arith.constant 0 : i32
    %c0_i32_1 = arith.constant 0 : i32
    return %arg0, %c0_i32, %c0_i32_0 : i32, i32, i32
  }
  func.func @transform_13(%arg0: i32) -> (i32, i32, i32) {
    %c0_i32 = arith.constant 0 : i32
    %c0_i32_0 = arith.constant 0 : i32
    %c0_i32_1 = arith.constant 0 : i32
    return %arg0, %c0_i32, %c0_i32_0 : i32, i32, i32
  }
  func.func @transform_14(%arg0: i32) -> (i32, i32, i32) {
    %c0_i32 = arith.constant 0 : i32
    %c0_i32_0 = arith.constant 0 : i32
    %c0_i32_1 = arith.constant 0 : i32
    return %arg0, %c0_i32, %c0_i32_0 : i32, i32, i32
  }
  func.func @transform_15(%arg0: i32) -> (i32, i32, i32) {
    %c0_i32 = arith.constant 0 : i32
    %c0_i32_0 = arith.constant 0 : i32
    %c0_i32_1 = arith.constant 0 : i32
    return %arg0, %c0_i32, %c0_i32_0 : i32, i32, i32
  }
  func.func @transform_16(%arg0: i32) -> (i32, i32, i32) {
    %c0_i32 = arith.constant 0 : i32
    %c0_i32_0 = arith.constant 0 : i32
    %c0_i32_1 = arith.constant 0 : i32
    return %arg0, %c0_i32, %c0_i32_0 : i32, i32, i32
  }
  func.func @transform_17(%arg0: i32) -> (i32, i32, i32) {
    %c0_i32 = arith.constant 0 : i32
    %c0_i32_0 = arith.constant 0 : i32
    %c0_i32_1 = arith.constant 0 : i32
    return %arg0, %c0_i32, %c0_i32_0 : i32, i32, i32
  }
  func.func @transform_18(%arg0: i32) -> (i32, i32) {
    %c0_i32 = arith.constant 0 : i32
    %c0_i32_0 = arith.constant 0 : i32
    %c0_i32_1 = arith.constant 0 : i32
    return %c0_i32, %c0_i32_0 : i32, i32
  }
}

</mosaic_0001>

<llo_original>
// kernel: tpu_custom_call.1
$region0: #{tpu_custom_call.1}
  #allocation0 [shape = 'u32[]', space=smem, size = 0x4, offset = 0x4, fixed_abs, tag = 'smem constant byte address 0x4 - core index']
  #allocation1 [shape = 'u32[144,128]{1,0:T(1,128)}', space=vmem, size = 0x12000, scoped, tag = 'internal scratch']
  #allocation2 [shape = 'f32[16,32]{1,0:T(8,128)}', space=vmem, size = 0x2000, scoped, tag = 'scratch operand']
  %s0 = inlined_call_operand.hbm [shape: f32[16,32], index: 0, kind: input, shape index: {}]
  %s1 = inlined_call_operand.hbm [shape: bf16[16,32], index: 1, kind: input, shape index: {}]
  %s2 = inlined_call_operand.hbm [shape: f32[8,8], index: 2, kind: input, shape index: {}]
  %s3 = inlined_call_operand.hbm [shape: f32[8,8], index: 3, kind: input, shape index: {}]
  %s4 = inlined_call_operand.vmem [shape: bf16[2,32,96], index: 4, kind: input, shape index: {}]
  %s5 = inlined_call_operand.hbm [shape: f32[2,1,96], index: 5, kind: input, shape index: {}]
  %s6 = inlined_call_operand.vmem [shape: bf16[2,32,32], index: 6, kind: input, shape index: {}]
  %s7 = inlined_call_operand.hbm [shape: f32[2,1,32], index: 7, kind: input, shape index: {}]
  %s8 = inlined_call_operand.vmem [shape: bf16[2,32,96], index: 8, kind: input, shape index: {}]
  %s9 = inlined_call_operand.hbm [shape: f32[2,1,96], index: 9, kind: input, shape index: {}]
  %s10 = inlined_call_operand.vmem [shape: bf16[2,32,32], index: 10, kind: input, shape index: {}]
  %s11 = inlined_call_operand.hbm [shape: f32[2,1,32], index: 11, kind: input, shape index: {}]
  %s12 = inlined_call_operand.hbm [shape: bf16[2,32,64], index: 12, kind: input, shape index: {}]
  %s13 = inlined_call_operand.hbm [shape: f32[2,1,64], index: 13, kind: input, shape index: {}]
  %s14 = inlined_call_operand.vmem [shape: bf16[2,64,32], index: 14, kind: input, shape index: {}]
  %s15 = inlined_call_operand.vmem [shape: f32[2,1,32], index: 15, kind: input, shape index: {}]
  %s16 = inlined_call_operand.vmem [shape: f32[2,3,32], index: 16, kind: input, shape index: {}]
  %s17 = inlined_call_operand.vmem [shape: f32[2,3,32], index: 17, kind: input, shape index: {}]
  %s18 = inlined_call_operand.hbm [shape: f32[16,32], index: 18, kind: output, shape index: {}]
  %s19 = sld [smem:[#allocation0]]
  $region153: #{tpu_custom_call.1} parent=0
    _
  %s21 = ssub.s32 1, %s19
  %s22 = scalar_select 0, %s21, %s19
  $region1: #{tpu_custom_call.1} parent=0
    #allocation3 [shape = 'u8[8192]{0}', space=vmem, size = 0x2000, scoped, tag = 'input window, operand 0, single buffered']
    #allocation4 [shape = 's32[2]{0}', space=sflag, size = 0x8, scoped, tag = 'scoped memory for tpu_custom_call.1']
    #allocation5 [shape = 's32[2]{0}', space=sflag, size = 0x8, scoped, tag = 'scoped memory for tpu_custom_call.1']
    #allocation6 [shape = 'u8[4096]{0}', space=vmem, size = 0x1000, scoped, tag = 'input window, operand 1, single buffered']
    #allocation7 [shape = 's32[1]{0}', space=sflag, size = 0x4, scoped, tag = 'scoped memory for tpu_custom_call.1']
    #allocation8 [shape = 'u8[4096]{0}', space=vmem, size = 0x1000, scoped, tag = 'input window, operand 2, single buffered']
    #allocation9 [shape = 'u8[4096]{0}', space=vmem, size = 0x1000, scoped, tag = 'input window, operand 3, single buffered']
    #allocation10 [shape = 's32[1]{0}', space=sflag, size = 0x4, scoped, tag = 'scoped memory for tpu_custom_call.1']
    #allocation11 [shape = 'u8[1024]{0}', space=vmem, size = 0x400, scoped, tag = 'input window, operand 5']
    #allocation12 [shape = 'u8[1024]{0}', space=vmem, size = 0x400, scoped, tag = 'input window, operand 7']
    #allocation13 [shape = 'u8[1024]{0}', space=vmem, size = 0x400, scoped, tag = 'input window, operand 9']
    #allocation14 [shape = 'u8[1024]{0}', space=vmem, size = 0x400, scoped, tag = 'input window, operand 11']
    #allocation15 [shape = 'u8[16384]{0}', space=vmem, size = 0x4000, scoped, tag = 'input window, operand 12']
    #allocation16 [shape = 'u8[1024]{0}', space=vmem, size = 0x400, scoped, tag = 'input window, operand 13']
    #allocation17 [shape = 'u8[8192]{0}', space=vmem, size = 0x2000, scoped, tag = 'output window, operand 0, single buffered']
    %23 = vsyncpa [#allocation4], 0
    %24 = vsyncpa [#allocation7], 0
    %25 = vsyncpa [#allocation10], 0
    %26 = vsyncpa [#allocation5], 0
    loop: start=0, step=1, limit=4
    $region2: #{tpu_custom_call.1} parent=1 // loop_pre_header
      _
    $region3: #{tpu_custom_call.1} parent=1 // loop_header
      %s28 = sphi 0, %s32
      %p29 = scmp.ge.s32.totalorder %s28, 4
      %s36 = sphi 0, %s36
      %s38 = sphi 0, %s36
      %s39 = sphi 0, %s38
      %s53 = sphi 0, %s39
      %s57 = sphi 0, %s57
      %s59 = sphi 0, %s57
      %s60 = sphi 0, %s59
      %s74 = sphi 0, %s60
      %s78 = sphi 0, %s78
      %s80 = sphi 0, %s78
      %s81 = sphi 0, %s80
      %s95 = sphi 0, %s81
      %s99 = sphi 0, %s99
      %s101 = sphi 0, %s99
      %s102 = sphi 0, %s101
      %s116 = sphi 0, %s102
      %s122 = sphi 0, %s124
      %s125 = sphi 0, %s122
      %s126 = sphi 0, %s125
      %s142 = sphi 0, %s126
      %s148 = sphi 0, %s150
      %s151 = sphi 0, %s148
      %s152 = sphi 0, %s151
      %s168 = sphi 0, %s152
      %s174 = sphi 0, %s176
      %s177 = sphi 0, %s174
      %s178 = sphi 0, %s177
      %s194 = sphi 0, %s178
      %s200 = sphi 0, %s202
      %s203 = sphi 0, %s200
      %s204 = sphi 0, %s203
      %s220 = sphi 0, %s204
      %s226 = sphi 0, %s228
      %s229 = sphi 0, %s226
      %s230 = sphi 0, %s229
      %s246 = sphi 0, %s230
      %s252 = sphi 0, %s254
      %s255 = sphi 0, %s252
      %s256 = sphi 0, %s255
      %s272 = sphi 0, %s256
      %s278 = sphi 0, %s280
      %s281 = sphi 0, %s278
      %s282 = sphi 0, %s281
      %s298 = sphi 0, %s282
      %s304 = sphi 0, %s306
      %s307 = sphi 0, %s304
      %s308 = sphi 0, %s307
      %s324 = sphi 0, %s308
      %s330 = sphi 0, %s332
      %s333 = sphi 0, %s330
      %s334 = sphi 0, %s333
      %s350 = sphi 0, %s334
      %s356 = sphi 0, %s358
      %s359 = sphi 0, %s356
      %s360 = sphi 0, %s359
      %s376 = sphi 0, %s360
      %s382 = sphi 0, %s384
      %s385 = sphi 0, %s382
      %s386 = sphi 0, %s385
      %s402 = sphi 0, %s386
      %s408 = sphi 0, %s410
      %s411 = sphi 0, %s408
      %s412 = sphi 0, %s411
      %s428 = sphi 0, %s412
      %s434 = sphi 0, %s436
      %s437 = sphi 0, %s434
      %s438 = sphi 0, %s437
      %s454 = sphi 0, %s438
      %s460 = sphi 0, %s462
      %s463 = sphi 0, %s460
      %s464 = sphi 0, %s463
      %s480 = sphi 0, %s464
      %s484 = sphi 0, %s484
      %s486 = sphi 0, %s484
      %s487 = sphi 0, %s486
      %s501 = sphi 0, %s487
    $region4: #{tpu_custom_call.1} parent=1 // loop_header_branch
      %31 = sbr.rel (%p29) target = $region8
    $region5: #{tpu_custom_call.1} parent=1 // loop_body
      %s33 = ssub.s32 %s28, 1
      %s34 = ssub.s32 %s28, 2
      %s35 = sadd.s32 %s28, 1
      %s37 = sadd.s32 %s36, 1
      %p40 = scmp.eq.s32.totalorder %s28, 1
      %p41 = scmp.ne.s32.totalorder %s36, %s38
      %p42 = scmp.eq.s32.totalorder %s28, 0
      %p43 = por %p41, %p42
      %p44 = scmp.ne.s32.totalorder %s36, %s38
      %p45 = scmp.eq.s32.totalorder %s33, 1
      %p46 = por %p44, %p45
      %p47 = scmp.ne.s32.totalorder %s38, %s39
      %p48 = scmp.eq.s32.totalorder %s33, 0
      %p49 = por %p47, %p48
      %p50 = scmp.ne.s32.totalorder %s38, %s39
      %p51 = scmp.eq.s32.totalorder %s34, 1
      %p52 = por %p50, %p51
      %p54 = scmp.ne.s32.totalorder %s39, %s53
      %p55 = scmp.eq.s32.totalorder %s34, 0
      %p56 = por %p54, %p55
      %s58 = sadd.s32 %s57, 1
      %p61 = scmp.eq.s32.totalorder %s28, 1
      %p62 = scmp.ne.s32.totalorder %s57, %s59
      %p63 = scmp.eq.s32.totalorder %s28, 0
      %p64 = por %p62, %p63
      %p65 = scmp.ne.s32.totalorder %s57, %s59
      %p66 = scmp.eq.s32.totalorder %s33, 1
      %p67 = por %p65, %p66
      %p68 = scmp.ne.s32.totalorder %s59, %s60
      %p69 = scmp.eq.s32.totalorder %s33, 0
      %p70 = por %p68, %p69
      %p71 = scmp.ne.s32.totalorder %s59, %s60
      %p72 = scmp.eq.s32.totalorder %s34, 1
      %p73 = por %p71, %p72
      %p75 = scmp.ne.s32.totalorder %s60, %s74
      %p76 = scmp.eq.s32.totalorder %s34, 0
      %p77 = por %p75, %p76
      %s79 = sadd.s32 %s78, 1
      %p82 = scmp.eq.s32.totalorder %s28, 1
      %p83 = scmp.ne.s32.totalorder %s78, %s80
      %p84 = scmp.eq.s32.totalorder %s28, 0
      %p85 = por %p83, %p84
      %p86 = scmp.ne.s32.totalorder %s78, %s80
      %p87 = scmp.eq.s32.totalorder %s33, 1
      %p88 = por %p86, %p87
      %p89 = scmp.ne.s32.totalorder %s80, %s81
      %p90 = scmp.eq.s32.totalorder %s33, 0
      %p91 = por %p89, %p90
      %p92 = scmp.ne.s32.totalorder %s80, %s81
      %p93 = scmp.eq.s32.totalorder %s34, 1
      %p94 = por %p92, %p93
      %p96 = scmp.ne.s32.totalorder %s81, %s95
      %p97 = scmp.eq.s32.totalorder %s34, 0
      %p98 = por %p96, %p97
      %s100 = sadd.s32 %s99, 1
      %p103 = scmp.eq.s32.totalorder %s28, 1
      %p104 = scmp.ne.s32.totalorder %s99, %s101
      %p105 = scmp.eq.s32.totalorder %s28, 0
      %p106 = por %p104, %p105
      %p107 = scmp.ne.s32.totalorder %s99, %s101
      %p108 = scmp.eq.s32.totalorder %s33, 1
      %p109 = por %p107, %p108
      %p110 = scmp.ne.s32.totalorder %s101, %s102
      %p111 = scmp.eq.s32.totalorder %s33, 0
      %p112 = por %p110, %p111
      %p113 = scmp.ne.s32.totalorder %s101, %s102
      %p114 = scmp.eq.s32.totalorder %s34, 1
      %p115 = por %p113, %p114
      %p117 = scmp.ne.s32.totalorder %s102, %s116
      %p118 = scmp.eq.s32.totalorder %s34, 0
      %p119 = por %p117, %p118
      %s120 = ssub.s32 %s28, %s35
      %p121 = scmp.eq.s32.totalorder %s120, 0
      %s123 = sadd.s32 %s122, 1
      %s124 = scalar_select %p121, %s122, %s123
      %p127 = pneg %p121
      %p128 = scmp.eq.s32.totalorder %s28, 1
      %p129 = por %p127, %p128
      %p130 = scmp.ne.s32.totalorder %s122, %s125
      %p131 = scmp.eq.s32.totalorder %s28, 0
      %p132 = por %p130, %p131
      %p133 = scmp.ne.s32.totalorder %s122, %s125
      %p134 = scmp.eq.s32.totalorder %s33, 1
      %p135 = por %p133, %p134
      %p136 = scmp.ne.s32.totalorder %s125, %s126
      %p137 = scmp.eq.s32.totalorder %s33, 0
      %p138 = por %p136, %p137
      %p139 = scmp.ne.s32.totalorder %s125, %s126
      %p140 = scmp.eq.s32.totalorder %s34, 1
      %p141 = por %p139, %p140
      %p143 = scmp.ne.s32.totalorder %s126, %s142
      %p144 = scmp.eq.s32.totalorder %s34, 0
      %p145 = por %p143, %p144
      %s146 = ssub.s32 %s28, %s35
      %p147 = scmp.eq.s32.totalorder %s146, 0
      %s149 = sadd.s32 %s148, 1
      %s150 = scalar_select %p147, %s148, %s149
      %p153 = pneg %p147
      %p154 = scmp.eq.s32.totalorder %s28, 1
      %p155 = por %p153, %p154
      %p156 = scmp.ne.s32.totalorder %s148, %s151
      %p157 = scmp.eq.s32.totalorder %s28, 0
      %p158 = por %p156, %p157
      %p159 = scmp.ne.s32.totalorder %s148, %s151
      %p160 = scmp.eq.s32.totalorder %s33, 1
      %p161 = por %p159, %p160
      %p162 = scmp.ne.s32.totalorder %s151, %s152
      %p163 = scmp.eq.s32.totalorder %s33, 0
      %p164 = por %p162, %p163
      %p165 = scmp.ne.s32.totalorder %s151, %s152
      %p166 = scmp.eq.s32.totalorder %s34, 1
      %p167 = por %p165, %p166
      %p169 = scmp.ne.s32.totalorder %s152, %s168
      %p170 = scmp.eq.s32.totalorder %s34, 0
      %p171 = por %p169, %p170
      %s172 = ssub.s32 %s28, %s35
      %p173 = scmp.eq.s32.totalorder %s172, 0
      %s175 = sadd.s32 %s174, 1
      %s176 = scalar_select %p173, %s174, %s175
      %p179 = pneg %p173
      %p180 = scmp.eq.s32.totalorder %s28, 1
      %p181 = por %p179, %p180
      %p182 = scmp.ne.s32.totalorder %s174, %s177
      %p183 = scmp.eq.s32.totalorder %s28, 0
      %p184 = por %p182, %p183
      %p185 = scmp.ne.s32.totalorder %s174, %s177
      %p186 = scmp.eq.s32.totalorder %s33, 1
      %p187 = por %p185, %p186
      %p188 = scmp.ne.s32.totalorder %s177, %s178
      %p189 = scmp.eq.s32.totalorder %s33, 0
      %p190 = por %p188, %p189
      %p191 = scmp.ne.s32.totalorder %s177, %s178
      %p192 = scmp.eq.s32.totalorder %s34, 1
      %p193 = por %p191, %p192
      %p195 = scmp.ne.s32.totalorder %s178, %s194
      %p196 = scmp.eq.s32.totalorder %s34, 0
      %p197 = por %p195, %p196
      %s198 = ssub.s32 %s28, %s35
      %p199 = scmp.eq.s32.totalorder %s198, 0
      %s201 = sadd.s32 %s200, 1
      %s202 = scalar_select %p199, %s200, %s201
      %p205 = pneg %p199
      %p206 = scmp.eq.s32.totalorder %s28, 1
      %p207 = por %p205, %p206
      %p208 = scmp.ne.s32.totalorder %s200, %s203
      %p209 = scmp.eq.s32.totalorder %s28, 0
      %p210 = por %p208, %p209
      %p211 = scmp.ne.s32.totalorder %s200, %s203
      %p212 = scmp.eq.s32.totalorder %s33, 1
      %p213 = por %p211, %p212
      %p214 = scmp.ne.s32.totalorder %s203, %s204
      %p215 = scmp.eq.s32.totalorder %s33, 0
      %p216 = por %p214, %p215
      %p217 = scmp.ne.s32.totalorder %s203, %s204
      %p218 = scmp.eq.s32.totalorder %s34, 1
      %p219 = por %p217, %p218
      %p221 = scmp.ne.s32.totalorder %s204, %s220
      %p222 = scmp.eq.s32.totalorder %s34, 0
      %p223 = por %p221, %p222
      %s224 = ssub.s32 %s28, %s35
      %p225 = scmp.eq.s32.totalorder %s224, 0
      %s227 = sadd.s32 %s226, 1
      %s228 = scalar_select %p225, %s226, %s227
      %p231 = pneg %p225
      %p232 = scmp.eq.s32.totalorder %s28, 1
      %p233 = por %p231, %p232
      %p234 = scmp.ne.s32.totalorder %s226, %s229
      %p235 = scmp.eq.s32.totalorder %s28, 0
      %p236 = por %p234, %p235
      %p237 = scmp.ne.s32.totalorder %s226, %s229
      %p238 = scmp.eq.s32.totalorder %s33, 1
      %p239 = por %p237, %p238
      %p240 = scmp.ne.s32.totalorder %s229, %s230
      %p241 = scmp.eq.s32.totalorder %s33, 0
      %p242 = por %p240, %p241
      %p243 = scmp.ne.s32.totalorder %s229, %s230
      %p244 = scmp.eq.s32.totalorder %s34, 1
      %p245 = por %p243, %p244
      %p247 = scmp.ne.s32.totalorder %s230, %s246
      %p248 = scmp.eq.s32.totalorder %s34, 0
      %p249 = por %p247, %p248
      %s250 = ssub.s32 %s28, %s35
      %p251 = scmp.eq.s32.totalorder %s250, 0
      %s253 = sadd.s32 %s252, 1
      %s254 = scalar_select %p251, %s252, %s253
      %p257 = pneg %p251
      %p258 = scmp.eq.s32.totalorder %s28, 1
      %p259 = por %p257, %p258
      %p260 = scmp.ne.s32.totalorder %s252, %s255
      %p261 = scmp.eq.s32.totalorder %s28, 0
      %p262 = por %p260, %p261
      %p263 = scmp.ne.s32.totalorder %s252, %s255
      %p264 = scmp.eq.s32.totalorder %s33, 1
      %p265 = por %p263, %p264
      %p266 = scmp.ne.s32.totalorder %s255, %s256
      %p267 = scmp.eq.s32.totalorder %s33, 0
      %p268 = por %p266, %p267
      %p269 = scmp.ne.s32.totalorder %s255, %s256
      %p270 = scmp.eq.s32.totalorder %s34, 1
      %p271 = por %p269, %p270
      %p273 = scmp.ne.s32.totalorder %s256, %s272
      %p274 = scmp.eq.s32.totalorder %s34, 0
      %p275 = por %p273, %p274
      %s276 = ssub.s32 %s28, %s35
      %p277 = scmp.eq.s32.totalorder %s276, 0
      %s279 = sadd.s32 %s278, 1
      %s280 = scalar_select %p277, %s278, %s279
      %p283 = pneg %p277
      %p284 = scmp.eq.s32.totalorder %s28, 1
      %p285 = por %p283, %p284
      %p286 = scmp.ne.s32.totalorder %s278, %s281
      %p287 = scmp.eq.s32.totalorder %s28, 0
      %p288 = por %p286, %p287
      %p289 = scmp.ne.s32.totalorder %s278, %s281
      %p290 = scmp.eq.s32.totalorder %s33, 1
      %p291 = por %p289, %p290
      %p292 = scmp.ne.s32.totalorder %s281, %s282
      %p293 = scmp.eq.s32.totalorder %s33, 0
      %p294 = por %p292, %p293
      %p295 = scmp.ne.s32.totalorder %s281, %s282
      %p296 = scmp.eq.s32.totalorder %s34, 1
      %p297 = por %p295, %p296
      %p299 = scmp.ne.s32.totalorder %s282, %s298
      %p300 = scmp.eq.s32.totalorder %s34, 0
      %p301 = por %p299, %p300
      %s302 = ssub.s32 %s28, %s35
      %p303 = scmp.eq.s32.totalorder %s302, 0
      %s305 = sadd.s32 %s304, 1
      %s306 = scalar_select %p303, %s304, %s305
      %p309 = pneg %p303
      %p310 = scmp.eq.s32.totalorder %s28, 1
      %p311 = por %p309, %p310
      %p312 = scmp.ne.s32.totalorder %s304, %s307
      %p313 = scmp.eq.s32.totalorder %s28, 0
      %p314 = por %p312, %p313
      %p315 = scmp.ne.s32.totalorder %s304, %s307
      %p316 = scmp.eq.s32.totalorder %s33, 1
      %p317 = por %p315, %p316
      %p318 = scmp.ne.s32.totalorder %s307, %s308
      %p319 = scmp.eq.s32.totalorder %s33, 0
      %p320 = por %p318, %p319
      %p321 = scmp.ne.s32.totalorder %s307, %s308
      %p322 = scmp.eq.s32.totalorder %s34, 1
      %p323 = por %p321, %p322
      %p325 = scmp.ne.s32.totalorder %s308, %s324
      %p326 = scmp.eq.s32.totalorder %s34, 0
      %p327 = por %p325, %p326
      %s328 = ssub.s32 %s28, %s35
      %p329 = scmp.eq.s32.totalorder %s328, 0
      %s331 = sadd.s32 %s330, 1
      %s332 = scalar_select %p329, %s330, %s331
      %p335 = pneg %p329
      %p336 = scmp.eq.s32.totalorder %s28, 1
      %p337 = por %p335, %p336
      %p338 = scmp.ne.s32.totalorder %s330, %s333
      %p339 = scmp.eq.s32.totalorder %s28, 0
      %p340 = por %p338, %p339
      %p341 = scmp.ne.s32.totalorder %s330, %s333
      %p342 = scmp.eq.s32.totalorder %s33, 1
      %p343 = por %p341, %p342
      %p344 = scmp.ne.s32.totalorder %s333, %s334
      %p345 = scmp.eq.s32.totalorder %s33, 0
      %p346 = por %p344, %p345
      %p347 = scmp.ne.s32.totalorder %s333, %s334
      %p348 = scmp.eq.s32.totalorder %s34, 1
      %p349 = por %p347, %p348
      %p351 = scmp.ne.s32.totalorder %s334, %s350
      %p352 = scmp.eq.s32.totalorder %s34, 0
      %p353 = por %p351, %p352
      %s354 = ssub.s32 %s28, %s35
      %p355 = scmp.eq.s32.totalorder %s354, 0
      %s357 = sadd.s32 %s356, 1
      %s358 = scalar_select %p355, %s356, %s357
      %p361 = pneg %p355
      %p362 = scmp.eq.s32.totalorder %s28, 1
      %p363 = por %p361, %p362
      %p364 = scmp.ne.s32.totalorder %s356, %s359
      %p365 = scmp.eq.s32.totalorder %s28, 0
      %p366 = por %p364, %p365
      %p367 = scmp.ne.s32.totalorder %s356, %s359
      %p368 = scmp.eq.s32.totalorder %s33, 1
      %p369 = por %p367, %p368
      %p370 = scmp.ne.s32.totalorder %s359, %s360
      %p371 = scmp.eq.s32.totalorder %s33, 0
      %p372 = por %p370, %p371
      %p373 = scmp.ne.s32.totalorder %s359, %s360
      %p374 = scmp.eq.s32.totalorder %s34, 1
      %p375 = por %p373, %p374
      %p377 = scmp.ne.s32.totalorder %s360, %s376
      %p378 = scmp.eq.s32.totalorder %s34, 0
      %p379 = por %p377, %p378
      %s380 = ssub.s32 %s28, %s35
      %p381 = scmp.eq.s32.totalorder %s380, 0
      %s383 = sadd.s32 %s382, 1
      %s384 = scalar_select %p381, %s382, %s383
      %p387 = pneg %p381
      %p388 = scmp.eq.s32.totalorder %s28, 1
      %p389 = por %p387, %p388
      %p390 = scmp.ne.s32.totalorder %s382, %s385
      %p391 = scmp.eq.s32.totalorder %s28, 0
      %p392 = por %p390, %p391
      %p393 = scmp.ne.s32.totalorder %s382, %s385
      %p394 = scmp.eq.s32.totalorder %s33, 1
      %p395 = por %p393, %p394
      %p396 = scmp.ne.s32.totalorder %s385, %s386
      %p397 = scmp.eq.s32.totalorder %s33, 0
      %p398 = por %p396, %p397
      %p399 = scmp.ne.s32.totalorder %s385, %s386
      %p400 = scmp.eq.s32.totalorder %s34, 1
      %p401 = por %p399, %p400
      %p403 = scmp.ne.s32.totalorder %s386, %s402
      %p404 = scmp.eq.s32.totalorder %s34, 0
      %p405 = por %p403, %p404
      %s406 = ssub.s32 %s28, %s35
      %p407 = scmp.eq.s32.totalorder %s406, 0
      %s409 = sadd.s32 %s408, 1
      %s410 = scalar_select %p407, %s408, %s409
      %p413 = pneg %p407
      %p414 = scmp.eq.s32.totalorder %s28, 1
      %p415 = por %p413, %p414
      %p416 = scmp.ne.s32.totalorder %s408, %s411
      %p417 = scmp.eq.s32.totalorder %s28, 0
      %p418 = por %p416, %p417
      %p419 = scmp.ne.s32.totalorder %s408, %s411
      %p420 = scmp.eq.s32.totalorder %s33, 1
      %p421 = por %p419, %p420
      %p422 = scmp.ne.s32.totalorder %s411, %s412
      %p423 = scmp.eq.s32.totalorder %s33, 0
      %p424 = por %p422, %p423
      %p425 = scmp.ne.s32.totalorder %s411, %s412
      %p426 = scmp.eq.s32.totalorder %s34, 1
      %p427 = por %p425, %p426
      %p429 = scmp.ne.s32.totalorder %s412, %s428
      %p430 = scmp.eq.s32.totalorder %s34, 0
      %p431 = por %p429, %p430
      %s432 = ssub.s32 %s28, %s35
      %p433 = scmp.eq.s32.totalorder %s432, 0
      %s435 = sadd.s32 %s434, 1
      %s436 = scalar_select %p433, %s434, %s435
      %p439 = pneg %p433
      %p440 = scmp.eq.s32.totalorder %s28, 1
      %p441 = por %p439, %p440
      %p442 = scmp.ne.s32.totalorder %s434, %s437
      %p443 = scmp.eq.s32.totalorder %s28, 0
      %p444 = por %p442, %p443
      %p445 = scmp.ne.s32.totalorder %s434, %s437
      %p446 = scmp.eq.s32.totalorder %s33, 1
      %p447 = por %p445, %p446
      %p448 = scmp.ne.s32.totalorder %s437, %s438
      %p449 = scmp.eq.s32.totalorder %s33, 0
      %p450 = por %p448, %p449
      %p451 = scmp.ne.s32.totalorder %s437, %s438
      %p452 = scmp.eq.s32.totalorder %s34, 1
      %p453 = por %p451, %p452
      %p455 = scmp.ne.s32.totalorder %s438, %s454
      %p456 = scmp.eq.s32.totalorder %s34, 0
      %p457 = por %p455, %p456
      %s458 = ssub.s32 %s28, %s35
      %p459 = scmp.eq.s32.totalorder %s458, 0
      %s461 = sadd.s32 %s460, 1
      %s462 = scalar_select %p459, %s460, %s461
      %p465 = pneg %p459
      %p466 = scmp.eq.s32.totalorder %s28, 1
      %p467 = por %p465, %p466
      %p468 = scmp.ne.s32.totalorder %s460, %s463
      %p469 = scmp.eq.s32.totalorder %s28, 0
      %p470 = por %p468, %p469
      %p471 = scmp.ne.s32.totalorder %s460, %s463
      %p472 = scmp.eq.s32.totalorder %s33, 1
      %p473 = por %p471, %p472
      %p474 = scmp.ne.s32.totalorder %s463, %s464
      %p475 = scmp.eq.s32.totalorder %s33, 0
      %p476 = por %p474, %p475
      %p477 = scmp.ne.s32.totalorder %s463, %s464
      %p478 = scmp.eq.s32.totalorder %s34, 1
      %p479 = por %p477, %p478
      %p481 = scmp.ne.s32.totalorder %s464, %s480
      %p482 = scmp.eq.s32.totalorder %s34, 0
      %p483 = por %p481, %p482
      %s485 = sadd.s32 %s484, 1
      %p488 = scmp.eq.s32.totalorder %s28, 1
      %p489 = scmp.ne.s32.totalorder %s484, %s486
      %p490 = scmp.eq.s32.totalorder %s28, 0
      %p491 = por %p489, %p490
      %p492 = scmp.ne.s32.totalorder %s484, %s486
      %p493 = scmp.eq.s32.totalorder %s33, 1
      %p494 = por %p492, %p493
      %p495 = scmp.ne.s32.totalorder %s486, %s487
      %p496 = scmp.eq.s32.totalorder %s33, 0
      %p497 = por %p495, %p496
      %p498 = scmp.ne.s32.totalorder %s486, %s487
      %p499 = scmp.eq.s32.totalorder %s34, 1
      %p500 = por %p498, %p499
      %p502 = scmp.ne.s32.totalorder %s487, %s501
      %p503 = scmp.eq.s32.totalorder %s34, 0
      %p504 = por %p502, %p503
      %p505 = scmp.le.s32.totalorder 1, %s28
      %p506 = scmp.lt.s32.totalorder %s28, 3
      %p507 = pnand %p505, %p506
      %p508 = pneg %p507
      // Predicated region
      $region9: #{tpu_custom_call.1} parent=5 // pred_check
        _
      $region10: #{tpu_custom_call.1} parent=5 // pred_check_branch
        %510 = sbr.rel (%p507) target = $region12
      $region11: #{tpu_custom_call.1} parent=5 // pred_region
        %s511 = ssub.s32 %s28, 1
        // Predicated region
        $region13: #{tpu_custom_call.1} parent=11 // pred_check
          %p512 = pneg %p49
        $region14: #{tpu_custom_call.1} parent=11 // pred_check_branch
          %514 = sbr.rel (%p512) target = $region16
        $region15: #{tpu_custom_call.1} parent=11 // pred_region
          %s516 = ssub.s32 256, 256
          %517 = vsyncadd [#allocation4], %s516
          %s518 = sshll.u32 [#allocation3], 4
          %s519 = int_to_ptr.vmem [resolvable:$true] %s518
          %524 = dma.hbm_to_vmem [thread:$0]  %s0, 256, %s519, [#allocation4], 128, 128, 8
        $region16: #{tpu_custom_call.1} parent=11 // pred_fallthru
          _
        // Predicated region
        $region17: #{tpu_custom_call.1} parent=11 // pred_check
          %p525 = pneg %p70
        $region18: #{tpu_custom_call.1} parent=11 // pred_check_branch
          %527 = sbr.rel (%p525) target = $region20
        $region19: #{tpu_custom_call.1} parent=11 // pred_region
          %s529 = ssub.s32 128, 128
          %530 = vsyncadd [#allocation7], %s529
          %s531 = sshll.u32 [#allocation6], 4
          %s532 = int_to_ptr.vmem [resolvable:$true] %s531
          %537 = dma.hbm_to_vmem [thread:$0]  %s1, 128, %s532, [#allocation7], 64, 64, 4
        $region20: #{tpu_custom_call.1} parent=11 // pred_fallthru
          _
        // Predicated region
        $region21: #{tpu_custom_call.1} parent=11 // pred_check
          %p538 = pneg %p91
        $region22: #{tpu_custom_call.1} parent=11 // pred_check_branch
          %540 = sbr.rel (%p538) target = $region24
        $region23: #{tpu_custom_call.1} parent=11 // pred_region
          %s542 = ssub.s32 128, 128
          %543 = vsyncadd [#allocation7], %s542
          %s545 = sshll.u32 [#allocation8], 4
          %s546 = int_to_ptr.vmem [resolvable:$true] %s545
          %548 = dma.hbm_to_vmem [thread:$0]  %s2, 128, %s546, [#allocation7]
        $region24: #{tpu_custom_call.1} parent=11 // pred_fallthru
          _
        // Predicated region
        $region25: #{tpu_custom_call.1} parent=11 // pred_check
          %p549 = pneg %p112
        $region26: #{tpu_custom_call.1} parent=11 // pred_check_branch
          %551 = sbr.rel (%p549) target = $region28
        $region27: #{tpu_custom_call.1} parent=11 // pred_region
          %s553 = ssub.s32 128, 128
          %554 = vsyncadd [#allocation10], %s553
          %s556 = sshll.u32 [#allocation9], 4
          %s557 = int_to_ptr.vmem [resolvable:$true] %s556
          %559 = dma.hbm_to_vmem [thread:$0]  %s3, 128, %s557, [#allocation10]
        $region28: #{tpu_custom_call.1} parent=11 // pred_fallthru
          _
      $region12: #{tpu_custom_call.1} parent=5 // pred_fallthru
        _
      %p560 = scmp.lt.s32.totalorder %s28, 2
      // Predicated region
      $region29: #{tpu_custom_call.1} parent=5 // pred_check
        %p561 = pneg %p560
      $region30: #{tpu_custom_call.1} parent=5 // pred_check_branch
        %563 = sbr.rel (%p561) target = $region32
      $region31: #{tpu_custom_call.1} parent=5 // pred_region
        // Predicated region
        $region33: #{tpu_custom_call.1} parent=31 // pred_check
          %p564 = pneg %p132
        $region34: #{tpu_custom_call.1} parent=31 // pred_check_branch
          %566 = sbr.rel (%p564) target = $region36
        $region35: #{tpu_custom_call.1} parent=31 // pred_region
          %p567 = scmp.lt.s32.totalorder %s28, 1
          %s568 = scalar_select %p567, %s28, 1
          %s569 = smul.addr %s568, 4
          %s570 = smul.addr %s569, 4
          %s571 = scalar_lea.vmem %s4, %s570
        $region36: #{tpu_custom_call.1} parent=31 // pred_fallthru
          _
        // Predicated region
        $region37: #{tpu_custom_call.1} parent=31 // pred_check
          %p572 = pneg %p158
        $region38: #{tpu_custom_call.1} parent=31 // pred_check_branch
          %574 = sbr.rel (%p572) target = $region40
        $region39: #{tpu_custom_call.1} parent=31 // pred_region
          %s575 = sand.u32 %s28, 1
          %s576 = scalar_lea.sflag [#allocation4], %s575
          %s577 = sand.u32 %s148, 1
          %s578 = scalar_lea.vmem [#allocation11], %s577
          %s580 = ssub.s32 16, 16
          %581 = vsyncadd %s576, %s580
          %s582 = smul.addr %s28, 16
          %s583 = scalar_lea.hbm %s5, %s582
          %s585 = sshll.u32 %s578, 4
          %s586 = int_to_ptr.vmem [resolvable:$true] %s585
          %588 = dma.hbm_to_vmem [thread:$0]  %s583, 16, %s586, %s576
        $region40: #{tpu_custom_call.1} parent=31 // pred_fallthru
          _
        // Predicated region
        $region41: #{tpu_custom_call.1} parent=31 // pred_check
          %p589 = pneg %p184
        $region42: #{tpu_custom_call.1} parent=31 // pred_check_branch
          %591 = sbr.rel (%p589) target = $region44
        $region43: #{tpu_custom_call.1} parent=31 // pred_region
          %p592 = scmp.lt.s32.totalorder %s28, 1
          %s593 = scalar_select %p592, %s28, 1
          %s594 = smul.addr %s593, 4
          %s595 = smul.addr %s594, 4
          %s596 = scalar_lea.vmem %s6, %s595
        $region44: #{tpu_custom_call.1} parent=31 // pred_fallthru
          _
        // Predicated region
        $region45: #{tpu_custom_call.1} parent=31 // pred_check
          %p597 = pneg %p210
        $region46: #{tpu_custom_call.1} parent=31 // pred_check_branch
          %599 = sbr.rel (%p597) target = $region48
        $region47: #{tpu_custom_call.1} parent=31 // pred_region
          %s600 = sand.u32 %s28, 1
          %s601 = scalar_lea.sflag [#allocation4], %s600
          %s602 = sand.u32 %s200, 1
          %s603 = scalar_lea.vmem [#allocation12], %s602
          %s605 = ssub.s32 16, 16
          %606 = vsyncadd %s601, %s605
          %s607 = smul.addr %s28, 16
          %s608 = scalar_lea.hbm %s7, %s607
          %s610 = sshll.u32 %s603, 4
          %s611 = int_to_ptr.vmem [resolvable:$true] %s610
          %613 = dma.hbm_to_vmem [thread:$0]  %s608, 16, %s611, %s601
        $region48: #{tpu_custom_call.1} parent=31 // pred_fallthru
          _
        // Predicated region
        $region49: #{tpu_custom_call.1} parent=31 // pred_check
          %p614 = pneg %p236
        $region50: #{tpu_custom_call.1} parent=31 // pred_check_branch
          %616 = sbr.rel (%p614) target = $region52
        $region51: #{tpu_custom_call.1} parent=31 // pred_region
          %p617 = scmp.lt.s32.totalorder %s28, 1
          %s618 = scalar_select %p617, %s28, 1
          %s619 = smul.addr %s618, 4
          %s620 = smul.addr %s619, 4
          %s621 = scalar_lea.vmem %s8, %s620
        $region52: #{tpu_custom_call.1} parent=31 // pred_fallthru
          _
        // Predicated region
        $region53: #{tpu_custom_call.1} parent=31 // pred_check
          %p622 = pneg %p262
        $region54: #{tpu_custom_call.1} parent=31 // pred_check_branch
          %624 = sbr.rel (%p622) target = $region56
        $region55: #{tpu_custom_call.1} parent=31 // pred_region
          %s625 = sand.u32 %s28, 1
          %s626 = scalar_lea.sflag [#allocation4], %s625
          %s627 = sand.u32 %s252, 1
          %s628 = scalar_lea.vmem [#allocation13], %s627
          %s630 = ssub.s32 16, 16
          %631 = vsyncadd %s626, %s630
          %s632 = smul.addr %s28, 16
          %s633 = scalar_lea.hbm %s9, %s632
          %s635 = sshll.u32 %s628, 4
          %s636 = int_to_ptr.vmem [resolvable:$true] %s635
          %638 = dma.hbm_to_vmem [thread:$0]  %s633, 16, %s636, %s626
        $region56: #{tpu_custom_call.1} parent=31 // pred_fallthru
          _
        // Predicated region
        $region57: #{tpu_custom_call.1} parent=31 // pred_check
          %p639 = pneg %p288
        $region58: #{tpu_custom_call.1} parent=31 // pred_check_branch
          %641 = sbr.rel (%p639) target = $region60
        $region59: #{tpu_custom_call.1} parent=31 // pred_region
          %p642 = scmp.lt.s32.totalorder %s28, 1
          %s643 = scalar_select %p642, %s28, 1
          %s644 = smul.addr %s643, 4
          %s645 = smul.addr %s644, 4
          %s646 = scalar_lea.vmem %s10, %s645
        $region60: #{tpu_custom_call.1} parent=31 // pred_fallthru
          _
        // Predicated region
        $region61: #{tpu_custom_call.1} parent=31 // pred_check
          %p647 = pneg %p314
        $region62: #{tpu_custom_call.1} parent=31 // pred_check_branch
          %649 = sbr.rel (%p647) target = $region64
        $region63: #{tpu_custom_call.1} parent=31 // pred_region
          %s650 = sand.u32 %s28, 1
          %s651 = scalar_lea.sflag [#allocation4], %s650
          %s652 = sand.u32 %s304, 1
          %s653 = scalar_lea.vmem [#allocation14], %s652
          %s655 = ssub.s32 16, 16
          %656 = vsyncadd %s651, %s655
          %s657 = smul.addr %s28, 16
          %s658 = scalar_lea.hbm %s11, %s657
          %s660 = sshll.u32 %s653, 4
          %s661 = int_to_ptr.vmem [resolvable:$true] %s660
          %663 = dma.hbm_to_vmem [thread:$0]  %s658, 16, %s661, %s651
        $region64: #{tpu_custom_call.1} parent=31 // pred_fallthru
          _
        // Predicated region
        $region65: #{tpu_custom_call.1} parent=31 // pred_check
          %p664 = pneg %p340
        $region66: #{tpu_custom_call.1} parent=31 // pred_check_branch
          %666 = sbr.rel (%p664) target = $region68
        $region67: #{tpu_custom_call.1} parent=31 // pred_region
          %s667 = sand.u32 %s28, 1
          %s668 = scalar_lea.sflag [#allocation4], %s667
          %s669 = sand.u32 %s330, 1
          %s670 = smul.addr %s669, 16
          %s671 = scalar_lea.vmem [#allocation15], %s670
          %s673 = ssub.s32 256, 256
          %674 = vsyncadd %s668, %s673
          %s675 = smul.addr %s28, 4
          %s676 = smul.addr %s675, 64
          %s677 = scalar_lea.hbm %s12, %s676
          %s678 = sshll.u32 %s671, 4
          %s679 = int_to_ptr.vmem [resolvable:$true] %s678
          %684 = dma.hbm_to_vmem [thread:$0]  %s677, 256, %s679, %s668, 64, 64, 4
        $region68: #{tpu_custom_call.1} parent=31 // pred_fallthru
          _
        // Predicated region
        $region69: #{tpu_custom_call.1} parent=31 // pred_check
          %p685 = pneg %p366
        $region70: #{tpu_custom_call.1} parent=31 // pred_check_branch
          %687 = sbr.rel (%p685) target = $region72
        $region71: #{tpu_custom_call.1} parent=31 // pred_region
          %s688 = sand.u32 %s28, 1
          %s689 = scalar_lea.sflag [#allocation4], %s688
          %s690 = sand.u32 %s356, 1
          %s691 = scalar_lea.vmem [#allocation16], %s690
          %s693 = ssub.s32 16, 16
          %694 = vsyncadd %s689, %s693
          %s695 = smul.addr %s28, 16
          %s696 = scalar_lea.hbm %s13, %s695
          %s698 = sshll.u32 %s691, 4
          %s699 = int_to_ptr.vmem [resolvable:$true] %s698
          %701 = dma.hbm_to_vmem [thread:$0]  %s696, 16, %s699, %s689
        $region72: #{tpu_custom_call.1} parent=31 // pred_fallthru
          _
        // Predicated region
        $region73: #{tpu_custom_call.1} parent=31 // pred_check
          %p702 = pneg %p392
        $region74: #{tpu_custom_call.1} parent=31 // pred_check_branch
          %704 = sbr.rel (%p702) target = $region76
        $region75: #{tpu_custom_call.1} parent=31 // pred_region
          %p705 = scmp.lt.s32.totalorder %s28, 1
          %s706 = scalar_select %p705, %s28, 1
          %s707 = smul.addr %s706, 8
          %s708 = smul.addr %s707, 4
          %s709 = scalar_lea.vmem %s14, %s708
        $region76: #{tpu_custom_call.1} parent=31 // pred_fallthru
          _
        // Predicated region
        $region77: #{tpu_custom_call.1} parent=31 // pred_check
          %p710 = pneg %p418
        $region78: #{tpu_custom_call.1} parent=31 // pred_check_branch
          %712 = sbr.rel (%p710) target = $region80
        $region79: #{tpu_custom_call.1} parent=31 // pred_region
          %p713 = scmp.lt.s32.totalorder %s28, 1
          %s714 = scalar_select %p713, %s28, 1
          %s715 = scalar_lea.vmem %s15, %s714
        $region80: #{tpu_custom_call.1} parent=31 // pred_fallthru
          _
        // Predicated region
        $region81: #{tpu_custom_call.1} parent=31 // pred_check
          %p716 = pneg %p444
        $region82: #{tpu_custom_call.1} parent=31 // pred_check_branch
          %718 = sbr.rel (%p716) target = $region84
        $region83: #{tpu_custom_call.1} parent=31 // pred_region
          %p719 = scmp.lt.s32.totalorder %s28, 1
          %s720 = scalar_select %p719, %s28, 1
          %s721 = smul.addr %s720, 4
          %s722 = scalar_lea.vmem %s16, %s721
        $region84: #{tpu_custom_call.1} parent=31 // pred_fallthru
          _
        // Predicated region
        $region85: #{tpu_custom_call.1} parent=31 // pred_check
          %p723 = pneg %p470
        $region86: #{tpu_custom_call.1} parent=31 // pred_check_branch
          %725 = sbr.rel (%p723) target = $region88
        $region87: #{tpu_custom_call.1} parent=31 // pred_region
          %p726 = scmp.lt.s32.totalorder %s28, 1
          %s727 = scalar_select %p726, %s28, 1
          %s728 = smul.addr %s727, 4
          %s729 = scalar_lea.vmem %s17, %s728
        $region88: #{tpu_custom_call.1} parent=31 // pred_fallthru
          _
      $region32: #{tpu_custom_call.1} parent=5 // pred_fallthru
        _
      %p730 = scmp.le.s32.totalorder 1, %s28
      %p731 = scmp.lt.s32.totalorder %s28, 3
      %p732 = pnand %p730, %p731
      %p733 = pneg %p732
      // Predicated region
      $region89: #{tpu_custom_call.1} parent=5 // pred_check
        _
      $region90: #{tpu_custom_call.1} parent=5 // pred_check_branch
        %735 = sbr.rel (%p732) target = $region92
      $region91: #{tpu_custom_call.1} parent=5 // pred_region
        %s736 = ssub.s32 %s28, 1
        // Predicated region
        $region93: #{tpu_custom_call.1} parent=91 // pred_check
          %p737 = pneg %p49
        $region94: #{tpu_custom_call.1} parent=91 // pred_check_branch
          %739 = sbr.rel (%p737) target = $region96
        $region95: #{tpu_custom_call.1} parent=91 // pred_region
          %740 = dma.done [#allocation4], 256
        $region96: #{tpu_custom_call.1} parent=91 // pred_fallthru
          _
        // Predicated region
        $region97: #{tpu_custom_call.1} parent=91 // pred_check
          %p741 = pneg %p70
        $region98: #{tpu_custom_call.1} parent=91 // pred_check_branch
          %743 = sbr.rel (%p741) target = $region100
        $region99: #{tpu_custom_call.1} parent=91 // pred_region
          %744 = dma.done [#allocation7], 128
        $region100: #{tpu_custom_call.1} parent=91 // pred_fallthru
          _
        // Predicated region
        $region101: #{tpu_custom_call.1} parent=91 // pred_check
          %p745 = pneg %p91
        $region102: #{tpu_custom_call.1} parent=91 // pred_check_branch
          %747 = sbr.rel (%p745) target = $region104
        $region103: #{tpu_custom_call.1} parent=91 // pred_region
          %748 = dma.done [#allocation7], 128
        $region104: #{tpu_custom_call.1} parent=91 // pred_fallthru
          _
        // Predicated region
        $region105: #{tpu_custom_call.1} parent=91 // pred_check
          %p749 = pneg %p112
        $region106: #{tpu_custom_call.1} parent=91 // pred_check_branch
          %751 = sbr.rel (%p749) target = $region108
        $region107: #{tpu_custom_call.1} parent=91 // pred_region
          %752 = dma.done [#allocation10], 128
        $region108: #{tpu_custom_call.1} parent=91 // pred_fallthru
          _
        %s753 = sand.u32 %s33, 1
        %s754 = scalar_lea.sflag [#allocation4], %s753
        %s755 = sand.u32 %s151, 1
        %s756 = scalar_lea.vmem [#allocation11], %s755
        // Predicated region
        $region109: #{tpu_custom_call.1} parent=91 // pred_check
          %p757 = pneg %p164
        $region110: #{tpu_custom_call.1} parent=91 // pred_check_branch
          %759 = sbr.rel (%p757) target = $region112
        $region111: #{tpu_custom_call.1} parent=91 // pred_region
          %760 = dma.done %s754, 16
        $region112: #{tpu_custom_call.1} parent=91 // pred_fallthru
          _
        %s761 = sand.u32 %s33, 1
        %s762 = scalar_lea.sflag [#allocation4], %s761
        %s763 = sand.u32 %s203, 1
        %s764 = scalar_lea.vmem [#allocation12], %s763
        // Predicated region
        $region113: #{tpu_custom_call.1} parent=91 // pred_check
          %p765 = pneg %p216
        $region114: #{tpu_custom_call.1} parent=91 // pred_check_branch
          %767 = sbr.rel (%p765) target = $region116
        $region115: #{tpu_custom_call.1} parent=91 // pred_region
          %768 = dma.done %s762, 16
        $region116: #{tpu_custom_call.1} parent=91 // pred_fallthru
          _
        %s769 = sand.u32 %s33, 1
        %s770 = scalar_lea.sflag [#allocation4], %s769
        %s771 = sand.u32 %s255, 1
        %s772 = scalar_lea.vmem [#allocation13], %s771
        // Predicated region
        $region117: #{tpu_custom_call.1} parent=91 // pred_check
          %p773 = pneg %p268
        $region118: #{tpu_custom_call.1} parent=91 // pred_check_branch
          %775 = sbr.rel (%p773) target = $region120
        $region119: #{tpu_custom_call.1} parent=91 // pred_region
          %776 = dma.done %s770, 16
        $region120: #{tpu_custom_call.1} parent=91 // pred_fallthru
          _
        %s777 = sand.u32 %s33, 1
        %s778 = scalar_lea.sflag [#allocation4], %s777
        %s779 = sand.u32 %s307, 1
        %s780 = scalar_lea.vmem [#allocation14], %s779
        // Predicated region
        $region121: #{tpu_custom_call.1} parent=91 // pred_check
          %p781 = pneg %p320
        $region122: #{tpu_custom_call.1} parent=91 // pred_check_branch
          %783 = sbr.rel (%p781) target = $region124
        $region123: #{tpu_custom_call.1} parent=91 // pred_region
          %784 = dma.done %s778, 16
        $region124: #{tpu_custom_call.1} parent=91 // pred_fallthru
          _
        %s785 = sand.u32 %s33, 1
        %s786 = scalar_lea.sflag [#allocation4], %s785
        %s787 = sand.u32 %s333, 1
        %s788 = smul.addr %s787, 16
        %s789 = scalar_lea.vmem [#allocation15], %s788
        // Predicated region
        $region125: #{tpu_custom_call.1} parent=91 // pred_check
          %p790 = pneg %p346
        $region126: #{tpu_custom_call.1} parent=91 // pred_check_branch
          %792 = sbr.rel (%p790) target = $region128
        $region127: #{tpu_custom_call.1} parent=91 // pred_region
          %793 = dma.done %s786, 256
        $region128: #{tpu_custom_call.1} parent=91 // pred_fallthru
          _
        %s794 = sand.u32 %s33, 1
        %s795 = scalar_lea.sflag [#allocation4], %s794
        %s796 = sand.u32 %s359, 1
        %s797 = scalar_lea.vmem [#allocation16], %s796
        // Predicated region
        $region129: #{tpu_custom_call.1} parent=91 // pred_check
          %p798 = pneg %p372
        $region130: #{tpu_custom_call.1} parent=91 // pred_check_branch
          %800 = sbr.rel (%p798) target = $region132
        $region131: #{tpu_custom_call.1} parent=91 // pred_region
          %801 = dma.done %s795, 16
        $region132: #{tpu_custom_call.1} parent=91 // pred_fallthru
          _
        %p802 = pneg %p49
        %p803 = pneg %p46
        %p804 = pneg %p70
        %p805 = pneg %p67
        %p806 = pneg %p91
        %p807 = pneg %p88
        %p808 = pneg %p112
        %p809 = pneg %p109
        %p810 = scmp.lt.s32.totalorder %s33, 1
        %s811 = scalar_select %p810, %s33, 1
        %s812 = smul.addr %s811, 4
        %s813 = smul.addr %s812, 4
        %s814 = scalar_lea.vmem %s4, %s813
        %p815 = pneg %p138
        %p816 = pneg %p135
        %s817 = sand.u32 %s33, 1
        %s818 = scalar_lea.sflag [#allocation4], %s817
        %s819 = sand.u32 %s151, 1
        %s820 = scalar_lea.vmem [#allocation11], %s819
        %p821 = pneg %p164
        %p822 = pneg %p161
        %p823 = scmp.lt.s32.totalorder %s33, 1
        %s824 = scalar_select %p823, %s33, 1
        %s825 = smul.addr %s824, 4
        %s826 = smul.addr %s825, 4
        %s827 = scalar_lea.vmem %s6, %s826
        %p828 = pneg %p190
        %p829 = pneg %p187
        %s830 = sand.u32 %s33, 1
        %s831 = scalar_lea.sflag [#allocation4], %s830
        %s832 = sand.u32 %s203, 1
        %s833 = scalar_lea.vmem [#allocation12], %s832
        %p834 = pneg %p216
        %p835 = pneg %p213
        %p836 = scmp.lt.s32.totalorder %s33, 1
        %s837 = scalar_select %p836, %s33, 1
        %s838 = smul.addr %s837, 4
        %s839 = smul.addr %s838, 4
        %s840 = scalar_lea.vmem %s8, %s839
        %p841 = pneg %p242
        %p842 = pneg %p239
        %s843 = sand.u32 %s33, 1
        %s844 = scalar_lea.sflag [#allocation4], %s843
        %s845 = sand.u32 %s255, 1
        %s846 = scalar_lea.vmem [#allocation13], %s845
        %p847 = pneg %p268
        %p848 = pneg %p265
        %p849 = scmp.lt.s32.totalorder %s33, 1
        %s850 = scalar_select %p849, %s33, 1
        %s851 = smul.addr %s850, 4
        %s852 = smul.addr %s851, 4
        %s853 = scalar_lea.vmem %s10, %s852
        %p854 = pneg %p294
        %p855 = pneg %p291
        %s856 = sand.u32 %s33, 1
        %s857 = scalar_lea.sflag [#allocation4], %s856
        %s858 = sand.u32 %s307, 1
        %s859 = scalar_lea.vmem [#allocation14], %s858
        %p860 = pneg %p320
        %p861 = pneg %p317
        %s862 = sand.u32 %s33, 1
        %s863 = scalar_lea.sflag [#allocation4], %s862
        %s864 = sand.u32 %s333, 1
        %s865 = smul.addr %s864, 16
        %s866 = scalar_lea.vmem [#allocation15], %s865
        %p867 = pneg %p346
        %p868 = pneg %p343
        %s869 = sand.u32 %s33, 1
        %s870 = scalar_lea.sflag [#allocation4], %s869
        %s871 = sand.u32 %s359, 1
        %s872 = scalar_lea.vmem [#allocation16], %s871
        %p873 = pneg %p372
        %p874 = pneg %p369
        %p875 = scmp.lt.s32.totalorder %s33, 1
        %s876 = scalar_select %p875, %s33, 1
        %s877 = smul.addr %s876, 8
        %s878 = smul.addr %s877, 4
        %s879 = scalar_lea.vmem %s14, %s878
        %p880 = pneg %p398
        %p881 = pneg %p395
        %p882 = scmp.lt.s32.totalorder %s33, 1
        %s883 = scalar_select %p882, %s33, 1
        %s884 = scalar_lea.vmem %s15, %s883
        %p885 = pneg %p424
        %p886 = pneg %p421
        %p887 = scmp.lt.s32.totalorder %s33, 1
        %s888 = scalar_select %p887, %s33, 1
        %s889 = smul.addr %s888, 4
        %s890 = scalar_lea.vmem %s16, %s889
        %p891 = pneg %p450
        %p892 = pneg %p447
        %p893 = scmp.lt.s32.totalorder %s33, 1
        %s894 = scalar_select %p893, %s33, 1
        %s895 = smul.addr %s894, 4
        %s896 = scalar_lea.vmem %s17, %s895
        %p897 = pneg %p476
        %p898 = pneg %p473
        %p899 = pneg %p497
        %p900 = pneg %p494
        %p901 = scmp.lt.s32.totalorder %s33, 1
        %s902 = scalar_select %p901, %s33, 1
        %s903 = smul.addr %s902, 4
        %s904 = smul.addr %s903, 4
        %s905 = scalar_lea.vmem %s4, %s904
        %p906 = scmp.lt.s32.totalorder %s33, 1
        %s907 = scalar_select %p906, %s33, 1
        %s908 = smul.addr %s907, 4
        %s909 = smul.addr %s908, 4
        %s910 = scalar_lea.vmem %s6, %s909
        %p911 = scmp.lt.s32.totalorder %s33, 1
        %s912 = scalar_select %p911, %s33, 1
        %s913 = smul.addr %s912, 4
        %s914 = smul.addr %s913, 4
        %s915 = scalar_lea.vmem %s8, %s914
        %p916 = scmp.lt.s32.totalorder %s33, 1
        %s917 = scalar_select %p916, %s33, 1
        %s918 = smul.addr %s917, 4
        %s919 = smul.addr %s918, 4
        %s920 = scalar_lea.vmem %s10, %s919
        %p921 = scmp.lt.s32.totalorder %s33, 1
        %s922 = scalar_select %p921, %s33, 1
        %s923 = smul.addr %s922, 8
        %s924 = smul.addr %s923, 4
        %s925 = scalar_lea.vmem %s14, %s924
        %p926 = scmp.lt.s32.totalorder %s33, 1
        %s927 = scalar_select %p926, %s33, 1
        %s928 = scalar_lea.vmem %s15, %s927
        %p929 = scmp.lt.s32.totalorder %s33, 1
        %s930 = scalar_select %p929, %s33, 1
        %s931 = smul.addr %s930, 4
        %s932 = scalar_lea.vmem %s16, %s931
        %p933 = scmp.lt.s32.totalorder %s33, 1
        %s934 = scalar_select %p933, %s33, 1
        %s935 = smul.addr %s934, 4
        %s936 = scalar_lea.vmem %s17, %s935
        %p938 = scmp.eq.s32.totalorder %s33, 0
        // Predicated region
        $region133: #{tpu_custom_call.1} parent=91 // pred_check
          %p939 = pneg %p938
        $region134: #{tpu_custom_call.1} parent=91 // pred_check_branch
          %941 = sbr.rel (%p939) target = $region136
        $region135: #{tpu_custom_call.1} parent=91 // pred_region
          %v942 = vld [vmem:[#allocation3] sm:$0xff]
          %v943 = vld [vmem:[#allocation3 + $0x8] sm:$0xff]
          %vm944 = vcmask 261120
          %945 = vst.msk [vmem:[#allocation2] sm:$0xff] %vm944, %v942
          %946 = vst.msk [vmem:[#allocation2 + $0x8] sm:$0xff] %vm944, %v943
        $region136: #{tpu_custom_call.1} parent=91 // pred_fallthru
          _
        %v947 = vld [vmem:[#allocation2] sm:$0xff]
        %v948 = vld [vmem:[#allocation2 + $0x8] sm:$0xff]
        %v949 = vld [vmem:[#allocation6] sm:$0xf]
        %v950 = vld [vmem:[#allocation6 + $0x4] sm:$0xf]
        %v951 = vld [vmem:[#allocation8] sm:$0xff]
        %v952 = vld [vmem:[#allocation9] sm:$0xff]
        %v953 = vld [vmem:[%s905] sm:$0xf]
        %v954 = vld [vmem:[%s905 + $0x4] sm:$0xf]
        %v955 = vld [vmem:[%s905 + $0x8] sm:$0xf]
        %v956 = vld [vmem:[%s905 + $0xc] sm:$0xf]
        %v957 = vld [vmem:[%s756] sm:$0x1]
        %v958 = vld [vmem:[%s910] sm:$0xf]
        %v959 = vld [vmem:[%s910 + $0x4] sm:$0xf]
        %v960 = vld [vmem:[%s910 + $0x8] sm:$0xf]
        %v961 = vld [vmem:[%s910 + $0xc] sm:$0xf]
        %v962 = vld [vmem:[%s764] sm:$0x1]
        %v963 = vld [vmem:[%s915] sm:$0xf]
        %v964 = vld [vmem:[%s915 + $0x4] sm:$0xf]
        %v965 = vld [vmem:[%s915 + $0x8] sm:$0xf]
        %v966 = vld [vmem:[%s915 + $0xc] sm:$0xf]
        %v967 = vld [vmem:[%s772] sm:$0x1]
        %v968 = vld [vmem:[%s920] sm:$0xf]
        %v969 = vld [vmem:[%s920 + $0x4] sm:$0xf]
        %v970 = vld [vmem:[%s920 + $0x8] sm:$0xf]
        %v971 = vld [vmem:[%s920 + $0xc] sm:$0xf]
        %v972 = vld [vmem:[%s780] sm:$0x1]
        %v973 = vld [vmem:[%s789] sm:$0xf]
        %v974 = vld [vmem:[%s789 + $0x4] sm:$0xf]
        %v975 = vld [vmem:[%s789 + $0x8] sm:$0xf]
        %v976 = vld [vmem:[%s789 + $0xc] sm:$0xf]
        %v977 = vld [vmem:[%s797] sm:$0x1]
        %v978 = vld [vmem:[%s925] sm:$0xf]
        %v979 = vld [vmem:[%s925 + $0x4] sm:$0xf]
        %v980 = vld [vmem:[%s925 + $0x8] sm:$0xf]
        %v981 = vld [vmem:[%s925 + $0xc] sm:$0xf]
        %v982 = vld [vmem:[%s925 + $0x10] sm:$0xf]
        %v983 = vld [vmem:[%s925 + $0x14] sm:$0xf]
        %v984 = vld [vmem:[%s925 + $0x18] sm:$0xf]
        %v985 = vld [vmem:[%s925 + $0x1c] sm:$0xf]
        %v986 = vld [vmem:[%s928] sm:$0x1]
        %v987 = vld [vmem:[%s932] sm:$0x7]
        %v988 = vld [vmem:[%s936] sm:$0x7]
        %v989 = vpack.c.bf16 %v948, %v947
        %v991 = vlaneseq
        %v992 = vshrl.u32 %v991, 7
        %v993 = vsub.s32 0, %v992
        %v994 = vrot.slane %v957, %v993
        %v1000 = vunpack.c.l.b16 %v953
        %v1001 = vunpack.c.l.b16 %v954
        %v1002 = vunpack.c.l.b16 %v955
        %v1003 = vunpack.c.l.b16 %v956
        %v1004 = vpack.c.b16 %v1001, %v1000
        %v1005 = vpack.c.b16 %v1003, %v1002
        %vm1008 = vcmask 261120
        %v1010 = vsel %vm1008, %v989, 0
        %1012 = vmatprep.subr.bf16.mxu0 0
        %1013 = vmatpush1.bf16.msra.mxu0 %v1004
        %1014 = vmatprep.subr.bf16.mxu0 0
        %1015 = vmatpush1.bf16.msra.mxu0 %v1005
        %1016 = vmatprep.subr.bf16.mxu0 0
        %1017 = vmatpush1.bf16.msra.mxu0 0
        %1018 = vmatprep.subr.bf16.mxu0 0
        %1019 = vmatpush1.bf16.msra.mxu0 0
        %1020 = vmatprep.subr.bf16.mxu0 0
        %1021 = vmatpush1.bf16.msra.mxu0 0
        %1022 = vmatprep.subr.bf16.mxu0 0
        %1023 = vmatpush1.bf16.msra.mxu0 0
        %1024 = vmatprep.subr.bf16.mxu0 0
        %1025 = vmatpush1.bf16.msra.mxu0 0
        %1026 = vmatprep.subr.bf16.mxu0 0
        %1027 = vmatpush1.bf16.msra.mxu0 0
        %1028 = vmatprep.subr.bf16.mxu0 0
        %1029 = vmatpush1.bf16.msra.mxu0 0
        %1030 = vmatprep.subr.bf16.mxu0 0
        %1031 = vmatpush1.bf16.msra.mxu0 0
        %1032 = vmatprep.subr.bf16.mxu0 0
        %1033 = vmatpush1.bf16.msra.mxu0 0
        %1034 = vmatprep.subr.bf16.mxu0 0
        %1035 = vmatpush1.bf16.msra.mxu0 0
        %1036 = vmatprep.subr.bf16.mxu0 0
        %1037 = vmatpush1.bf16.msra.mxu0 0
        %1038 = vmatprep.subr.bf16.mxu0 0
        %1039 = vmatpush1.bf16.msra.mxu0 0
        %1040 = vmatprep.subr.bf16.mxu0 0
        %1041 = vmatpush1.bf16.msra.mxu0 0
        %1042 = vmatprep.subr.bf16.mxu0 0
        %1043 = vmatpush1.bf16.msra.mxu0 0
        %1044 = vmatprep.mubr.bf16.mxu0 0
        %1045 = vmatmul.mubr.bf16.gmra.mrb[0].mxu0 %v1010
        %v1046 = vpop.f32.mrb[0].mxu0
        %v1047 = vadd.f32 %v994, %v1046
        %v1048 = vpop.f32.mrb[0].mxu0
        %v1049 = vpop.f32.mrb[0].mxu0
        %v1050 = vadd.f32 %v994, %v1049
        %v1051 = vpop.f32.mrb[0].mxu0
        %1052 = vdwg.mxu0
        %1055 = vrot.lane.b32.xlu0 %v1047, 124
        %v1056 = vpop.permute.xlu0 %1055
        %1057 = vrot.lane.b32.xlu0 %v1050, 124
        %v1058 = vpop.permute.xlu0 %1057
        %1061 = vrot.lane.b32.xlu0 %v1047, 120
        %v1062 = vpop.permute.xlu0 %1061
        %1063 = vrot.lane.b32.xlu0 %v1050, 120
        %v1064 = vpop.permute.xlu0 %1063
        %1067 = vrot.lane.b32.xlu0 %v1047, 116
        %v1068 = vpop.permute.xlu0 %1067
        %1069 = vrot.lane.b32.xlu0 %v1050, 116
        %v1070 = vpop.permute.xlu0 %1069
        %1073 = vrot.lane.b32.xlu0 %v1047, 112
        %v1074 = vpop.permute.xlu0 %1073
        %1075 = vrot.lane.b32.xlu0 %v1050, 112
        %v1076 = vpop.permute.xlu0 %1075
        %1079 = vrot.lane.b32.xlu0 %v1047, 108
        %v1080 = vpop.permute.xlu0 %1079
        %1081 = vrot.lane.b32.xlu0 %v1050, 108
        %v1082 = vpop.permute.xlu0 %1081
        %1085 = vrot.lane.b32.xlu0 %v1047, 104
        %v1086 = vpop.permute.xlu0 %1085
        %1087 = vrot.lane.b32.xlu0 %v1050, 104
        %v1088 = vpop.permute.xlu0 %1087
        %1091 = vrot.lane.b32.xlu0 %v1047, 100
        %v1092 = vpop.permute.xlu0 %1091
        %1093 = vrot.lane.b32.xlu0 %v1050, 100
        %v1094 = vpop.permute.xlu0 %1093
        %v1097 = vcombine.low %v1047, %v1062
        %v1098 = vcombine.high %v1047, %v1062
        %v1100 = vunpack.c.l.s4 1983009808
        %v1101 = vunpack.c.0.s8 %v1100
        %v1102 = vlaneseq
        %v1103 = vshrl.u32 %v1102, 7
        %v1104 = vsub.s32 %v1101, %v1103
        %v1105 = vrot.slane %v1097, %v1104
        %v1107 = vunpack.c.l.s4 1983009808
        %v1108 = vunpack.c.0.s8 %v1107
        %v1109 = vlaneseq
        %v1110 = vshrl.u32 %v1109, 7
        %v1111 = vsub.s32 %v1108, %v1110
        %v1112 = vrot.slane %v1098, %v1111
        %v1113 = vcombine.low %v1056, %v1068
        %v1114 = vcombine.high %v1056, %v1068
        %v1116 = vunpack.c.l.s4 1983009808
        %v1117 = vunpack.c.0.s8 %v1116
        %v1118 = vlaneseq
        %v1119 = vshrl.u32 %v1118, 7
        %v1120 = vsub.s32 %v1117, %v1119
        %v1121 = vrot.slane %v1113, %v1120
        %v1123 = vunpack.c.l.s4 1983009808
        %v1124 = vunpack.c.0.s8 %v1123
        %v1125 = vlaneseq
        %v1126 = vshrl.u32 %v1125, 7
        %v1127 = vsub.s32 %v1124, %v1126
        %v1128 = vrot.slane %v1114, %v1127
        %v1129 = vcombine.low %v1074, %v1086
        %v1130 = vcombine.high %v1074, %v1086
        %v1132 = vunpack.c.l.s4 1983009808
        %v1133 = vunpack.c.0.s8 %v1132
        %v1134 = vlaneseq
        %v1135 = vshrl.u32 %v1134, 7
        %v1136 = vsub.s32 %v1133, %v1135
        %v1137 = vrot.slane %v1129, %v1136
        %v1139 = vunpack.c.l.s4 1983009808
        %v1140 = vunpack.c.0.s8 %v1139
        %v1141 = vlaneseq
        %v1142 = vshrl.u32 %v1141, 7
        %v1143 = vsub.s32 %v1140, %v1142
        %v1144 = vrot.slane %v1130, %v1143
        %v1145 = vcombine.low %v1080, %v1092
        %v1146 = vcombine.high %v1080, %v1092
        %v1148 = vunpack.c.l.s4 1983009808
        %v1149 = vunpack.c.0.s8 %v1148
        %v1150 = vlaneseq
        %v1151 = vshrl.u32 %v1150, 7
        %v1152 = vsub.s32 %v1149, %v1151
        %v1153 = vrot.slane %v1145, %v1152
        %v1155 = vunpack.c.l.s4 1983009808
        %v1156 = vunpack.c.0.s8 %v1155
        %v1157 = vlaneseq
        %v1158 = vshrl.u32 %v1157, 7
        %v1159 = vsub.s32 %v1156, %v1158
        %v1160 = vrot.slane %v1146, %v1159
        %v1161 = vcombine.low %v1105, %v1121
        %v1162 = vcombine.high %v1105, %v1121
        %v1164 = vunpack.c.l.s4 1934713408
        %v1165 = vunpack.c.0.s8 %v1164
        %v1166 = vlaneseq
        %v1167 = vshrl.u32 %v1166, 7
        %v1168 = vsub.s32 %v1165, %v1167
        %v1169 = vrot.slane %v1161, %v1168
        %v1171 = vunpack.c.l.s4 1934713408
        %v1172 = vunpack.c.0.s8 %v1171
        %v1173 = vlaneseq
        %v1174 = vshrl.u32 %v1173, 7
        %v1175 = vsub.s32 %v1172, %v1174
        %v1176 = vrot.slane %v1162, %v1175
        %v1177 = vcombine.low %v1112, %v1128
        %v1178 = vcombine.high %v1112, %v1128
        %v1180 = vunpack.c.l.s4 1934713408
        %v1181 = vunpack.c.0.s8 %v1180
        %v1182 = vlaneseq
        %v1183 = vshrl.u32 %v1182, 7
        %v1184 = vsub.s32 %v1181, %v1183
        %v1185 = vrot.slane %v1177, %v1184
        %v1187 = vunpack.c.l.s4 1934713408
        %v1188 = vunpack.c.0.s8 %v1187
        %v1189 = vlaneseq
        %v1190 = vshrl.u32 %v1189, 7
        %v1191 = vsub.s32 %v1188, %v1190
        %v1192 = vrot.slane %v1178, %v1191
        %v1193 = vcombine.low %v1137, %v1153
        %v1194 = vcombine.high %v1137, %v1153
        %v1196 = vunpack.c.l.s4 1934713408
        %v1197 = vunpack.c.0.s8 %v1196
        %v1198 = vlaneseq
        %v1199 = vshrl.u32 %v1198, 7
        %v1200 = vsub.s32 %v1197, %v1199
        %v1201 = vrot.slane %v1193, %v1200
        %v1203 = vunpack.c.l.s4 1934713408
        %v1204 = vunpack.c.0.s8 %v1203
        %v1205 = vlaneseq
        %v1206 = vshrl.u32 %v1205, 7
        %v1207 = vsub.s32 %v1204, %v1206
        %v1208 = vrot.slane %v1194, %v1207
        %v1209 = vcombine.low %v1144, %v1160
        %v1210 = vcombine.high %v1144, %v1160
        %v1212 = vunpack.c.l.s4 1934713408
        %v1213 = vunpack.c.0.s8 %v1212
        %v1214 = vlaneseq
        %v1215 = vshrl.u32 %v1214, 7
        %v1216 = vsub.s32 %v1213, %v1215
        %v1217 = vrot.slane %v1209, %v1216
        %v1219 = vunpack.c.l.s4 1934713408
        %v1220 = vunpack.c.0.s8 %v1219
        %v1221 = vlaneseq
        %v1222 = vshrl.u32 %v1221, 7
        %v1223 = vsub.s32 %v1220, %v1222
        %v1224 = vrot.slane %v1210, %v1223
        %v1225 = vcombine.low %v1169, %v1201
        %v1226 = vcombine.high %v1169, %v1201
        %v1227 = vcombine.low %v1176, %v1208
        %v1228 = vcombine.high %v1176, %v1208
        %v1229 = vcombine.low %v1185, %v1217
        %v1230 = vcombine.high %v1185, %v1217
        %v1231 = vcombine.low %v1192, %v1224
        %v1232 = vcombine.high %v1192, %v1224
        %v1233 = vcombine.low %v1050, %v1064
        %v1234 = vcombine.high %v1050, %v1064
        %v1236 = vunpack.c.l.s4 1983009808
        %v1237 = vunpack.c.0.s8 %v1236
        %v1238 = vlaneseq
        %v1239 = vshrl.u32 %v1238, 7
        %v1240 = vsub.s32 %v1237, %v1239
        %v1241 = vrot.slane %v1233, %v1240
        %v1243 = vunpack.c.l.s4 1983009808
        %v1244 = vunpack.c.0.s8 %v1243
        %v1245 = vlaneseq
        %v1246 = vshrl.u32 %v1245, 7
        %v1247 = vsub.s32 %v1244, %v1246
        %v1248 = vrot.slane %v1234, %v1247
        %v1249 = vcombine.low %v1058, %v1070
        %v1250 = vcombine.high %v1058, %v1070
        %v1252 = vunpack.c.l.s4 1983009808
        %v1253 = vunpack.c.0.s8 %v1252
        %v1254 = vlaneseq
        %v1255 = vshrl.u32 %v1254, 7
        %v1256 = vsub.s32 %v1253, %v1255
        %v1257 = vrot.slane %v1249, %v1256
        %v1259 = vunpack.c.l.s4 1983009808
        %v1260 = vunpack.c.0.s8 %v1259
        %v1261 = vlaneseq
        %v1262 = vshrl.u32 %v1261, 7
        %v1263 = vsub.s32 %v1260, %v1262
        %v1264 = vrot.slane %v1250, %v1263
        %v1265 = vcombine.low %v1076, %v1088
        %v1266 = vcombine.high %v1076, %v1088
        %v1268 = vunpack.c.l.s4 1983009808
        %v1269 = vunpack.c.0.s8 %v1268
        %v1270 = vlaneseq
        %v1271 = vshrl.u32 %v1270, 7
        %v1272 = vsub.s32 %v1269, %v1271
        %v1273 = vrot.slane %v1265, %v1272
        %v1275 = vunpack.c.l.s4 1983009808
        %v1276 = vunpack.c.0.s8 %v1275
        %v1277 = vlaneseq
        %v1278 = vshrl.u32 %v1277, 7
        %v1279 = vsub.s32 %v1276, %v1278
        %v1280 = vrot.slane %v1266, %v1279
        %v1281 = vcombine.low %v1082, %v1094
        %v1282 = vcombine.high %v1082, %v1094
        %v1284 = vunpack.c.l.s4 1983009808
        %v1285 = vunpack.c.0.s8 %v1284
        %v1286 = vlaneseq
        %v1287 = vshrl.u32 %v1286, 7
        %v1288 = vsub.s32 %v1285, %v1287
        %v1289 = vrot.slane %v1281, %v1288
        %v1291 = vunpack.c.l.s4 1983009808
        %v1292 = vunpack.c.0.s8 %v1291
        %v1293 = vlaneseq
        %v1294 = vshrl.u32 %v1293, 7
        %v1295 = vsub.s32 %v1292, %v1294
        %v1296 = vrot.slane %v1282, %v1295
        %v1297 = vcombine.low %v1241, %v1257
        %v1298 = vcombine.high %v1241, %v1257
        %v1300 = vunpack.c.l.s4 1934713408
        %v1301 = vunpack.c.0.s8 %v1300
        %v1302 = vlaneseq
        %v1303 = vshrl.u32 %v1302, 7
        %v1304 = vsub.s32 %v1301, %v1303
        %v1305 = vrot.slane %v1297, %v1304
        %v1307 = vunpack.c.l.s4 1934713408
        %v1308 = vunpack.c.0.s8 %v1307
        %v1309 = vlaneseq
        %v1310 = vshrl.u32 %v1309, 7
        %v1311 = vsub.s32 %v1308, %v1310
        %v1312 = vrot.slane %v1298, %v1311
        %v1313 = vcombine.low %v1248, %v1264
        %v1314 = vcombine.high %v1248, %v1264
        %v1316 = vunpack.c.l.s4 1934713408
        %v1317 = vunpack.c.0.s8 %v1316
        %v1318 = vlaneseq
        %v1319 = vshrl.u32 %v1318, 7
        %v1320 = vsub.s32 %v1317, %v1319
        %v1321 = vrot.slane %v1313, %v1320
        %v1323 = vunpack.c.l.s4 1934713408
        %v1324 = vunpack.c.0.s8 %v1323
        %v1325 = vlaneseq
        %v1326 = vshrl.u32 %v1325, 7
        %v1327 = vsub.s32 %v1324, %v1326
        %v1328 = vrot.slane %v1314, %v1327
        %v1329 = vcombine.low %v1273, %v1289
        %v1330 = vcombine.high %v1273, %v1289
        %v1332 = vunpack.c.l.s4 1934713408
        %v1333 = vunpack.c.0.s8 %v1332
        %v1334 = vlaneseq
        %v1335 = vshrl.u32 %v1334, 7
        %v1336 = vsub.s32 %v1333, %v1335
        %v1337 = vrot.slane %v1329, %v1336
        %v1339 = vunpack.c.l.s4 1934713408
        %v1340 = vunpack.c.0.s8 %v1339
        %v1341 = vlaneseq
        %v1342 = vshrl.u32 %v1341, 7
        %v1343 = vsub.s32 %v1340, %v1342
        %v1344 = vrot.slane %v1330, %v1343
        %v1345 = vcombine.low %v1280, %v1296
        %v1346 = vcombine.high %v1280, %v1296
        %v1348 = vunpack.c.l.s4 1934713408
        %v1349 = vunpack.c.0.s8 %v1348
        %v1350 = vlaneseq
        %v1351 = vshrl.u32 %v1350, 7
        %v1352 = vsub.s32 %v1349, %v1351
        %v1353 = vrot.slane %v1345, %v1352
        %v1355 = vunpack.c.l.s4 1934713408
        %v1356 = vunpack.c.0.s8 %v1355
        %v1357 = vlaneseq
        %v1358 = vshrl.u32 %v1357, 7
        %v1359 = vsub.s32 %v1356, %v1358
        %v1360 = vrot.slane %v1346, %v1359
        %v1361 = vcombine.low %v1305, %v1337
        %v1362 = vcombine.high %v1305, %v1337
        %v1363 = vcombine.low %v1312, %v1344
        %v1364 = vcombine.high %v1312, %v1344
        %v1365 = vcombine.low %v1321, %v1353
        %v1366 = vcombine.high %v1321, %v1353
        %v1367 = vcombine.low %v1328, %v1360
        %v1368 = vcombine.high %v1328, %v1360
        %v1369 = vcombine.low %v1225, %v1227
        %v1370 = vcombine.high %v1225, %v1227
        %v1372 = vunpack.c.l.s4 1983009808
        %v1373 = vunpack.c.0.s8 %v1372
        %v1374 = vlaneseq
        %v1375 = vshrl.u32 %v1374, 7
        %v1376 = vsub.s32 %v1373, %v1375
        %v1377 = vrot.slane %v1369, %v1376
        %v1379 = vunpack.c.l.s4 1983009808
        %v1380 = vunpack.c.0.s8 %v1379
        %v1381 = vlaneseq
        %v1382 = vshrl.u32 %v1381, 7
        %v1383 = vsub.s32 %v1380, %v1382
        %v1384 = vrot.slane %v1370, %v1383
        %v1385 = vcombine.low %v1226, %v1228
        %v1386 = vcombine.high %v1226, %v1228
        %v1388 = vunpack.c.l.s4 1983009808
        %v1389 = vunpack.c.0.s8 %v1388
        %v1390 = vlaneseq
        %v1391 = vshrl.u32 %v1390, 7
        %v1392 = vsub.s32 %v1389, %v1391
        %v1393 = vrot.slane %v1385, %v1392
        %v1395 = vunpack.c.l.s4 1983009808
        %v1396 = vunpack.c.0.s8 %v1395
        %v1397 = vlaneseq
        %v1398 = vshrl.u32 %v1397, 7
        %v1399 = vsub.s32 %v1396, %v1398
        %v1400 = vrot.slane %v1386, %v1399
        %v1401 = vcombine.low %v1229, %v1231
        %v1402 = vcombine.high %v1229, %v1231
        %v1404 = vunpack.c.l.s4 1983009808
        %v1405 = vunpack.c.0.s8 %v1404
        %v1406 = vlaneseq
        %v1407 = vshrl.u32 %v1406, 7
        %v1408 = vsub.s32 %v1405, %v1407
        %v1409 = vrot.slane %v1401, %v1408
        %v1411 = vunpack.c.l.s4 1983009808
        %v1412 = vunpack.c.0.s8 %v1411
        %v1413 = vlaneseq
        %v1414 = vshrl.u32 %v1413, 7
        %v1415 = vsub.s32 %v1412, %v1414
        %v1416 = vrot.slane %v1402, %v1415
        %v1417 = vcombine.low %v1230, %v1232
        %v1418 = vcombine.high %v1230, %v1232
        %v1420 = vunpack.c.l.s4 1983009808
        %v1421 = vunpack.c.0.s8 %v1420
        %v1422 = vlaneseq
        %v1423 = vshrl.u32 %v1422, 7
        %v1424 = vsub.s32 %v1421, %v1423
        %v1425 = vrot.slane %v1417, %v1424
        %v1427 = vunpack.c.l.s4 1983009808
        %v1428 = vunpack.c.0.s8 %v1427
        %v1429 = vlaneseq
        %v1430 = vshrl.u32 %v1429, 7
        %v1431 = vsub.s32 %v1428, %v1430
        %v1432 = vrot.slane %v1418, %v1431
        %v1433 = vcombine.low %v1377, %v1393
        %v1434 = vcombine.high %v1377, %v1393
        %v1436 = vunpack.c.l.s4 1934713408
        %v1437 = vunpack.c.0.s8 %v1436
        %v1438 = vlaneseq
        %v1439 = vshrl.u32 %v1438, 7
        %v1440 = vsub.s32 %v1437, %v1439
        %v1441 = vrot.slane %v1433, %v1440
        %v1443 = vunpack.c.l.s4 1934713408
        %v1444 = vunpack.c.0.s8 %v1443
        %v1445 = vlaneseq
        %v1446 = vshrl.u32 %v1445, 7
        %v1447 = vsub.s32 %v1444, %v1446
        %v1448 = vrot.slane %v1434, %v1447
        %v1449 = vcombine.low %v1384, %v1400
        %v1450 = vcombine.high %v1384, %v1400
        %v1452 = vunpack.c.l.s4 1934713408
        %v1453 = vunpack.c.0.s8 %v1452
        %v1454 = vlaneseq
        %v1455 = vshrl.u32 %v1454, 7
        %v1456 = vsub.s32 %v1453, %v1455
        %v1457 = vrot.slane %v1449, %v1456
        %v1459 = vunpack.c.l.s4 1934713408
        %v1460 = vunpack.c.0.s8 %v1459
        %v1461 = vlaneseq
        %v1462 = vshrl.u32 %v1461, 7
        %v1463 = vsub.s32 %v1460, %v1462
        %v1464 = vrot.slane %v1450, %v1463
        %v1465 = vcombine.low %v1409, %v1425
        %v1466 = vcombine.high %v1409, %v1425
        %v1468 = vunpack.c.l.s4 1934713408
        %v1469 = vunpack.c.0.s8 %v1468
        %v1470 = vlaneseq
        %v1471 = vshrl.u32 %v1470, 7
        %v1472 = vsub.s32 %v1469, %v1471
        %v1473 = vrot.slane %v1465, %v1472
        %v1475 = vunpack.c.l.s4 1934713408
        %v1476 = vunpack.c.0.s8 %v1475
        %v1477 = vlaneseq
        %v1478 = vshrl.u32 %v1477, 7
        %v1479 = vsub.s32 %v1476, %v1478
        %v1480 = vrot.slane %v1466, %v1479
        %v1481 = vcombine.low %v1416, %v1432
        %v1482 = vcombine.high %v1416, %v1432
        %v1484 = vunpack.c.l.s4 1934713408
        %v1485 = vunpack.c.0.s8 %v1484
        %v1486 = vlaneseq
        %v1487 = vshrl.u32 %v1486, 7
        %v1488 = vsub.s32 %v1485, %v1487
        %v1489 = vrot.slane %v1481, %v1488
        %v1491 = vunpack.c.l.s4 1934713408
        %v1492 = vunpack.c.0.s8 %v1491
        %v1493 = vlaneseq
        %v1494 = vshrl.u32 %v1493, 7
        %v1495 = vsub.s32 %v1492, %v1494
        %v1496 = vrot.slane %v1482, %v1495
        %v1497 = vcombine.low %v1441, %v1473
        %v1498 = vcombine.high %v1441, %v1473
        %v1499 = vcombine.low %v1448, %v1480
        %v1500 = vcombine.high %v1448, %v1480
        %v1501 = vcombine.low %v1457, %v1489
        %v1502 = vcombine.high %v1457, %v1489
        %v1503 = vcombine.low %v1464, %v1496
        %v1504 = vcombine.high %v1464, %v1496
        %v1505 = vcombine.low %v1361, %v1363
        %v1506 = vcombine.high %v1361, %v1363
        %v1508 = vunpack.c.l.s4 1983009808
        %v1509 = vunpack.c.0.s8 %v1508
        %v1510 = vlaneseq
        %v1511 = vshrl.u32 %v1510, 7
        %v1512 = vsub.s32 %v1509, %v1511
        %v1513 = vrot.slane %v1505, %v1512
        %v1515 = vunpack.c.l.s4 1983009808
        %v1516 = vunpack.c.0.s8 %v1515
        %v1517 = vlaneseq
        %v1518 = vshrl.u32 %v1517, 7
        %v1519 = vsub.s32 %v1516, %v1518
        %v1520 = vrot.slane %v1506, %v1519
        %v1521 = vcombine.low %v1362, %v1364
        %v1522 = vcombine.high %v1362, %v1364
        %v1524 = vunpack.c.l.s4 1983009808
        %v1525 = vunpack.c.0.s8 %v1524
        %v1526 = vlaneseq
        %v1527 = vshrl.u32 %v1526, 7
        %v1528 = vsub.s32 %v1525, %v1527
        %v1529 = vrot.slane %v1521, %v1528
        %v1531 = vunpack.c.l.s4 1983009808
        %v1532 = vunpack.c.0.s8 %v1531
        %v1533 = vlaneseq
        %v1534 = vshrl.u32 %v1533, 7
        %v1535 = vsub.s32 %v1532, %v1534
        %v1536 = vrot.slane %v1522, %v1535
        %v1537 = vcombine.low %v1365, %v1367
        %v1538 = vcombine.high %v1365, %v1367
        %v1540 = vunpack.c.l.s4 1983009808
        %v1541 = vunpack.c.0.s8 %v1540
        %v1542 = vlaneseq
        %v1543 = vshrl.u32 %v1542, 7
        %v1544 = vsub.s32 %v1541, %v1543
        %v1545 = vrot.slane %v1537, %v1544
        %v1547 = vunpack.c.l.s4 1983009808
        %v1548 = vunpack.c.0.s8 %v1547
        %v1549 = vlaneseq
        %v1550 = vshrl.u32 %v1549, 7
        %v1551 = vsub.s32 %v1548, %v1550
        %v1552 = vrot.slane %v1538, %v1551
        %v1553 = vcombine.low %v1366, %v1368
        %v1554 = vcombine.high %v1366, %v1368
        %v1556 = vunpack.c.l.s4 1983009808
        %v1557 = vunpack.c.0.s8 %v1556
        %v1558 = vlaneseq
        %v1559 = vshrl.u32 %v1558, 7
        %v1560 = vsub.s32 %v1557, %v1559
        %v1561 = vrot.slane %v1553, %v1560
        %v1563 = vunpack.c.l.s4 1983009808
        %v1564 = vunpack.c.0.s8 %v1563
        %v1565 = vlaneseq
        %v1566 = vshrl.u32 %v1565, 7
        %v1567 = vsub.s32 %v1564, %v1566
        %v1568 = vrot.slane %v1554, %v1567
        %v1569 = vcombine.low %v1513, %v1529
        %v1570 = vcombine.high %v1513, %v1529
        %v1572 = vunpack.c.l.s4 1934713408
        %v1573 = vunpack.c.0.s8 %v1572
        %v1574 = vlaneseq
        %v1575 = vshrl.u32 %v1574, 7
        %v1576 = vsub.s32 %v1573, %v1575
        %v1577 = vrot.slane %v1569, %v1576
        %v1579 = vunpack.c.l.s4 1934713408
        %v1580 = vunpack.c.0.s8 %v1579
        %v1581 = vlaneseq
        %v1582 = vshrl.u32 %v1581, 7
        %v1583 = vsub.s32 %v1580, %v1582
        %v1584 = vrot.slane %v1570, %v1583
        %v1585 = vcombine.low %v1520, %v1536
        %v1586 = vcombine.high %v1520, %v1536
        %v1588 = vunpack.c.l.s4 1934713408
        %v1589 = vunpack.c.0.s8 %v1588
        %v1590 = vlaneseq
        %v1591 = vshrl.u32 %v1590, 7
        %v1592 = vsub.s32 %v1589, %v1591
        %v1593 = vrot.slane %v1585, %v1592
        %v1595 = vunpack.c.l.s4 1934713408
        %v1596 = vunpack.c.0.s8 %v1595
        %v1597 = vlaneseq
        %v1598 = vshrl.u32 %v1597, 7
        %v1599 = vsub.s32 %v1596, %v1598
        %v1600 = vrot.slane %v1586, %v1599
        %v1601 = vcombine.low %v1545, %v1561
        %v1602 = vcombine.high %v1545, %v1561
        %v1604 = vunpack.c.l.s4 1934713408
        %v1605 = vunpack.c.0.s8 %v1604
        %v1606 = vlaneseq
        %v1607 = vshrl.u32 %v1606, 7
        %v1608 = vsub.s32 %v1605, %v1607
        %v1609 = vrot.slane %v1601, %v1608
        %v1611 = vunpack.c.l.s4 1934713408
        %v1612 = vunpack.c.0.s8 %v1611
        %v1613 = vlaneseq
        %v1614 = vshrl.u32 %v1613, 7
        %v1615 = vsub.s32 %v1612, %v1614
        %v1616 = vrot.slane %v1602, %v1615
        %v1617 = vcombine.low %v1552, %v1568
        %v1618 = vcombine.high %v1552, %v1568
        %v1620 = vunpack.c.l.s4 1934713408
        %v1621 = vunpack.c.0.s8 %v1620
        %v1622 = vlaneseq
        %v1623 = vshrl.u32 %v1622, 7
        %v1624 = vsub.s32 %v1621, %v1623
        %v1625 = vrot.slane %v1617, %v1624
        %v1627 = vunpack.c.l.s4 1934713408
        %v1628 = vunpack.c.0.s8 %v1627
        %v1629 = vlaneseq
        %v1630 = vshrl.u32 %v1629, 7
        %v1631 = vsub.s32 %v1628, %v1630
        %v1632 = vrot.slane %v1618, %v1631
        %v1633 = vcombine.low %v1577, %v1609
        %v1634 = vcombine.high %v1577, %v1609
        %v1635 = vcombine.low %v1584, %v1616
        %v1636 = vcombine.high %v1584, %v1616
        %v1637 = vcombine.low %v1593, %v1625
        %v1638 = vcombine.high %v1593, %v1625
        %v1639 = vcombine.low %v1600, %v1632
        %v1640 = vcombine.high %v1600, %v1632
        %1641 = vrot.lane.b32.xlu0 %v1047, 96
        %v1642 = vpop.permute.xlu0 %1641
        %1643 = vrot.lane.b32.xlu0 %v1050, 96
        %v1644 = vpop.permute.xlu0 %1643
        %1645 = vrot.lane.b32.xlu0 %v1056, 96
        %v1646 = vpop.permute.xlu0 %1645
        %1647 = vrot.lane.b32.xlu0 %v1058, 96
        %v1648 = vpop.permute.xlu0 %1647
        %1649 = vrot.lane.b32.xlu0 %v1062, 96
        %v1650 = vpop.permute.xlu0 %1649
        %1651 = vrot.lane.b32.xlu0 %v1064, 96
        %v1652 = vpop.permute.xlu0 %1651
        %1653 = vrot.lane.b32.xlu0 %v1068, 96
        %v1654 = vpop.permute.xlu0 %1653
        %1655 = vrot.lane.b32.xlu0 %v1070, 96
        %v1656 = vpop.permute.xlu0 %1655
        %1657 = vrot.lane.b32.xlu0 %v1074, 96
        %v1658 = vpop.permute.xlu0 %1657
        %1659 = vrot.lane.b32.xlu0 %v1076, 96
        %v1660 = vpop.permute.xlu0 %1659
        %1661 = vrot.lane.b32.xlu0 %v1080, 96
        %v1662 = vpop.permute.xlu0 %1661
        %1663 = vrot.lane.b32.xlu0 %v1082, 96
        %v1664 = vpop.permute.xlu0 %1663
        %1665 = vrot.lane.b32.xlu0 %v1086, 96
        %v1666 = vpop.permute.xlu0 %1665
        %1667 = vrot.lane.b32.xlu0 %v1088, 96
        %v1668 = vpop.permute.xlu0 %1667
        %1669 = vrot.lane.b32.xlu0 %v1092, 96
        %v1670 = vpop.permute.xlu0 %1669
        %1671 = vrot.lane.b32.xlu0 %v1094, 96
        %v1672 = vpop.permute.xlu0 %1671
        %v1689 = vcombine.low %v1642, %v1650
        %v1690 = vcombine.high %v1642, %v1650
        %v1692 = vunpack.c.l.s4 1983009808
        %v1693 = vunpack.c.0.s8 %v1692
        %v1694 = vlaneseq
        %v1695 = vshrl.u32 %v1694, 7
        %v1696 = vsub.s32 %v1693, %v1695
        %v1697 = vrot.slane %v1689, %v1696
        %v1699 = vunpack.c.l.s4 1983009808
        %v1700 = vunpack.c.0.s8 %v1699
        %v1701 = vlaneseq
        %v1702 = vshrl.u32 %v1701, 7
        %v1703 = vsub.s32 %v1700, %v1702
        %v1704 = vrot.slane %v1690, %v1703
        %v1705 = vcombine.low %v1646, %v1654
        %v1706 = vcombine.high %v1646, %v1654
        %v1708 = vunpack.c.l.s4 1983009808
        %v1709 = vunpack.c.0.s8 %v1708
        %v1710 = vlaneseq
        %v1711 = vshrl.u32 %v1710, 7
        %v1712 = vsub.s32 %v1709, %v1711
        %v1713 = vrot.slane %v1705, %v1712
        %v1715 = vunpack.c.l.s4 1983009808
        %v1716 = vunpack.c.0.s8 %v1715
        %v1717 = vlaneseq
        %v1718 = vshrl.u32 %v1717, 7
        %v1719 = vsub.s32 %v1716, %v1718
        %v1720 = vrot.slane %v1706, %v1719
        %v1721 = vcombine.low %v1658, %v1666
        %v1722 = vcombine.high %v1658, %v1666
        %v1724 = vunpack.c.l.s4 1983009808
        %v1725 = vunpack.c.0.s8 %v1724
        %v1726 = vlaneseq
        %v1727 = vshrl.u32 %v1726, 7
        %v1728 = vsub.s32 %v1725, %v1727
        %v1729 = vrot.slane %v1721, %v1728
        %v1731 = vunpack.c.l.s4 1983009808
        %v1732 = vunpack.c.0.s8 %v1731
        %v1733 = vlaneseq
        %v1734 = vshrl.u32 %v1733, 7
        %v1735 = vsub.s32 %v1732, %v1734
        %v1736 = vrot.slane %v1722, %v1735
        %v1737 = vcombine.low %v1662, %v1670
        %v1738 = vcombine.high %v1662, %v1670
        %v1740 = vunpack.c.l.s4 1983009808
        %v1741 = vunpack.c.0.s8 %v1740
        %v1742 = vlaneseq
        %v1743 = vshrl.u32 %v1742, 7
        %v1744 = vsub.s32 %v1741, %v1743
        %v1745 = vrot.slane %v1737, %v1744
        %v1747 = vunpack.c.l.s4 1983009808
        %v1748 = vunpack.c.0.s8 %v1747
        %v1749 = vlaneseq
        %v1750 = vshrl.u32 %v1749, 7
        %v1751 = vsub.s32 %v1748, %v1750
        %v1752 = vrot.slane %v1738, %v1751
        %v1753 = vcombine.low %v1697, %v1713
        %v1754 = vcombine.high %v1697, %v1713
        %v1756 = vunpack.c.l.s4 1934713408
        %v1757 = vunpack.c.0.s8 %v1756
        %v1758 = vlaneseq
        %v1759 = vshrl.u32 %v1758, 7
        %v1760 = vsub.s32 %v1757, %v1759
        %v1761 = vrot.slane %v1753, %v1760
        %v1763 = vunpack.c.l.s4 1934713408
        %v1764 = vunpack.c.0.s8 %v1763
        %v1765 = vlaneseq
        %v1766 = vshrl.u32 %v1765, 7
        %v1767 = vsub.s32 %v1764, %v1766
        %v1768 = vrot.slane %v1754, %v1767
        %v1769 = vcombine.low %v1704, %v1720
        %v1770 = vcombine.high %v1704, %v1720
        %v1772 = vunpack.c.l.s4 1934713408
        %v1773 = vunpack.c.0.s8 %v1772
        %v1774 = vlaneseq
        %v1775 = vshrl.u32 %v1774, 7
        %v1776 = vsub.s32 %v1773, %v1775
        %v1777 = vrot.slane %v1769, %v1776
        %v1779 = vunpack.c.l.s4 1934713408
        %v1780 = vunpack.c.0.s8 %v1779
        %v1781 = vlaneseq
        %v1782 = vshrl.u32 %v1781, 7
        %v1783 = vsub.s32 %v1780, %v1782
        %v1784 = vrot.slane %v1770, %v1783
        %v1785 = vcombine.low %v1729, %v1745
        %v1786 = vcombine.high %v1729, %v1745
        %v1788 = vunpack.c.l.s4 1934713408
        %v1789 = vunpack.c.0.s8 %v1788
        %v1790 = vlaneseq
        %v1791 = vshrl.u32 %v1790, 7
        %v1792 = vsub.s32 %v1789, %v1791
        %v1793 = vrot.slane %v1785, %v1792
        %v1795 = vunpack.c.l.s4 1934713408
        %v1796 = vunpack.c.0.s8 %v1795
        %v1797 = vlaneseq
        %v1798 = vshrl.u32 %v1797, 7
        %v1799 = vsub.s32 %v1796, %v1798
        %v1800 = vrot.slane %v1786, %v1799
        %v1801 = vcombine.low %v1736, %v1752
        %v1802 = vcombine.high %v1736, %v1752
        %v1804 = vunpack.c.l.s4 1934713408
        %v1805 = vunpack.c.0.s8 %v1804
        %v1806 = vlaneseq
        %v1807 = vshrl.u32 %v1806, 7
        %v1808 = vsub.s32 %v1805, %v1807
        %v1809 = vrot.slane %v1801, %v1808
        %v1811 = vunpack.c.l.s4 1934713408
        %v1812 = vunpack.c.0.s8 %v1811
        %v1813 = vlaneseq
        %v1814 = vshrl.u32 %v1813, 7
        %v1815 = vsub.s32 %v1812, %v1814
        %v1816 = vrot.slane %v1802, %v1815
        %v1817 = vcombine.low %v1761, %v1793
        %v1818 = vcombine.high %v1761, %v1793
        %v1819 = vcombine.low %v1768, %v1800
        %v1820 = vcombine.high %v1768, %v1800
        %v1821 = vcombine.low %v1777, %v1809
        %v1822 = vcombine.high %v1777, %v1809
        %v1823 = vcombine.low %v1784, %v1816
        %v1824 = vcombine.high %v1784, %v1816
        %v1825 = vcombine.low %v1644, %v1652
        %v1826 = vcombine.high %v1644, %v1652
        %v1828 = vunpack.c.l.s4 1983009808
        %v1829 = vunpack.c.0.s8 %v1828
        %v1830 = vlaneseq
        %v1831 = vshrl.u32 %v1830, 7
        %v1832 = vsub.s32 %v1829, %v1831
        %v1833 = vrot.slane %v1825, %v1832
        %v1835 = vunpack.c.l.s4 1983009808
        %v1836 = vunpack.c.0.s8 %v1835
        %v1837 = vlaneseq
        %v1838 = vshrl.u32 %v1837, 7
        %v1839 = vsub.s32 %v1836, %v1838
        %v1840 = vrot.slane %v1826, %v1839
        %v1841 = vcombine.low %v1648, %v1656
        %v1842 = vcombine.high %v1648, %v1656
        %v1844 = vunpack.c.l.s4 1983009808
        %v1845 = vunpack.c.0.s8 %v1844
        %v1846 = vlaneseq
        %v1847 = vshrl.u32 %v1846, 7
        %v1848 = vsub.s32 %v1845, %v1847
        %v1849 = vrot.slane %v1841, %v1848
        %v1851 = vunpack.c.l.s4 1983009808
        %v1852 = vunpack.c.0.s8 %v1851
        %v1853 = vlaneseq
        %v1854 = vshrl.u32 %v1853, 7
        %v1855 = vsub.s32 %v1852, %v1854
        %v1856 = vrot.slane %v1842, %v1855
        %v1857 = vcombine.low %v1660, %v1668
        %v1858 = vcombine.high %v1660, %v1668
        %v1860 = vunpack.c.l.s4 1983009808
        %v1861 = vunpack.c.0.s8 %v1860
        %v1862 = vlaneseq
        %v1863 = vshrl.u32 %v1862, 7
        %v1864 = vsub.s32 %v1861, %v1863
        %v1865 = vrot.slane %v1857, %v1864
        %v1867 = vunpack.c.l.s4 1983009808
        %v1868 = vunpack.c.0.s8 %v1867
        %v1869 = vlaneseq
        %v1870 = vshrl.u32 %v1869, 7
        %v1871 = vsub.s32 %v1868, %v1870
        %v1872 = vrot.slane %v1858, %v1871
        %v1873 = vcombine.low %v1664, %v1672
        %v1874 = vcombine.high %v1664, %v1672
        %v1876 = vunpack.c.l.s4 1983009808
        %v1877 = vunpack.c.0.s8 %v1876
        %v1878 = vlaneseq
        %v1879 = vshrl.u32 %v1878, 7
        %v1880 = vsub.s32 %v1877, %v1879
        %v1881 = vrot.slane %v1873, %v1880
        %v1883 = vunpack.c.l.s4 1983009808
        %v1884 = vunpack.c.0.s8 %v1883
        %v1885 = vlaneseq
        %v1886 = vshrl.u32 %v1885, 7
        %v1887 = vsub.s32 %v1884, %v1886
        %v1888 = vrot.slane %v1874, %v1887
        %v1889 = vcombine.low %v1833, %v1849
        %v1890 = vcombine.high %v1833, %v1849
        %v1892 = vunpack.c.l.s4 1934713408
        %v1893 = vunpack.c.0.s8 %v1892
        %v1894 = vlaneseq
        %v1895 = vshrl.u32 %v1894, 7
        %v1896 = vsub.s32 %v1893, %v1895
        %v1897 = vrot.slane %v1889, %v1896
        %v1899 = vunpack.c.l.s4 1934713408
        %v1900 = vunpack.c.0.s8 %v1899
        %v1901 = vlaneseq
        %v1902 = vshrl.u32 %v1901, 7
        %v1903 = vsub.s32 %v1900, %v1902
        %v1904 = vrot.slane %v1890, %v1903
        %v1905 = vcombine.low %v1840, %v1856
        %v1906 = vcombine.high %v1840, %v1856
        %v1908 = vunpack.c.l.s4 1934713408
        %v1909 = vunpack.c.0.s8 %v1908
        %v1910 = vlaneseq
        %v1911 = vshrl.u32 %v1910, 7
        %v1912 = vsub.s32 %v1909, %v1911
        %v1913 = vrot.slane %v1905, %v1912
        %v1915 = vunpack.c.l.s4 1934713408
        %v1916 = vunpack.c.0.s8 %v1915
        %v1917 = vlaneseq
        %v1918 = vshrl.u32 %v1917, 7
        %v1919 = vsub.s32 %v1916, %v1918
        %v1920 = vrot.slane %v1906, %v1919
        %v1921 = vcombine.low %v1865, %v1881
        %v1922 = vcombine.high %v1865, %v1881
        %v1924 = vunpack.c.l.s4 1934713408
        %v1925 = vunpack.c.0.s8 %v1924
        %v1926 = vlaneseq
        %v1927 = vshrl.u32 %v1926, 7
        %v1928 = vsub.s32 %v1925, %v1927
        %v1929 = vrot.slane %v1921, %v1928
        %v1931 = vunpack.c.l.s4 1934713408
        %v1932 = vunpack.c.0.s8 %v1931
        %v1933 = vlaneseq
        %v1934 = vshrl.u32 %v1933, 7
        %v1935 = vsub.s32 %v1932, %v1934
        %v1936 = vrot.slane %v1922, %v1935
        %v1937 = vcombine.low %v1872, %v1888
        %v1938 = vcombine.high %v1872, %v1888
        %v1940 = vunpack.c.l.s4 1934713408
        %v1941 = vunpack.c.0.s8 %v1940
        %v1942 = vlaneseq
        %v1943 = vshrl.u32 %v1942, 7
        %v1944 = vsub.s32 %v1941, %v1943
        %v1945 = vrot.slane %v1937, %v1944
        %v1947 = vunpack.c.l.s4 1934713408
        %v1948 = vunpack.c.0.s8 %v1947
        %v1949 = vlaneseq
        %v1950 = vshrl.u32 %v1949, 7
        %v1951 = vsub.s32 %v1948, %v1950
        %v1952 = vrot.slane %v1938, %v1951
        %v1953 = vcombine.low %v1897, %v1929
        %v1954 = vcombine.high %v1897, %v1929
        %v1955 = vcombine.low %v1904, %v1936
        %v1956 = vcombine.high %v1904, %v1936
        %v1957 = vcombine.low %v1913, %v1945
        %v1958 = vcombine.high %v1913, %v1945
        %v1959 = vcombine.low %v1920, %v1952
        %v1960 = vcombine.high %v1920, %v1952
        %v1961 = vcombine.low %v1817, %v1819
        %v1962 = vcombine.high %v1817, %v1819
        %v1964 = vunpack.c.l.s4 1983009808
        %v1965 = vunpack.c.0.s8 %v1964
        %v1966 = vlaneseq
        %v1967 = vshrl.u32 %v1966, 7
        %v1968 = vsub.s32 %v1965, %v1967
        %v1969 = vrot.slane %v1961, %v1968
        %v1971 = vunpack.c.l.s4 1983009808
        %v1972 = vunpack.c.0.s8 %v1971
        %v1973 = vlaneseq
        %v1974 = vshrl.u32 %v1973, 7
        %v1975 = vsub.s32 %v1972, %v1974
        %v1976 = vrot.slane %v1962, %v1975
        %v1977 = vcombine.low %v1818, %v1820
        %v1978 = vcombine.high %v1818, %v1820
        %v1980 = vunpack.c.l.s4 1983009808
        %v1981 = vunpack.c.0.s8 %v1980
        %v1982 = vlaneseq
        %v1983 = vshrl.u32 %v1982, 7
        %v1984 = vsub.s32 %v1981, %v1983
        %v1985 = vrot.slane %v1977, %v1984
        %v1987 = vunpack.c.l.s4 1983009808
        %v1988 = vunpack.c.0.s8 %v1987
        %v1989 = vlaneseq
        %v1990 = vshrl.u32 %v1989, 7
        %v1991 = vsub.s32 %v1988, %v1990
        %v1992 = vrot.slane %v1978, %v1991
        %v1993 = vcombine.low %v1821, %v1823
        %v1994 = vcombine.high %v1821, %v1823
        %v1996 = vunpack.c.l.s4 1983009808
        %v1997 = vunpack.c.0.s8 %v1996
        %v1998 = vlaneseq
        %v1999 = vshrl.u32 %v1998, 7
        %v2000 = vsub.s32 %v1997, %v1999
        %v2001 = vrot.slane %v1993, %v2000
        %v2003 = vunpack.c.l.s4 1983009808
        %v2004 = vunpack.c.0.s8 %v2003
        %v2005 = vlaneseq
        %v2006 = vshrl.u32 %v2005, 7
        %v2007 = vsub.s32 %v2004, %v2006
        %v2008 = vrot.slane %v1994, %v2007
        %v2009 = vcombine.low %v1822, %v1824
        %v2010 = vcombine.high %v1822, %v1824
        %v2012 = vunpack.c.l.s4 1983009808
        %v2013 = vunpack.c.0.s8 %v2012
        %v2014 = vlaneseq
        %v2015 = vshrl.u32 %v2014, 7
        %v2016 = vsub.s32 %v2013, %v2015
        %v2017 = vrot.slane %v2009, %v2016
        %v2019 = vunpack.c.l.s4 1983009808
        %v2020 = vunpack.c.0.s8 %v2019
        %v2021 = vlaneseq
        %v2022 = vshrl.u32 %v2021, 7
        %v2023 = vsub.s32 %v2020, %v2022
        %v2024 = vrot.slane %v2010, %v2023
        %v2025 = vcombine.low %v1969, %v1985
        %v2026 = vcombine.high %v1969, %v1985
        %v2028 = vunpack.c.l.s4 1934713408
        %v2029 = vunpack.c.0.s8 %v2028
        %v2030 = vlaneseq
        %v2031 = vshrl.u32 %v2030, 7
        %v2032 = vsub.s32 %v2029, %v2031
        %v2033 = vrot.slane %v2025, %v2032
        %v2035 = vunpack.c.l.s4 1934713408
        %v2036 = vunpack.c.0.s8 %v2035
        %v2037 = vlaneseq
        %v2038 = vshrl.u32 %v2037, 7
        %v2039 = vsub.s32 %v2036, %v2038
        %v2040 = vrot.slane %v2026, %v2039
        %v2041 = vcombine.low %v1976, %v1992
        %v2042 = vcombine.high %v1976, %v1992
        %v2044 = vunpack.c.l.s4 1934713408
        %v2045 = vunpack.c.0.s8 %v2044
        %v2046 = vlaneseq
        %v2047 = vshrl.u32 %v2046, 7
        %v2048 = vsub.s32 %v2045, %v2047
        %v2049 = vrot.slane %v2041, %v2048
        %v2051 = vunpack.c.l.s4 1934713408
        %v2052 = vunpack.c.0.s8 %v2051
        %v2053 = vlaneseq
        %v2054 = vshrl.u32 %v2053, 7
        %v2055 = vsub.s32 %v2052, %v2054
        %v2056 = vrot.slane %v2042, %v2055
        %v2057 = vcombine.low %v2001, %v2017
        %v2058 = vcombine.high %v2001, %v2017
        %v2060 = vunpack.c.l.s4 1934713408
        %v2061 = vunpack.c.0.s8 %v2060
        %v2062 = vlaneseq
        %v2063 = vshrl.u32 %v2062, 7
        %v2064 = vsub.s32 %v2061, %v2063
        %v2065 = vrot.slane %v2057, %v2064
        %v2067 = vunpack.c.l.s4 1934713408
        %v2068 = vunpack.c.0.s8 %v2067
        %v2069 = vlaneseq
        %v2070 = vshrl.u32 %v2069, 7
        %v2071 = vsub.s32 %v2068, %v2070
        %v2072 = vrot.slane %v2058, %v2071
        %v2073 = vcombine.low %v2008, %v2024
        %v2074 = vcombine.high %v2008, %v2024
        %v2076 = vunpack.c.l.s4 1934713408
        %v2077 = vunpack.c.0.s8 %v2076
        %v2078 = vlaneseq
        %v2079 = vshrl.u32 %v2078, 7
        %v2080 = vsub.s32 %v2077, %v2079
        %v2081 = vrot.slane %v2073, %v2080
        %v2083 = vunpack.c.l.s4 1934713408
        %v2084 = vunpack.c.0.s8 %v2083
        %v2085 = vlaneseq
        %v2086 = vshrl.u32 %v2085, 7
        %v2087 = vsub.s32 %v2084, %v2086
        %v2088 = vrot.slane %v2074, %v2087
        %v2089 = vcombine.low %v2033, %v2065
        %v2090 = vcombine.high %v2033, %v2065
        %v2091 = vcombine.low %v2040, %v2072
        %v2092 = vcombine.high %v2040, %v2072
        %v2093 = vcombine.low %v2049, %v2081
        %v2094 = vcombine.high %v2049, %v2081
        %v2095 = vcombine.low %v2056, %v2088
        %v2096 = vcombine.high %v2056, %v2088
        %v2097 = vcombine.low %v1953, %v1955
        %v2098 = vcombine.high %v1953, %v1955
        %v2100 = vunpack.c.l.s4 1983009808
        %v2101 = vunpack.c.0.s8 %v2100
        %v2102 = vlaneseq
        %v2103 = vshrl.u32 %v2102, 7
        %v2104 = vsub.s32 %v2101, %v2103
        %v2105 = vrot.slane %v2097, %v2104
        %v2107 = vunpack.c.l.s4 1983009808
        %v2108 = vunpack.c.0.s8 %v2107
        %v2109 = vlaneseq
        %v2110 = vshrl.u32 %v2109, 7
        %v2111 = vsub.s32 %v2108, %v2110
        %v2112 = vrot.slane %v2098, %v2111
        %v2113 = vcombine.low %v1954, %v1956
        %v2114 = vcombine.high %v1954, %v1956
        %v2116 = vunpack.c.l.s4 1983009808
        %v2117 = vunpack.c.0.s8 %v2116
        %v2118 = vlaneseq
        %v2119 = vshrl.u32 %v2118, 7
        %v2120 = vsub.s32 %v2117, %v2119
        %v2121 = vrot.slane %v2113, %v2120
        %v2123 = vunpack.c.l.s4 1983009808
        %v2124 = vunpack.c.0.s8 %v2123
        %v2125 = vlaneseq
        %v2126 = vshrl.u32 %v2125, 7
        %v2127 = vsub.s32 %v2124, %v2126
        %v2128 = vrot.slane %v2114, %v2127
        %v2129 = vcombine.low %v1957, %v1959
        %v2130 = vcombine.high %v1957, %v1959
        %v2132 = vunpack.c.l.s4 1983009808
        %v2133 = vunpack.c.0.s8 %v2132
        %v2134 = vlaneseq
        %v2135 = vshrl.u32 %v2134, 7
        %v2136 = vsub.s32 %v2133, %v2135
        %v2137 = vrot.slane %v2129, %v2136
        %v2139 = vunpack.c.l.s4 1983009808
        %v2140 = vunpack.c.0.s8 %v2139
        %v2141 = vlaneseq
        %v2142 = vshrl.u32 %v2141, 7
        %v2143 = vsub.s32 %v2140, %v2142
        %v2144 = vrot.slane %v2130, %v2143
        %v2145 = vcombine.low %v1958, %v1960
        %v2146 = vcombine.high %v1958, %v1960
        %v2148 = vunpack.c.l.s4 1983009808
        %v2149 = vunpack.c.0.s8 %v2148
        %v2150 = vlaneseq
        %v2151 = vshrl.u32 %v2150, 7
        %v2152 = vsub.s32 %v2149, %v2151
        %v2153 = vrot.slane %v2145, %v2152
        %v2155 = vunpack.c.l.s4 1983009808
        %v2156 = vunpack.c.0.s8 %v2155
        %v2157 = vlaneseq
        %v2158 = vshrl.u32 %v2157, 7
        %v2159 = vsub.s32 %v2156, %v2158
        %v2160 = vrot.slane %v2146, %v2159
        %v2161 = vcombine.low %v2105, %v2121
        %v2162 = vcombine.high %v2105, %v2121
        %v2164 = vunpack.c.l.s4 1934713408
        %v2165 = vunpack.c.0.s8 %v2164
        %v2166 = vlaneseq
        %v2167 = vshrl.u32 %v2166, 7
        %v2168 = vsub.s32 %v2165, %v2167
        %v2169 = vrot.slane %v2161, %v2168
        %v2171 = vunpack.c.l.s4 1934713408
        %v2172 = vunpack.c.0.s8 %v2171
        %v2173 = vlaneseq
        %v2174 = vshrl.u32 %v2173, 7
        %v2175 = vsub.s32 %v2172, %v2174
        %v2176 = vrot.slane %v2162, %v2175
        %v2177 = vcombine.low %v2112, %v2128
        %v2178 = vcombine.high %v2112, %v2128
        %v2180 = vunpack.c.l.s4 1934713408
        %v2181 = vunpack.c.0.s8 %v2180
        %v2182 = vlaneseq
        %v2183 = vshrl.u32 %v2182, 7
        %v2184 = vsub.s32 %v2181, %v2183
        %v2185 = vrot.slane %v2177, %v2184
        %v2187 = vunpack.c.l.s4 1934713408
        %v2188 = vunpack.c.0.s8 %v2187
        %v2189 = vlaneseq
        %v2190 = vshrl.u32 %v2189, 7
        %v2191 = vsub.s32 %v2188, %v2190
        %v2192 = vrot.slane %v2178, %v2191
        %v2193 = vcombine.low %v2137, %v2153
        %v2194 = vcombine.high %v2137, %v2153
        %v2196 = vunpack.c.l.s4 1934713408
        %v2197 = vunpack.c.0.s8 %v2196
        %v2198 = vlaneseq
        %v2199 = vshrl.u32 %v2198, 7
        %v2200 = vsub.s32 %v2197, %v2199
        %v2201 = vrot.slane %v2193, %v2200
        %v2203 = vunpack.c.l.s4 1934713408
        %v2204 = vunpack.c.0.s8 %v2203
        %v2205 = vlaneseq
        %v2206 = vshrl.u32 %v2205, 7
        %v2207 = vsub.s32 %v2204, %v2206
        %v2208 = vrot.slane %v2194, %v2207
        %v2209 = vcombine.low %v2144, %v2160
        %v2210 = vcombine.high %v2144, %v2160
        %v2212 = vunpack.c.l.s4 1934713408
        %v2213 = vunpack.c.0.s8 %v2212
        %v2214 = vlaneseq
        %v2215 = vshrl.u32 %v2214, 7
        %v2216 = vsub.s32 %v2213, %v2215
        %v2217 = vrot.slane %v2209, %v2216
        %v2219 = vunpack.c.l.s4 1934713408
        %v2220 = vunpack.c.0.s8 %v2219
        %v2221 = vlaneseq
        %v2222 = vshrl.u32 %v2221, 7
        %v2223 = vsub.s32 %v2220, %v2222
        %v2224 = vrot.slane %v2210, %v2223
        %v2225 = vcombine.low %v2169, %v2201
        %v2226 = vcombine.high %v2169, %v2201
        %v2227 = vcombine.low %v2176, %v2208
        %v2228 = vcombine.high %v2176, %v2208
        %v2229 = vcombine.low %v2185, %v2217
        %v2230 = vcombine.high %v2185, %v2217
        %v2231 = vcombine.low %v2192, %v2224
        %v2232 = vcombine.high %v2192, %v2224
        %2233 = vrot.lane.b32.xlu0 %v1047, 64
        %v2234 = vpop.permute.xlu0 %2233
        %2235 = vrot.lane.b32.xlu0 %v1050, 64
        %v2236 = vpop.permute.xlu0 %2235
        %2237 = vrot.lane.b32.xlu0 %v1056, 64
        %v2238 = vpop.permute.xlu0 %2237
        %2239 = vrot.lane.b32.xlu0 %v1058, 64
        %v2240 = vpop.permute.xlu0 %2239
        %2241 = vrot.lane.b32.xlu0 %v1062, 64
        %v2242 = vpop.permute.xlu0 %2241
        %2243 = vrot.lane.b32.xlu0 %v1064, 64
        %v2244 = vpop.permute.xlu0 %2243
        %2245 = vrot.lane.b32.xlu0 %v1068, 64
        %v2246 = vpop.permute.xlu0 %2245
        %2247 = vrot.lane.b32.xlu0 %v1070, 64
        %v2248 = vpop.permute.xlu0 %2247
        %2249 = vrot.lane.b32.xlu0 %v1074, 64
        %v2250 = vpop.permute.xlu0 %2249
        %2251 = vrot.lane.b32.xlu0 %v1076, 64
        %v2252 = vpop.permute.xlu0 %2251
        %2253 = vrot.lane.b32.xlu0 %v1080, 64
        %v2254 = vpop.permute.xlu0 %2253
        %2255 = vrot.lane.b32.xlu0 %v1082, 64
        %v2256 = vpop.permute.xlu0 %2255
        %2257 = vrot.lane.b32.xlu0 %v1086, 64
        %v2258 = vpop.permute.xlu0 %2257
        %2259 = vrot.lane.b32.xlu0 %v1088, 64
        %v2260 = vpop.permute.xlu0 %2259
        %2261 = vrot.lane.b32.xlu0 %v1092, 64
        %v2262 = vpop.permute.xlu0 %2261
        %2263 = vrot.lane.b32.xlu0 %v1094, 64
        %v2264 = vpop.permute.xlu0 %2263
        %v2281 = vcombine.low %v2234, %v2242
        %v2282 = vcombine.high %v2234, %v2242
        %v2284 = vunpack.c.l.s4 1983009808
        %v2285 = vunpack.c.0.s8 %v2284
        %v2286 = vlaneseq
        %v2287 = vshrl.u32 %v2286, 7
        %v2288 = vsub.s32 %v2285, %v2287
        %v2289 = vrot.slane %v2281, %v2288
        %v2291 = vunpack.c.l.s4 1983009808
        %v2292 = vunpack.c.0.s8 %v2291
        %v2293 = vlaneseq
        %v2294 = vshrl.u32 %v2293, 7
        %v2295 = vsub.s32 %v2292, %v2294
        %v2296 = vrot.slane %v2282, %v2295
        %v2297 = vcombine.low %v2238, %v2246
        %v2298 = vcombine.high %v2238, %v2246
        %v2300 = vunpack.c.l.s4 1983009808
        %v2301 = vunpack.c.0.s8 %v2300
        %v2302 = vlaneseq
        %v2303 = vshrl.u32 %v2302, 7
        %v2304 = vsub.s32 %v2301, %v2303
        %v2305 = vrot.slane %v2297, %v2304
        %v2307 = vunpack.c.l.s4 1983009808
        %v2308 = vunpack.c.0.s8 %v2307
        %v2309 = vlaneseq
        %v2310 = vshrl.u32 %v2309, 7
        %v2311 = vsub.s32 %v2308, %v2310
        %v2312 = vrot.slane %v2298, %v2311
        %v2313 = vcombine.low %v2250, %v2258
        %v2314 = vcombine.high %v2250, %v2258
        %v2316 = vunpack.c.l.s4 1983009808
        %v2317 = vunpack.c.0.s8 %v2316
        %v2318 = vlaneseq
        %v2319 = vshrl.u32 %v2318, 7
        %v2320 = vsub.s32 %v2317, %v2319
        %v2321 = vrot.slane %v2313, %v2320
        %v2323 = vunpack.c.l.s4 1983009808
        %v2324 = vunpack.c.0.s8 %v2323
        %v2325 = vlaneseq
        %v2326 = vshrl.u32 %v2325, 7
        %v2327 = vsub.s32 %v2324, %v2326
        %v2328 = vrot.slane %v2314, %v2327
        %v2329 = vcombine.low %v2254, %v2262
        %v2330 = vcombine.high %v2254, %v2262
        %v2332 = vunpack.c.l.s4 1983009808
        %v2333 = vunpack.c.0.s8 %v2332
        %v2334 = vlaneseq
        %v2335 = vshrl.u32 %v2334, 7
        %v2336 = vsub.s32 %v2333, %v2335
        %v2337 = vrot.slane %v2329, %v2336
        %v2339 = vunpack.c.l.s4 1983009808
        %v2340 = vunpack.c.0.s8 %v2339
        %v2341 = vlaneseq
        %v2342 = vshrl.u32 %v2341, 7
        %v2343 = vsub.s32 %v2340, %v2342
        %v2344 = vrot.slane %v2330, %v2343
        %v2345 = vcombine.low %v2289, %v2305
        %v2346 = vcombine.high %v2289, %v2305
        %v2348 = vunpack.c.l.s4 1934713408
        %v2349 = vunpack.c.0.s8 %v2348
        %v2350 = vlaneseq
        %v2351 = vshrl.u32 %v2350, 7
        %v2352 = vsub.s32 %v2349, %v2351
        %v2353 = vrot.slane %v2345, %v2352
        %v2355 = vunpack.c.l.s4 1934713408
        %v2356 = vunpack.c.0.s8 %v2355
        %v2357 = vlaneseq
        %v2358 = vshrl.u32 %v2357, 7
        %v2359 = vsub.s32 %v2356, %v2358
        %v2360 = vrot.slane %v2346, %v2359
        %v2361 = vcombine.low %v2296, %v2312
        %v2362 = vcombine.high %v2296, %v2312
        %v2364 = vunpack.c.l.s4 1934713408
        %v2365 = vunpack.c.0.s8 %v2364
        %v2366 = vlaneseq
        %v2367 = vshrl.u32 %v2366, 7
        %v2368 = vsub.s32 %v2365, %v2367
        %v2369 = vrot.slane %v2361, %v2368
        %v2371 = vunpack.c.l.s4 1934713408
        %v2372 = vunpack.c.0.s8 %v2371
        %v2373 = vlaneseq
        %v2374 = vshrl.u32 %v2373, 7
        %v2375 = vsub.s32 %v2372, %v2374
        %v2376 = vrot.slane %v2362, %v2375
        %v2377 = vcombine.low %v2321, %v2337
        %v2378 = vcombine.high %v2321, %v2337
        %v2380 = vunpack.c.l.s4 1934713408
        %v2381 = vunpack.c.0.s8 %v2380
        %v2382 = vlaneseq
        %v2383 = vshrl.u32 %v2382, 7
        %v2384 = vsub.s32 %v2381, %v2383
        %v2385 = vrot.slane %v2377, %v2384
        %v2387 = vunpack.c.l.s4 1934713408
        %v2388 = vunpack.c.0.s8 %v2387
        %v2389 = vlaneseq
        %v2390 = vshrl.u32 %v2389, 7
        %v2391 = vsub.s32 %v2388, %v2390
        %v2392 = vrot.slane %v2378, %v2391
        %v2393 = vcombine.low %v2328, %v2344
        %v2394 = vcombine.high %v2328, %v2344
        %v2396 = vunpack.c.l.s4 1934713408
        %v2397 = vunpack.c.0.s8 %v2396
        %v2398 = vlaneseq
        %v2399 = vshrl.u32 %v2398, 7
        %v2400 = vsub.s32 %v2397, %v2399
        %v2401 = vrot.slane %v2393, %v2400
        %v2403 = vunpack.c.l.s4 1934713408
        %v2404 = vunpack.c.0.s8 %v2403
        %v2405 = vlaneseq
        %v2406 = vshrl.u32 %v2405, 7
        %v2407 = vsub.s32 %v2404, %v2406
        %v2408 = vrot.slane %v2394, %v2407
        %v2409 = vcombine.low %v2353, %v2385
        %v2410 = vcombine.high %v2353, %v2385
        %v2411 = vcombine.low %v2360, %v2392
        %v2412 = vcombine.high %v2360, %v2392
        %v2413 = vcombine.low %v2369, %v2401
        %v2414 = vcombine.high %v2369, %v2401
        %v2415 = vcombine.low %v2376, %v2408
        %v2416 = vcombine.high %v2376, %v2408
        %v2417 = vcombine.low %v2236, %v2244
        %v2418 = vcombine.high %v2236, %v2244
        %v2420 = vunpack.c.l.s4 1983009808
        %v2421 = vunpack.c.0.s8 %v2420
        %v2422 = vlaneseq
        %v2423 = vshrl.u32 %v2422, 7
        %v2424 = vsub.s32 %v2421, %v2423
        %v2425 = vrot.slane %v2417, %v2424
        %v2427 = vunpack.c.l.s4 1983009808
        %v2428 = vunpack.c.0.s8 %v2427
        %v2429 = vlaneseq
        %v2430 = vshrl.u32 %v2429, 7
        %v2431 = vsub.s32 %v2428, %v2430
        %v2432 = vrot.slane %v2418, %v2431
        %v2433 = vcombine.low %v2240, %v2248
        %v2434 = vcombine.high %v2240, %v2248
        %v2436 = vunpack.c.l.s4 1983009808
        %v2437 = vunpack.c.0.s8 %v2436
        %v2438 = vlaneseq
        %v2439 = vshrl.u32 %v2438, 7
        %v2440 = vsub.s32 %v2437, %v2439
        %v2441 = vrot.slane %v2433, %v2440
        %v2443 = vunpack.c.l.s4 1983009808
        %v2444 = vunpack.c.0.s8 %v2443
        %v2445 = vlaneseq
        %v2446 = vshrl.u32 %v2445, 7
        %v2447 = vsub.s32 %v2444, %v2446
        %v2448 = vrot.slane %v2434, %v2447
        %v2449 = vcombine.low %v2252, %v2260
        %v2450 = vcombine.high %v2252, %v2260
        %v2452 = vunpack.c.l.s4 1983009808
        %v2453 = vunpack.c.0.s8 %v2452
        %v2454 = vlaneseq
        %v2455 = vshrl.u32 %v2454, 7
        %v2456 = vsub.s32 %v2453, %v2455
        %v2457 = vrot.slane %v2449, %v2456
        %v2459 = vunpack.c.l.s4 1983009808
        %v2460 = vunpack.c.0.s8 %v2459
        %v2461 = vlaneseq
        %v2462 = vshrl.u32 %v2461, 7
        %v2463 = vsub.s32 %v2460, %v2462
        %v2464 = vrot.slane %v2450, %v2463
        %v2465 = vcombine.low %v2256, %v2264
        %v2466 = vcombine.high %v2256, %v2264
        %v2468 = vunpack.c.l.s4 1983009808
        %v2469 = vunpack.c.0.s8 %v2468
        %v2470 = vlaneseq
        %v2471 = vshrl.u32 %v2470, 7
        %v2472 = vsub.s32 %v2469, %v2471
        %v2473 = vrot.slane %v2465, %v2472
        %v2475 = vunpack.c.l.s4 1983009808
        %v2476 = vunpack.c.0.s8 %v2475
        %v2477 = vlaneseq
        %v2478 = vshrl.u32 %v2477, 7
        %v2479 = vsub.s32 %v2476, %v2478
        %v2480 = vrot.slane %v2466, %v2479
        %v2481 = vcombine.low %v2425, %v2441
        %v2482 = vcombine.high %v2425, %v2441
        %v2484 = vunpack.c.l.s4 1934713408
        %v2485 = vunpack.c.0.s8 %v2484
        %v2486 = vlaneseq
        %v2487 = vshrl.u32 %v2486, 7
        %v2488 = vsub.s32 %v2485, %v2487
        %v2489 = vrot.slane %v2481, %v2488
        %v2491 = vunpack.c.l.s4 1934713408
        %v2492 = vunpack.c.0.s8 %v2491
        %v2493 = vlaneseq
        %v2494 = vshrl.u32 %v2493, 7
        %v2495 = vsub.s32 %v2492, %v2494
        %v2496 = vrot.slane %v2482, %v2495
        %v2497 = vcombine.low %v2432, %v2448
        %v2498 = vcombine.high %v2432, %v2448
        %v2500 = vunpack.c.l.s4 1934713408
        %v2501 = vunpack.c.0.s8 %v2500
        %v2502 = vlaneseq
        %v2503 = vshrl.u32 %v2502, 7
        %v2504 = vsub.s32 %v2501, %v2503
        %v2505 = vrot.slane %v2497, %v2504
        %v2507 = vunpack.c.l.s4 1934713408
        %v2508 = vunpack.c.0.s8 %v2507
        %v2509 = vlaneseq
        %v2510 = vshrl.u32 %v2509, 7
        %v2511 = vsub.s32 %v2508, %v2510
        %v2512 = vrot.slane %v2498, %v2511
        %v2513 = vcombine.low %v2457, %v2473
        %v2514 = vcombine.high %v2457, %v2473
        %v2516 = vunpack.c.l.s4 1934713408
        %v2517 = vunpack.c.0.s8 %v2516
        %v2518 = vlaneseq
        %v2519 = vshrl.u32 %v2518, 7
        %v2520 = vsub.s32 %v2517, %v2519
        %v2521 = vrot.slane %v2513, %v2520
        %v2523 = vunpack.c.l.s4 1934713408
        %v2524 = vunpack.c.0.s8 %v2523
        %v2525 = vlaneseq
        %v2526 = vshrl.u32 %v2525, 7
        %v2527 = vsub.s32 %v2524, %v2526
        %v2528 = vrot.slane %v2514, %v2527
        %v2529 = vcombine.low %v2464, %v2480
        %v2530 = vcombine.high %v2464, %v2480
        %v2532 = vunpack.c.l.s4 1934713408
        %v2533 = vunpack.c.0.s8 %v2532
        %v2534 = vlaneseq
        %v2535 = vshrl.u32 %v2534, 7
        %v2536 = vsub.s32 %v2533, %v2535
        %v2537 = vrot.slane %v2529, %v2536
        %v2539 = vunpack.c.l.s4 1934713408
        %v2540 = vunpack.c.0.s8 %v2539
        %v2541 = vlaneseq
        %v2542 = vshrl.u32 %v2541, 7
        %v2543 = vsub.s32 %v2540, %v2542
        %v2544 = vrot.slane %v2530, %v2543
        %v2545 = vcombine.low %v2489, %v2521
        %v2546 = vcombine.high %v2489, %v2521
        %v2547 = vcombine.low %v2496, %v2528
        %v2548 = vcombine.high %v2496, %v2528
        %v2549 = vcombine.low %v2505, %v2537
        %v2550 = vcombine.high %v2505, %v2537
        %v2551 = vcombine.low %v2512, %v2544
        %v2552 = vcombine.high %v2512, %v2544
        %v2553 = vcombine.low %v2409, %v2411
        %v2554 = vcombine.high %v2409, %v2411
        %v2556 = vunpack.c.l.s4 1983009808
        %v2557 = vunpack.c.0.s8 %v2556
        %v2558 = vlaneseq
        %v2559 = vshrl.u32 %v2558, 7
        %v2560 = vsub.s32 %v2557, %v2559
        %v2561 = vrot.slane %v2553, %v2560
        %v2563 = vunpack.c.l.s4 1983009808
        %v2564 = vunpack.c.0.s8 %v2563
        %v2565 = vlaneseq
        %v2566 = vshrl.u32 %v2565, 7
        %v2567 = vsub.s32 %v2564, %v2566
        %v2568 = vrot.slane %v2554, %v2567
        %v2569 = vcombine.low %v2410, %v2412
        %v2570 = vcombine.high %v2410, %v2412
        %v2572 = vunpack.c.l.s4 1983009808
        %v2573 = vunpack.c.0.s8 %v2572
        %v2574 = vlaneseq
        %v2575 = vshrl.u32 %v2574, 7
        %v2576 = vsub.s32 %v2573, %v2575
        %v2577 = vrot.slane %v2569, %v2576
        %v2579 = vunpack.c.l.s4 1983009808
        %v2580 = vunpack.c.0.s8 %v2579
        %v2581 = vlaneseq
        %v2582 = vshrl.u32 %v2581, 7
        %v2583 = vsub.s32 %v2580, %v2582
        %v2584 = vrot.slane %v2570, %v2583
        %v2585 = vcombine.low %v2413, %v2415
        %v2586 = vcombine.high %v2413, %v2415
        %v2588 = vunpack.c.l.s4 1983009808
        %v2589 = vunpack.c.0.s8 %v2588
        %v2590 = vlaneseq
        %v2591 = vshrl.u32 %v2590, 7
        %v2592 = vsub.s32 %v2589, %v2591
        %v2593 = vrot.slane %v2585, %v2592
        %v2595 = vunpack.c.l.s4 1983009808
        %v2596 = vunpack.c.0.s8 %v2595
        %v2597 = vlaneseq
        %v2598 = vshrl.u32 %v2597, 7
        %v2599 = vsub.s32 %v2596, %v2598
        %v2600 = vrot.slane %v2586, %v2599
        %v2601 = vcombine.low %v2414, %v2416
        %v2602 = vcombine.high %v2414, %v2416
        %v2604 = vunpack.c.l.s4 1983009808
        %v2605 = vunpack.c.0.s8 %v2604
        %v2606 = vlaneseq
        %v2607 = vshrl.u32 %v2606, 7
        %v2608 = vsub.s32 %v2605, %v2607
        %v2609 = vrot.slane %v2601, %v2608
        %v2611 = vunpack.c.l.s4 1983009808
        %v2612 = vunpack.c.0.s8 %v2611
        %v2613 = vlaneseq
        %v2614 = vshrl.u32 %v2613, 7
        %v2615 = vsub.s32 %v2612, %v2614
        %v2616 = vrot.slane %v2602, %v2615
        %v2617 = vcombine.low %v2561, %v2577
        %v2618 = vcombine.high %v2561, %v2577
        %v2620 = vunpack.c.l.s4 1934713408
        %v2621 = vunpack.c.0.s8 %v2620
        %v2622 = vlaneseq
        %v2623 = vshrl.u32 %v2622, 7
        %v2624 = vsub.s32 %v2621, %v2623
        %v2625 = vrot.slane %v2617, %v2624
        %v2627 = vunpack.c.l.s4 1934713408
        %v2628 = vunpack.c.0.s8 %v2627
        %v2629 = vlaneseq
        %v2630 = vshrl.u32 %v2629, 7
        %v2631 = vsub.s32 %v2628, %v2630
        %v2632 = vrot.slane %v2618, %v2631
        %v2633 = vcombine.low %v2568, %v2584
        %v2634 = vcombine.high %v2568, %v2584
        %v2636 = vunpack.c.l.s4 1934713408
        %v2637 = vunpack.c.0.s8 %v2636
        %v2638 = vlaneseq
        %v2639 = vshrl.u32 %v2638, 7
        %v2640 = vsub.s32 %v2637, %v2639
        %v2641 = vrot.slane %v2633, %v2640
        %v2643 = vunpack.c.l.s4 1934713408
        %v2644 = vunpack.c.0.s8 %v2643
        %v2645 = vlaneseq
        %v2646 = vshrl.u32 %v2645, 7
        %v2647 = vsub.s32 %v2644, %v2646
        %v2648 = vrot.slane %v2634, %v2647
        %v2649 = vcombine.low %v2593, %v2609
        %v2650 = vcombine.high %v2593, %v2609
        %v2652 = vunpack.c.l.s4 1934713408
        %v2653 = vunpack.c.0.s8 %v2652
        %v2654 = vlaneseq
        %v2655 = vshrl.u32 %v2654, 7
        %v2656 = vsub.s32 %v2653, %v2655
        %v2657 = vrot.slane %v2649, %v2656
        %v2659 = vunpack.c.l.s4 1934713408
        %v2660 = vunpack.c.0.s8 %v2659
        %v2661 = vlaneseq
        %v2662 = vshrl.u32 %v2661, 7
        %v2663 = vsub.s32 %v2660, %v2662
        %v2664 = vrot.slane %v2650, %v2663
        %v2665 = vcombine.low %v2600, %v2616
        %v2666 = vcombine.high %v2600, %v2616
        %v2668 = vunpack.c.l.s4 1934713408
        %v2669 = vunpack.c.0.s8 %v2668
        %v2670 = vlaneseq
        %v2671 = vshrl.u32 %v2670, 7
        %v2672 = vsub.s32 %v2669, %v2671
        %v2673 = vrot.slane %v2665, %v2672
        %v2675 = vunpack.c.l.s4 1934713408
        %v2676 = vunpack.c.0.s8 %v2675
        %v2677 = vlaneseq
        %v2678 = vshrl.u32 %v2677, 7
        %v2679 = vsub.s32 %v2676, %v2678
        %v2680 = vrot.slane %v2666, %v2679
        %v2681 = vcombine.low %v2625, %v2657
        %v2682 = vcombine.high %v2625, %v2657
        %v2683 = vcombine.low %v2632, %v2664
        %v2684 = vcombine.high %v2632, %v2664
        %v2685 = vcombine.low %v2641, %v2673
        %v2686 = vcombine.high %v2641, %v2673
        %v2687 = vcombine.low %v2648, %v2680
        %v2688 = vcombine.high %v2648, %v2680
        %v2689 = vcombine.low %v2545, %v2547
        %v2690 = vcombine.high %v2545, %v2547
        %v2692 = vunpack.c.l.s4 1983009808
        %v2693 = vunpack.c.0.s8 %v2692
        %v2694 = vlaneseq
        %v2695 = vshrl.u32 %v2694, 7
        %v2696 = vsub.s32 %v2693, %v2695
        %v2697 = vrot.slane %v2689, %v2696
        %v2699 = vunpack.c.l.s4 1983009808
        %v2700 = vunpack.c.0.s8 %v2699
        %v2701 = vlaneseq
        %v2702 = vshrl.u32 %v2701, 7
        %v2703 = vsub.s32 %v2700, %v2702
        %v2704 = vrot.slane %v2690, %v2703
        %v2705 = vcombine.low %v2546, %v2548
        %v2706 = vcombine.high %v2546, %v2548
        %v2708 = vunpack.c.l.s4 1983009808
        %v2709 = vunpack.c.0.s8 %v2708
        %v2710 = vlaneseq
        %v2711 = vshrl.u32 %v2710, 7
        %v2712 = vsub.s32 %v2709, %v2711
        %v2713 = vrot.slane %v2705, %v2712
        %v2715 = vunpack.c.l.s4 1983009808
        %v2716 = vunpack.c.0.s8 %v2715
        %v2717 = vlaneseq
        %v2718 = vshrl.u32 %v2717, 7
        %v2719 = vsub.s32 %v2716, %v2718
        %v2720 = vrot.slane %v2706, %v2719
        %v2721 = vcombine.low %v2549, %v2551
        %v2722 = vcombine.high %v2549, %v2551
        %v2724 = vunpack.c.l.s4 1983009808
        %v2725 = vunpack.c.0.s8 %v2724
        %v2726 = vlaneseq
        %v2727 = vshrl.u32 %v2726, 7
        %v2728 = vsub.s32 %v2725, %v2727
        %v2729 = vrot.slane %v2721, %v2728
        %v2731 = vunpack.c.l.s4 1983009808
        %v2732 = vunpack.c.0.s8 %v2731
        %v2733 = vlaneseq
        %v2734 = vshrl.u32 %v2733, 7
        %v2735 = vsub.s32 %v2732, %v2734
        %v2736 = vrot.slane %v2722, %v2735
        %v2737 = vcombine.low %v2550, %v2552
        %v2738 = vcombine.high %v2550, %v2552
        %v2740 = vunpack.c.l.s4 1983009808
        %v2741 = vunpack.c.0.s8 %v2740
        %v2742 = vlaneseq
        %v2743 = vshrl.u32 %v2742, 7
        %v2744 = vsub.s32 %v2741, %v2743
        %v2745 = vrot.slane %v2737, %v2744
        %v2747 = vunpack.c.l.s4 1983009808
        %v2748 = vunpack.c.0.s8 %v2747
        %v2749 = vlaneseq
        %v2750 = vshrl.u32 %v2749, 7
        %v2751 = vsub.s32 %v2748, %v2750
        %v2752 = vrot.slane %v2738, %v2751
        %v2753 = vcombine.low %v2697, %v2713
        %v2754 = vcombine.high %v2697, %v2713
        %v2756 = vunpack.c.l.s4 1934713408
        %v2757 = vunpack.c.0.s8 %v2756
        %v2758 = vlaneseq
        %v2759 = vshrl.u32 %v2758, 7
        %v2760 = vsub.s32 %v2757, %v2759
        %v2761 = vrot.slane %v2753, %v2760
        %v2763 = vunpack.c.l.s4 1934713408
        %v2764 = vunpack.c.0.s8 %v2763
        %v2765 = vlaneseq
        %v2766 = vshrl.u32 %v2765, 7
        %v2767 = vsub.s32 %v2764, %v2766
        %v2768 = vrot.slane %v2754, %v2767
        %v2769 = vcombine.low %v2704, %v2720
        %v2770 = vcombine.high %v2704, %v2720
        %v2772 = vunpack.c.l.s4 1934713408
        %v2773 = vunpack.c.0.s8 %v2772
        %v2774 = vlaneseq
        %v2775 = vshrl.u32 %v2774, 7
        %v2776 = vsub.s32 %v2773, %v2775
        %v2777 = vrot.slane %v2769, %v2776
        %v2779 = vunpack.c.l.s4 1934713408
        %v2780 = vunpack.c.0.s8 %v2779
        %v2781 = vlaneseq
        %v2782 = vshrl.u32 %v2781, 7
        %v2783 = vsub.s32 %v2780, %v2782
        %v2784 = vrot.slane %v2770, %v2783
        %v2785 = vcombine.low %v2729, %v2745
        %v2786 = vcombine.high %v2729, %v2745
        %v2788 = vunpack.c.l.s4 1934713408
        %v2789 = vunpack.c.0.s8 %v2788
        %v2790 = vlaneseq
        %v2791 = vshrl.u32 %v2790, 7
        %v2792 = vsub.s32 %v2789, %v2791
        %v2793 = vrot.slane %v2785, %v2792
        %v2795 = vunpack.c.l.s4 1934713408
        %v2796 = vunpack.c.0.s8 %v2795
        %v2797 = vlaneseq
        %v2798 = vshrl.u32 %v2797, 7
        %v2799 = vsub.s32 %v2796, %v2798
        %v2800 = vrot.slane %v2786, %v2799
        %v2801 = vcombine.low %v2736, %v2752
        %v2802 = vcombine.high %v2736, %v2752
        %v2804 = vunpack.c.l.s4 1934713408
        %v2805 = vunpack.c.0.s8 %v2804
        %v2806 = vlaneseq
        %v2807 = vshrl.u32 %v2806, 7
        %v2808 = vsub.s32 %v2805, %v2807
        %v2809 = vrot.slane %v2801, %v2808
        %v2811 = vunpack.c.l.s4 1934713408
        %v2812 = vunpack.c.0.s8 %v2811
        %v2813 = vlaneseq
        %v2814 = vshrl.u32 %v2813, 7
        %v2815 = vsub.s32 %v2812, %v2814
        %v2816 = vrot.slane %v2802, %v2815
        %v2817 = vcombine.low %v2761, %v2793
        %v2818 = vcombine.high %v2761, %v2793
        %v2819 = vcombine.low %v2768, %v2800
        %v2820 = vcombine.high %v2768, %v2800
        %v2821 = vcombine.low %v2777, %v2809
        %v2822 = vcombine.high %v2777, %v2809
        %v2823 = vcombine.low %v2784, %v2816
        %v2824 = vcombine.high %v2784, %v2816
        %v2825 = vpack.c.bf16 %v1497, %v1497
        %v2826 = vpack.c.bf16 %v1633, %v1633
        %v2827 = vpack.c.bf16 %v1498, %v1498
        %v2828 = vpack.c.bf16 %v1634, %v1634
        %v2829 = vpack.c.bf16 %v1499, %v1499
        %v2830 = vpack.c.bf16 %v1635, %v1635
        %v2831 = vpack.c.bf16 %v1500, %v1500
        %v2832 = vpack.c.bf16 %v1636, %v1636
        %v2833 = vpack.c.bf16 %v1501, %v1501
        %v2834 = vpack.c.bf16 %v1637, %v1637
        %v2835 = vpack.c.bf16 %v1502, %v1502
        %v2836 = vpack.c.bf16 %v1638, %v1638
        %v2837 = vpack.c.bf16 %v1503, %v1503
        %v2838 = vpack.c.bf16 %v1639, %v1639
        %v2839 = vpack.c.bf16 %v1504, %v1504
        %v2840 = vpack.c.bf16 %v1640, %v1640
        %v2841 = vpack.c.bf16 %v2089, %v2089
        %v2842 = vpack.c.bf16 %v2225, %v2225
        %v2843 = vpack.c.bf16 %v2090, %v2090
        %v2844 = vpack.c.bf16 %v2226, %v2226
        %v2845 = vpack.c.bf16 %v2091, %v2091
        %v2846 = vpack.c.bf16 %v2227, %v2227
        %v2847 = vpack.c.bf16 %v2092, %v2092
        %v2848 = vpack.c.bf16 %v2228, %v2228
        %v2849 = vpack.c.bf16 %v2093, %v2093
        %v2850 = vpack.c.bf16 %v2229, %v2229
        %v2851 = vpack.c.bf16 %v2094, %v2094
        %v2852 = vpack.c.bf16 %v2230, %v2230
        %v2853 = vpack.c.bf16 %v2095, %v2095
        %v2854 = vpack.c.bf16 %v2231, %v2231
        %v2855 = vpack.c.bf16 %v2096, %v2096
        %v2856 = vpack.c.bf16 %v2232, %v2232
        %vm2857 = vcmask 31744
        %v2859 = vsel %vm2857, %v2825, 0
        %v2862 = vsel %vm2857, %v2841, 0
        %2864 = vmatprep.subr.bf16.mxu0 0
        %2865 = vmatpush1.bf16.xpose.msra.mxu0 %v2862
        %2866 = vmatprep.subr.bf16.mxu0 0
        %2867 = vmatpush1.bf16.xpose.msra.mxu0 0
        %2868 = vmatprep.subr.bf16.mxu0 0
        %2869 = vmatpush1.bf16.xpose.msra.mxu0 0
        %2870 = vmatprep.subr.bf16.mxu0 0
        %2871 = vmatpush1.bf16.xpose.msra.mxu0 0
        %2872 = vmatprep.subr.bf16.mxu0 0
        %2873 = vmatpush1.bf16.xpose.msra.mxu0 0
        %2874 = vmatprep.subr.bf16.mxu0 0
        %2875 = vmatpush1.bf16.xpose.msra.mxu0 0
        %2876 = vmatprep.subr.bf16.mxu0 0
        %2877 = vmatpush1.bf16.xpose.msra.mxu0 0
        %2878 = vmatprep.subr.bf16.mxu0 0
        %2879 = vmatpush1.bf16.xpose.msra.mxu0 0
        %2880 = vmatprep.subr.bf16.mxu0 0
        %2881 = vmatpush1.bf16.xpose.msra.mxu0 0
        %2882 = vmatprep.subr.bf16.mxu0 0
        %2883 = vmatpush1.bf16.xpose.msra.mxu0 0
        %2884 = vmatprep.subr.bf16.mxu0 0
        %2885 = vmatpush1.bf16.xpose.msra.mxu0 0
        %2886 = vmatprep.subr.bf16.mxu0 0
        %2887 = vmatpush1.bf16.xpose.msra.mxu0 0
        %2888 = vmatprep.subr.bf16.mxu0 0
        %2889 = vmatpush1.bf16.xpose.msra.mxu0 0
        %2890 = vmatprep.subr.bf16.mxu0 0
        %2891 = vmatpush1.bf16.xpose.msra.mxu0 0
        %2892 = vmatprep.subr.bf16.mxu0 0
        %2893 = vmatpush1.bf16.xpose.msra.mxu0 0
        %2894 = vmatprep.subr.bf16.mxu0 0
        %2895 = vmatpush1.bf16.xpose.msra.mxu0 0
        %2896 = vmatprep.mubr.bf16.mxu0 0
        %2897 = vmatmul.mubr.bf16.gmra.mrb[0].mxu0 %v2859
        %v2898 = vpop.f32.mrb[0].mxu0
        %v2899 = vadd.f32 0.0, %v2898
        %v2900 = vpop.f32.mrb[0].mxu0
        %v2901 = vpop.f32.mrb[0].mxu0
        %v2902 = vpop.f32.mrb[0].mxu0
        %2903 = vdwg.mxu0
        %v2905 = vsel %vm2857, %v2826, 0
        %v2908 = vsel %vm2857, %v2842, 0
        %2910 = vmatprep.subr.bf16.mxu0 0
        %2911 = vmatpush1.bf16.xpose.msra.mxu0 %v2908
        %2912 = vmatprep.subr.bf16.mxu0 0
        %2913 = vmatpush1.bf16.xpose.msra.mxu0 0
        %2914 = vmatprep.subr.bf16.mxu0 0
        %2915 = vmatpush1.bf16.xpose.msra.mxu0 0
        %2916 = vmatprep.subr.bf16.mxu0 0
        %2917 = vmatpush1.bf16.xpose.msra.mxu0 0
        %2918 = vmatprep.subr.bf16.mxu0 0
        %2919 = vmatpush1.bf16.xpose.msra.mxu0 0
        %2920 = vmatprep.subr.bf16.mxu0 0
        %2921 = vmatpush1.bf16.xpose.msra.mxu0 0
        %2922 = vmatprep.subr.bf16.mxu0 0
        %2923 = vmatpush1.bf16.xpose.msra.mxu0 0
        %2924 = vmatprep.subr.bf16.mxu0 0
        %2925 = vmatpush1.bf16.xpose.msra.mxu0 0
        %2926 = vmatprep.subr.bf16.mxu0 0
        %2927 = vmatpush1.bf16.xpose.msra.mxu0 0
        %2928 = vmatprep.subr.bf16.mxu0 0
        %2929 = vmatpush1.bf16.xpose.msra.mxu0 0
        %2930 = vmatprep.subr.bf16.mxu0 0
        %2931 = vmatpush1.bf16.xpose.msra.mxu0 0
        %2932 = vmatprep.subr.bf16.mxu0 0
        %2933 = vmatpush1.bf16.xpose.msra.mxu0 0
        %2934 = vmatprep.subr.bf16.mxu0 0
        %2935 = vmatpush1.bf16.xpose.msra.mxu0 0
        %2936 = vmatprep.subr.bf16.mxu0 0
        %2937 = vmatpush1.bf16.xpose.msra.mxu0 0
        %2938 = vmatprep.subr.bf16.mxu0 0
        %2939 = vmatpush1.bf16.xpose.msra.mxu0 0
        %2940 = vmatprep.subr.bf16.mxu0 0
        %2941 = vmatpush1.bf16.xpose.msra.mxu0 0
        %2942 = vmatprep.mubr.bf16.mxu0 0
        %2943 = vmatmul.mubr.bf16.gmra.mrb[0].mxu0 %v2905
        %v2944 = vpop.f32.mrb[0].mxu0
        %v2945 = vadd.f32 0.0, %v2944
        %v2946 = vpop.f32.mrb[0].mxu0
        %v2947 = vpop.f32.mrb[0].mxu0
        %v2948 = vpop.f32.mrb[0].mxu0
        %2949 = vdwg.mxu0
        %v2951 = vsel %vm2857, %v2827, 0
        %v2954 = vsel %vm2857, %v2843, 0
        %2956 = vmatprep.subr.bf16.mxu0 0
        %2957 = vmatpush1.bf16.xpose.msra.mxu0 %v2954
        %2958 = vmatprep.subr.bf16.mxu0 0
        %2959 = vmatpush1.bf16.xpose.msra.mxu0 0
        %2960 = vmatprep.subr.bf16.mxu0 0
        %2961 = vmatpush1.bf16.xpose.msra.mxu0 0
        %2962 = vmatprep.subr.bf16.mxu0 0
        %2963 = vmatpush1.bf16.xpose.msra.mxu0 0
        %2964 = vmatprep.subr.bf16.mxu0 0
        %2965 = vmatpush1.bf16.xpose.msra.mxu0 0
        %2966 = vmatprep.subr.bf16.mxu0 0
        %2967 = vmatpush1.bf16.xpose.msra.mxu0 0
        %2968 = vmatprep.subr.bf16.mxu0 0
        %2969 = vmatpush1.bf16.xpose.msra.mxu0 0
        %2970 = vmatprep.subr.bf16.mxu0 0
        %2971 = vmatpush1.bf16.xpose.msra.mxu0 0
        %2972 = vmatprep.subr.bf16.mxu0 0
        %2973 = vmatpush1.bf16.xpose.msra.mxu0 0
        %2974 = vmatprep.subr.bf16.mxu0 0
        %2975 = vmatpush1.bf16.xpose.msra.mxu0 0
        %2976 = vmatprep.subr.bf16.mxu0 0
        %2977 = vmatpush1.bf16.xpose.msra.mxu0 0
        %2978 = vmatprep.subr.bf16.mxu0 0
        %2979 = vmatpush1.bf16.xpose.msra.mxu0 0
        %2980 = vmatprep.subr.bf16.mxu0 0
        %2981 = vmatpush1.bf16.xpose.msra.mxu0 0
        %2982 = vmatprep.subr.bf16.mxu0 0
        %2983 = vmatpush1.bf16.xpose.msra.mxu0 0
        %2984 = vmatprep.subr.bf16.mxu0 0
        %2985 = vmatpush1.bf16.xpose.msra.mxu0 0
        %2986 = vmatprep.subr.bf16.mxu0 0
        %2987 = vmatpush1.bf16.xpose.msra.mxu0 0
        %2988 = vmatprep.mubr.bf16.mxu0 0
        %2989 = vmatmul.mubr.bf16.gmra.mrb[0].mxu0 %v2951
        %v2990 = vpop.f32.mrb[0].mxu0
        %v2991 = vadd.f32 0.0, %v2990
        %v2992 = vpop.f32.mrb[0].mxu0
        %v2993 = vpop.f32.mrb[0].mxu0
        %v2994 = vpop.f32.mrb[0].mxu0
        %2995 = vdwg.mxu0
        %v2997 = vsel %vm2857, %v2828, 0
        %v3000 = vsel %vm2857, %v2844, 0
        %3002 = vmatprep.subr.bf16.mxu0 0
        %3003 = vmatpush1.bf16.xpose.msra.mxu0 %v3000
        %3004 = vmatprep.subr.bf16.mxu0 0
        %3005 = vmatpush1.bf16.xpose.msra.mxu0 0
        %3006 = vmatprep.subr.bf16.mxu0 0
        %3007 = vmatpush1.bf16.xpose.msra.mxu0 0
        %3008 = vmatprep.subr.bf16.mxu0 0
        %3009 = vmatpush1.bf16.xpose.msra.mxu0 0
        %3010 = vmatprep.subr.bf16.mxu0 0
        %3011 = vmatpush1.bf16.xpose.msra.mxu0 0
        %3012 = vmatprep.subr.bf16.mxu0 0
        %3013 = vmatpush1.bf16.xpose.msra.mxu0 0
        %3014 = vmatprep.subr.bf16.mxu0 0
        %3015 = vmatpush1.bf16.xpose.msra.mxu0 0
        %3016 = vmatprep.subr.bf16.mxu0 0
        %3017 = vmatpush1.bf16.xpose.msra.mxu0 0
        %3018 = vmatprep.subr.bf16.mxu0 0
        %3019 = vmatpush1.bf16.xpose.msra.mxu0 0
        %3020 = vmatprep.subr.bf16.mxu0 0
        %3021 = vmatpush1.bf16.xpose.msra.mxu0 0
        %3022 = vmatprep.subr.bf16.mxu0 0
        %3023 = vmatpush1.bf16.xpose.msra.mxu0 0
        %3024 = vmatprep.subr.bf16.mxu0 0
        %3025 = vmatpush1.bf16.xpose.msra.mxu0 0
        %3026 = vmatprep.subr.bf16.mxu0 0
        %3027 = vmatpush1.bf16.xpose.msra.mxu0 0
        %3028 = vmatprep.subr.bf16.mxu0 0
        %3029 = vmatpush1.bf16.xpose.msra.mxu0 0
        %3030 = vmatprep.subr.bf16.mxu0 0
        %3031 = vmatpush1.bf16.xpose.msra.mxu0 0
        %3032 = vmatprep.subr.bf16.mxu0 0
        %3033 = vmatpush1.bf16.xpose.msra.mxu0 0
        %3034 = vmatprep.mubr.bf16.mxu0 0
        %3035 = vmatmul.mubr.bf16.gmra.mrb[0].mxu0 %v2997
        %v3036 = vpop.f32.mrb[0].mxu0
        %v3037 = vadd.f32 0.0, %v3036
        %v3038 = vpop.f32.mrb[0].mxu0
        %v3039 = vpop.f32.mrb[0].mxu0
        %v3040 = vpop.f32.mrb[0].mxu0
        %3041 = vdwg.mxu0
        %v3043 = vsel %vm2857, %v2829, 0
        %v3046 = vsel %vm2857, %v2845, 0
        %3048 = vmatprep.subr.bf16.mxu0 0
        %3049 = vmatpush1.bf16.xpose.msra.mxu0 %v3046
        %3050 = vmatprep.subr.bf16.mxu0 0
        %3051 = vmatpush1.bf16.xpose.msra.mxu0 0
        %3052 = vmatprep.subr.bf16.mxu0 0
        %3053 = vmatpush1.bf16.xpose.msra.mxu0 0
        %3054 = vmatprep.subr.bf16.mxu0 0
        %3055 = vmatpush1.bf16.xpose.msra.mxu0 0
        %3056 = vmatprep.subr.bf16.mxu0 0
        %3057 = vmatpush1.bf16.xpose.msra.mxu0 0
        %3058 = vmatprep.subr.bf16.mxu0 0
        %3059 = vmatpush1.bf16.xpose.msra.mxu0 0
        %3060 = vmatprep.subr.bf16.mxu0 0
        %3061 = vmatpush1.bf16.xpose.msra.mxu0 0
        %3062 = vmatprep.subr.bf16.mxu0 0
        %3063 = vmatpush1.bf16.xpose.msra.mxu0 0
        %3064 = vmatprep.subr.bf16.mxu0 0
        %3065 = vmatpush1.bf16.xpose.msra.mxu0 0
        %3066 = vmatprep.subr.bf16.mxu0 0
        %3067 = vmatpush1.bf16.xpose.msra.mxu0 0
        %3068 = vmatprep.subr.bf16.mxu0 0
        %3069 = vmatpush1.bf16.xpose.msra.mxu0 0
        %3070 = vmatprep.subr.bf16.mxu0 0
        %3071 = vmatpush1.bf16.xpose.msra.mxu0 0
        %3072 = vmatprep.subr.bf16.mxu0 0
        %3073 = vmatpush1.bf16.xpose.msra.mxu0 0
        %3074 = vmatprep.subr.bf16.mxu0 0
        %3075 = vmatpush1.bf16.xpose.msra.mxu0 0
        %3076 = vmatprep.subr.bf16.mxu0 0
        %3077 = vmatpush1.bf16.xpose.msra.mxu0 0
        %3078 = vmatprep.subr.bf16.mxu0 0
        %3079 = vmatpush1.bf16.xpose.msra.mxu0 0
        %3080 = vmatprep.mubr.bf16.mxu0 0
        %3081 = vmatmul.mubr.bf16.gmra.mrb[0].mxu0 %v3043
        %v3082 = vpop.f32.mrb[0].mxu0
        %v3083 = vadd.f32 0.0, %v3082
        %v3084 = vpop.f32.mrb[0].mxu0
        %v3085 = vpop.f32.mrb[0].mxu0
        %v3086 = vpop.f32.mrb[0].mxu0
        %3087 = vdwg.mxu0
        %v3089 = vsel %vm2857, %v2830, 0
        %v3092 = vsel %vm2857, %v2846, 0
        %3094 = vmatprep.subr.bf16.mxu0 0
        %3095 = vmatpush1.bf16.xpose.msra.mxu0 %v3092
        %3096 = vmatprep.subr.bf16.mxu0 0
        %3097 = vmatpush1.bf16.xpose.msra.mxu0 0
        %3098 = vmatprep.subr.bf16.mxu0 0
        %3099 = vmatpush1.bf16.xpose.msra.mxu0 0
        %3100 = vmatprep.subr.bf16.mxu0 0
        %3101 = vmatpush1.bf16.xpose.msra.mxu0 0
        %3102 = vmatprep.subr.bf16.mxu0 0
        %3103 = vmatpush1.bf16.xpose.msra.mxu0 0
        %3104 = vmatprep.subr.bf16.mxu0 0
        %3105 = vmatpush1.bf16.xpose.msra.mxu0 0
        %3106 = vmatprep.subr.bf16.mxu0 0
        %3107 = vmatpush1.bf16.xpose.msra.mxu0 0
        %3108 = vmatprep.subr.bf16.mxu0 0
        %3109 = vmatpush1.bf16.xpose.msra.mxu0 0
        %3110 = vmatprep.subr.bf16.mxu0 0
        %3111 = vmatpush1.bf16.xpose.msra.mxu0 0
        %3112 = vmatprep.subr.bf16.mxu0 0
        %3113 = vmatpush1.bf16.xpose.msra.mxu0 0
        %3114 = vmatprep.subr.bf16.mxu0 0
        %3115 = vmatpush1.bf16.xpose.msra.mxu0 0
        %3116 = vmatprep.subr.bf16.mxu0 0
        %3117 = vmatpush1.bf16.xpose.msra.mxu0 0
        %3118 = vmatprep.subr.bf16.mxu0 0
        %3119 = vmatpush1.bf16.xpose.msra.mxu0 0
        %3120 = vmatprep.subr.bf16.mxu0 0
        %3121 = vmatpush1.bf16.xpose.msra.mxu0 0
        %3122 = vmatprep.subr.bf16.mxu0 0
        %3123 = vmatpush1.bf16.xpose.msra.mxu0 0
        %3124 = vmatprep.subr.bf16.mxu0 0
        %3125 = vmatpush1.bf16.xpose.msra.mxu0 0
        %3126 = vmatprep.mubr.bf16.mxu0 0
        %3127 = vmatmul.mubr.bf16.gmra.mrb[0].mxu0 %v3089
        %v3128 = vpop.f32.mrb[0].mxu0
        %v3129 = vadd.f32 0.0, %v3128
        %v3130 = vpop.f32.mrb[0].mxu0
        %v3131 = vpop.f32.mrb[0].mxu0
        %v3132 = vpop.f32.mrb[0].mxu0
        %3133 = vdwg.mxu0
        %v3135 = vsel %vm2857, %v2831, 0
        %v3138 = vsel %vm2857, %v2847, 0
        %3140 = vmatprep.subr.bf16.mxu0 0
        %3141 = vmatpush1.bf16.xpose.msra.mxu0 %v3138
        %3142 = vmatprep.subr.bf16.mxu0 0
        %3143 = vmatpush1.bf16.xpose.msra.mxu0 0
        %3144 = vmatprep.subr.bf16.mxu0 0
        %3145 = vmatpush1.bf16.xpose.msra.mxu0 0
        %3146 = vmatprep.subr.bf16.mxu0 0
        %3147 = vmatpush1.bf16.xpose.msra.mxu0 0
        %3148 = vmatprep.subr.bf16.mxu0 0
        %3149 = vmatpush1.bf16.xpose.msra.mxu0 0
        %3150 = vmatprep.subr.bf16.mxu0 0
        %3151 = vmatpush1.bf16.xpose.msra.mxu0 0
        %3152 = vmatprep.subr.bf16.mxu0 0
        %3153 = vmatpush1.bf16.xpose.msra.mxu0 0
        %3154 = vmatprep.subr.bf16.mxu0 0
        %3155 = vmatpush1.bf16.xpose.msra.mxu0 0
        %3156 = vmatprep.subr.bf16.mxu0 0
        %3157 = vmatpush1.bf16.xpose.msra.mxu0 0
        %3158 = vmatprep.subr.bf16.mxu0 0
        %3159 = vmatpush1.bf16.xpose.msra.mxu0 0
        %3160 = vmatprep.subr.bf16.mxu0 0
        %3161 = vmatpush1.bf16.xpose.msra.mxu0 0
        %3162 = vmatprep.subr.bf16.mxu0 0
        %3163 = vmatpush1.bf16.xpose.msra.mxu0 0
        %3164 = vmatprep.subr.bf16.mxu0 0
        %3165 = vmatpush1.bf16.xpose.msra.mxu0 0
        %3166 = vmatprep.subr.bf16.mxu0 0
        %3167 = vmatpush1.bf16.xpose.msra.mxu0 0
        %3168 = vmatprep.subr.bf16.mxu0 0
        %3169 = vmatpush1.bf16.xpose.msra.mxu0 0
        %3170 = vmatprep.subr.bf16.mxu0 0
        %3171 = vmatpush1.bf16.xpose.msra.mxu0 0
        %3172 = vmatprep.mubr.bf16.mxu0 0
        %3173 = vmatmul.mubr.bf16.gmra.mrb[0].mxu0 %v3135
        %v3174 = vpop.f32.mrb[0].mxu0
        %v3175 = vadd.f32 0.0, %v3174
        %v3176 = vpop.f32.mrb[0].mxu0
        %v3177 = vpop.f32.mrb[0].mxu0
        %v3178 = vpop.f32.mrb[0].mxu0
        %3179 = vdwg.mxu0
        %v3181 = vsel %vm2857, %v2832, 0
        %v3184 = vsel %vm2857, %v2848, 0
        %3186 = vmatprep.subr.bf16.mxu0 0
        %3187 = vmatpush1.bf16.xpose.msra.mxu0 %v3184
        %3188 = vmatprep.subr.bf16.mxu0 0
        %3189 = vmatpush1.bf16.xpose.msra.mxu0 0
        %3190 = vmatprep.subr.bf16.mxu0 0
        %3191 = vmatpush1.bf16.xpose.msra.mxu0 0
        %3192 = vmatprep.subr.bf16.mxu0 0
        %3193 = vmatpush1.bf16.xpose.msra.mxu0 0
        %3194 = vmatprep.subr.bf16.mxu0 0
        %3195 = vmatpush1.bf16.xpose.msra.mxu0 0
        %3196 = vmatprep.subr.bf16.mxu0 0
        %3197 = vmatpush1.bf16.xpose.msra.mxu0 0
        %3198 = vmatprep.subr.bf16.mxu0 0
        %3199 = vmatpush1.bf16.xpose.msra.mxu0 0
        %3200 = vmatprep.subr.bf16.mxu0 0
        %3201 = vmatpush1.bf16.xpose.msra.mxu0 0
        %3202 = vmatprep.subr.bf16.mxu0 0
        %3203 = vmatpush1.bf16.xpose.msra.mxu0 0
        %3204 = vmatprep.subr.bf16.mxu0 0
        %3205 = vmatpush1.bf16.xpose.msra.mxu0 0
        %3206 = vmatprep.subr.bf16.mxu0 0
        %3207 = vmatpush1.bf16.xpose.msra.mxu0 0
        %3208 = vmatprep.subr.bf16.mxu0 0
        %3209 = vmatpush1.bf16.xpose.msra.mxu0 0
        %3210 = vmatprep.subr.bf16.mxu0 0
        %3211 = vmatpush1.bf16.xpose.msra.mxu0 0
        %3212 = vmatprep.subr.bf16.mxu0 0
        %3213 = vmatpush1.bf16.xpose.msra.mxu0 0
        %3214 = vmatprep.subr.bf16.mxu0 0
        %3215 = vmatpush1.bf16.xpose.msra.mxu0 0
        %3216 = vmatprep.subr.bf16.mxu0 0
        %3217 = vmatpush1.bf16.xpose.msra.mxu0 0
        %3218 = vmatprep.mubr.bf16.mxu0 0
        %3219 = vmatmul.mubr.bf16.gmra.mrb[0].mxu0 %v3181
        %v3220 = vpop.f32.mrb[0].mxu0
        %v3221 = vadd.f32 0.0, %v3220
        %v3222 = vpop.f32.mrb[0].mxu0
        %v3223 = vpop.f32.mrb[0].mxu0
        %v3224 = vpop.f32.mrb[0].mxu0
        %3225 = vdwg.mxu0
        %v3227 = vsel %vm2857, %v2833, 0
        %v3230 = vsel %vm2857, %v2849, 0
        %3232 = vmatprep.subr.bf16.mxu0 0
        %3233 = vmatpush1.bf16.xpose.msra.mxu0 %v3230
        %3234 = vmatprep.subr.bf16.mxu0 0
        %3235 = vmatpush1.bf16.xpose.msra.mxu0 0
        %3236 = vmatprep.subr.bf16.mxu0 0
        %3237 = vmatpush1.bf16.xpose.msra.mxu0 0
        %3238 = vmatprep.subr.bf16.mxu0 0
        %3239 = vmatpush1.bf16.xpose.msra.mxu0 0
        %3240 = vmatprep.subr.bf16.mxu0 0
        %3241 = vmatpush1.bf16.xpose.msra.mxu0 0
        %3242 = vmatprep.subr.bf16.mxu0 0
        %3243 = vmatpush1.bf16.xpose.msra.mxu0 0
        %3244 = vmatprep.subr.bf16.mxu0 0
        %3245 = vmatpush1.bf16.xpose.msra.mxu0 0
        %3246 = vmatprep.subr.bf16.mxu0 0
        %3247 = vmatpush1.bf16.xpose.msra.mxu0 0
        %3248 = vmatprep.subr.bf16.mxu0 0
        %3249 = vmatpush1.bf16.xpose.msra.mxu0 0
        %3250 = vmatprep.subr.bf16.mxu0 0
        %3251 = vmatpush1.bf16.xpose.msra.mxu0 0
        %3252 = vmatprep.subr.bf16.mxu0 0
        %3253 = vmatpush1.bf16.xpose.msra.mxu0 0
        %3254 = vmatprep.subr.bf16.mxu0 0
        %3255 = vmatpush1.bf16.xpose.msra.mxu0 0
        %3256 = vmatprep.subr.bf16.mxu0 0
        %3257 = vmatpush1.bf16.xpose.msra.mxu0 0
        %3258 = vmatprep.subr.bf16.mxu0 0
        %3259 = vmatpush1.bf16.xpose.msra.mxu0 0
        %3260 = vmatprep.subr.bf16.mxu0 0
        %3261 = vmatpush1.bf16.xpose.msra.mxu0 0
        %3262 = vmatprep.subr.bf16.mxu0 0
        %3263 = vmatpush1.bf16.xpose.msra.mxu0 0
        %3264 = vmatprep.mubr.bf16.mxu0 0
        %3265 = vmatmul.mubr.bf16.gmra.mrb[0].mxu0 %v3227
        %v3266 = vpop.f32.mrb[0].mxu0
        %v3267 = vadd.f32 0.0, %v3266
        %v3268 = vpop.f32.mrb[0].mxu0
        %v3269 = vpop.f32.mrb[0].mxu0
        %v3270 = vpop.f32.mrb[0].mxu0
        %3271 = vdwg.mxu0
        %v3273 = vsel %vm2857, %v2834, 0
        %v3276 = vsel %vm2857, %v2850, 0
        %3278 = vmatprep.subr.bf16.mxu0 0
        %3279 = vmatpush1.bf16.xpose.msra.mxu0 %v3276
        %3280 = vmatprep.subr.bf16.mxu0 0
        %3281 = vmatpush1.bf16.xpose.msra.mxu0 0
        %3282 = vmatprep.subr.bf16.mxu0 0
        %3283 = vmatpush1.bf16.xpose.msra.mxu0 0
        %3284 = vmatprep.subr.bf16.mxu0 0
        %3285 = vmatpush1.bf16.xpose.msra.mxu0 0
        %3286 = vmatprep.subr.bf16.mxu0 0
        %3287 = vmatpush1.bf16.xpose.msra.mxu0 0
        %3288 = vmatprep.subr.bf16.mxu0 0
        %3289 = vmatpush1.bf16.xpose.msra.mxu0 0
        %3290 = vmatprep.subr.bf16.mxu0 0
        %3291 = vmatpush1.bf16.xpose.msra.mxu0 0
        %3292 = vmatprep.subr.bf16.mxu0 0
        %3293 = vmatpush1.bf16.xpose.msra.mxu0 0
        %3294 = vmatprep.subr.bf16.mxu0 0
        %3295 = vmatpush1.bf16.xpose.msra.mxu0 0
        %3296 = vmatprep.subr.bf16.mxu0 0
        %3297 = vmatpush1.bf16.xpose.msra.mxu0 0
        %3298 = vmatprep.subr.bf16.mxu0 0
        %3299 = vmatpush1.bf16.xpose.msra.mxu0 0
        %3300 = vmatprep.subr.bf16.mxu0 0
        %3301 = vmatpush1.bf16.xpose.msra.mxu0 0
        %3302 = vmatprep.subr.bf16.mxu0 0
        %3303 = vmatpush1.bf16.xpose.msra.mxu0 0
        %3304 = vmatprep.subr.bf16.mxu0 0
        %3305 = vmatpush1.bf16.xpose.msra.mxu0 0
        %3306 = vmatprep.subr.bf16.mxu0 0
        %3307 = vmatpush1.bf16.xpose.msra.mxu0 0
        %3308 = vmatprep.subr.bf16.mxu0 0
        %3309 = vmatpush1.bf16.xpose.msra.mxu0 0
        %3310 = vmatprep.mubr.bf16.mxu0 0
        %3311 = vmatmul.mubr.bf16.gmra.mrb[0].mxu0 %v3273
        %v3312 = vpop.f32.mrb[0].mxu0
        %v3313 = vadd.f32 0.0, %v3312
        %v3314 = vpop.f32.mrb[0].mxu0
        %v3315 = vpop.f32.mrb[0].mxu0
        %v3316 = vpop.f32.mrb[0].mxu0
        %3317 = vdwg.mxu0
        %v3319 = vsel %vm2857, %v2835, 0
        %v3322 = vsel %vm2857, %v2851, 0
        %3324 = vmatprep.subr.bf16.mxu0 0
        %3325 = vmatpush1.bf16.xpose.msra.mxu0 %v3322
        %3326 = vmatprep.subr.bf16.mxu0 0
        %3327 = vmatpush1.bf16.xpose.msra.mxu0 0
        %3328 = vmatprep.subr.bf16.mxu0 0
        %3329 = vmatpush1.bf16.xpose.msra.mxu0 0
        %3330 = vmatprep.subr.bf16.mxu0 0
        %3331 = vmatpush1.bf16.xpose.msra.mxu0 0
        %3332 = vmatprep.subr.bf16.mxu0 0
        %3333 = vmatpush1.bf16.xpose.msra.mxu0 0
        %3334 = vmatprep.subr.bf16.mxu0 0
        %3335 = vmatpush1.bf16.xpose.msra.mxu0 0
        %3336 = vmatprep.subr.bf16.mxu0 0
        %3337 = vmatpush1.bf16.xpose.msra.mxu0 0
        %3338 = vmatprep.subr.bf16.mxu0 0
        %3339 = vmatpush1.bf16.xpose.msra.mxu0 0
        %3340 = vmatprep.subr.bf16.mxu0 0
        %3341 = vmatpush1.bf16.xpose.msra.mxu0 0
        %3342 = vmatprep.subr.bf16.mxu0 0
        %3343 = vmatpush1.bf16.xpose.msra.mxu0 0
        %3344 = vmatprep.subr.bf16.mxu0 0
        %3345 = vmatpush1.bf16.xpose.msra.mxu0 0
        %3346 = vmatprep.subr.bf16.mxu0 0
        %3347 = vmatpush1.bf16.xpose.msra.mxu0 0
        %3348 = vmatprep.subr.bf16.mxu0 0
        %3349 = vmatpush1.bf16.xpose.msra.mxu0 0
        %3350 = vmatprep.subr.bf16.mxu0 0
        %3351 = vmatpush1.bf16.xpose.msra.mxu0 0
        %3352 = vmatprep.subr.bf16.mxu0 0
        %3353 = vmatpush1.bf16.xpose.msra.mxu0 0
        %3354 = vmatprep.subr.bf16.mxu0 0
        %3355 = vmatpush1.bf16.xpose.msra.mxu0 0
        %3356 = vmatprep.mubr.bf16.mxu0 0
        %3357 = vmatmul.mubr.bf16.gmra.mrb[0].mxu0 %v3319
        %v3358 = vpop.f32.mrb[0].mxu0
        %v3359 = vadd.f32 0.0, %v3358
        %v3360 = vpop.f32.mrb[0].mxu0
        %v3361 = vpop.f32.mrb[0].mxu0
        %v3362 = vpop.f32.mrb[0].mxu0
        %3363 = vdwg.mxu0
        %v3365 = vsel %vm2857, %v2836, 0
        %v3368 = vsel %vm2857, %v2852, 0
        %3370 = vmatprep.subr.bf16.mxu0 0
        %3371 = vmatpush1.bf16.xpose.msra.mxu0 %v3368
        %3372 = vmatprep.subr.bf16.mxu0 0
        %3373 = vmatpush1.bf16.xpose.msra.mxu0 0
        %3374 = vmatprep.subr.bf16.mxu0 0
        %3375 = vmatpush1.bf16.xpose.msra.mxu0 0
        %3376 = vmatprep.subr.bf16.mxu0 0
        %3377 = vmatpush1.bf16.xpose.msra.mxu0 0
        %3378 = vmatprep.subr.bf16.mxu0 0
        %3379 = vmatpush1.bf16.xpose.msra.mxu0 0
        %3380 = vmatprep.subr.bf16.mxu0 0
        %3381 = vmatpush1.bf16.xpose.msra.mxu0 0
        %3382 = vmatprep.subr.bf16.mxu0 0
        %3383 = vmatpush1.bf16.xpose.msra.mxu0 0
        %3384 = vmatprep.subr.bf16.mxu0 0
        %3385 = vmatpush1.bf16.xpose.msra.mxu0 0
        %3386 = vmatprep.subr.bf16.mxu0 0
        %3387 = vmatpush1.bf16.xpose.msra.mxu0 0
        %3388 = vmatprep.subr.bf16.mxu0 0
        %3389 = vmatpush1.bf16.xpose.msra.mxu0 0
        %3390 = vmatprep.subr.bf16.mxu0 0
        %3391 = vmatpush1.bf16.xpose.msra.mxu0 0
        %3392 = vmatprep.subr.bf16.mxu0 0
        %3393 = vmatpush1.bf16.xpose.msra.mxu0 0
        %3394 = vmatprep.subr.bf16.mxu0 0
        %3395 = vmatpush1.bf16.xpose.msra.mxu0 0
        %3396 = vmatprep.subr.bf16.mxu0 0
        %3397 = vmatpush1.bf16.xpose.msra.mxu0 0
        %3398 = vmatprep.subr.bf16.mxu0 0
        %3399 = vmatpush1.bf16.xpose.msra.mxu0 0
        %3400 = vmatprep.subr.bf16.mxu0 0
        %3401 = vmatpush1.bf16.xpose.msra.mxu0 0
        %3402 = vmatprep.mubr.bf16.mxu0 0
        %3403 = vmatmul.mubr.bf16.gmra.mrb[0].mxu0 %v3365
        %v3404 = vpop.f32.mrb[0].mxu0
        %v3405 = vadd.f32 0.0, %v3404
        %v3406 = vpop.f32.mrb[0].mxu0
        %v3407 = vpop.f32.mrb[0].mxu0
        %v3408 = vpop.f32.mrb[0].mxu0
        %3409 = vdwg.mxu0
        %v3411 = vsel %vm2857, %v2837, 0
        %v3414 = vsel %vm2857, %v2853, 0
        %3416 = vmatprep.subr.bf16.mxu0 0
        %3417 = vmatpush1.bf16.xpose.msra.mxu0 %v3414
        %3418 = vmatprep.subr.bf16.mxu0 0
        %3419 = vmatpush1.bf16.xpose.msra.mxu0 0
        %3420 = vmatprep.subr.bf16.mxu0 0
        %3421 = vmatpush1.bf16.xpose.msra.mxu0 0
        %3422 = vmatprep.subr.bf16.mxu0 0
        %3423 = vmatpush1.bf16.xpose.msra.mxu0 0
        %3424 = vmatprep.subr.bf16.mxu0 0
        %3425 = vmatpush1.bf16.xpose.msra.mxu0 0
        %3426 = vmatprep.subr.bf16.mxu0 0
        %3427 = vmatpush1.bf16.xpose.msra.mxu0 0
        %3428 = vmatprep.subr.bf16.mxu0 0
        %3429 = vmatpush1.bf16.xpose.msra.mxu0 0
        %3430 = vmatprep.subr.bf16.mxu0 0
        %3431 = vmatpush1.bf16.xpose.msra.mxu0 0
        %3432 = vmatprep.subr.bf16.mxu0 0
        %3433 = vmatpush1.bf16.xpose.msra.mxu0 0
        %3434 = vmatprep.subr.bf16.mxu0 0
        %3435 = vmatpush1.bf16.xpose.msra.mxu0 0
        %3436 = vmatprep.subr.bf16.mxu0 0
        %3437 = vmatpush1.bf16.xpose.msra.mxu0 0
        %3438 = vmatprep.subr.bf16.mxu0 0
        %3439 = vmatpush1.bf16.xpose.msra.mxu0 0
        %3440 = vmatprep.subr.bf16.mxu0 0
        %3441 = vmatpush1.bf16.xpose.msra.mxu0 0
        %3442 = vmatprep.subr.bf16.mxu0 0
        %3443 = vmatpush1.bf16.xpose.msra.mxu0 0
        %3444 = vmatprep.subr.bf16.mxu0 0
        %3445 = vmatpush1.bf16.xpose.msra.mxu0 0
        %3446 = vmatprep.subr.bf16.mxu0 0
        %3447 = vmatpush1.bf16.xpose.msra.mxu0 0
        %3448 = vmatprep.mubr.bf16.mxu0 0
        %3449 = vmatmul.mubr.bf16.gmra.mrb[0].mxu0 %v3411
        %v3450 = vpop.f32.mrb[0].mxu0
        %v3451 = vadd.f32 0.0, %v3450
        %v3452 = vpop.f32.mrb[0].mxu0
        %v3453 = vpop.f32.mrb[0].mxu0
        %v3454 = vpop.f32.mrb[0].mxu0
        %3455 = vdwg.mxu0
        %v3457 = vsel %vm2857, %v2838, 0
        %v3460 = vsel %vm2857, %v2854, 0
        %3462 = vmatprep.subr.bf16.mxu0 0
        %3463 = vmatpush1.bf16.xpose.msra.mxu0 %v3460
        %3464 = vmatprep.subr.bf16.mxu0 0
        %3465 = vmatpush1.bf16.xpose.msra.mxu0 0
        %3466 = vmatprep.subr.bf16.mxu0 0
        %3467 = vmatpush1.bf16.xpose.msra.mxu0 0
        %3468 = vmatprep.subr.bf16.mxu0 0
        %3469 = vmatpush1.bf16.xpose.msra.mxu0 0
        %3470 = vmatprep.subr.bf16.mxu0 0
        %3471 = vmatpush1.bf16.xpose.msra.mxu0 0
        %3472 = vmatprep.subr.bf16.mxu0 0
        %3473 = vmatpush1.bf16.xpose.msra.mxu0 0
        %3474 = vmatprep.subr.bf16.mxu0 0
        %3475 = vmatpush1.bf16.xpose.msra.mxu0 0
        %3476 = vmatprep.subr.bf16.mxu0 0
        %3477 = vmatpush1.bf16.xpose.msra.mxu0 0
        %3478 = vmatprep.subr.bf16.mxu0 0
        %3479 = vmatpush1.bf16.xpose.msra.mxu0 0
        %3480 = vmatprep.subr.bf16.mxu0 0
        %3481 = vmatpush1.bf16.xpose.msra.mxu0 0
        %3482 = vmatprep.subr.bf16.mxu0 0
        %3483 = vmatpush1.bf16.xpose.msra.mxu0 0
        %3484 = vmatprep.subr.bf16.mxu0 0
        %3485 = vmatpush1.bf16.xpose.msra.mxu0 0
        %3486 = vmatprep.subr.bf16.mxu0 0
        %3487 = vmatpush1.bf16.xpose.msra.mxu0 0
        %3488 = vmatprep.subr.bf16.mxu0 0
        %3489 = vmatpush1.bf16.xpose.msra.mxu0 0
        %3490 = vmatprep.subr.bf16.mxu0 0
        %3491 = vmatpush1.bf16.xpose.msra.mxu0 0
        %3492 = vmatprep.subr.bf16.mxu0 0
        %3493 = vmatpush1.bf16.xpose.msra.mxu0 0
        %3494 = vmatprep.mubr.bf16.mxu0 0
        %3495 = vmatmul.mubr.bf16.gmra.mrb[0].mxu0 %v3457
        %v3496 = vpop.f32.mrb[0].mxu0
        %v3497 = vadd.f32 0.0, %v3496
        %v3498 = vpop.f32.mrb[0].mxu0
        %v3499 = vpop.f32.mrb[0].mxu0
        %v3500 = vpop.f32.mrb[0].mxu0
        %3501 = vdwg.mxu0
        %v3503 = vsel %vm2857, %v2839, 0
        %v3506 = vsel %vm2857, %v2855, 0
        %3508 = vmatprep.subr.bf16.mxu0 0
        %3509 = vmatpush1.bf16.xpose.msra.mxu0 %v3506
        %3510 = vmatprep.subr.bf16.mxu0 0
        %3511 = vmatpush1.bf16.xpose.msra.mxu0 0
        %3512 = vmatprep.subr.bf16.mxu0 0
        %3513 = vmatpush1.bf16.xpose.msra.mxu0 0
        %3514 = vmatprep.subr.bf16.mxu0 0
        %3515 = vmatpush1.bf16.xpose.msra.mxu0 0
        %3516 = vmatprep.subr.bf16.mxu0 0
        %3517 = vmatpush1.bf16.xpose.msra.mxu0 0
        %3518 = vmatprep.subr.bf16.mxu0 0
        %3519 = vmatpush1.bf16.xpose.msra.mxu0 0
        %3520 = vmatprep.subr.bf16.mxu0 0
        %3521 = vmatpush1.bf16.xpose.msra.mxu0 0
        %3522 = vmatprep.subr.bf16.mxu0 0
        %3523 = vmatpush1.bf16.xpose.msra.mxu0 0
        %3524 = vmatprep.subr.bf16.mxu0 0
        %3525 = vmatpush1.bf16.xpose.msra.mxu0 0
        %3526 = vmatprep.subr.bf16.mxu0 0
        %3527 = vmatpush1.bf16.xpose.msra.mxu0 0
        %3528 = vmatprep.subr.bf16.mxu0 0
        %3529 = vmatpush1.bf16.xpose.msra.mxu0 0
        %3530 = vmatprep.subr.bf16.mxu0 0
        %3531 = vmatpush1.bf16.xpose.msra.mxu0 0
        %3532 = vmatprep.subr.bf16.mxu0 0
        %3533 = vmatpush1.bf16.xpose.msra.mxu0 0
        %3534 = vmatprep.subr.bf16.mxu0 0
        %3535 = vmatpush1.bf16.xpose.msra.mxu0 0
        %3536 = vmatprep.subr.bf16.mxu0 0
        %3537 = vmatpush1.bf16.xpose.msra.mxu0 0
        %3538 = vmatprep.subr.bf16.mxu0 0
        %3539 = vmatpush1.bf16.xpose.msra.mxu0 0
        %3540 = vmatprep.mubr.bf16.mxu0 0
        %3541 = vmatmul.mubr.bf16.gmra.mrb[0].mxu0 %v3503
        %v3542 = vpop.f32.mrb[0].mxu0
        %v3543 = vadd.f32 0.0, %v3542
        %v3544 = vpop.f32.mrb[0].mxu0
        %v3545 = vpop.f32.mrb[0].mxu0
        %v3546 = vpop.f32.mrb[0].mxu0
        %3547 = vdwg.mxu0
        %v3549 = vsel %vm2857, %v2840, 0
        %v3552 = vsel %vm2857, %v2856, 0
        %3554 = vmatprep.subr.bf16.mxu0 0
        %3555 = vmatpush1.bf16.xpose.msra.mxu0 %v3552
        %3556 = vmatprep.subr.bf16.mxu0 0
        %3557 = vmatpush1.bf16.xpose.msra.mxu0 0
        %3558 = vmatprep.subr.bf16.mxu0 0
        %3559 = vmatpush1.bf16.xpose.msra.mxu0 0
        %3560 = vmatprep.subr.bf16.mxu0 0
        %3561 = vmatpush1.bf16.xpose.msra.mxu0 0
        %3562 = vmatprep.subr.bf16.mxu0 0
        %3563 = vmatpush1.bf16.xpose.msra.mxu0 0
        %3564 = vmatprep.subr.bf16.mxu0 0
        %3565 = vmatpush1.bf16.xpose.msra.mxu0 0
        %3566 = vmatprep.subr.bf16.mxu0 0
        %3567 = vmatpush1.bf16.xpose.msra.mxu0 0
        %3568 = vmatprep.subr.bf16.mxu0 0
        %3569 = vmatpush1.bf16.xpose.msra.mxu0 0
        %3570 = vmatprep.subr.bf16.mxu0 0
        %3571 = vmatpush1.bf16.xpose.msra.mxu0 0
        %3572 = vmatprep.subr.bf16.mxu0 0
        %3573 = vmatpush1.bf16.xpose.msra.mxu0 0
        %3574 = vmatprep.subr.bf16.mxu0 0
        %3575 = vmatpush1.bf16.xpose.msra.mxu0 0
        %3576 = vmatprep.subr.bf16.mxu0 0
        %3577 = vmatpush1.bf16.xpose.msra.mxu0 0
        %3578 = vmatprep.subr.bf16.mxu0 0
        %3579 = vmatpush1.bf16.xpose.msra.mxu0 0
        %3580 = vmatprep.subr.bf16.mxu0 0
        %3581 = vmatpush1.bf16.xpose.msra.mxu0 0
        %3582 = vmatprep.subr.bf16.mxu0 0
        %3583 = vmatpush1.bf16.xpose.msra.mxu0 0
        %3584 = vmatprep.subr.bf16.mxu0 0
        %3585 = vmatpush1.bf16.xpose.msra.mxu0 0
        %3586 = vmatprep.mubr.bf16.mxu0 0
        %3587 = vmatmul.mubr.bf16.gmra.mrb[0].mxu0 %v3549
        %v3588 = vpop.f32.mrb[0].mxu0
        %v3589 = vadd.f32 0.0, %v3588
        %v3590 = vpop.f32.mrb[0].mxu0
        %v3591 = vpop.f32.mrb[0].mxu0
        %v3592 = vpop.f32.mrb[0].mxu0
        %3593 = vdwg.mxu0
        %v3594 = vmul.f32 %v2899, 0.5
        %v3595 = vmul.f32 %v2945, 0.5
        %v3596 = vmul.f32 %v2991, 0.5
        %v3597 = vmul.f32 %v3037, 0.5
        %v3598 = vmul.f32 %v3083, 0.5
        %v3599 = vmul.f32 %v3129, 0.5
        %v3600 = vmul.f32 %v3175, 0.5
        %v3601 = vmul.f32 %v3221, 0.5
        %v3602 = vmul.f32 %v3267, 0.5
        %v3603 = vmul.f32 %v3313, 0.5
        %v3604 = vmul.f32 %v3359, 0.5
        %v3605 = vmul.f32 %v3405, 0.5
        %v3606 = vmul.f32 %v3451, 0.5
        %v3607 = vmul.f32 %v3497, 0.5
        %v3608 = vmul.f32 %v3543, 0.5
        %v3609 = vmul.f32 %v3589, 0.5
        %v3610 = vadd.f32 %v3594, %v951
        %v3611 = vadd.f32 %v3595, %v951
        %v3612 = vadd.f32 %v3596, %v951
        %v3613 = vadd.f32 %v3597, %v951
        %v3614 = vadd.f32 %v3598, %v951
        %v3615 = vadd.f32 %v3599, %v951
        %v3616 = vadd.f32 %v3600, %v951
        %v3617 = vadd.f32 %v3601, %v951
        %v3618 = vadd.f32 %v3602, %v951
        %v3619 = vadd.f32 %v3603, %v951
        %v3620 = vadd.f32 %v3604, %v951
        %v3621 = vadd.f32 %v3605, %v951
        %v3622 = vadd.f32 %v3606, %v951
        %v3623 = vadd.f32 %v3607, %v951
        %v3624 = vadd.f32 %v3608, %v951
        %v3625 = vadd.f32 %v3609, %v951
        %vm3626 = vcmask 64512
        %v3627 = vsel %vm3626, %v3610, -inf
        %3628 = vmax.xlane.f32.xlu0 %v3627
        %v3629 = vpop.xlane.xlu0 %3628
        %v3630 = vsel %vm3626, %v3611, -inf
        %3631 = vmax.xlane.f32.xlu0 %v3630
        %v3632 = vpop.xlane.xlu0 %3631
        %v3633 = vsel %vm3626, %v3612, -inf
        %3634 = vmax.xlane.f32.xlu0 %v3633
        %v3635 = vpop.xlane.xlu0 %3634
        %v3636 = vsel %vm3626, %v3613, -inf
        %3637 = vmax.xlane.f32.xlu0 %v3636
        %v3638 = vpop.xlane.xlu0 %3637
        %v3639 = vsel %vm3626, %v3614, -inf
        %3640 = vmax.xlane.f32.xlu0 %v3639
        %v3641 = vpop.xlane.xlu0 %3640
        %v3642 = vsel %vm3626, %v3615, -inf
        %3643 = vmax.xlane.f32.xlu0 %v3642
        %v3644 = vpop.xlane.xlu0 %3643
        %v3645 = vsel %vm3626, %v3616, -inf
        %3646 = vmax.xlane.f32.xlu0 %v3645
        %v3647 = vpop.xlane.xlu0 %3646
        %v3648 = vsel %vm3626, %v3617, -inf
        %3649 = vmax.xlane.f32.xlu0 %v3648
        %v3650 = vpop.xlane.xlu0 %3649
        %v3651 = vsel %vm3626, %v3618, -inf
        %3652 = vmax.xlane.f32.xlu0 %v3651
        %v3653 = vpop.xlane.xlu0 %3652
        %v3654 = vsel %vm3626, %v3619, -inf
        %3655 = vmax.xlane.f32.xlu0 %v3654
        %v3656 = vpop.xlane.xlu0 %3655
        %v3657 = vsel %vm3626, %v3620, -inf
        %3658 = vmax.xlane.f32.xlu0 %v3657
        %v3659 = vpop.xlane.xlu0 %3658
        %v3660 = vsel %vm3626, %v3621, -inf
        %3661 = vmax.xlane.f32.xlu0 %v3660
        %v3662 = vpop.xlane.xlu0 %3661
        %v3663 = vsel %vm3626, %v3622, -inf
        %3664 = vmax.xlane.f32.xlu0 %v3663
        %v3665 = vpop.xlane.xlu0 %3664
        %v3666 = vsel %vm3626, %v3623, -inf
        %3667 = vmax.xlane.f32.xlu0 %v3666
        %v3668 = vpop.xlane.xlu0 %3667
        %v3669 = vsel %vm3626, %v3624, -inf
        %3670 = vmax.xlane.f32.xlu0 %v3669
        %v3671 = vpop.xlane.xlu0 %3670
        %v3672 = vsel %vm3626, %v3625, -inf
        %3673 = vmax.xlane.f32.xlu0 %v3672
        %v3674 = vpop.xlane.xlu0 %3673
        %v3675 = vsub.f32 %v3610, %v3629
        %v3676 = vsub.f32 %v3611, %v3632
        %v3677 = vsub.f32 %v3612, %v3635
        %v3678 = vsub.f32 %v3613, %v3638
        %v3679 = vsub.f32 %v3614, %v3641
        %v3680 = vsub.f32 %v3615, %v3644
        %v3681 = vsub.f32 %v3616, %v3647
        %v3682 = vsub.f32 %v3617, %v3650
        %v3683 = vsub.f32 %v3618, %v3653
        %v3684 = vsub.f32 %v3619, %v3656
        %v3685 = vsub.f32 %v3620, %v3659
        %v3686 = vsub.f32 %v3621, %v3662
        %v3687 = vsub.f32 %v3622, %v3665
        %v3688 = vsub.f32 %v3623, %v3668
        %v3689 = vsub.f32 %v3624, %v3671
        %v3690 = vsub.f32 %v3625, %v3674
        %v3691 = vmul.f32 %v3675, 1.442695
        %v3692 = vpow.pop %v3691
        %v3693 = vmul.f32 %v3676, 1.442695
        %v3694 = vpow.pop %v3693
        %v3695 = vmul.f32 %v3677, 1.442695
        %v3696 = vpow.pop %v3695
        %v3697 = vmul.f32 %v3678, 1.442695
        %v3698 = vpow.pop %v3697
        %v3699 = vmul.f32 %v3679, 1.442695
        %v3700 = vpow.pop %v3699
        %v3701 = vmul.f32 %v3680, 1.442695
        %v3702 = vpow.pop %v3701
        %v3703 = vmul.f32 %v3681, 1.442695
        %v3704 = vpow.pop %v3703
        %v3705 = vmul.f32 %v3682, 1.442695
        %v3706 = vpow.pop %v3705
        %v3707 = vmul.f32 %v3683, 1.442695
        %v3708 = vpow.pop %v3707
        %v3709 = vmul.f32 %v3684, 1.442695
        %v3710 = vpow.pop %v3709
        %v3711 = vmul.f32 %v3685, 1.442695
        %v3712 = vpow.pop %v3711
        %v3713 = vmul.f32 %v3686, 1.442695
        %v3714 = vpow.pop %v3713
        %v3715 = vmul.f32 %v3687, 1.442695
        %v3716 = vpow.pop %v3715
        %v3717 = vmul.f32 %v3688, 1.442695
        %v3718 = vpow.pop %v3717
        %v3719 = vmul.f32 %v3689, 1.442695
        %v3720 = vpow.pop %v3719
        %v3721 = vmul.f32 %v3690, 1.442695
        %v3722 = vpow.pop %v3721
        %v3723 = vsel %vm3626, %v3692, 0.0
        %3724 = vadd.xlane.f32.xlu0 %v3723
        %v3725 = vpop.xlane.xlu0 %3724
        %v3726 = vsel %vm3626, %v3694, 0.0
        %3727 = vadd.xlane.f32.xlu0 %v3726
        %v3728 = vpop.xlane.xlu0 %3727
        %v3729 = vsel %vm3626, %v3696, 0.0
        %3730 = vadd.xlane.f32.xlu0 %v3729
        %v3731 = vpop.xlane.xlu0 %3730
        %v3732 = vsel %vm3626, %v3698, 0.0
        %3733 = vadd.xlane.f32.xlu0 %v3732
        %v3734 = vpop.xlane.xlu0 %3733
        %v3735 = vsel %vm3626, %v3700, 0.0
        %3736 = vadd.xlane.f32.xlu0 %v3735
        %v3737 = vpop.xlane.xlu0 %3736
        %v3738 = vsel %vm3626, %v3702, 0.0
        %3739 = vadd.xlane.f32.xlu0 %v3738
        %v3740 = vpop.xlane.xlu0 %3739
        %v3741 = vsel %vm3626, %v3704, 0.0
        %3742 = vadd.xlane.f32.xlu0 %v3741
        %v3743 = vpop.xlane.xlu0 %3742
        %v3744 = vsel %vm3626, %v3706, 0.0
        %3745 = vadd.xlane.f32.xlu0 %v3744
        %v3746 = vpop.xlane.xlu0 %3745
        %v3747 = vsel %vm3626, %v3708, 0.0
        %3748 = vadd.xlane.f32.xlu0 %v3747
        %v3749 = vpop.xlane.xlu0 %3748
        %v3750 = vsel %vm3626, %v3710, 0.0
        %3751 = vadd.xlane.f32.xlu0 %v3750
        %v3752 = vpop.xlane.xlu0 %3751
        %v3753 = vsel %vm3626, %v3712, 0.0
        %3754 = vadd.xlane.f32.xlu0 %v3753
        %v3755 = vpop.xlane.xlu0 %3754
        %v3756 = vsel %vm3626, %v3714, 0.0
        %3757 = vadd.xlane.f32.xlu0 %v3756
        %v3758 = vpop.xlane.xlu0 %3757
        %v3759 = vsel %vm3626, %v3716, 0.0
        %3760 = vadd.xlane.f32.xlu0 %v3759
        %v3761 = vpop.xlane.xlu0 %3760
        %v3762 = vsel %vm3626, %v3718, 0.0
        %3763 = vadd.xlane.f32.xlu0 %v3762
        %v3764 = vpop.xlane.xlu0 %3763
        %v3765 = vsel %vm3626, %v3720, 0.0
        %3766 = vadd.xlane.f32.xlu0 %v3765
        %v3767 = vpop.xlane.xlu0 %3766
        %v3768 = vsel %vm3626, %v3722, 0.0
        %3769 = vadd.xlane.f32.xlu0 %v3768
        %v3770 = vpop.xlane.xlu0 %3769
        %v3771 = vrcp.pop %v3725
        %v3772 = vrcp.pop %v3728
        %v3773 = vrcp.pop %v3731
        %v3774 = vrcp.pop %v3734
        %v3775 = vrcp.pop %v3737
        %v3776 = vrcp.pop %v3740
        %v3777 = vrcp.pop %v3743
        %v3778 = vrcp.pop %v3746
        %v3779 = vrcp.pop %v3749
        %v3780 = vrcp.pop %v3752
        %v3781 = vrcp.pop %v3755
        %v3782 = vrcp.pop %v3758
        %v3783 = vrcp.pop %v3761
        %v3784 = vrcp.pop %v3764
        %v3785 = vrcp.pop %v3767
        %v3786 = vrcp.pop %v3770
        %v3787 = vmul.f32 %v3692, %v3771
        %v3788 = vmul.f32 %v3694, %v3772
        %v3789 = vmul.f32 %v3696, %v3773
        %v3790 = vmul.f32 %v3698, %v3774
        %v3791 = vmul.f32 %v3700, %v3775
        %v3792 = vmul.f32 %v3702, %v3776
        %v3793 = vmul.f32 %v3704, %v3777
        %v3794 = vmul.f32 %v3706, %v3778
        %v3795 = vmul.f32 %v3708, %v3779
        %v3796 = vmul.f32 %v3710, %v3780
        %v3797 = vmul.f32 %v3712, %v3781
        %v3798 = vmul.f32 %v3714, %v3782
        %v3799 = vmul.f32 %v3716, %v3783
        %v3800 = vmul.f32 %v3718, %v3784
        %v3801 = vmul.f32 %v3720, %v3785
        %v3802 = vmul.f32 %v3722, %v3786
        %v3803 = vpack.c.bf16 %v3787, %v3787
        %v3804 = vpack.c.bf16 %v3788, %v3788
        %v3805 = vpack.c.bf16 %v3789, %v3789
        %v3806 = vpack.c.bf16 %v3790, %v3790
        %v3807 = vpack.c.bf16 %v3791, %v3791
        %v3808 = vpack.c.bf16 %v3792, %v3792
        %v3809 = vpack.c.bf16 %v3793, %v3793
        %v3810 = vpack.c.bf16 %v3794, %v3794
        %v3811 = vpack.c.bf16 %v3795, %v3795
        %v3812 = vpack.c.bf16 %v3796, %v3796
        %v3813 = vpack.c.bf16 %v3797, %v3797
        %v3814 = vpack.c.bf16 %v3798, %v3798
        %v3815 = vpack.c.bf16 %v3799, %v3799
        %v3816 = vpack.c.bf16 %v3800, %v3800
        %v3817 = vpack.c.bf16 %v3801, %v3801
        %v3818 = vpack.c.bf16 %v3802, %v3802
        %v3819 = vpack.c.bf16 %v2681, %v2681
        %v3820 = vpack.c.bf16 %v2817, %v2817
        %v3821 = vpack.c.bf16 %v2682, %v2682
        %v3822 = vpack.c.bf16 %v2818, %v2818
        %v3823 = vpack.c.bf16 %v2683, %v2683
        %v3824 = vpack.c.bf16 %v2819, %v2819
        %v3825 = vpack.c.bf16 %v2684, %v2684
        %v3826 = vpack.c.bf16 %v2820, %v2820
        %v3827 = vpack.c.bf16 %v2685, %v2685
        %v3828 = vpack.c.bf16 %v2821, %v2821
        %v3829 = vpack.c.bf16 %v2686, %v2686
        %v3830 = vpack.c.bf16 %v2822, %v2822
        %v3831 = vpack.c.bf16 %v2687, %v2687
        %v3832 = vpack.c.bf16 %v2823, %v2823
        %v3833 = vpack.c.bf16 %v2688, %v2688
        %v3834 = vpack.c.bf16 %v2824, %v2824
        %v3836 = vsel %vm3626, %v3803, 0
        %vm3838 = vcmask 1043456
        %v3840 = vsel %vm3838, %v3819, 0
        %3842 = vmatprep.subr.bf16.mxu0 0
        %3843 = vmatpush1.bf16.msra.mxu0 %v3840
        %3844 = vmatprep.subr.bf16.mxu0 0
        %3845 = vmatpush1.bf16.msra.mxu0 0
        %3846 = vmatprep.subr.bf16.mxu0 0
        %3847 = vmatpush1.bf16.msra.mxu0 0
        %3848 = vmatprep.subr.bf16.mxu0 0
        %3849 = vmatpush1.bf16.msra.mxu0 0
        %3850 = vmatprep.subr.bf16.mxu0 0
        %3851 = vmatpush1.bf16.msra.mxu0 0
        %3852 = vmatprep.subr.bf16.mxu0 0
        %3853 = vmatpush1.bf16.msra.mxu0 0
        %3854 = vmatprep.subr.bf16.mxu0 0
        %3855 = vmatpush1.bf16.msra.mxu0 0
        %3856 = vmatprep.subr.bf16.mxu0 0
        %3857 = vmatpush1.bf16.msra.mxu0 0
        %3858 = vmatprep.subr.bf16.mxu0 0
        %3859 = vmatpush1.bf16.msra.mxu0 0
        %3860 = vmatprep.subr.bf16.mxu0 0
        %3861 = vmatpush1.bf16.msra.mxu0 0
        %3862 = vmatprep.subr.bf16.mxu0 0
        %3863 = vmatpush1.bf16.msra.mxu0 0
        %3864 = vmatprep.subr.bf16.mxu0 0
        %3865 = vmatpush1.bf16.msra.mxu0 0
        %3866 = vmatprep.subr.bf16.mxu0 0
        %3867 = vmatpush1.bf16.msra.mxu0 0
        %3868 = vmatprep.subr.bf16.mxu0 0
        %3869 = vmatpush1.bf16.msra.mxu0 0
        %3870 = vmatprep.subr.bf16.mxu0 0
        %3871 = vmatpush1.bf16.msra.mxu0 0
        %3872 = vmatprep.subr.bf16.mxu0 0
        %3873 = vmatpush1.bf16.msra.mxu0 0
        %3874 = vmatprep.mubr.bf16.mxu0 0
        %3875 = vmatmul.mubr.bf16.gmra.mrb[0].mxu0 %v3836
        %v3876 = vpop.f32.mrb[0].mxu0
        %v3877 = vadd.f32 0.0, %v3876
        %v3878 = vpop.f32.mrb[0].mxu0
        %v3879 = vpop.f32.mrb[0].mxu0
        %v3880 = vpop.f32.mrb[0].mxu0
        %3881 = vdwg.mxu0
        %v3883 = vsel %vm3626, %v3804, 0
        %v3886 = vsel %vm3838, %v3820, 0
        %3888 = vmatprep.subr.bf16.mxu0 0
        %3889 = vmatpush1.bf16.msra.mxu0 %v3886
        %3890 = vmatprep.subr.bf16.mxu0 0
        %3891 = vmatpush1.bf16.msra.mxu0 0
        %3892 = vmatprep.subr.bf16.mxu0 0
        %3893 = vmatpush1.bf16.msra.mxu0 0
        %3894 = vmatprep.subr.bf16.mxu0 0
        %3895 = vmatpush1.bf16.msra.mxu0 0
        %3896 = vmatprep.subr.bf16.mxu0 0
        %3897 = vmatpush1.bf16.msra.mxu0 0
        %3898 = vmatprep.subr.bf16.mxu0 0
        %3899 = vmatpush1.bf16.msra.mxu0 0
        %3900 = vmatprep.subr.bf16.mxu0 0
        %3901 = vmatpush1.bf16.msra.mxu0 0
        %3902 = vmatprep.subr.bf16.mxu0 0
        %3903 = vmatpush1.bf16.msra.mxu0 0
        %3904 = vmatprep.subr.bf16.mxu0 0
        %3905 = vmatpush1.bf16.msra.mxu0 0
        %3906 = vmatprep.subr.bf16.mxu0 0
        %3907 = vmatpush1.bf16.msra.mxu0 0
        %3908 = vmatprep.subr.bf16.mxu0 0
        %3909 = vmatpush1.bf16.msra.mxu0 0
        %3910 = vmatprep.subr.bf16.mxu0 0
        %3911 = vmatpush1.bf16.msra.mxu0 0
        %3912 = vmatprep.subr.bf16.mxu0 0
        %3913 = vmatpush1.bf16.msra.mxu0 0
        %3914 = vmatprep.subr.bf16.mxu0 0
        %3915 = vmatpush1.bf16.msra.mxu0 0
        %3916 = vmatprep.subr.bf16.mxu0 0
        %3917 = vmatpush1.bf16.msra.mxu0 0
        %3918 = vmatprep.subr.bf16.mxu0 0
        %3919 = vmatpush1.bf16.msra.mxu0 0
        %3920 = vmatprep.mubr.bf16.mxu0 0
        %3921 = vmatmul.mubr.bf16.gmra.mrb[0].mxu0 %v3883
        %v3922 = vpop.f32.mrb[0].mxu0
        %v3923 = vadd.f32 0.0, %v3922
        %v3924 = vpop.f32.mrb[0].mxu0
        %v3925 = vpop.f32.mrb[0].mxu0
        %v3926 = vpop.f32.mrb[0].mxu0
        %3927 = vdwg.mxu0
        %v3929 = vsel %vm3626, %v3805, 0
        %v3932 = vsel %vm3838, %v3821, 0
        %3934 = vmatprep.subr.bf16.mxu0 0
        %3935 = vmatpush1.bf16.msra.mxu0 %v3932
        %3936 = vmatprep.subr.bf16.mxu0 0
        %3937 = vmatpush1.bf16.msra.mxu0 0
        %3938 = vmatprep.subr.bf16.mxu0 0
        %3939 = vmatpush1.bf16.msra.mxu0 0
        %3940 = vmatprep.subr.bf16.mxu0 0
        %3941 = vmatpush1.bf16.msra.mxu0 0
        %3942 = vmatprep.subr.bf16.mxu0 0
        %3943 = vmatpush1.bf16.msra.mxu0 0
        %3944 = vmatprep.subr.bf16.mxu0 0
        %3945 = vmatpush1.bf16.msra.mxu0 0
        %3946 = vmatprep.subr.bf16.mxu0 0
        %3947 = vmatpush1.bf16.msra.mxu0 0
        %3948 = vmatprep.subr.bf16.mxu0 0
        %3949 = vmatpush1.bf16.msra.mxu0 0
        %3950 = vmatprep.subr.bf16.mxu0 0
        %3951 = vmatpush1.bf16.msra.mxu0 0
        %3952 = vmatprep.subr.bf16.mxu0 0
        %3953 = vmatpush1.bf16.msra.mxu0 0
        %3954 = vmatprep.subr.bf16.mxu0 0
        %3955 = vmatpush1.bf16.msra.mxu0 0
        %3956 = vmatprep.subr.bf16.mxu0 0
        %3957 = vmatpush1.bf16.msra.mxu0 0
        %3958 = vmatprep.subr.bf16.mxu0 0
        %3959 = vmatpush1.bf16.msra.mxu0 0
        %3960 = vmatprep.subr.bf16.mxu0 0
        %3961 = vmatpush1.bf16.msra.mxu0 0
        %3962 = vmatprep.subr.bf16.mxu0 0
        %3963 = vmatpush1.bf16.msra.mxu0 0
        %3964 = vmatprep.subr.bf16.mxu0 0
        %3965 = vmatpush1.bf16.msra.mxu0 0
        %3966 = vmatprep.mubr.bf16.mxu0 0
        %3967 = vmatmul.mubr.bf16.gmra.mrb[0].mxu0 %v3929
        %v3968 = vpop.f32.mrb[0].mxu0
        %v3969 = vadd.f32 0.0, %v3968
        %v3970 = vpop.f32.mrb[0].mxu0
        %v3971 = vpop.f32.mrb[0].mxu0
        %v3972 = vpop.f32.mrb[0].mxu0
        %3973 = vdwg.mxu0
        %v3975 = vsel %vm3626, %v3806, 0
        %v3978 = vsel %vm3838, %v3822, 0
        %3980 = vmatprep.subr.bf16.mxu0 0
        %3981 = vmatpush1.bf16.msra.mxu0 %v3978
        %3982 = vmatprep.subr.bf16.mxu0 0
        %3983 = vmatpush1.bf16.msra.mxu0 0
        %3984 = vmatprep.subr.bf16.mxu0 0
        %3985 = vmatpush1.bf16.msra.mxu0 0
        %3986 = vmatprep.subr.bf16.mxu0 0
        %3987 = vmatpush1.bf16.msra.mxu0 0
        %3988 = vmatprep.subr.bf16.mxu0 0
        %3989 = vmatpush1.bf16.msra.mxu0 0
        %3990 = vmatprep.subr.bf16.mxu0 0
        %3991 = vmatpush1.bf16.msra.mxu0 0
        %3992 = vmatprep.subr.bf16.mxu0 0
        %3993 = vmatpush1.bf16.msra.mxu0 0
        %3994 = vmatprep.subr.bf16.mxu0 0
        %3995 = vmatpush1.bf16.msra.mxu0 0
        %3996 = vmatprep.subr.bf16.mxu0 0
        %3997 = vmatpush1.bf16.msra.mxu0 0
        %3998 = vmatprep.subr.bf16.mxu0 0
        %3999 = vmatpush1.bf16.msra.mxu0 0
        %4000 = vmatprep.subr.bf16.mxu0 0
        %4001 = vmatpush1.bf16.msra.mxu0 0
        %4002 = vmatprep.subr.bf16.mxu0 0
        %4003 = vmatpush1.bf16.msra.mxu0 0
        %4004 = vmatprep.subr.bf16.mxu0 0
        %4005 = vmatpush1.bf16.msra.mxu0 0
        %4006 = vmatprep.subr.bf16.mxu0 0
        %4007 = vmatpush1.bf16.msra.mxu0 0
        %4008 = vmatprep.subr.bf16.mxu0 0
        %4009 = vmatpush1.bf16.msra.mxu0 0
        %4010 = vmatprep.subr.bf16.mxu0 0
        %4011 = vmatpush1.bf16.msra.mxu0 0
        %4012 = vmatprep.mubr.bf16.mxu0 0
        %4013 = vmatmul.mubr.bf16.gmra.mrb[0].mxu0 %v3975
        %v4014 = vpop.f32.mrb[0].mxu0
        %v4015 = vadd.f32 0.0, %v4014
        %v4016 = vpop.f32.mrb[0].mxu0
        %v4017 = vpop.f32.mrb[0].mxu0
        %v4018 = vpop.f32.mrb[0].mxu0
        %4019 = vdwg.mxu0
        %v4021 = vsel %vm3626, %v3807, 0
        %v4024 = vsel %vm3838, %v3823, 0
        %4026 = vmatprep.subr.bf16.mxu0 0
        %4027 = vmatpush1.bf16.msra.mxu0 %v4024
        %4028 = vmatprep.subr.bf16.mxu0 0
        %4029 = vmatpush1.bf16.msra.mxu0 0
        %4030 = vmatprep.subr.bf16.mxu0 0
        %4031 = vmatpush1.bf16.msra.mxu0 0
        %4032 = vmatprep.subr.bf16.mxu0 0
        %4033 = vmatpush1.bf16.msra.mxu0 0
        %4034 = vmatprep.subr.bf16.mxu0 0
        %4035 = vmatpush1.bf16.msra.mxu0 0
        %4036 = vmatprep.subr.bf16.mxu0 0
        %4037 = vmatpush1.bf16.msra.mxu0 0
        %4038 = vmatprep.subr.bf16.mxu0 0
        %4039 = vmatpush1.bf16.msra.mxu0 0
        %4040 = vmatprep.subr.bf16.mxu0 0
        %4041 = vmatpush1.bf16.msra.mxu0 0
        %4042 = vmatprep.subr.bf16.mxu0 0
        %4043 = vmatpush1.bf16.msra.mxu0 0
        %4044 = vmatprep.subr.bf16.mxu0 0
        %4045 = vmatpush1.bf16.msra.mxu0 0
        %4046 = vmatprep.subr.bf16.mxu0 0
        %4047 = vmatpush1.bf16.msra.mxu0 0
        %4048 = vmatprep.subr.bf16.mxu0 0
        %4049 = vmatpush1.bf16.msra.mxu0 0
        %4050 = vmatprep.subr.bf16.mxu0 0
        %4051 = vmatpush1.bf16.msra.mxu0 0
        %4052 = vmatprep.subr.bf16.mxu0 0
        %4053 = vmatpush1.bf16.msra.mxu0 0
        %4054 = vmatprep.subr.bf16.mxu0 0
        %4055 = vmatpush1.bf16.msra.mxu0 0
        %4056 = vmatprep.subr.bf16.mxu0 0
        %4057 = vmatpush1.bf16.msra.mxu0 0
        %4058 = vmatprep.mubr.bf16.mxu0 0
        %4059 = vmatmul.mubr.bf16.gmra.mrb[0].mxu0 %v4021
        %v4060 = vpop.f32.mrb[0].mxu0
        %v4061 = vadd.f32 0.0, %v4060
        %v4062 = vpop.f32.mrb[0].mxu0
        %v4063 = vpop.f32.mrb[0].mxu0
        %v4064 = vpop.f32.mrb[0].mxu0
        %4065 = vdwg.mxu0
        %v4067 = vsel %vm3626, %v3808, 0
        %v4070 = vsel %vm3838, %v3824, 0
        %4072 = vmatprep.subr.bf16.mxu0 0
        %4073 = vmatpush1.bf16.msra.mxu0 %v4070
        %4074 = vmatprep.subr.bf16.mxu0 0
        %4075 = vmatpush1.bf16.msra.mxu0 0
        %4076 = vmatprep.subr.bf16.mxu0 0
        %4077 = vmatpush1.bf16.msra.mxu0 0
        %4078 = vmatprep.subr.bf16.mxu0 0
        %4079 = vmatpush1.bf16.msra.mxu0 0
        %4080 = vmatprep.subr.bf16.mxu0 0
        %4081 = vmatpush1.bf16.msra.mxu0 0
        %4082 = vmatprep.subr.bf16.mxu0 0
        %4083 = vmatpush1.bf16.msra.mxu0 0
        %4084 = vmatprep.subr.bf16.mxu0 0
        %4085 = vmatpush1.bf16.msra.mxu0 0
        %4086 = vmatprep.subr.bf16.mxu0 0
        %4087 = vmatpush1.bf16.msra.mxu0 0
        %4088 = vmatprep.subr.bf16.mxu0 0
        %4089 = vmatpush1.bf16.msra.mxu0 0
        %4090 = vmatprep.subr.bf16.mxu0 0
        %4091 = vmatpush1.bf16.msra.mxu0 0
        %4092 = vmatprep.subr.bf16.mxu0 0
        %4093 = vmatpush1.bf16.msra.mxu0 0
        %4094 = vmatprep.subr.bf16.mxu0 0
        %4095 = vmatpush1.bf16.msra.mxu0 0
        %4096 = vmatprep.subr.bf16.mxu0 0
        %4097 = vmatpush1.bf16.msra.mxu0 0
        %4098 = vmatprep.subr.bf16.mxu0 0
        %4099 = vmatpush1.bf16.msra.mxu0 0
        %4100 = vmatprep.subr.bf16.mxu0 0
        %4101 = vmatpush1.bf16.msra.mxu0 0
        %4102 = vmatprep.subr.bf16.mxu0 0
        %4103 = vmatpush1.bf16.msra.mxu0 0
        %4104 = vmatprep.mubr.bf16.mxu0 0
        %4105 = vmatmul.mubr.bf16.gmra.mrb[0].mxu0 %v4067
        %v4106 = vpop.f32.mrb[0].mxu0
        %v4107 = vadd.f32 0.0, %v4106
        %v4108 = vpop.f32.mrb[0].mxu0
        %v4109 = vpop.f32.mrb[0].mxu0
        %v4110 = vpop.f32.mrb[0].mxu0
        %4111 = vdwg.mxu0
        %v4113 = vsel %vm3626, %v3809, 0
        %v4116 = vsel %vm3838, %v3825, 0
        %4118 = vmatprep.subr.bf16.mxu0 0
        %4119 = vmatpush1.bf16.msra.mxu0 %v4116
        %4120 = vmatprep.subr.bf16.mxu0 0
        %4121 = vmatpush1.bf16.msra.mxu0 0
        %4122 = vmatprep.subr.bf16.mxu0 0
        %4123 = vmatpush1.bf16.msra.mxu0 0
        %4124 = vmatprep.subr.bf16.mxu0 0
        %4125 = vmatpush1.bf16.msra.mxu0 0
        %4126 = vmatprep.subr.bf16.mxu0 0
        %4127 = vmatpush1.bf16.msra.mxu0 0
        %4128 = vmatprep.subr.bf16.mxu0 0
        %4129 = vmatpush1.bf16.msra.mxu0 0
        %4130 = vmatprep.subr.bf16.mxu0 0
        %4131 = vmatpush1.bf16.msra.mxu0 0
        %4132 = vmatprep.subr.bf16.mxu0 0
        %4133 = vmatpush1.bf16.msra.mxu0 0
        %4134 = vmatprep.subr.bf16.mxu0 0
        %4135 = vmatpush1.bf16.msra.mxu0 0
        %4136 = vmatprep.subr.bf16.mxu0 0
        %4137 = vmatpush1.bf16.msra.mxu0 0
        %4138 = vmatprep.subr.bf16.mxu0 0
        %4139 = vmatpush1.bf16.msra.mxu0 0
        %4140 = vmatprep.subr.bf16.mxu0 0
        %4141 = vmatpush1.bf16.msra.mxu0 0
        %4142 = vmatprep.subr.bf16.mxu0 0
        %4143 = vmatpush1.bf16.msra.mxu0 0
        %4144 = vmatprep.subr.bf16.mxu0 0
        %4145 = vmatpush1.bf16.msra.mxu0 0
        %4146 = vmatprep.subr.bf16.mxu0 0
        %4147 = vmatpush1.bf16.msra.mxu0 0
        %4148 = vmatprep.subr.bf16.mxu0 0
        %4149 = vmatpush1.bf16.msra.mxu0 0
        %4150 = vmatprep.mubr.bf16.mxu0 0
        %4151 = vmatmul.mubr.bf16.gmra.mrb[0].mxu0 %v4113
        %v4152 = vpop.f32.mrb[0].mxu0
        %v4153 = vadd.f32 0.0, %v4152
        %v4154 = vpop.f32.mrb[0].mxu0
        %v4155 = vpop.f32.mrb[0].mxu0
        %v4156 = vpop.f32.mrb[0].mxu0
        %4157 = vdwg.mxu0
        %v4159 = vsel %vm3626, %v3810, 0
        %v4162 = vsel %vm3838, %v3826, 0
        %4164 = vmatprep.subr.bf16.mxu0 0
        %4165 = vmatpush1.bf16.msra.mxu0 %v4162
        %4166 = vmatprep.subr.bf16.mxu0 0
        %4167 = vmatpush1.bf16.msra.mxu0 0
        %4168 = vmatprep.subr.bf16.mxu0 0
        %4169 = vmatpush1.bf16.msra.mxu0 0
        %4170 = vmatprep.subr.bf16.mxu0 0
        %4171 = vmatpush1.bf16.msra.mxu0 0
        %4172 = vmatprep.subr.bf16.mxu0 0
        %4173 = vmatpush1.bf16.msra.mxu0 0
        %4174 = vmatprep.subr.bf16.mxu0 0
        %4175 = vmatpush1.bf16.msra.mxu0 0
        %4176 = vmatprep.subr.bf16.mxu0 0
        %4177 = vmatpush1.bf16.msra.mxu0 0
        %4178 = vmatprep.subr.bf16.mxu0 0
        %4179 = vmatpush1.bf16.msra.mxu0 0
        %4180 = vmatprep.subr.bf16.mxu0 0
        %4181 = vmatpush1.bf16.msra.mxu0 0
        %4182 = vmatprep.subr.bf16.mxu0 0
        %4183 = vmatpush1.bf16.msra.mxu0 0
        %4184 = vmatprep.subr.bf16.mxu0 0
        %4185 = vmatpush1.bf16.msra.mxu0 0
        %4186 = vmatprep.subr.bf16.mxu0 0
        %4187 = vmatpush1.bf16.msra.mxu0 0
        %4188 = vmatprep.subr.bf16.mxu0 0
        %4189 = vmatpush1.bf16.msra.mxu0 0
        %4190 = vmatprep.subr.bf16.mxu0 0
        %4191 = vmatpush1.bf16.msra.mxu0 0
        %4192 = vmatprep.subr.bf16.mxu0 0
        %4193 = vmatpush1.bf16.msra.mxu0 0
        %4194 = vmatprep.subr.bf16.mxu0 0
        %4195 = vmatpush1.bf16.msra.mxu0 0
        %4196 = vmatprep.mubr.bf16.mxu0 0
        %4197 = vmatmul.mubr.bf16.gmra.mrb[0].mxu0 %v4159
        %v4198 = vpop.f32.mrb[0].mxu0
        %v4199 = vadd.f32 0.0, %v4198
        %v4200 = vpop.f32.mrb[0].mxu0
        %v4201 = vpop.f32.mrb[0].mxu0
        %v4202 = vpop.f32.mrb[0].mxu0
        %4203 = vdwg.mxu0
        %v4205 = vsel %vm3626, %v3811, 0
        %v4208 = vsel %vm3838, %v3827, 0
        %4210 = vmatprep.subr.bf16.mxu0 0
        %4211 = vmatpush1.bf16.msra.mxu0 %v4208
        %4212 = vmatprep.subr.bf16.mxu0 0
        %4213 = vmatpush1.bf16.msra.mxu0 0
        %4214 = vmatprep.subr.bf16.mxu0 0
        %4215 = vmatpush1.bf16.msra.mxu0 0
        %4216 = vmatprep.subr.bf16.mxu0 0
        %4217 = vmatpush1.bf16.msra.mxu0 0
        %4218 = vmatprep.subr.bf16.mxu0 0
        %4219 = vmatpush1.bf16.msra.mxu0 0
        %4220 = vmatprep.subr.bf16.mxu0 0
        %4221 = vmatpush1.bf16.msra.mxu0 0
        %4222 = vmatprep.subr.bf16.mxu0 0
        %4223 = vmatpush1.bf16.msra.mxu0 0
        %4224 = vmatprep.subr.bf16.mxu0 0
        %4225 = vmatpush1.bf16.msra.mxu0 0
        %4226 = vmatprep.subr.bf16.mxu0 0
        %4227 = vmatpush1.bf16.msra.mxu0 0
        %4228 = vmatprep.subr.bf16.mxu0 0
        %4229 = vmatpush1.bf16.msra.mxu0 0
        %4230 = vmatprep.subr.bf16.mxu0 0
        %4231 = vmatpush1.bf16.msra.mxu0 0
        %4232 = vmatprep.subr.bf16.mxu0 0
        %4233 = vmatpush1.bf16.msra.mxu0 0
        %4234 = vmatprep.subr.bf16.mxu0 0
        %4235 = vmatpush1.bf16.msra.mxu0 0
        %4236 = vmatprep.subr.bf16.mxu0 0
        %4237 = vmatpush1.bf16.msra.mxu0 0
        %4238 = vmatprep.subr.bf16.mxu0 0
        %4239 = vmatpush1.bf16.msra.mxu0 0
        %4240 = vmatprep.subr.bf16.mxu0 0
        %4241 = vmatpush1.bf16.msra.mxu0 0
        %4242 = vmatprep.mubr.bf16.mxu0 0
        %4243 = vmatmul.mubr.bf16.gmra.mrb[0].mxu0 %v4205
        %v4244 = vpop.f32.mrb[0].mxu0
        %v4245 = vadd.f32 0.0, %v4244
        %v4246 = vpop.f32.mrb[0].mxu0
        %v4247 = vpop.f32.mrb[0].mxu0
        %v4248 = vpop.f32.mrb[0].mxu0
        %4249 = vdwg.mxu0
        %v4251 = vsel %vm3626, %v3812, 0
        %v4254 = vsel %vm3838, %v3828, 0
        %4256 = vmatprep.subr.bf16.mxu0 0
        %4257 = vmatpush1.bf16.msra.mxu0 %v4254
        %4258 = vmatprep.subr.bf16.mxu0 0
        %4259 = vmatpush1.bf16.msra.mxu0 0
        %4260 = vmatprep.subr.bf16.mxu0 0
        %4261 = vmatpush1.bf16.msra.mxu0 0
        %4262 = vmatprep.subr.bf16.mxu0 0
        %4263 = vmatpush1.bf16.msra.mxu0 0
        %4264 = vmatprep.subr.bf16.mxu0 0
        %4265 = vmatpush1.bf16.msra.mxu0 0
        %4266 = vmatprep.subr.bf16.mxu0 0
        %4267 = vmatpush1.bf16.msra.mxu0 0
        %4268 = vmatprep.subr.bf16.mxu0 0
        %4269 = vmatpush1.bf16.msra.mxu0 0
        %4270 = vmatprep.subr.bf16.mxu0 0
        %4271 = vmatpush1.bf16.msra.mxu0 0
        %4272 = vmatprep.subr.bf16.mxu0 0
        %4273 = vmatpush1.bf16.msra.mxu0 0
        %4274 = vmatprep.subr.bf16.mxu0 0
        %4275 = vmatpush1.bf16.msra.mxu0 0
        %4276 = vmatprep.subr.bf16.mxu0 0
        %4277 = vmatpush1.bf16.msra.mxu0 0
        %4278 = vmatprep.subr.bf16.mxu0 0
        %4279 = vmatpush1.bf16.msra.mxu0 0
        %4280 = vmatprep.subr.bf16.mxu0 0
        %4281 = vmatpush1.bf16.msra.mxu0 0
        %4282 = vmatprep.subr.bf16.mxu0 0
        %4283 = vmatpush1.bf16.msra.mxu0 0
        %4284 = vmatprep.subr.bf16.mxu0 0
        %4285 = vmatpush1.bf16.msra.mxu0 0
        %4286 = vmatprep.subr.bf16.mxu0 0
        %4287 = vmatpush1.bf16.msra.mxu0 0
        %4288 = vmatprep.mubr.bf16.mxu0 0
        %4289 = vmatmul.mubr.bf16.gmra.mrb[0].mxu0 %v4251
        %v4290 = vpop.f32.mrb[0].mxu0
        %v4291 = vadd.f32 0.0, %v4290
        %v4292 = vpop.f32.mrb[0].mxu0
        %v4293 = vpop.f32.mrb[0].mxu0
        %v4294 = vpop.f32.mrb[0].mxu0
        %4295 = vdwg.mxu0
        %v4297 = vsel %vm3626, %v3813, 0
        %v4300 = vsel %vm3838, %v3829, 0
        %4302 = vmatprep.subr.bf16.mxu0 0
        %4303 = vmatpush1.bf16.msra.mxu0 %v4300
        %4304 = vmatprep.subr.bf16.mxu0 0
        %4305 = vmatpush1.bf16.msra.mxu0 0
        %4306 = vmatprep.subr.bf16.mxu0 0
        %4307 = vmatpush1.bf16.msra.mxu0 0
        %4308 = vmatprep.subr.bf16.mxu0 0
        %4309 = vmatpush1.bf16.msra.mxu0 0
        %4310 = vmatprep.subr.bf16.mxu0 0
        %4311 = vmatpush1.bf16.msra.mxu0 0
        %4312 = vmatprep.subr.bf16.mxu0 0
        %4313 = vmatpush1.bf16.msra.mxu0 0
        %4314 = vmatprep.subr.bf16.mxu0 0
        %4315 = vmatpush1.bf16.msra.mxu0 0
        %4316 = vmatprep.subr.bf16.mxu0 0
        %4317 = vmatpush1.bf16.msra.mxu0 0
        %4318 = vmatprep.subr.bf16.mxu0 0
        %4319 = vmatpush1.bf16.msra.mxu0 0
        %4320 = vmatprep.subr.bf16.mxu0 0
        %4321 = vmatpush1.bf16.msra.mxu0 0
        %4322 = vmatprep.subr.bf16.mxu0 0
        %4323 = vmatpush1.bf16.msra.mxu0 0
        %4324 = vmatprep.subr.bf16.mxu0 0
        %4325 = vmatpush1.bf16.msra.mxu0 0
        %4326 = vmatprep.subr.bf16.mxu0 0
        %4327 = vmatpush1.bf16.msra.mxu0 0
        %4328 = vmatprep.subr.bf16.mxu0 0
        %4329 = vmatpush1.bf16.msra.mxu0 0
        %4330 = vmatprep.subr.bf16.mxu0 0
        %4331 = vmatpush1.bf16.msra.mxu0 0
        %4332 = vmatprep.subr.bf16.mxu0 0
        %4333 = vmatpush1.bf16.msra.mxu0 0
        %4334 = vmatprep.mubr.bf16.mxu0 0
        %4335 = vmatmul.mubr.bf16.gmra.mrb[0].mxu0 %v4297
        %v4336 = vpop.f32.mrb[0].mxu0
        %v4337 = vadd.f32 0.0, %v4336
        %v4338 = vpop.f32.mrb[0].mxu0
        %v4339 = vpop.f32.mrb[0].mxu0
        %v4340 = vpop.f32.mrb[0].mxu0
        %4341 = vdwg.mxu0
        %v4343 = vsel %vm3626, %v3814, 0
        %v4346 = vsel %vm3838, %v3830, 0
        %4348 = vmatprep.subr.bf16.mxu0 0
        %4349 = vmatpush1.bf16.msra.mxu0 %v4346
        %4350 = vmatprep.subr.bf16.mxu0 0
        %4351 = vmatpush1.bf16.msra.mxu0 0
        %4352 = vmatprep.subr.bf16.mxu0 0
        %4353 = vmatpush1.bf16.msra.mxu0 0
        %4354 = vmatprep.subr.bf16.mxu0 0
        %4355 = vmatpush1.bf16.msra.mxu0 0
        %4356 = vmatprep.subr.bf16.mxu0 0
        %4357 = vmatpush1.bf16.msra.mxu0 0
        %4358 = vmatprep.subr.bf16.mxu0 0
        %4359 = vmatpush1.bf16.msra.mxu0 0
        %4360 = vmatprep.subr.bf16.mxu0 0
        %4361 = vmatpush1.bf16.msra.mxu0 0
        %4362 = vmatprep.subr.bf16.mxu0 0
        %4363 = vmatpush1.bf16.msra.mxu0 0
        %4364 = vmatprep.subr.bf16.mxu0 0
        %4365 = vmatpush1.bf16.msra.mxu0 0
        %4366 = vmatprep.subr.bf16.mxu0 0
        %4367 = vmatpush1.bf16.msra.mxu0 0
        %4368 = vmatprep.subr.bf16.mxu0 0
        %4369 = vmatpush1.bf16.msra.mxu0 0
        %4370 = vmatprep.subr.bf16.mxu0 0
        %4371 = vmatpush1.bf16.msra.mxu0 0
        %4372 = vmatprep.subr.bf16.mxu0 0
        %4373 = vmatpush1.bf16.msra.mxu0 0
        %4374 = vmatprep.subr.bf16.mxu0 0
        %4375 = vmatpush1.bf16.msra.mxu0 0
        %4376 = vmatprep.subr.bf16.mxu0 0
        %4377 = vmatpush1.bf16.msra.mxu0 0
        %4378 = vmatprep.subr.bf16.mxu0 0
        %4379 = vmatpush1.bf16.msra.mxu0 0
        %4380 = vmatprep.mubr.bf16.mxu0 0
        %4381 = vmatmul.mubr.bf16.gmra.mrb[0].mxu0 %v4343
        %v4382 = vpop.f32.mrb[0].mxu0
        %v4383 = vadd.f32 0.0, %v4382
        %v4384 = vpop.f32.mrb[0].mxu0
        %v4385 = vpop.f32.mrb[0].mxu0
        %v4386 = vpop.f32.mrb[0].mxu0
        %4387 = vdwg.mxu0
        %v4389 = vsel %vm3626, %v3815, 0
        %v4392 = vsel %vm3838, %v3831, 0
        %4394 = vmatprep.subr.bf16.mxu0 0
        %4395 = vmatpush1.bf16.msra.mxu0 %v4392
        %4396 = vmatprep.subr.bf16.mxu0 0
        %4397 = vmatpush1.bf16.msra.mxu0 0
        %4398 = vmatprep.subr.bf16.mxu0 0
        %4399 = vmatpush1.bf16.msra.mxu0 0
        %4400 = vmatprep.subr.bf16.mxu0 0
        %4401 = vmatpush1.bf16.msra.mxu0 0
        %4402 = vmatprep.subr.bf16.mxu0 0
        %4403 = vmatpush1.bf16.msra.mxu0 0
        %4404 = vmatprep.subr.bf16.mxu0 0
        %4405 = vmatpush1.bf16.msra.mxu0 0
        %4406 = vmatprep.subr.bf16.mxu0 0
        %4407 = vmatpush1.bf16.msra.mxu0 0
        %4408 = vmatprep.subr.bf16.mxu0 0
        %4409 = vmatpush1.bf16.msra.mxu0 0
        %4410 = vmatprep.subr.bf16.mxu0 0
        %4411 = vmatpush1.bf16.msra.mxu0 0
        %4412 = vmatprep.subr.bf16.mxu0 0
        %4413 = vmatpush1.bf16.msra.mxu0 0
        %4414 = vmatprep.subr.bf16.mxu0 0
        %4415 = vmatpush1.bf16.msra.mxu0 0
        %4416 = vmatprep.subr.bf16.mxu0 0
        %4417 = vmatpush1.bf16.msra.mxu0 0
        %4418 = vmatprep.subr.bf16.mxu0 0
        %4419 = vmatpush1.bf16.msra.mxu0 0
        %4420 = vmatprep.subr.bf16.mxu0 0
        %4421 = vmatpush1.bf16.msra.mxu0 0
        %4422 = vmatprep.subr.bf16.mxu0 0
        %4423 = vmatpush1.bf16.msra.mxu0 0
        %4424 = vmatprep.subr.bf16.mxu0 0
        %4425 = vmatpush1.bf16.msra.mxu0 0
        %4426 = vmatprep.mubr.bf16.mxu0 0
        %4427 = vmatmul.mubr.bf16.gmra.mrb[0].mxu0 %v4389
        %v4428 = vpop.f32.mrb[0].mxu0
        %v4429 = vadd.f32 0.0, %v4428
        %v4430 = vpop.f32.mrb[0].mxu0
        %v4431 = vpop.f32.mrb[0].mxu0
        %v4432 = vpop.f32.mrb[0].mxu0
        %4433 = vdwg.mxu0
        %v4435 = vsel %vm3626, %v3816, 0
        %v4438 = vsel %vm3838, %v3832, 0
        %4440 = vmatprep.subr.bf16.mxu0 0
        %4441 = vmatpush1.bf16.msra.mxu0 %v4438
        %4442 = vmatprep.subr.bf16.mxu0 0
        %4443 = vmatpush1.bf16.msra.mxu0 0
        %4444 = vmatprep.subr.bf16.mxu0 0
        %4445 = vmatpush1.bf16.msra.mxu0 0
        %4446 = vmatprep.subr.bf16.mxu0 0
        %4447 = vmatpush1.bf16.msra.mxu0 0
        %4448 = vmatprep.subr.bf16.mxu0 0
        %4449 = vmatpush1.bf16.msra.mxu0 0
        %4450 = vmatprep.subr.bf16.mxu0 0
        %4451 = vmatpush1.bf16.msra.mxu0 0
        %4452 = vmatprep.subr.bf16.mxu0 0
        %4453 = vmatpush1.bf16.msra.mxu0 0
        %4454 = vmatprep.subr.bf16.mxu0 0
        %4455 = vmatpush1.bf16.msra.mxu0 0
        %4456 = vmatprep.subr.bf16.mxu0 0
        %4457 = vmatpush1.bf16.msra.mxu0 0
        %4458 = vmatprep.subr.bf16.mxu0 0
        %4459 = vmatpush1.bf16.msra.mxu0 0
        %4460 = vmatprep.subr.bf16.mxu0 0
        %4461 = vmatpush1.bf16.msra.mxu0 0
        %4462 = vmatprep.subr.bf16.mxu0 0
        %4463 = vmatpush1.bf16.msra.mxu0 0
        %4464 = vmatprep.subr.bf16.mxu0 0
        %4465 = vmatpush1.bf16.msra.mxu0 0
        %4466 = vmatprep.subr.bf16.mxu0 0
        %4467 = vmatpush1.bf16.msra.mxu0 0
        %4468 = vmatprep.subr.bf16.mxu0 0
        %4469 = vmatpush1.bf16.msra.mxu0 0
        %4470 = vmatprep.subr.bf16.mxu0 0
        %4471 = vmatpush1.bf16.msra.mxu0 0
        %4472 = vmatprep.mubr.bf16.mxu0 0
        %4473 = vmatmul.mubr.bf16.gmra.mrb[0].mxu0 %v4435
        %v4474 = vpop.f32.mrb[0].mxu0
        %v4475 = vadd.f32 0.0, %v4474
        %v4476 = vpop.f32.mrb[0].mxu0
        %v4477 = vpop.f32.mrb[0].mxu0
        %v4478 = vpop.f32.mrb[0].mxu0
        %4479 = vdwg.mxu0
        %v4481 = vsel %vm3626, %v3817, 0
        %v4484 = vsel %vm3838, %v3833, 0
        %4486 = vmatprep.subr.bf16.mxu0 0
        %4487 = vmatpush1.bf16.msra.mxu0 %v4484
        %4488 = vmatprep.subr.bf16.mxu0 0
        %4489 = vmatpush1.bf16.msra.mxu0 0
        %4490 = vmatprep.subr.bf16.mxu0 0
        %4491 = vmatpush1.bf16.msra.mxu0 0
        %4492 = vmatprep.subr.bf16.mxu0 0
        %4493 = vmatpush1.bf16.msra.mxu0 0
        %4494 = vmatprep.subr.bf16.mxu0 0
        %4495 = vmatpush1.bf16.msra.mxu0 0
        %4496 = vmatprep.subr.bf16.mxu0 0
        %4497 = vmatpush1.bf16.msra.mxu0 0
        %4498 = vmatprep.subr.bf16.mxu0 0
        %4499 = vmatpush1.bf16.msra.mxu0 0
        %4500 = vmatprep.subr.bf16.mxu0 0
        %4501 = vmatpush1.bf16.msra.mxu0 0
        %4502 = vmatprep.subr.bf16.mxu0 0
        %4503 = vmatpush1.bf16.msra.mxu0 0
        %4504 = vmatprep.subr.bf16.mxu0 0
        %4505 = vmatpush1.bf16.msra.mxu0 0
        %4506 = vmatprep.subr.bf16.mxu0 0
        %4507 = vmatpush1.bf16.msra.mxu0 0
        %4508 = vmatprep.subr.bf16.mxu0 0
        %4509 = vmatpush1.bf16.msra.mxu0 0
        %4510 = vmatprep.subr.bf16.mxu0 0
        %4511 = vmatpush1.bf16.msra.mxu0 0
        %4512 = vmatprep.subr.bf16.mxu0 0
        %4513 = vmatpush1.bf16.msra.mxu0 0
        %4514 = vmatprep.subr.bf16.mxu0 0
        %4515 = vmatpush1.bf16.msra.mxu0 0
        %4516 = vmatprep.subr.bf16.mxu0 0
        %4517 = vmatpush1.bf16.msra.mxu0 0
        %4518 = vmatprep.mubr.bf16.mxu0 0
        %4519 = vmatmul.mubr.bf16.gmra.mrb[0].mxu0 %v4481
        %v4520 = vpop.f32.mrb[0].mxu0
        %v4521 = vadd.f32 0.0, %v4520
        %v4522 = vpop.f32.mrb[0].mxu0
        %v4523 = vpop.f32.mrb[0].mxu0
        %v4524 = vpop.f32.mrb[0].mxu0
        %4525 = vdwg.mxu0
        %v4527 = vsel %vm3626, %v3818, 0
        %v4530 = vsel %vm3838, %v3834, 0
        %4532 = vmatprep.subr.bf16.mxu0 0
        %4533 = vmatpush1.bf16.msra.mxu0 %v4530
        %4534 = vmatprep.subr.bf16.mxu0 0
        %4535 = vmatpush1.bf16.msra.mxu0 0
        %4536 = vmatprep.subr.bf16.mxu0 0
        %4537 = vmatpush1.bf16.msra.mxu0 0
        %4538 = vmatprep.subr.bf16.mxu0 0
        %4539 = vmatpush1.bf16.msra.mxu0 0
        %4540 = vmatprep.subr.bf16.mxu0 0
        %4541 = vmatpush1.bf16.msra.mxu0 0
        %4542 = vmatprep.subr.bf16.mxu0 0
        %4543 = vmatpush1.bf16.msra.mxu0 0
        %4544 = vmatprep.subr.bf16.mxu0 0
        %4545 = vmatpush1.bf16.msra.mxu0 0
        %4546 = vmatprep.subr.bf16.mxu0 0
        %4547 = vmatpush1.bf16.msra.mxu0 0
        %4548 = vmatprep.subr.bf16.mxu0 0
        %4549 = vmatpush1.bf16.msra.mxu0 0
        %4550 = vmatprep.subr.bf16.mxu0 0
        %4551 = vmatpush1.bf16.msra.mxu0 0
        %4552 = vmatprep.subr.bf16.mxu0 0
        %4553 = vmatpush1.bf16.msra.mxu0 0
        %4554 = vmatprep.subr.bf16.mxu0 0
        %4555 = vmatpush1.bf16.msra.mxu0 0
        %4556 = vmatprep.subr.bf16.mxu0 0
        %4557 = vmatpush1.bf16.msra.mxu0 0
        %4558 = vmatprep.subr.bf16.mxu0 0
        %4559 = vmatpush1.bf16.msra.mxu0 0
        %4560 = vmatprep.subr.bf16.mxu0 0
        %4561 = vmatpush1.bf16.msra.mxu0 0
        %4562 = vmatprep.subr.bf16.mxu0 0
        %4563 = vmatpush1.bf16.msra.mxu0 0
        %4564 = vmatprep.mubr.bf16.mxu0 0
        %4565 = vmatmul.mubr.bf16.gmra.mrb[0].mxu0 %v4527
        %v4566 = vpop.f32.mrb[0].mxu0
        %v4567 = vadd.f32 0.0, %v4566
        %v4568 = vpop.f32.mrb[0].mxu0
        %v4569 = vpop.f32.mrb[0].mxu0
        %v4570 = vpop.f32.mrb[0].mxu0
        %4571 = vdwg.mxu0
        %v4572 = vcombine.low %v3877, %v4061
        %v4573 = vcombine.high %v3877, %v4061
        %v4575 = vunpack.c.l.s4 1983009808
        %v4576 = vunpack.c.0.s8 %v4575
        %v4577 = vlaneseq
        %v4578 = vshrl.u32 %v4577, 7
        %v4579 = vsub.s32 %v4576, %v4578
        %v4580 = vrot.slane %v4572, %v4579
        %v4582 = vunpack.c.l.s4 1983009808
        %v4583 = vunpack.c.0.s8 %v4582
        %v4584 = vlaneseq
        %v4585 = vshrl.u32 %v4584, 7
        %v4586 = vsub.s32 %v4583, %v4585
        %v4587 = vrot.slane %v4573, %v4586
        %v4588 = vcombine.low %v3969, %v4153
        %v4589 = vcombine.high %v3969, %v4153
        %v4591 = vunpack.c.l.s4 1983009808
        %v4592 = vunpack.c.0.s8 %v4591
        %v4593 = vlaneseq
        %v4594 = vshrl.u32 %v4593, 7
        %v4595 = vsub.s32 %v4592, %v4594
        %v4596 = vrot.slane %v4588, %v4595
        %v4598 = vunpack.c.l.s4 1983009808
        %v4599 = vunpack.c.0.s8 %v4598
        %v4600 = vlaneseq
        %v4601 = vshrl.u32 %v4600, 7
        %v4602 = vsub.s32 %v4599, %v4601
        %v4603 = vrot.slane %v4589, %v4602
        %v4604 = vcombine.low %v4245, %v4429
        %v4605 = vcombine.high %v4245, %v4429
        %v4607 = vunpack.c.l.s4 1983009808
        %v4608 = vunpack.c.0.s8 %v4607
        %v4609 = vlaneseq
        %v4610 = vshrl.u32 %v4609, 7
        %v4611 = vsub.s32 %v4608, %v4610
        %v4612 = vrot.slane %v4604, %v4611
        %v4614 = vunpack.c.l.s4 1983009808
        %v4615 = vunpack.c.0.s8 %v4614
        %v4616 = vlaneseq
        %v4617 = vshrl.u32 %v4616, 7
        %v4618 = vsub.s32 %v4615, %v4617
        %v4619 = vrot.slane %v4605, %v4618
        %v4620 = vcombine.low %v4337, %v4521
        %v4621 = vcombine.high %v4337, %v4521
        %v4623 = vunpack.c.l.s4 1983009808
        %v4624 = vunpack.c.0.s8 %v4623
        %v4625 = vlaneseq
        %v4626 = vshrl.u32 %v4625, 7
        %v4627 = vsub.s32 %v4624, %v4626
        %v4628 = vrot.slane %v4620, %v4627
        %v4630 = vunpack.c.l.s4 1983009808
        %v4631 = vunpack.c.0.s8 %v4630
        %v4632 = vlaneseq
        %v4633 = vshrl.u32 %v4632, 7
        %v4634 = vsub.s32 %v4631, %v4633
        %v4635 = vrot.slane %v4621, %v4634
        %v4636 = vcombine.low %v4580, %v4596
        %v4637 = vcombine.high %v4580, %v4596
        %v4639 = vunpack.c.l.s4 1934713408
        %v4640 = vunpack.c.0.s8 %v4639
        %v4641 = vlaneseq
        %v4642 = vshrl.u32 %v4641, 7
        %v4643 = vsub.s32 %v4640, %v4642
        %v4644 = vrot.slane %v4636, %v4643
        %v4646 = vunpack.c.l.s4 1934713408
        %v4647 = vunpack.c.0.s8 %v4646
        %v4648 = vlaneseq
        %v4649 = vshrl.u32 %v4648, 7
        %v4650 = vsub.s32 %v4647, %v4649
        %v4651 = vrot.slane %v4637, %v4650
        %v4652 = vcombine.low %v4587, %v4603
        %v4653 = vcombine.high %v4587, %v4603
        %v4655 = vunpack.c.l.s4 1934713408
        %v4656 = vunpack.c.0.s8 %v4655
        %v4657 = vlaneseq
        %v4658 = vshrl.u32 %v4657, 7
        %v4659 = vsub.s32 %v4656, %v4658
        %v4660 = vrot.slane %v4652, %v4659
        %v4662 = vunpack.c.l.s4 1934713408
        %v4663 = vunpack.c.0.s8 %v4662
        %v4664 = vlaneseq
        %v4665 = vshrl.u32 %v4664, 7
        %v4666 = vsub.s32 %v4663, %v4665
        %v4667 = vrot.slane %v4653, %v4666
        %v4668 = vcombine.low %v4612, %v4628
        %v4669 = vcombine.high %v4612, %v4628
        %v4671 = vunpack.c.l.s4 1934713408
        %v4672 = vunpack.c.0.s8 %v4671
        %v4673 = vlaneseq
        %v4674 = vshrl.u32 %v4673, 7
        %v4675 = vsub.s32 %v4672, %v4674
        %v4676 = vrot.slane %v4668, %v4675
        %v4678 = vunpack.c.l.s4 1934713408
        %v4679 = vunpack.c.0.s8 %v4678
        %v4680 = vlaneseq
        %v4681 = vshrl.u32 %v4680, 7
        %v4682 = vsub.s32 %v4679, %v4681
        %v4683 = vrot.slane %v4669, %v4682
        %v4684 = vcombine.low %v4619, %v4635
        %v4685 = vcombine.high %v4619, %v4635
        %v4687 = vunpack.c.l.s4 1934713408
        %v4688 = vunpack.c.0.s8 %v4687
        %v4689 = vlaneseq
        %v4690 = vshrl.u32 %v4689, 7
        %v4691 = vsub.s32 %v4688, %v4690
        %v4692 = vrot.slane %v4684, %v4691
        %v4694 = vunpack.c.l.s4 1934713408
        %v4695 = vunpack.c.0.s8 %v4694
        %v4696 = vlaneseq
        %v4697 = vshrl.u32 %v4696, 7
        %v4698 = vsub.s32 %v4695, %v4697
        %v4699 = vrot.slane %v4685, %v4698
        %v4700 = vcombine.low %v4644, %v4676
        %v4701 = vcombine.high %v4644, %v4676
        %v4702 = vcombine.low %v4651, %v4683
        %v4703 = vcombine.high %v4651, %v4683
        %v4704 = vcombine.low %v4660, %v4692
        %v4705 = vcombine.high %v4660, %v4692
        %v4706 = vcombine.low %v4667, %v4699
        %v4707 = vcombine.high %v4667, %v4699
        %v4708 = vcombine.low %v3923, %v4107
        %v4709 = vcombine.high %v3923, %v4107
        %v4711 = vunpack.c.l.s4 1983009808
        %v4712 = vunpack.c.0.s8 %v4711
        %v4713 = vlaneseq
        %v4714 = vshrl.u32 %v4713, 7
        %v4715 = vsub.s32 %v4712, %v4714
        %v4716 = vrot.slane %v4708, %v4715
        %v4718 = vunpack.c.l.s4 1983009808
        %v4719 = vunpack.c.0.s8 %v4718
        %v4720 = vlaneseq
        %v4721 = vshrl.u32 %v4720, 7
        %v4722 = vsub.s32 %v4719, %v4721
        %v4723 = vrot.slane %v4709, %v4722
        %v4724 = vcombine.low %v4015, %v4199
        %v4725 = vcombine.high %v4015, %v4199
        %v4727 = vunpack.c.l.s4 1983009808
        %v4728 = vunpack.c.0.s8 %v4727
        %v4729 = vlaneseq
        %v4730 = vshrl.u32 %v4729, 7
        %v4731 = vsub.s32 %v4728, %v4730
        %v4732 = vrot.slane %v4724, %v4731
        %v4734 = vunpack.c.l.s4 1983009808
        %v4735 = vunpack.c.0.s8 %v4734
        %v4736 = vlaneseq
        %v4737 = vshrl.u32 %v4736, 7
        %v4738 = vsub.s32 %v4735, %v4737
        %v4739 = vrot.slane %v4725, %v4738
        %v4740 = vcombine.low %v4291, %v4475
        %v4741 = vcombine.high %v4291, %v4475
        %v4743 = vunpack.c.l.s4 1983009808
        %v4744 = vunpack.c.0.s8 %v4743
        %v4745 = vlaneseq
        %v4746 = vshrl.u32 %v4745, 7
        %v4747 = vsub.s32 %v4744, %v4746
        %v4748 = vrot.slane %v4740, %v4747
        %v4750 = vunpack.c.l.s4 1983009808
        %v4751 = vunpack.c.0.s8 %v4750
        %v4752 = vlaneseq
        %v4753 = vshrl.u32 %v4752, 7
        %v4754 = vsub.s32 %v4751, %v4753
        %v4755 = vrot.slane %v4741, %v4754
        %v4756 = vcombine.low %v4383, %v4567
        %v4757 = vcombine.high %v4383, %v4567
        %v4759 = vunpack.c.l.s4 1983009808
        %v4760 = vunpack.c.0.s8 %v4759
        %v4761 = vlaneseq
        %v4762 = vshrl.u32 %v4761, 7
        %v4763 = vsub.s32 %v4760, %v4762
        %v4764 = vrot.slane %v4756, %v4763
        %v4766 = vunpack.c.l.s4 1983009808
        %v4767 = vunpack.c.0.s8 %v4766
        %v4768 = vlaneseq
        %v4769 = vshrl.u32 %v4768, 7
        %v4770 = vsub.s32 %v4767, %v4769
        %v4771 = vrot.slane %v4757, %v4770
        %v4772 = vcombine.low %v4716, %v4732
        %v4773 = vcombine.high %v4716, %v4732
        %v4775 = vunpack.c.l.s4 1934713408
        %v4776 = vunpack.c.0.s8 %v4775
        %v4777 = vlaneseq
        %v4778 = vshrl.u32 %v4777, 7
        %v4779 = vsub.s32 %v4776, %v4778
        %v4780 = vrot.slane %v4772, %v4779
        %v4782 = vunpack.c.l.s4 1934713408
        %v4783 = vunpack.c.0.s8 %v4782
        %v4784 = vlaneseq
        %v4785 = vshrl.u32 %v4784, 7
        %v4786 = vsub.s32 %v4783, %v4785
        %v4787 = vrot.slane %v4773, %v4786
        %v4788 = vcombine.low %v4723, %v4739
        %v4789 = vcombine.high %v4723, %v4739
        %v4791 = vunpack.c.l.s4 1934713408
        %v4792 = vunpack.c.0.s8 %v4791
        %v4793 = vlaneseq
        %v4794 = vshrl.u32 %v4793, 7
        %v4795 = vsub.s32 %v4792, %v4794
        %v4796 = vrot.slane %v4788, %v4795
        %v4798 = vunpack.c.l.s4 1934713408
        %v4799 = vunpack.c.0.s8 %v4798
        %v4800 = vlaneseq
        %v4801 = vshrl.u32 %v4800, 7
        %v4802 = vsub.s32 %v4799, %v4801
        %v4803 = vrot.slane %v4789, %v4802
        %v4804 = vcombine.low %v4748, %v4764
        %v4805 = vcombine.high %v4748, %v4764
        %v4807 = vunpack.c.l.s4 1934713408
        %v4808 = vunpack.c.0.s8 %v4807
        %v4809 = vlaneseq
        %v4810 = vshrl.u32 %v4809, 7
        %v4811 = vsub.s32 %v4808, %v4810
        %v4812 = vrot.slane %v4804, %v4811
        %v4814 = vunpack.c.l.s4 1934713408
        %v4815 = vunpack.c.0.s8 %v4814
        %v4816 = vlaneseq
        %v4817 = vshrl.u32 %v4816, 7
        %v4818 = vsub.s32 %v4815, %v4817
        %v4819 = vrot.slane %v4805, %v4818
        %v4820 = vcombine.low %v4755, %v4771
        %v4821 = vcombine.high %v4755, %v4771
        %v4823 = vunpack.c.l.s4 1934713408
        %v4824 = vunpack.c.0.s8 %v4823
        %v4825 = vlaneseq
        %v4826 = vshrl.u32 %v4825, 7
        %v4827 = vsub.s32 %v4824, %v4826
        %v4828 = vrot.slane %v4820, %v4827
        %v4830 = vunpack.c.l.s4 1934713408
        %v4831 = vunpack.c.0.s8 %v4830
        %v4832 = vlaneseq
        %v4833 = vshrl.u32 %v4832, 7
        %v4834 = vsub.s32 %v4831, %v4833
        %v4835 = vrot.slane %v4821, %v4834
        %v4836 = vcombine.low %v4780, %v4812
        %v4837 = vcombine.high %v4780, %v4812
        %v4838 = vcombine.low %v4787, %v4819
        %v4839 = vcombine.high %v4787, %v4819
        %v4840 = vcombine.low %v4796, %v4828
        %v4841 = vcombine.high %v4796, %v4828
        %v4842 = vcombine.low %v4803, %v4835
        %v4843 = vcombine.high %v4803, %v4835
        %v4844 = vcombine.low %v4700, %v4702
        %v4845 = vcombine.high %v4700, %v4702
        %v4847 = vunpack.c.l.s4 1983009808
        %v4848 = vunpack.c.0.s8 %v4847
        %v4849 = vlaneseq
        %v4850 = vshrl.u32 %v4849, 7
        %v4851 = vsub.s32 %v4848, %v4850
        %v4852 = vrot.slane %v4844, %v4851
        %v4854 = vunpack.c.l.s4 1983009808
        %v4855 = vunpack.c.0.s8 %v4854
        %v4856 = vlaneseq
        %v4857 = vshrl.u32 %v4856, 7
        %v4858 = vsub.s32 %v4855, %v4857
        %v4859 = vrot.slane %v4845, %v4858
        %v4860 = vcombine.low %v4701, %v4703
        %v4861 = vcombine.high %v4701, %v4703
        %v4863 = vunpack.c.l.s4 1983009808
        %v4864 = vunpack.c.0.s8 %v4863
        %v4865 = vlaneseq
        %v4866 = vshrl.u32 %v4865, 7
        %v4867 = vsub.s32 %v4864, %v4866
        %v4868 = vrot.slane %v4860, %v4867
        %v4870 = vunpack.c.l.s4 1983009808
        %v4871 = vunpack.c.0.s8 %v4870
        %v4872 = vlaneseq
        %v4873 = vshrl.u32 %v4872, 7
        %v4874 = vsub.s32 %v4871, %v4873
        %v4875 = vrot.slane %v4861, %v4874
        %v4876 = vcombine.low %v4704, %v4706
        %v4877 = vcombine.high %v4704, %v4706
        %v4879 = vunpack.c.l.s4 1983009808
        %v4880 = vunpack.c.0.s8 %v4879
        %v4881 = vlaneseq
        %v4882 = vshrl.u32 %v4881, 7
        %v4883 = vsub.s32 %v4880, %v4882
        %v4884 = vrot.slane %v4876, %v4883
        %v4886 = vunpack.c.l.s4 1983009808
        %v4887 = vunpack.c.0.s8 %v4886
        %v4888 = vlaneseq
        %v4889 = vshrl.u32 %v4888, 7
        %v4890 = vsub.s32 %v4887, %v4889
        %v4891 = vrot.slane %v4877, %v4890
        %v4892 = vcombine.low %v4705, %v4707
        %v4893 = vcombine.high %v4705, %v4707
        %v4895 = vunpack.c.l.s4 1983009808
        %v4896 = vunpack.c.0.s8 %v4895
        %v4897 = vlaneseq
        %v4898 = vshrl.u32 %v4897, 7
        %v4899 = vsub.s32 %v4896, %v4898
        %v4900 = vrot.slane %v4892, %v4899
        %v4902 = vunpack.c.l.s4 1983009808
        %v4903 = vunpack.c.0.s8 %v4902
        %v4904 = vlaneseq
        %v4905 = vshrl.u32 %v4904, 7
        %v4906 = vsub.s32 %v4903, %v4905
        %v4907 = vrot.slane %v4893, %v4906
        %v4908 = vcombine.low %v4852, %v4868
        %v4909 = vcombine.high %v4852, %v4868
        %v4911 = vunpack.c.l.s4 1934713408
        %v4912 = vunpack.c.0.s8 %v4911
        %v4913 = vlaneseq
        %v4914 = vshrl.u32 %v4913, 7
        %v4915 = vsub.s32 %v4912, %v4914
        %v4916 = vrot.slane %v4908, %v4915
        %v4918 = vunpack.c.l.s4 1934713408
        %v4919 = vunpack.c.0.s8 %v4918
        %v4920 = vlaneseq
        %v4921 = vshrl.u32 %v4920, 7
        %v4922 = vsub.s32 %v4919, %v4921
        %v4923 = vrot.slane %v4909, %v4922
        %v4924 = vcombine.low %v4859, %v4875
        %v4925 = vcombine.high %v4859, %v4875
        %v4927 = vunpack.c.l.s4 1934713408
        %v4928 = vunpack.c.0.s8 %v4927
        %v4929 = vlaneseq
        %v4930 = vshrl.u32 %v4929, 7
        %v4931 = vsub.s32 %v4928, %v4930
        %v4932 = vrot.slane %v4924, %v4931
        %v4934 = vunpack.c.l.s4 1934713408
        %v4935 = vunpack.c.0.s8 %v4934
        %v4936 = vlaneseq
        %v4937 = vshrl.u32 %v4936, 7
        %v4938 = vsub.s32 %v4935, %v4937
        %v4939 = vrot.slane %v4925, %v4938
        %v4940 = vcombine.low %v4884, %v4900
        %v4941 = vcombine.high %v4884, %v4900
        %v4943 = vunpack.c.l.s4 1934713408
        %v4944 = vunpack.c.0.s8 %v4943
        %v4945 = vlaneseq
        %v4946 = vshrl.u32 %v4945, 7
        %v4947 = vsub.s32 %v4944, %v4946
        %v4948 = vrot.slane %v4940, %v4947
        %v4950 = vunpack.c.l.s4 1934713408
        %v4951 = vunpack.c.0.s8 %v4950
        %v4952 = vlaneseq
        %v4953 = vshrl.u32 %v4952, 7
        %v4954 = vsub.s32 %v4951, %v4953
        %v4955 = vrot.slane %v4941, %v4954
        %v4956 = vcombine.low %v4891, %v4907
        %v4957 = vcombine.high %v4891, %v4907
        %v4959 = vunpack.c.l.s4 1934713408
        %v4960 = vunpack.c.0.s8 %v4959
        %v4961 = vlaneseq
        %v4962 = vshrl.u32 %v4961, 7
        %v4963 = vsub.s32 %v4960, %v4962
        %v4964 = vrot.slane %v4956, %v4963
        %v4966 = vunpack.c.l.s4 1934713408
        %v4967 = vunpack.c.0.s8 %v4966
        %v4968 = vlaneseq
        %v4969 = vshrl.u32 %v4968, 7
        %v4970 = vsub.s32 %v4967, %v4969
        %v4971 = vrot.slane %v4957, %v4970
        %v4972 = vcombine.low %v4916, %v4948
        %v4973 = vcombine.high %v4916, %v4948
        %v4974 = vcombine.low %v4923, %v4955
        %v4975 = vcombine.high %v4923, %v4955
        %v4976 = vcombine.low %v4932, %v4964
        %v4977 = vcombine.high %v4932, %v4964
        %v4978 = vcombine.low %v4939, %v4971
        %v4979 = vcombine.high %v4939, %v4971
        %v4980 = vcombine.low %v4836, %v4838
        %v4981 = vcombine.high %v4836, %v4838
        %v4983 = vunpack.c.l.s4 1983009808
        %v4984 = vunpack.c.0.s8 %v4983
        %v4985 = vlaneseq
        %v4986 = vshrl.u32 %v4985, 7
        %v4987 = vsub.s32 %v4984, %v4986
        %v4988 = vrot.slane %v4980, %v4987
        %v4990 = vunpack.c.l.s4 1983009808
        %v4991 = vunpack.c.0.s8 %v4990
        %v4992 = vlaneseq
        %v4993 = vshrl.u32 %v4992, 7
        %v4994 = vsub.s32 %v4991, %v4993
        %v4995 = vrot.slane %v4981, %v4994
        %v4996 = vcombine.low %v4837, %v4839
        %v4997 = vcombine.high %v4837, %v4839
        %v4999 = vunpack.c.l.s4 1983009808
        %v5000 = vunpack.c.0.s8 %v4999
        %v5001 = vlaneseq
        %v5002 = vshrl.u32 %v5001, 7
        %v5003 = vsub.s32 %v5000, %v5002
        %v5004 = vrot.slane %v4996, %v5003
        %v5006 = vunpack.c.l.s4 1983009808
        %v5007 = vunpack.c.0.s8 %v5006
        %v5008 = vlaneseq
        %v5009 = vshrl.u32 %v5008, 7
        %v5010 = vsub.s32 %v5007, %v5009
        %v5011 = vrot.slane %v4997, %v5010
        %v5012 = vcombine.low %v4840, %v4842
        %v5013 = vcombine.high %v4840, %v4842
        %v5015 = vunpack.c.l.s4 1983009808
        %v5016 = vunpack.c.0.s8 %v5015
        %v5017 = vlaneseq
        %v5018 = vshrl.u32 %v5017, 7
        %v5019 = vsub.s32 %v5016, %v5018
        %v5020 = vrot.slane %v5012, %v5019
        %v5022 = vunpack.c.l.s4 1983009808
        %v5023 = vunpack.c.0.s8 %v5022
        %v5024 = vlaneseq
        %v5025 = vshrl.u32 %v5024, 7
        %v5026 = vsub.s32 %v5023, %v5025
        %v5027 = vrot.slane %v5013, %v5026
        %v5028 = vcombine.low %v4841, %v4843
        %v5029 = vcombine.high %v4841, %v4843
        %v5031 = vunpack.c.l.s4 1983009808
        %v5032 = vunpack.c.0.s8 %v5031
        %v5033 = vlaneseq
        %v5034 = vshrl.u32 %v5033, 7
        %v5035 = vsub.s32 %v5032, %v5034
        %v5036 = vrot.slane %v5028, %v5035
        %v5038 = vunpack.c.l.s4 1983009808
        %v5039 = vunpack.c.0.s8 %v5038
        %v5040 = vlaneseq
        %v5041 = vshrl.u32 %v5040, 7
        %v5042 = vsub.s32 %v5039, %v5041
        %v5043 = vrot.slane %v5029, %v5042
        %v5044 = vcombine.low %v4988, %v5004
        %v5045 = vcombine.high %v4988, %v5004
        %v5047 = vunpack.c.l.s4 1934713408
        %v5048 = vunpack.c.0.s8 %v5047
        %v5049 = vlaneseq
        %v5050 = vshrl.u32 %v5049, 7
        %v5051 = vsub.s32 %v5048, %v5050
        %v5052 = vrot.slane %v5044, %v5051
        %v5054 = vunpack.c.l.s4 1934713408
        %v5055 = vunpack.c.0.s8 %v5054
        %v5056 = vlaneseq
        %v5057 = vshrl.u32 %v5056, 7
        %v5058 = vsub.s32 %v5055, %v5057
        %v5059 = vrot.slane %v5045, %v5058
        %v5060 = vcombine.low %v4995, %v5011
        %v5061 = vcombine.high %v4995, %v5011
        %v5063 = vunpack.c.l.s4 1934713408
        %v5064 = vunpack.c.0.s8 %v5063
        %v5065 = vlaneseq
        %v5066 = vshrl.u32 %v5065, 7
        %v5067 = vsub.s32 %v5064, %v5066
        %v5068 = vrot.slane %v5060, %v5067
        %v5070 = vunpack.c.l.s4 1934713408
        %v5071 = vunpack.c.0.s8 %v5070
        %v5072 = vlaneseq
        %v5073 = vshrl.u32 %v5072, 7
        %v5074 = vsub.s32 %v5071, %v5073
        %v5075 = vrot.slane %v5061, %v5074
        %v5076 = vcombine.low %v5020, %v5036
        %v5077 = vcombine.high %v5020, %v5036
        %v5079 = vunpack.c.l.s4 1934713408
        %v5080 = vunpack.c.0.s8 %v5079
        %v5081 = vlaneseq
        %v5082 = vshrl.u32 %v5081, 7
        %v5083 = vsub.s32 %v5080, %v5082
        %v5084 = vrot.slane %v5076, %v5083
        %v5086 = vunpack.c.l.s4 1934713408
        %v5087 = vunpack.c.0.s8 %v5086
        %v5088 = vlaneseq
        %v5089 = vshrl.u32 %v5088, 7
        %v5090 = vsub.s32 %v5087, %v5089
        %v5091 = vrot.slane %v5077, %v5090
        %v5092 = vcombine.low %v5027, %v5043
        %v5093 = vcombine.high %v5027, %v5043
        %v5095 = vunpack.c.l.s4 1934713408
        %v5096 = vunpack.c.0.s8 %v5095
        %v5097 = vlaneseq
        %v5098 = vshrl.u32 %v5097, 7
        %v5099 = vsub.s32 %v5096, %v5098
        %v5100 = vrot.slane %v5092, %v5099
        %v5102 = vunpack.c.l.s4 1934713408
        %v5103 = vunpack.c.0.s8 %v5102
        %v5104 = vlaneseq
        %v5105 = vshrl.u32 %v5104, 7
        %v5106 = vsub.s32 %v5103, %v5105
        %v5107 = vrot.slane %v5093, %v5106
        %v5108 = vcombine.low %v5052, %v5084
        %v5109 = vcombine.high %v5052, %v5084
        %v5110 = vcombine.low %v5059, %v5091
        %v5111 = vcombine.high %v5059, %v5091
        %v5112 = vcombine.low %v5068, %v5100
        %v5113 = vcombine.high %v5068, %v5100
        %v5114 = vcombine.low %v5075, %v5107
        %v5115 = vcombine.high %v5075, %v5107
        %5118 = vrot.lane.b32.xlu0 %v4973, 4
        %v5119 = vpop.permute.xlu0 %5118
        %5120 = vrot.lane.b32.xlu0 %v5109, 4
        %v5121 = vpop.permute.xlu0 %5120
        %5126 = vrot.lane.b32.xlu0 %v4974, 8
        %v5127 = vpop.permute.xlu0 %5126
        %5128 = vrot.lane.b32.xlu0 %v5110, 8
        %v5129 = vpop.permute.xlu0 %5128
        %5134 = vrot.lane.b32.xlu0 %v4975, 12
        %v5135 = vpop.permute.xlu0 %5134
        %5136 = vrot.lane.b32.xlu0 %v5111, 12
        %v5137 = vpop.permute.xlu0 %5136
        %5142 = vrot.lane.b32.xlu0 %v4976, 16
        %v5143 = vpop.permute.xlu0 %5142
        %5144 = vrot.lane.b32.xlu0 %v5112, 16
        %v5145 = vpop.permute.xlu0 %5144
        %5150 = vrot.lane.b32.xlu0 %v4977, 20
        %v5151 = vpop.permute.xlu0 %5150
        %5152 = vrot.lane.b32.xlu0 %v5113, 20
        %v5153 = vpop.permute.xlu0 %5152
        %5158 = vrot.lane.b32.xlu0 %v4978, 24
        %v5159 = vpop.permute.xlu0 %5158
        %5160 = vrot.lane.b32.xlu0 %v5114, 24
        %v5161 = vpop.permute.xlu0 %5160
        %5166 = vrot.lane.b32.xlu0 %v4979, 28
        %v5167 = vpop.permute.xlu0 %5166
        %5168 = vrot.lane.b32.xlu0 %v5115, 28
        %v5169 = vpop.permute.xlu0 %5168
        %v5172 = vsel %vm2857, %v4972, %v5119
        %v5173 = vsel %vm2857, %v5108, %v5121
        %v5174 = vsel %vm3626, %v5172, %v5127
        %v5175 = vsel %vm3626, %v5173, %v5129
        %vm5176 = vcmask 97280
        %v5177 = vsel %vm5176, %v5174, %v5135
        %v5178 = vsel %vm5176, %v5175, %v5137
        %vm5179 = vcmask 130048
        %v5180 = vsel %vm5179, %v5177, %v5143
        %v5181 = vsel %vm5179, %v5178, %v5145
        %vm5182 = vcmask 162816
        %v5183 = vsel %vm5182, %v5180, %v5151
        %v5184 = vsel %vm5182, %v5181, %v5153
        %vm5185 = vcmask 195584
        %v5186 = vsel %vm5185, %v5183, %v5159
        %v5187 = vsel %vm5185, %v5184, %v5161
        %vm5188 = vcmask 228352
        %v5189 = vsel %vm5188, %v5186, %v5167
        %v5190 = vsel %vm5188, %v5187, %v5169
        %v5191 = vpack.c.bf16 %v5190, %v5189
        %v5193 = vlaneseq
        %v5194 = vshrl.u32 %v5193, 7
        %v5195 = vsub.s32 0, %v5194
        %v5196 = vrot.slane %v962, %v5195
        %v5202 = vunpack.c.l.b16 %v958
        %v5203 = vunpack.c.l.b16 %v959
        %v5204 = vunpack.c.l.b16 %v960
        %v5205 = vunpack.c.l.b16 %v961
        %v5206 = vpack.c.b16 %v5203, %v5202
        %v5207 = vpack.c.b16 %v5205, %v5204
        %v5211 = vsel %vm1008, %v5191, 0
        %5213 = vmatprep.subr.bf16.mxu0 0
        %5214 = vmatpush1.bf16.msra.mxu0 %v5206
        %5215 = vmatprep.subr.bf16.mxu0 0
        %5216 = vmatpush1.bf16.msra.mxu0 %v5207
        %5217 = vmatprep.subr.bf16.mxu0 0
        %5218 = vmatpush1.bf16.msra.mxu0 0
        %5219 = vmatprep.subr.bf16.mxu0 0
        %5220 = vmatpush1.bf16.msra.mxu0 0
        %5221 = vmatprep.subr.bf16.mxu0 0
        %5222 = vmatpush1.bf16.msra.mxu0 0
        %5223 = vmatprep.subr.bf16.mxu0 0
        %5224 = vmatpush1.bf16.msra.mxu0 0
        %5225 = vmatprep.subr.bf16.mxu0 0
        %5226 = vmatpush1.bf16.msra.mxu0 0
        %5227 = vmatprep.subr.bf16.mxu0 0
        %5228 = vmatpush1.bf16.msra.mxu0 0
        %5229 = vmatprep.subr.bf16.mxu0 0
        %5230 = vmatpush1.bf16.msra.mxu0 0
        %5231 = vmatprep.subr.bf16.mxu0 0
        %5232 = vmatpush1.bf16.msra.mxu0 0
        %5233 = vmatprep.subr.bf16.mxu0 0
        %5234 = vmatpush1.bf16.msra.mxu0 0
        %5235 = vmatprep.subr.bf16.mxu0 0
        %5236 = vmatpush1.bf16.msra.mxu0 0
        %5237 = vmatprep.subr.bf16.mxu0 0
        %5238 = vmatpush1.bf16.msra.mxu0 0
        %5239 = vmatprep.subr.bf16.mxu0 0
        %5240 = vmatpush1.bf16.msra.mxu0 0
        %5241 = vmatprep.subr.bf16.mxu0 0
        %5242 = vmatpush1.bf16.msra.mxu0 0
        %5243 = vmatprep.subr.bf16.mxu0 0
        %5244 = vmatpush1.bf16.msra.mxu0 0
        %5245 = vmatprep.mubr.bf16.mxu0 0
        %5246 = vmatmul.mubr.bf16.gmra.mrb[0].mxu0 %v5211
        %v5247 = vpop.f32.mrb[0].mxu0
        %v5248 = vadd.f32 %v5196, %v5247
        %v5249 = vpop.f32.mrb[0].mxu0
        %v5250 = vpop.f32.mrb[0].mxu0
        %v5251 = vadd.f32 %v5196, %v5250
        %v5252 = vpop.f32.mrb[0].mxu0
        %5253 = vdwg.mxu0
        %v5254 = vadd.f32 %v5248, %v947
        %v5255 = vadd.f32 %v5251, %v948
        %v5256 = vsel %vm1008, %v5254, 0.0
        %5257 = vadd.xlane.f32.xlu0 %v5256
        %v5258 = vpop.xlane.xlu0 %5257
        %v5259 = vsel %vm1008, %v5255, 0.0
        %5260 = vadd.xlane.f32.xlu0 %v5259
        %v5261 = vpop.xlane.xlu0 %5260
        %v5262 = vrcp.pop 32.0
        %v5263 = vmul.f32 %v5258, %v5262
        %v5264 = vmul.f32 %v5261, %v5262
        %v5265 = vsub.f32 %v5254, %v5263
        %v5266 = vsub.f32 %v5255, %v5264
        %v5267 = vmul.f32 %v5265, %v5265
        %v5268 = vmul.f32 %v5266, %v5266
        %v5269 = vsel %vm1008, %v5267, 0.0
        %5270 = vadd.xlane.f32.xlu0 %v5269
        %v5271 = vpop.xlane.xlu0 %5270
        %v5272 = vsel %vm1008, %v5268, 0.0
        %5273 = vadd.xlane.f32.xlu0 %v5272
        %v5274 = vpop.xlane.xlu0 %5273
        %v5275 = vmul.f32 %v5271, %v5262
        %v5276 = vmul.f32 %v5274, %v5262
        %v5277 = vadd.f32 %v5275, 1e-05
        %v5278 = vadd.f32 %v5276, 1e-05
        %v5279 = vrsqrt.pop %v5277
        %v5280 = vrsqrt.pop %v5278
        %v5281 = vmul.f32 %v5265, %v5279
        %v5282 = vmul.f32 %v5266, %v5280
        %v5283 = vlaneseq
        %v5284 = vshrl.u32 %v5283, 7
        %v5285 = vsub.s32 0, %v5284
        %v5286 = vrot.slane %v987, %v5285
        %v5287 = vmul.f32 %v5281, %v5286
        %v5288 = vmul.f32 %v5282, %v5286
        %v5289 = vlaneseq
        %v5290 = vshrl.u32 %v5289, 7
        %v5291 = vsub.s32 0, %v5290
        %v5292 = vrot.slane %v988, %v5291
        %v5293 = vadd.f32 %v5287, %v5292
        %v5294 = vadd.f32 %v5288, %v5292
        %v5295 = vpack.c.bf16 %v5294, %v5293
        %v5297 = vlaneseq
        %v5298 = vshrl.u32 %v5297, 7
        %v5299 = vsub.s32 0, %v5298
        %v5300 = vrot.slane %v967, %v5299
        %v5306 = vunpack.c.l.b16 %v963
        %v5307 = vunpack.c.l.b16 %v964
        %v5308 = vunpack.c.l.b16 %v965
        %v5309 = vunpack.c.l.b16 %v966
        %v5310 = vpack.c.b16 %v5307, %v5306
        %v5311 = vpack.c.b16 %v5309, %v5308
        %v5315 = vsel %vm1008, %v5295, 0
        %5317 = vmatprep.subr.bf16.mxu0 0
        %5318 = vmatpush1.bf16.msra.mxu0 %v5310
        %5319 = vmatprep.subr.bf16.mxu0 0
        %5320 = vmatpush1.bf16.msra.mxu0 %v5311
        %5321 = vmatprep.subr.bf16.mxu0 0
        %5322 = vmatpush1.bf16.msra.mxu0 0
        %5323 = vmatprep.subr.bf16.mxu0 0
        %5324 = vmatpush1.bf16.msra.mxu0 0
        %5325 = vmatprep.subr.bf16.mxu0 0
        %5326 = vmatpush1.bf16.msra.mxu0 0
        %5327 = vmatprep.subr.bf16.mxu0 0
        %5328 = vmatpush1.bf16.msra.mxu0 0
        %5329 = vmatprep.subr.bf16.mxu0 0
        %5330 = vmatpush1.bf16.msra.mxu0 0
        %5331 = vmatprep.subr.bf16.mxu0 0
        %5332 = vmatpush1.bf16.msra.mxu0 0
        %5333 = vmatprep.subr.bf16.mxu0 0
        %5334 = vmatpush1.bf16.msra.mxu0 0
        %5335 = vmatprep.subr.bf16.mxu0 0
        %5336 = vmatpush1.bf16.msra.mxu0 0
        %5337 = vmatprep.subr.bf16.mxu0 0
        %5338 = vmatpush1.bf16.msra.mxu0 0
        %5339 = vmatprep.subr.bf16.mxu0 0
        %5340 = vmatpush1.bf16.msra.mxu0 0
        %5341 = vmatprep.subr.bf16.mxu0 0
        %5342 = vmatpush1.bf16.msra.mxu0 0
        %5343 = vmatprep.subr.bf16.mxu0 0
        %5344 = vmatpush1.bf16.msra.mxu0 0
        %5345 = vmatprep.subr.bf16.mxu0 0
        %5346 = vmatpush1.bf16.msra.mxu0 0
        %5347 = vmatprep.subr.bf16.mxu0 0
        %5348 = vmatpush1.bf16.msra.mxu0 0
        %5349 = vmatprep.mubr.bf16.mxu0 0
        %5350 = vmatmul.mubr.bf16.gmra.mrb[0].mxu0 %v5315
        %v5351 = vpop.f32.mrb[0].mxu0
        %v5352 = vadd.f32 %v5300, %v5351
        %v5353 = vpop.f32.mrb[0].mxu0
        %v5354 = vpop.f32.mrb[0].mxu0
        %v5355 = vadd.f32 %v5300, %v5354
        %v5356 = vpop.f32.mrb[0].mxu0
        %5357 = vdwg.mxu0
        %v5360 = vunpack.c.l.b16 %v949
        %v5361 = vunpack.c.l.b16 %v950
        %v5362 = vpack.c.b16 %v5361, %v5360
        %5363 = vrot.lane.b32.xlu0 %v5310, 96
        %v5364 = vpop.permute.xlu0 %5363
        %5365 = vrot.lane.b32.xlu0 %v5311, 96
        %v5366 = vpop.permute.xlu0 %5365
        %5369 = vrot.lane.b32.xlu0 %v5300, 96
        %v5370 = vpop.permute.xlu0 %5369
        %v5373 = vsel %vm1008, %v5362, 0
        %5375 = vmatprep.subr.bf16.mxu0 0
        %5376 = vmatpush1.bf16.msra.mxu0 %v5364
        %5377 = vmatprep.subr.bf16.mxu0 0
        %5378 = vmatpush1.bf16.msra.mxu0 %v5366
        %5379 = vmatprep.subr.bf16.mxu0 0
        %5380 = vmatpush1.bf16.msra.mxu0 0
        %5381 = vmatprep.subr.bf16.mxu0 0
        %5382 = vmatpush1.bf16.msra.mxu0 0
        %5383 = vmatprep.subr.bf16.mxu0 0
        %5384 = vmatpush1.bf16.msra.mxu0 0
        %5385 = vmatprep.subr.bf16.mxu0 0
        %5386 = vmatpush1.bf16.msra.mxu0 0
        %5387 = vmatprep.subr.bf16.mxu0 0
        %5388 = vmatpush1.bf16.msra.mxu0 0
        %5389 = vmatprep.subr.bf16.mxu0 0
        %5390 = vmatpush1.bf16.msra.mxu0 0
        %5391 = vmatprep.subr.bf16.mxu0 0
        %5392 = vmatpush1.bf16.msra.mxu0 0
        %5393 = vmatprep.subr.bf16.mxu0 0
        %5394 = vmatpush1.bf16.msra.mxu0 0
        %5395 = vmatprep.subr.bf16.mxu0 0
        %5396 = vmatpush1.bf16.msra.mxu0 0
        %5397 = vmatprep.subr.bf16.mxu0 0
        %5398 = vmatpush1.bf16.msra.mxu0 0
        %5399 = vmatprep.subr.bf16.mxu0 0
        %5400 = vmatpush1.bf16.msra.mxu0 0
        %5401 = vmatprep.subr.bf16.mxu0 0
        %5402 = vmatpush1.bf16.msra.mxu0 0
        %5403 = vmatprep.subr.bf16.mxu0 0
        %5404 = vmatpush1.bf16.msra.mxu0 0
        %5405 = vmatprep.subr.bf16.mxu0 0
        %5406 = vmatpush1.bf16.msra.mxu0 0
        %5407 = vmatprep.mubr.bf16.mxu0 0
        %5408 = vmatmul.mubr.bf16.gmra.mrb[0].mxu0 %v5373
        %v5409 = vpop.f32.mrb[0].mxu0
        %v5410 = vadd.f32 %v5370, %v5409
        %v5411 = vpop.f32.mrb[0].mxu0
        %v5412 = vpop.f32.mrb[0].mxu0
        %v5413 = vadd.f32 %v5370, %v5412
        %v5414 = vpop.f32.mrb[0].mxu0
        %5415 = vdwg.mxu0
        %5418 = vrot.lane.b32.xlu0 %v5352, 124
        %v5419 = vpop.permute.xlu0 %5418
        %5420 = vrot.lane.b32.xlu0 %v5355, 124
        %v5421 = vpop.permute.xlu0 %5420
        %5424 = vrot.lane.b32.xlu0 %v5352, 120
        %v5425 = vpop.permute.xlu0 %5424
        %5426 = vrot.lane.b32.xlu0 %v5355, 120
        %v5427 = vpop.permute.xlu0 %5426
        %5430 = vrot.lane.b32.xlu0 %v5352, 116
        %v5431 = vpop.permute.xlu0 %5430
        %5432 = vrot.lane.b32.xlu0 %v5355, 116
        %v5433 = vpop.permute.xlu0 %5432
        %5436 = vrot.lane.b32.xlu0 %v5352, 112
        %v5437 = vpop.permute.xlu0 %5436
        %5438 = vrot.lane.b32.xlu0 %v5355, 112
        %v5439 = vpop.permute.xlu0 %5438
        %5442 = vrot.lane.b32.xlu0 %v5352, 108
        %v5443 = vpop.permute.xlu0 %5442
        %5444 = vrot.lane.b32.xlu0 %v5355, 108
        %v5445 = vpop.permute.xlu0 %5444
        %5448 = vrot.lane.b32.xlu0 %v5352, 104
        %v5449 = vpop.permute.xlu0 %5448
        %5450 = vrot.lane.b32.xlu0 %v5355, 104
        %v5451 = vpop.permute.xlu0 %5450
        %5454 = vrot.lane.b32.xlu0 %v5352, 100
        %v5455 = vpop.permute.xlu0 %5454
        %5456 = vrot.lane.b32.xlu0 %v5355, 100
        %v5457 = vpop.permute.xlu0 %5456
        %v5460 = vcombine.low %v5352, %v5425
        %v5461 = vcombine.high %v5352, %v5425
        %v5463 = vunpack.c.l.s4 1983009808
        %v5464 = vunpack.c.0.s8 %v5463
        %v5465 = vlaneseq
        %v5466 = vshrl.u32 %v5465, 7
        %v5467 = vsub.s32 %v5464, %v5466
        %v5468 = vrot.slane %v5460, %v5467
        %v5470 = vunpack.c.l.s4 1983009808
        %v5471 = vunpack.c.0.s8 %v5470
        %v5472 = vlaneseq
        %v5473 = vshrl.u32 %v5472, 7
        %v5474 = vsub.s32 %v5471, %v5473
        %v5475 = vrot.slane %v5461, %v5474
        %v5476 = vcombine.low %v5419, %v5431
        %v5477 = vcombine.high %v5419, %v5431
        %v5479 = vunpack.c.l.s4 1983009808
        %v5480 = vunpack.c.0.s8 %v5479
        %v5481 = vlaneseq
        %v5482 = vshrl.u32 %v5481, 7
        %v5483 = vsub.s32 %v5480, %v5482
        %v5484 = vrot.slane %v5476, %v5483
        %v5486 = vunpack.c.l.s4 1983009808
        %v5487 = vunpack.c.0.s8 %v5486
        %v5488 = vlaneseq
        %v5489 = vshrl.u32 %v5488, 7
        %v5490 = vsub.s32 %v5487, %v5489
        %v5491 = vrot.slane %v5477, %v5490
        %v5492 = vcombine.low %v5437, %v5449
        %v5493 = vcombine.high %v5437, %v5449
        %v5495 = vunpack.c.l.s4 1983009808
        %v5496 = vunpack.c.0.s8 %v5495
        %v5497 = vlaneseq
        %v5498 = vshrl.u32 %v5497, 7
        %v5499 = vsub.s32 %v5496, %v5498
        %v5500 = vrot.slane %v5492, %v5499
        %v5502 = vunpack.c.l.s4 1983009808
        %v5503 = vunpack.c.0.s8 %v5502
        %v5504 = vlaneseq
        %v5505 = vshrl.u32 %v5504, 7
        %v5506 = vsub.s32 %v5503, %v5505
        %v5507 = vrot.slane %v5493, %v5506
        %v5508 = vcombine.low %v5443, %v5455
        %v5509 = vcombine.high %v5443, %v5455
        %v5511 = vunpack.c.l.s4 1983009808
        %v5512 = vunpack.c.0.s8 %v5511
        %v5513 = vlaneseq
        %v5514 = vshrl.u32 %v5513, 7
        %v5515 = vsub.s32 %v5512, %v5514
        %v5516 = vrot.slane %v5508, %v5515
        %v5518 = vunpack.c.l.s4 1983009808
        %v5519 = vunpack.c.0.s8 %v5518
        %v5520 = vlaneseq
        %v5521 = vshrl.u32 %v5520, 7
        %v5522 = vsub.s32 %v5519, %v5521
        %v5523 = vrot.slane %v5509, %v5522
        %v5524 = vcombine.low %v5468, %v5484
        %v5525 = vcombine.high %v5468, %v5484
        %v5527 = vunpack.c.l.s4 1934713408
        %v5528 = vunpack.c.0.s8 %v5527
        %v5529 = vlaneseq
        %v5530 = vshrl.u32 %v5529, 7
        %v5531 = vsub.s32 %v5528, %v5530
        %v5532 = vrot.slane %v5524, %v5531
        %v5534 = vunpack.c.l.s4 1934713408
        %v5535 = vunpack.c.0.s8 %v5534
        %v5536 = vlaneseq
        %v5537 = vshrl.u32 %v5536, 7
        %v5538 = vsub.s32 %v5535, %v5537
        %v5539 = vrot.slane %v5525, %v5538
        %v5540 = vcombine.low %v5475, %v5491
        %v5541 = vcombine.high %v5475, %v5491
        %v5543 = vunpack.c.l.s4 1934713408
        %v5544 = vunpack.c.0.s8 %v5543
        %v5545 = vlaneseq
        %v5546 = vshrl.u32 %v5545, 7
        %v5547 = vsub.s32 %v5544, %v5546
        %v5548 = vrot.slane %v5540, %v5547
        %v5550 = vunpack.c.l.s4 1934713408
        %v5551 = vunpack.c.0.s8 %v5550
        %v5552 = vlaneseq
        %v5553 = vshrl.u32 %v5552, 7
        %v5554 = vsub.s32 %v5551, %v5553
        %v5555 = vrot.slane %v5541, %v5554
        %v5556 = vcombine.low %v5500, %v5516
        %v5557 = vcombine.high %v5500, %v5516
        %v5559 = vunpack.c.l.s4 1934713408
        %v5560 = vunpack.c.0.s8 %v5559
        %v5561 = vlaneseq
        %v5562 = vshrl.u32 %v5561, 7
        %v5563 = vsub.s32 %v5560, %v5562
        %v5564 = vrot.slane %v5556, %v5563
        %v5566 = vunpack.c.l.s4 1934713408
        %v5567 = vunpack.c.0.s8 %v5566
        %v5568 = vlaneseq
        %v5569 = vshrl.u32 %v5568, 7
        %v5570 = vsub.s32 %v5567, %v5569
        %v5571 = vrot.slane %v5557, %v5570
        %v5572 = vcombine.low %v5507, %v5523
        %v5573 = vcombine.high %v5507, %v5523
        %v5575 = vunpack.c.l.s4 1934713408
        %v5576 = vunpack.c.0.s8 %v5575
        %v5577 = vlaneseq
        %v5578 = vshrl.u32 %v5577, 7
        %v5579 = vsub.s32 %v5576, %v5578
        %v5580 = vrot.slane %v5572, %v5579
        %v5582 = vunpack.c.l.s4 1934713408
        %v5583 = vunpack.c.0.s8 %v5582
        %v5584 = vlaneseq
        %v5585 = vshrl.u32 %v5584, 7
        %v5586 = vsub.s32 %v5583, %v5585
        %v5587 = vrot.slane %v5573, %v5586
        %v5588 = vcombine.low %v5532, %v5564
        %v5589 = vcombine.high %v5532, %v5564
        %v5590 = vcombine.low %v5539, %v5571
        %v5591 = vcombine.high %v5539, %v5571
        %v5592 = vcombine.low %v5548, %v5580
        %v5593 = vcombine.high %v5548, %v5580
        %v5594 = vcombine.low %v5555, %v5587
        %v5595 = vcombine.high %v5555, %v5587
        %v5596 = vcombine.low %v5355, %v5427
        %v5597 = vcombine.high %v5355, %v5427
        %v5599 = vunpack.c.l.s4 1983009808
        %v5600 = vunpack.c.0.s8 %v5599
        %v5601 = vlaneseq
        %v5602 = vshrl.u32 %v5601, 7
        %v5603 = vsub.s32 %v5600, %v5602
        %v5604 = vrot.slane %v5596, %v5603
        %v5606 = vunpack.c.l.s4 1983009808
        %v5607 = vunpack.c.0.s8 %v5606
        %v5608 = vlaneseq
        %v5609 = vshrl.u32 %v5608, 7
        %v5610 = vsub.s32 %v5607, %v5609
        %v5611 = vrot.slane %v5597, %v5610
        %v5612 = vcombine.low %v5421, %v5433
        %v5613 = vcombine.high %v5421, %v5433
        %v5615 = vunpack.c.l.s4 1983009808
        %v5616 = vunpack.c.0.s8 %v5615
        %v5617 = vlaneseq
        %v5618 = vshrl.u32 %v5617, 7
        %v5619 = vsub.s32 %v5616, %v5618
        %v5620 = vrot.slane %v5612, %v5619
        %v5622 = vunpack.c.l.s4 1983009808
        %v5623 = vunpack.c.0.s8 %v5622
        %v5624 = vlaneseq
        %v5625 = vshrl.u32 %v5624, 7
        %v5626 = vsub.s32 %v5623, %v5625
        %v5627 = vrot.slane %v5613, %v5626
        %v5628 = vcombine.low %v5439, %v5451
        %v5629 = vcombine.high %v5439, %v5451
        %v5631 = vunpack.c.l.s4 1983009808
        %v5632 = vunpack.c.0.s8 %v5631
        %v5633 = vlaneseq
        %v5634 = vshrl.u32 %v5633, 7
        %v5635 = vsub.s32 %v5632, %v5634
        %v5636 = vrot.slane %v5628, %v5635
        %v5638 = vunpack.c.l.s4 1983009808
        %v5639 = vunpack.c.0.s8 %v5638
        %v5640 = vlaneseq
        %v5641 = vshrl.u32 %v5640, 7
        %v5642 = vsub.s32 %v5639, %v5641
        %v5643 = vrot.slane %v5629, %v5642
        %v5644 = vcombine.low %v5445, %v5457
        %v5645 = vcombine.high %v5445, %v5457
        %v5647 = vunpack.c.l.s4 1983009808
        %v5648 = vunpack.c.0.s8 %v5647
        %v5649 = vlaneseq
        %v5650 = vshrl.u32 %v5649, 7
        %v5651 = vsub.s32 %v5648, %v5650
        %v5652 = vrot.slane %v5644, %v5651
        %v5654 = vunpack.c.l.s4 1983009808
        %v5655 = vunpack.c.0.s8 %v5654
        %v5656 = vlaneseq
        %v5657 = vshrl.u32 %v5656, 7
        %v5658 = vsub.s32 %v5655, %v5657
        %v5659 = vrot.slane %v5645, %v5658
        %v5660 = vcombine.low %v5604, %v5620
        %v5661 = vcombine.high %v5604, %v5620
        %v5663 = vunpack.c.l.s4 1934713408
        %v5664 = vunpack.c.0.s8 %v5663
        %v5665 = vlaneseq
        %v5666 = vshrl.u32 %v5665, 7
        %v5667 = vsub.s32 %v5664, %v5666
        %v5668 = vrot.slane %v5660, %v5667
        %v5670 = vunpack.c.l.s4 1934713408
        %v5671 = vunpack.c.0.s8 %v5670
        %v5672 = vlaneseq
        %v5673 = vshrl.u32 %v5672, 7
        %v5674 = vsub.s32 %v5671, %v5673
        %v5675 = vrot.slane %v5661, %v5674
        %v5676 = vcombine.low %v5611, %v5627
        %v5677 = vcombine.high %v5611, %v5627
        %v5679 = vunpack.c.l.s4 1934713408
        %v5680 = vunpack.c.0.s8 %v5679
        %v5681 = vlaneseq
        %v5682 = vshrl.u32 %v5681, 7
        %v5683 = vsub.s32 %v5680, %v5682
        %v5684 = vrot.slane %v5676, %v5683
        %v5686 = vunpack.c.l.s4 1934713408
        %v5687 = vunpack.c.0.s8 %v5686
        %v5688 = vlaneseq
        %v5689 = vshrl.u32 %v5688, 7
        %v5690 = vsub.s32 %v5687, %v5689
        %v5691 = vrot.slane %v5677, %v5690
        %v5692 = vcombine.low %v5636, %v5652
        %v5693 = vcombine.high %v5636, %v5652
        %v5695 = vunpack.c.l.s4 1934713408
        %v5696 = vunpack.c.0.s8 %v5695
        %v5697 = vlaneseq
        %v5698 = vshrl.u32 %v5697, 7
        %v5699 = vsub.s32 %v5696, %v5698
        %v5700 = vrot.slane %v5692, %v5699
        %v5702 = vunpack.c.l.s4 1934713408
        %v5703 = vunpack.c.0.s8 %v5702
        %v5704 = vlaneseq
        %v5705 = vshrl.u32 %v5704, 7
        %v5706 = vsub.s32 %v5703, %v5705
        %v5707 = vrot.slane %v5693, %v5706
        %v5708 = vcombine.low %v5643, %v5659
        %v5709 = vcombine.high %v5643, %v5659
        %v5711 = vunpack.c.l.s4 1934713408
        %v5712 = vunpack.c.0.s8 %v5711
        %v5713 = vlaneseq
        %v5714 = vshrl.u32 %v5713, 7
        %v5715 = vsub.s32 %v5712, %v5714
        %v5716 = vrot.slane %v5708, %v5715
        %v5718 = vunpack.c.l.s4 1934713408
        %v5719 = vunpack.c.0.s8 %v5718
        %v5720 = vlaneseq
        %v5721 = vshrl.u32 %v5720, 7
        %v5722 = vsub.s32 %v5719, %v5721
        %v5723 = vrot.slane %v5709, %v5722
        %v5724 = vcombine.low %v5668, %v5700
        %v5725 = vcombine.high %v5668, %v5700
        %v5726 = vcombine.low %v5675, %v5707
        %v5727 = vcombine.high %v5675, %v5707
        %v5728 = vcombine.low %v5684, %v5716
        %v5729 = vcombine.high %v5684, %v5716
        %v5730 = vcombine.low %v5691, %v5723
        %v5731 = vcombine.high %v5691, %v5723
        %v5732 = vcombine.low %v5588, %v5590
        %v5733 = vcombine.high %v5588, %v5590
        %v5735 = vunpack.c.l.s4 1983009808
        %v5736 = vunpack.c.0.s8 %v5735
        %v5737 = vlaneseq
        %v5738 = vshrl.u32 %v5737, 7
        %v5739 = vsub.s32 %v5736, %v5738
        %v5740 = vrot.slane %v5732, %v5739
        %v5742 = vunpack.c.l.s4 1983009808
        %v5743 = vunpack.c.0.s8 %v5742
        %v5744 = vlaneseq
        %v5745 = vshrl.u32 %v5744, 7
        %v5746 = vsub.s32 %v5743, %v5745
        %v5747 = vrot.slane %v5733, %v5746
        %v5748 = vcombine.low %v5589, %v5591
        %v5749 = vcombine.high %v5589, %v5591
        %v5751 = vunpack.c.l.s4 1983009808
        %v5752 = vunpack.c.0.s8 %v5751
        %v5753 = vlaneseq
        %v5754 = vshrl.u32 %v5753, 7
        %v5755 = vsub.s32 %v5752, %v5754
        %v5756 = vrot.slane %v5748, %v5755
        %v5758 = vunpack.c.l.s4 1983009808
        %v5759 = vunpack.c.0.s8 %v5758
        %v5760 = vlaneseq
        %v5761 = vshrl.u32 %v5760, 7
        %v5762 = vsub.s32 %v5759, %v5761
        %v5763 = vrot.slane %v5749, %v5762
        %v5764 = vcombine.low %v5592, %v5594
        %v5765 = vcombine.high %v5592, %v5594
        %v5767 = vunpack.c.l.s4 1983009808
        %v5768 = vunpack.c.0.s8 %v5767
        %v5769 = vlaneseq
        %v5770 = vshrl.u32 %v5769, 7
        %v5771 = vsub.s32 %v5768, %v5770
        %v5772 = vrot.slane %v5764, %v5771
        %v5774 = vunpack.c.l.s4 1983009808
        %v5775 = vunpack.c.0.s8 %v5774
        %v5776 = vlaneseq
        %v5777 = vshrl.u32 %v5776, 7
        %v5778 = vsub.s32 %v5775, %v5777
        %v5779 = vrot.slane %v5765, %v5778
        %v5780 = vcombine.low %v5593, %v5595
        %v5781 = vcombine.high %v5593, %v5595
        %v5783 = vunpack.c.l.s4 1983009808
        %v5784 = vunpack.c.0.s8 %v5783
        %v5785 = vlaneseq
        %v5786 = vshrl.u32 %v5785, 7
        %v5787 = vsub.s32 %v5784, %v5786
        %v5788 = vrot.slane %v5780, %v5787
        %v5790 = vunpack.c.l.s4 1983009808
        %v5791 = vunpack.c.0.s8 %v5790
        %v5792 = vlaneseq
        %v5793 = vshrl.u32 %v5792, 7
        %v5794 = vsub.s32 %v5791, %v5793
        %v5795 = vrot.slane %v5781, %v5794
        %v5796 = vcombine.low %v5740, %v5756
        %v5797 = vcombine.high %v5740, %v5756
        %v5799 = vunpack.c.l.s4 1934713408
        %v5800 = vunpack.c.0.s8 %v5799
        %v5801 = vlaneseq
        %v5802 = vshrl.u32 %v5801, 7
        %v5803 = vsub.s32 %v5800, %v5802
        %v5804 = vrot.slane %v5796, %v5803
        %v5806 = vunpack.c.l.s4 1934713408
        %v5807 = vunpack.c.0.s8 %v5806
        %v5808 = vlaneseq
        %v5809 = vshrl.u32 %v5808, 7
        %v5810 = vsub.s32 %v5807, %v5809
        %v5811 = vrot.slane %v5797, %v5810
        %v5812 = vcombine.low %v5747, %v5763
        %v5813 = vcombine.high %v5747, %v5763
        %v5815 = vunpack.c.l.s4 1934713408
        %v5816 = vunpack.c.0.s8 %v5815
        %v5817 = vlaneseq
        %v5818 = vshrl.u32 %v5817, 7
        %v5819 = vsub.s32 %v5816, %v5818
        %v5820 = vrot.slane %v5812, %v5819
        %v5822 = vunpack.c.l.s4 1934713408
        %v5823 = vunpack.c.0.s8 %v5822
        %v5824 = vlaneseq
        %v5825 = vshrl.u32 %v5824, 7
        %v5826 = vsub.s32 %v5823, %v5825
        %v5827 = vrot.slane %v5813, %v5826
        %v5828 = vcombine.low %v5772, %v5788
        %v5829 = vcombine.high %v5772, %v5788
        %v5831 = vunpack.c.l.s4 1934713408
        %v5832 = vunpack.c.0.s8 %v5831
        %v5833 = vlaneseq
        %v5834 = vshrl.u32 %v5833, 7
        %v5835 = vsub.s32 %v5832, %v5834
        %v5836 = vrot.slane %v5828, %v5835
        %v5838 = vunpack.c.l.s4 1934713408
        %v5839 = vunpack.c.0.s8 %v5838
        %v5840 = vlaneseq
        %v5841 = vshrl.u32 %v5840, 7
        %v5842 = vsub.s32 %v5839, %v5841
        %v5843 = vrot.slane %v5829, %v5842
        %v5844 = vcombine.low %v5779, %v5795
        %v5845 = vcombine.high %v5779, %v5795
        %v5847 = vunpack.c.l.s4 1934713408
        %v5848 = vunpack.c.0.s8 %v5847
        %v5849 = vlaneseq
        %v5850 = vshrl.u32 %v5849, 7
        %v5851 = vsub.s32 %v5848, %v5850
        %v5852 = vrot.slane %v5844, %v5851
        %v5854 = vunpack.c.l.s4 1934713408
        %v5855 = vunpack.c.0.s8 %v5854
        %v5856 = vlaneseq
        %v5857 = vshrl.u32 %v5856, 7
        %v5858 = vsub.s32 %v5855, %v5857
        %v5859 = vrot.slane %v5845, %v5858
        %v5860 = vcombine.low %v5804, %v5836
        %v5861 = vcombine.high %v5804, %v5836
        %v5862 = vcombine.low %v5811, %v5843
        %v5863 = vcombine.high %v5811, %v5843
        %v5864 = vcombine.low %v5820, %v5852
        %v5865 = vcombine.high %v5820, %v5852
        %v5866 = vcombine.low %v5827, %v5859
        %v5867 = vcombine.high %v5827, %v5859
        %v5868 = vcombine.low %v5724, %v5726
        %v5869 = vcombine.high %v5724, %v5726
        %v5871 = vunpack.c.l.s4 1983009808
        %v5872 = vunpack.c.0.s8 %v5871
        %v5873 = vlaneseq
        %v5874 = vshrl.u32 %v5873, 7
        %v5875 = vsub.s32 %v5872, %v5874
        %v5876 = vrot.slane %v5868, %v5875
        %v5878 = vunpack.c.l.s4 1983009808
        %v5879 = vunpack.c.0.s8 %v5878
        %v5880 = vlaneseq
        %v5881 = vshrl.u32 %v5880, 7
        %v5882 = vsub.s32 %v5879, %v5881
        %v5883 = vrot.slane %v5869, %v5882
        %v5884 = vcombine.low %v5725, %v5727
        %v5885 = vcombine.high %v5725, %v5727
        %v5887 = vunpack.c.l.s4 1983009808
        %v5888 = vunpack.c.0.s8 %v5887
        %v5889 = vlaneseq
        %v5890 = vshrl.u32 %v5889, 7
        %v5891 = vsub.s32 %v5888, %v5890
        %v5892 = vrot.slane %v5884, %v5891
        %v5894 = vunpack.c.l.s4 1983009808
        %v5895 = vunpack.c.0.s8 %v5894
        %v5896 = vlaneseq
        %v5897 = vshrl.u32 %v5896, 7
        %v5898 = vsub.s32 %v5895, %v5897
        %v5899 = vrot.slane %v5885, %v5898
        %v5900 = vcombine.low %v5728, %v5730
        %v5901 = vcombine.high %v5728, %v5730
        %v5903 = vunpack.c.l.s4 1983009808
        %v5904 = vunpack.c.0.s8 %v5903
        %v5905 = vlaneseq
        %v5906 = vshrl.u32 %v5905, 7
        %v5907 = vsub.s32 %v5904, %v5906
        %v5908 = vrot.slane %v5900, %v5907
        %v5910 = vunpack.c.l.s4 1983009808
        %v5911 = vunpack.c.0.s8 %v5910
        %v5912 = vlaneseq
        %v5913 = vshrl.u32 %v5912, 7
        %v5914 = vsub.s32 %v5911, %v5913
        %v5915 = vrot.slane %v5901, %v5914
        %v5916 = vcombine.low %v5729, %v5731
        %v5917 = vcombine.high %v5729, %v5731
        %v5919 = vunpack.c.l.s4 1983009808
        %v5920 = vunpack.c.0.s8 %v5919
        %v5921 = vlaneseq
        %v5922 = vshrl.u32 %v5921, 7
        %v5923 = vsub.s32 %v5920, %v5922
        %v5924 = vrot.slane %v5916, %v5923
        %v5926 = vunpack.c.l.s4 1983009808
        %v5927 = vunpack.c.0.s8 %v5926
        %v5928 = vlaneseq
        %v5929 = vshrl.u32 %v5928, 7
        %v5930 = vsub.s32 %v5927, %v5929
        %v5931 = vrot.slane %v5917, %v5930
        %v5932 = vcombine.low %v5876, %v5892
        %v5933 = vcombine.high %v5876, %v5892
        %v5935 = vunpack.c.l.s4 1934713408
        %v5936 = vunpack.c.0.s8 %v5935
        %v5937 = vlaneseq
        %v5938 = vshrl.u32 %v5937, 7
        %v5939 = vsub.s32 %v5936, %v5938
        %v5940 = vrot.slane %v5932, %v5939
        %v5942 = vunpack.c.l.s4 1934713408
        %v5943 = vunpack.c.0.s8 %v5942
        %v5944 = vlaneseq
        %v5945 = vshrl.u32 %v5944, 7
        %v5946 = vsub.s32 %v5943, %v5945
        %v5947 = vrot.slane %v5933, %v5946
        %v5948 = vcombine.low %v5883, %v5899
        %v5949 = vcombine.high %v5883, %v5899
        %v5951 = vunpack.c.l.s4 1934713408
        %v5952 = vunpack.c.0.s8 %v5951
        %v5953 = vlaneseq
        %v5954 = vshrl.u32 %v5953, 7
        %v5955 = vsub.s32 %v5952, %v5954
        %v5956 = vrot.slane %v5948, %v5955
        %v5958 = vunpack.c.l.s4 1934713408
        %v5959 = vunpack.c.0.s8 %v5958
        %v5960 = vlaneseq
        %v5961 = vshrl.u32 %v5960, 7
        %v5962 = vsub.s32 %v5959, %v5961
        %v5963 = vrot.slane %v5949, %v5962
        %v5964 = vcombine.low %v5908, %v5924
        %v5965 = vcombine.high %v5908, %v5924
        %v5967 = vunpack.c.l.s4 1934713408
        %v5968 = vunpack.c.0.s8 %v5967
        %v5969 = vlaneseq
        %v5970 = vshrl.u32 %v5969, 7
        %v5971 = vsub.s32 %v5968, %v5970
        %v5972 = vrot.slane %v5964, %v5971
        %v5974 = vunpack.c.l.s4 1934713408
        %v5975 = vunpack.c.0.s8 %v5974
        %v5976 = vlaneseq
        %v5977 = vshrl.u32 %v5976, 7
        %v5978 = vsub.s32 %v5975, %v5977
        %v5979 = vrot.slane %v5965, %v5978
        %v5980 = vcombine.low %v5915, %v5931
        %v5981 = vcombine.high %v5915, %v5931
        %v5983 = vunpack.c.l.s4 1934713408
        %v5984 = vunpack.c.0.s8 %v5983
        %v5985 = vlaneseq
        %v5986 = vshrl.u32 %v5985, 7
        %v5987 = vsub.s32 %v5984, %v5986
        %v5988 = vrot.slane %v5980, %v5987
        %v5990 = vunpack.c.l.s4 1934713408
        %v5991 = vunpack.c.0.s8 %v5990
        %v5992 = vlaneseq
        %v5993 = vshrl.u32 %v5992, 7
        %v5994 = vsub.s32 %v5991, %v5993
        %v5995 = vrot.slane %v5981, %v5994
        %v5996 = vcombine.low %v5940, %v5972
        %v5997 = vcombine.high %v5940, %v5972
        %v5998 = vcombine.low %v5947, %v5979
        %v5999 = vcombine.high %v5947, %v5979
        %v6000 = vcombine.low %v5956, %v5988
        %v6001 = vcombine.high %v5956, %v5988
        %v6002 = vcombine.low %v5963, %v5995
        %v6003 = vcombine.high %v5963, %v5995
        %6006 = vrot.lane.b32.xlu0 %v5410, 124
        %v6007 = vpop.permute.xlu0 %6006
        %6008 = vrot.lane.b32.xlu0 %v5413, 124
        %v6009 = vpop.permute.xlu0 %6008
        %6012 = vrot.lane.b32.xlu0 %v5410, 120
        %v6013 = vpop.permute.xlu0 %6012
        %6014 = vrot.lane.b32.xlu0 %v5413, 120
        %v6015 = vpop.permute.xlu0 %6014
        %6018 = vrot.lane.b32.xlu0 %v5410, 116
        %v6019 = vpop.permute.xlu0 %6018
        %6020 = vrot.lane.b32.xlu0 %v5413, 116
        %v6021 = vpop.permute.xlu0 %6020
        %6024 = vrot.lane.b32.xlu0 %v5410, 112
        %v6025 = vpop.permute.xlu0 %6024
        %6026 = vrot.lane.b32.xlu0 %v5413, 112
        %v6027 = vpop.permute.xlu0 %6026
        %6030 = vrot.lane.b32.xlu0 %v5410, 108
        %v6031 = vpop.permute.xlu0 %6030
        %6032 = vrot.lane.b32.xlu0 %v5413, 108
        %v6033 = vpop.permute.xlu0 %6032
        %6036 = vrot.lane.b32.xlu0 %v5410, 104
        %v6037 = vpop.permute.xlu0 %6036
        %6038 = vrot.lane.b32.xlu0 %v5413, 104
        %v6039 = vpop.permute.xlu0 %6038
        %6042 = vrot.lane.b32.xlu0 %v5410, 100
        %v6043 = vpop.permute.xlu0 %6042
        %6044 = vrot.lane.b32.xlu0 %v5413, 100
        %v6045 = vpop.permute.xlu0 %6044
        %v6048 = vcombine.low %v5410, %v6013
        %v6049 = vcombine.high %v5410, %v6013
        %v6051 = vunpack.c.l.s4 1983009808
        %v6052 = vunpack.c.0.s8 %v6051
        %v6053 = vlaneseq
        %v6054 = vshrl.u32 %v6053, 7
        %v6055 = vsub.s32 %v6052, %v6054
        %v6056 = vrot.slane %v6048, %v6055
        %v6058 = vunpack.c.l.s4 1983009808
        %v6059 = vunpack.c.0.s8 %v6058
        %v6060 = vlaneseq
        %v6061 = vshrl.u32 %v6060, 7
        %v6062 = vsub.s32 %v6059, %v6061
        %v6063 = vrot.slane %v6049, %v6062
        %v6064 = vcombine.low %v6007, %v6019
        %v6065 = vcombine.high %v6007, %v6019
        %v6067 = vunpack.c.l.s4 1983009808
        %v6068 = vunpack.c.0.s8 %v6067
        %v6069 = vlaneseq
        %v6070 = vshrl.u32 %v6069, 7
        %v6071 = vsub.s32 %v6068, %v6070
        %v6072 = vrot.slane %v6064, %v6071
        %v6074 = vunpack.c.l.s4 1983009808
        %v6075 = vunpack.c.0.s8 %v6074
        %v6076 = vlaneseq
        %v6077 = vshrl.u32 %v6076, 7
        %v6078 = vsub.s32 %v6075, %v6077
        %v6079 = vrot.slane %v6065, %v6078
        %v6080 = vcombine.low %v6025, %v6037
        %v6081 = vcombine.high %v6025, %v6037
        %v6083 = vunpack.c.l.s4 1983009808
        %v6084 = vunpack.c.0.s8 %v6083
        %v6085 = vlaneseq
        %v6086 = vshrl.u32 %v6085, 7
        %v6087 = vsub.s32 %v6084, %v6086
        %v6088 = vrot.slane %v6080, %v6087
        %v6090 = vunpack.c.l.s4 1983009808
        %v6091 = vunpack.c.0.s8 %v6090
        %v6092 = vlaneseq
        %v6093 = vshrl.u32 %v6092, 7
        %v6094 = vsub.s32 %v6091, %v6093
        %v6095 = vrot.slane %v6081, %v6094
        %v6096 = vcombine.low %v6031, %v6043
        %v6097 = vcombine.high %v6031, %v6043
        %v6099 = vunpack.c.l.s4 1983009808
        %v6100 = vunpack.c.0.s8 %v6099
        %v6101 = vlaneseq
        %v6102 = vshrl.u32 %v6101, 7
        %v6103 = vsub.s32 %v6100, %v6102
        %v6104 = vrot.slane %v6096, %v6103
        %v6106 = vunpack.c.l.s4 1983009808
        %v6107 = vunpack.c.0.s8 %v6106
        %v6108 = vlaneseq
        %v6109 = vshrl.u32 %v6108, 7
        %v6110 = vsub.s32 %v6107, %v6109
        %v6111 = vrot.slane %v6097, %v6110
        %v6112 = vcombine.low %v6056, %v6072
        %v6113 = vcombine.high %v6056, %v6072
        %v6115 = vunpack.c.l.s4 1934713408
        %v6116 = vunpack.c.0.s8 %v6115
        %v6117 = vlaneseq
        %v6118 = vshrl.u32 %v6117, 7
        %v6119 = vsub.s32 %v6116, %v6118
        %v6120 = vrot.slane %v6112, %v6119
        %v6122 = vunpack.c.l.s4 1934713408
        %v6123 = vunpack.c.0.s8 %v6122
        %v6124 = vlaneseq
        %v6125 = vshrl.u32 %v6124, 7
        %v6126 = vsub.s32 %v6123, %v6125
        %v6127 = vrot.slane %v6113, %v6126
        %v6128 = vcombine.low %v6063, %v6079
        %v6129 = vcombine.high %v6063, %v6079
        %v6131 = vunpack.c.l.s4 1934713408
        %v6132 = vunpack.c.0.s8 %v6131
        %v6133 = vlaneseq
        %v6134 = vshrl.u32 %v6133, 7
        %v6135 = vsub.s32 %v6132, %v6134
        %v6136 = vrot.slane %v6128, %v6135
        %v6138 = vunpack.c.l.s4 1934713408
        %v6139 = vunpack.c.0.s8 %v6138
        %v6140 = vlaneseq
        %v6141 = vshrl.u32 %v6140, 7
        %v6142 = vsub.s32 %v6139, %v6141
        %v6143 = vrot.slane %v6129, %v6142
        %v6144 = vcombine.low %v6088, %v6104
        %v6145 = vcombine.high %v6088, %v6104
        %v6147 = vunpack.c.l.s4 1934713408
        %v6148 = vunpack.c.0.s8 %v6147
        %v6149 = vlaneseq
        %v6150 = vshrl.u32 %v6149, 7
        %v6151 = vsub.s32 %v6148, %v6150
        %v6152 = vrot.slane %v6144, %v6151
        %v6154 = vunpack.c.l.s4 1934713408
        %v6155 = vunpack.c.0.s8 %v6154
        %v6156 = vlaneseq
        %v6157 = vshrl.u32 %v6156, 7
        %v6158 = vsub.s32 %v6155, %v6157
        %v6159 = vrot.slane %v6145, %v6158
        %v6160 = vcombine.low %v6095, %v6111
        %v6161 = vcombine.high %v6095, %v6111
        %v6163 = vunpack.c.l.s4 1934713408
        %v6164 = vunpack.c.0.s8 %v6163
        %v6165 = vlaneseq
        %v6166 = vshrl.u32 %v6165, 7
        %v6167 = vsub.s32 %v6164, %v6166
        %v6168 = vrot.slane %v6160, %v6167
        %v6170 = vunpack.c.l.s4 1934713408
        %v6171 = vunpack.c.0.s8 %v6170
        %v6172 = vlaneseq
        %v6173 = vshrl.u32 %v6172, 7
        %v6174 = vsub.s32 %v6171, %v6173
        %v6175 = vrot.slane %v6161, %v6174
        %v6176 = vcombine.low %v6120, %v6152
        %v6177 = vcombine.high %v6120, %v6152
        %v6178 = vcombine.low %v6127, %v6159
        %v6179 = vcombine.high %v6127, %v6159
        %v6180 = vcombine.low %v6136, %v6168
        %v6181 = vcombine.high %v6136, %v6168
        %v6182 = vcombine.low %v6143, %v6175
        %v6183 = vcombine.high %v6143, %v6175
        %v6184 = vcombine.low %v5413, %v6015
        %v6185 = vcombine.high %v5413, %v6015
        %v6187 = vunpack.c.l.s4 1983009808
        %v6188 = vunpack.c.0.s8 %v6187
        %v6189 = vlaneseq
        %v6190 = vshrl.u32 %v6189, 7
        %v6191 = vsub.s32 %v6188, %v6190
        %v6192 = vrot.slane %v6184, %v6191
        %v6194 = vunpack.c.l.s4 1983009808
        %v6195 = vunpack.c.0.s8 %v6194
        %v6196 = vlaneseq
        %v6197 = vshrl.u32 %v6196, 7
        %v6198 = vsub.s32 %v6195, %v6197
        %v6199 = vrot.slane %v6185, %v6198
        %v6200 = vcombine.low %v6009, %v6021
        %v6201 = vcombine.high %v6009, %v6021
        %v6203 = vunpack.c.l.s4 1983009808
        %v6204 = vunpack.c.0.s8 %v6203
        %v6205 = vlaneseq
        %v6206 = vshrl.u32 %v6205, 7
        %v6207 = vsub.s32 %v6204, %v6206
        %v6208 = vrot.slane %v6200, %v6207
        %v6210 = vunpack.c.l.s4 1983009808
        %v6211 = vunpack.c.0.s8 %v6210
        %v6212 = vlaneseq
        %v6213 = vshrl.u32 %v6212, 7
        %v6214 = vsub.s32 %v6211, %v6213
        %v6215 = vrot.slane %v6201, %v6214
        %v6216 = vcombine.low %v6027, %v6039
        %v6217 = vcombine.high %v6027, %v6039
        %v6219 = vunpack.c.l.s4 1983009808
        %v6220 = vunpack.c.0.s8 %v6219
        %v6221 = vlaneseq
        %v6222 = vshrl.u32 %v6221, 7
        %v6223 = vsub.s32 %v6220, %v6222
        %v6224 = vrot.slane %v6216, %v6223
        %v6226 = vunpack.c.l.s4 1983009808
        %v6227 = vunpack.c.0.s8 %v6226
        %v6228 = vlaneseq
        %v6229 = vshrl.u32 %v6228, 7
        %v6230 = vsub.s32 %v6227, %v6229
        %v6231 = vrot.slane %v6217, %v6230
        %v6232 = vcombine.low %v6033, %v6045
        %v6233 = vcombine.high %v6033, %v6045
        %v6235 = vunpack.c.l.s4 1983009808
        %v6236 = vunpack.c.0.s8 %v6235
        %v6237 = vlaneseq
        %v6238 = vshrl.u32 %v6237, 7
        %v6239 = vsub.s32 %v6236, %v6238
        %v6240 = vrot.slane %v6232, %v6239
        %v6242 = vunpack.c.l.s4 1983009808
        %v6243 = vunpack.c.0.s8 %v6242
        %v6244 = vlaneseq
        %v6245 = vshrl.u32 %v6244, 7
        %v6246 = vsub.s32 %v6243, %v6245
        %v6247 = vrot.slane %v6233, %v6246
        %v6248 = vcombine.low %v6192, %v6208
        %v6249 = vcombine.high %v6192, %v6208
        %v6251 = vunpack.c.l.s4 1934713408
        %v6252 = vunpack.c.0.s8 %v6251
        %v6253 = vlaneseq
        %v6254 = vshrl.u32 %v6253, 7
        %v6255 = vsub.s32 %v6252, %v6254
        %v6256 = vrot.slane %v6248, %v6255
        %v6258 = vunpack.c.l.s4 1934713408
        %v6259 = vunpack.c.0.s8 %v6258
        %v6260 = vlaneseq
        %v6261 = vshrl.u32 %v6260, 7
        %v6262 = vsub.s32 %v6259, %v6261
        %v6263 = vrot.slane %v6249, %v6262
        %v6264 = vcombine.low %v6199, %v6215
        %v6265 = vcombine.high %v6199, %v6215
        %v6267 = vunpack.c.l.s4 1934713408
        %v6268 = vunpack.c.0.s8 %v6267
        %v6269 = vlaneseq
        %v6270 = vshrl.u32 %v6269, 7
        %v6271 = vsub.s32 %v6268, %v6270
        %v6272 = vrot.slane %v6264, %v6271
        %v6274 = vunpack.c.l.s4 1934713408
        %v6275 = vunpack.c.0.s8 %v6274
        %v6276 = vlaneseq
        %v6277 = vshrl.u32 %v6276, 7
        %v6278 = vsub.s32 %v6275, %v6277
        %v6279 = vrot.slane %v6265, %v6278
        %v6280 = vcombine.low %v6224, %v6240
        %v6281 = vcombine.high %v6224, %v6240
        %v6283 = vunpack.c.l.s4 1934713408
        %v6284 = vunpack.c.0.s8 %v6283
        %v6285 = vlaneseq
        %v6286 = vshrl.u32 %v6285, 7
        %v6287 = vsub.s32 %v6284, %v6286
        %v6288 = vrot.slane %v6280, %v6287
        %v6290 = vunpack.c.l.s4 1934713408
        %v6291 = vunpack.c.0.s8 %v6290
        %v6292 = vlaneseq
        %v6293 = vshrl.u32 %v6292, 7
        %v6294 = vsub.s32 %v6291, %v6293
        %v6295 = vrot.slane %v6281, %v6294
        %v6296 = vcombine.low %v6231, %v6247
        %v6297 = vcombine.high %v6231, %v6247
        %v6299 = vunpack.c.l.s4 1934713408
        %v6300 = vunpack.c.0.s8 %v6299
        %v6301 = vlaneseq
        %v6302 = vshrl.u32 %v6301, 7
        %v6303 = vsub.s32 %v6300, %v6302
        %v6304 = vrot.slane %v6296, %v6303
        %v6306 = vunpack.c.l.s4 1934713408
        %v6307 = vunpack.c.0.s8 %v6306
        %v6308 = vlaneseq
        %v6309 = vshrl.u32 %v6308, 7
        %v6310 = vsub.s32 %v6307, %v6309
        %v6311 = vrot.slane %v6297, %v6310
        %v6312 = vcombine.low %v6256, %v6288
        %v6313 = vcombine.high %v6256, %v6288
        %v6314 = vcombine.low %v6263, %v6295
        %v6315 = vcombine.high %v6263, %v6295
        %v6316 = vcombine.low %v6272, %v6304
        %v6317 = vcombine.high %v6272, %v6304
        %v6318 = vcombine.low %v6279, %v6311
        %v6319 = vcombine.high %v6279, %v6311
        %v6320 = vcombine.low %v6176, %v6178
        %v6321 = vcombine.high %v6176, %v6178
        %v6323 = vunpack.c.l.s4 1983009808
        %v6324 = vunpack.c.0.s8 %v6323
        %v6325 = vlaneseq
        %v6326 = vshrl.u32 %v6325, 7
        %v6327 = vsub.s32 %v6324, %v6326
        %v6328 = vrot.slane %v6320, %v6327
        %v6330 = vunpack.c.l.s4 1983009808
        %v6331 = vunpack.c.0.s8 %v6330
        %v6332 = vlaneseq
        %v6333 = vshrl.u32 %v6332, 7
        %v6334 = vsub.s32 %v6331, %v6333
        %v6335 = vrot.slane %v6321, %v6334
        %v6336 = vcombine.low %v6177, %v6179
        %v6337 = vcombine.high %v6177, %v6179
        %v6339 = vunpack.c.l.s4 1983009808
        %v6340 = vunpack.c.0.s8 %v6339
        %v6341 = vlaneseq
        %v6342 = vshrl.u32 %v6341, 7
        %v6343 = vsub.s32 %v6340, %v6342
        %v6344 = vrot.slane %v6336, %v6343
        %v6346 = vunpack.c.l.s4 1983009808
        %v6347 = vunpack.c.0.s8 %v6346
        %v6348 = vlaneseq
        %v6349 = vshrl.u32 %v6348, 7
        %v6350 = vsub.s32 %v6347, %v6349
        %v6351 = vrot.slane %v6337, %v6350
        %v6352 = vcombine.low %v6180, %v6182
        %v6353 = vcombine.high %v6180, %v6182
        %v6355 = vunpack.c.l.s4 1983009808
        %v6356 = vunpack.c.0.s8 %v6355
        %v6357 = vlaneseq
        %v6358 = vshrl.u32 %v6357, 7
        %v6359 = vsub.s32 %v6356, %v6358
        %v6360 = vrot.slane %v6352, %v6359
        %v6362 = vunpack.c.l.s4 1983009808
        %v6363 = vunpack.c.0.s8 %v6362
        %v6364 = vlaneseq
        %v6365 = vshrl.u32 %v6364, 7
        %v6366 = vsub.s32 %v6363, %v6365
        %v6367 = vrot.slane %v6353, %v6366
        %v6368 = vcombine.low %v6181, %v6183
        %v6369 = vcombine.high %v6181, %v6183
        %v6371 = vunpack.c.l.s4 1983009808
        %v6372 = vunpack.c.0.s8 %v6371
        %v6373 = vlaneseq
        %v6374 = vshrl.u32 %v6373, 7
        %v6375 = vsub.s32 %v6372, %v6374
        %v6376 = vrot.slane %v6368, %v6375
        %v6378 = vunpack.c.l.s4 1983009808
        %v6379 = vunpack.c.0.s8 %v6378
        %v6380 = vlaneseq
        %v6381 = vshrl.u32 %v6380, 7
        %v6382 = vsub.s32 %v6379, %v6381
        %v6383 = vrot.slane %v6369, %v6382
        %v6384 = vcombine.low %v6328, %v6344
        %v6385 = vcombine.high %v6328, %v6344
        %v6387 = vunpack.c.l.s4 1934713408
        %v6388 = vunpack.c.0.s8 %v6387
        %v6389 = vlaneseq
        %v6390 = vshrl.u32 %v6389, 7
        %v6391 = vsub.s32 %v6388, %v6390
        %v6392 = vrot.slane %v6384, %v6391
        %v6394 = vunpack.c.l.s4 1934713408
        %v6395 = vunpack.c.0.s8 %v6394
        %v6396 = vlaneseq
        %v6397 = vshrl.u32 %v6396, 7
        %v6398 = vsub.s32 %v6395, %v6397
        %v6399 = vrot.slane %v6385, %v6398
        %v6400 = vcombine.low %v6335, %v6351
        %v6401 = vcombine.high %v6335, %v6351
        %v6403 = vunpack.c.l.s4 1934713408
        %v6404 = vunpack.c.0.s8 %v6403
        %v6405 = vlaneseq
        %v6406 = vshrl.u32 %v6405, 7
        %v6407 = vsub.s32 %v6404, %v6406
        %v6408 = vrot.slane %v6400, %v6407
        %v6410 = vunpack.c.l.s4 1934713408
        %v6411 = vunpack.c.0.s8 %v6410
        %v6412 = vlaneseq
        %v6413 = vshrl.u32 %v6412, 7
        %v6414 = vsub.s32 %v6411, %v6413
        %v6415 = vrot.slane %v6401, %v6414
        %v6416 = vcombine.low %v6360, %v6376
        %v6417 = vcombine.high %v6360, %v6376
        %v6419 = vunpack.c.l.s4 1934713408
        %v6420 = vunpack.c.0.s8 %v6419
        %v6421 = vlaneseq
        %v6422 = vshrl.u32 %v6421, 7
        %v6423 = vsub.s32 %v6420, %v6422
        %v6424 = vrot.slane %v6416, %v6423
        %v6426 = vunpack.c.l.s4 1934713408
        %v6427 = vunpack.c.0.s8 %v6426
        %v6428 = vlaneseq
        %v6429 = vshrl.u32 %v6428, 7
        %v6430 = vsub.s32 %v6427, %v6429
        %v6431 = vrot.slane %v6417, %v6430
        %v6432 = vcombine.low %v6367, %v6383
        %v6433 = vcombine.high %v6367, %v6383
        %v6435 = vunpack.c.l.s4 1934713408
        %v6436 = vunpack.c.0.s8 %v6435
        %v6437 = vlaneseq
        %v6438 = vshrl.u32 %v6437, 7
        %v6439 = vsub.s32 %v6436, %v6438
        %v6440 = vrot.slane %v6432, %v6439
        %v6442 = vunpack.c.l.s4 1934713408
        %v6443 = vunpack.c.0.s8 %v6442
        %v6444 = vlaneseq
        %v6445 = vshrl.u32 %v6444, 7
        %v6446 = vsub.s32 %v6443, %v6445
        %v6447 = vrot.slane %v6433, %v6446
        %v6448 = vcombine.low %v6392, %v6424
        %v6449 = vcombine.high %v6392, %v6424
        %v6450 = vcombine.low %v6399, %v6431
        %v6451 = vcombine.high %v6399, %v6431
        %v6452 = vcombine.low %v6408, %v6440
        %v6453 = vcombine.high %v6408, %v6440
        %v6454 = vcombine.low %v6415, %v6447
        %v6455 = vcombine.high %v6415, %v6447
        %v6456 = vcombine.low %v6312, %v6314
        %v6457 = vcombine.high %v6312, %v6314
        %v6459 = vunpack.c.l.s4 1983009808
        %v6460 = vunpack.c.0.s8 %v6459
        %v6461 = vlaneseq
        %v6462 = vshrl.u32 %v6461, 7
        %v6463 = vsub.s32 %v6460, %v6462
        %v6464 = vrot.slane %v6456, %v6463
        %v6466 = vunpack.c.l.s4 1983009808
        %v6467 = vunpack.c.0.s8 %v6466
        %v6468 = vlaneseq
        %v6469 = vshrl.u32 %v6468, 7
        %v6470 = vsub.s32 %v6467, %v6469
        %v6471 = vrot.slane %v6457, %v6470
        %v6472 = vcombine.low %v6313, %v6315
        %v6473 = vcombine.high %v6313, %v6315
        %v6475 = vunpack.c.l.s4 1983009808
        %v6476 = vunpack.c.0.s8 %v6475
        %v6477 = vlaneseq
        %v6478 = vshrl.u32 %v6477, 7
        %v6479 = vsub.s32 %v6476, %v6478
        %v6480 = vrot.slane %v6472, %v6479
        %v6482 = vunpack.c.l.s4 1983009808
        %v6483 = vunpack.c.0.s8 %v6482
        %v6484 = vlaneseq
        %v6485 = vshrl.u32 %v6484, 7
        %v6486 = vsub.s32 %v6483, %v6485
        %v6487 = vrot.slane %v6473, %v6486
        %v6488 = vcombine.low %v6316, %v6318
        %v6489 = vcombine.high %v6316, %v6318
        %v6491 = vunpack.c.l.s4 1983009808
        %v6492 = vunpack.c.0.s8 %v6491
        %v6493 = vlaneseq
        %v6494 = vshrl.u32 %v6493, 7
        %v6495 = vsub.s32 %v6492, %v6494
        %v6496 = vrot.slane %v6488, %v6495
        %v6498 = vunpack.c.l.s4 1983009808
        %v6499 = vunpack.c.0.s8 %v6498
        %v6500 = vlaneseq
        %v6501 = vshrl.u32 %v6500, 7
        %v6502 = vsub.s32 %v6499, %v6501
        %v6503 = vrot.slane %v6489, %v6502
        %v6504 = vcombine.low %v6317, %v6319
        %v6505 = vcombine.high %v6317, %v6319
        %v6507 = vunpack.c.l.s4 1983009808
        %v6508 = vunpack.c.0.s8 %v6507
        %v6509 = vlaneseq
        %v6510 = vshrl.u32 %v6509, 7
        %v6511 = vsub.s32 %v6508, %v6510
        %v6512 = vrot.slane %v6504, %v6511
        %v6514 = vunpack.c.l.s4 1983009808
        %v6515 = vunpack.c.0.s8 %v6514
        %v6516 = vlaneseq
        %v6517 = vshrl.u32 %v6516, 7
        %v6518 = vsub.s32 %v6515, %v6517
        %v6519 = vrot.slane %v6505, %v6518
        %v6520 = vcombine.low %v6464, %v6480
        %v6521 = vcombine.high %v6464, %v6480
        %v6523 = vunpack.c.l.s4 1934713408
        %v6524 = vunpack.c.0.s8 %v6523
        %v6525 = vlaneseq
        %v6526 = vshrl.u32 %v6525, 7
        %v6527 = vsub.s32 %v6524, %v6526
        %v6528 = vrot.slane %v6520, %v6527
        %v6530 = vunpack.c.l.s4 1934713408
        %v6531 = vunpack.c.0.s8 %v6530
        %v6532 = vlaneseq
        %v6533 = vshrl.u32 %v6532, 7
        %v6534 = vsub.s32 %v6531, %v6533
        %v6535 = vrot.slane %v6521, %v6534
        %v6536 = vcombine.low %v6471, %v6487
        %v6537 = vcombine.high %v6471, %v6487
        %v6539 = vunpack.c.l.s4 1934713408
        %v6540 = vunpack.c.0.s8 %v6539
        %v6541 = vlaneseq
        %v6542 = vshrl.u32 %v6541, 7
        %v6543 = vsub.s32 %v6540, %v6542
        %v6544 = vrot.slane %v6536, %v6543
        %v6546 = vunpack.c.l.s4 1934713408
        %v6547 = vunpack.c.0.s8 %v6546
        %v6548 = vlaneseq
        %v6549 = vshrl.u32 %v6548, 7
        %v6550 = vsub.s32 %v6547, %v6549
        %v6551 = vrot.slane %v6537, %v6550
        %v6552 = vcombine.low %v6496, %v6512
        %v6553 = vcombine.high %v6496, %v6512
        %v6555 = vunpack.c.l.s4 1934713408
        %v6556 = vunpack.c.0.s8 %v6555
        %v6557 = vlaneseq
        %v6558 = vshrl.u32 %v6557, 7
        %v6559 = vsub.s32 %v6556, %v6558
        %v6560 = vrot.slane %v6552, %v6559
        %v6562 = vunpack.c.l.s4 1934713408
        %v6563 = vunpack.c.0.s8 %v6562
        %v6564 = vlaneseq
        %v6565 = vshrl.u32 %v6564, 7
        %v6566 = vsub.s32 %v6563, %v6565
        %v6567 = vrot.slane %v6553, %v6566
        %v6568 = vcombine.low %v6503, %v6519
        %v6569 = vcombine.high %v6503, %v6519
        %v6571 = vunpack.c.l.s4 1934713408
        %v6572 = vunpack.c.0.s8 %v6571
        %v6573 = vlaneseq
        %v6574 = vshrl.u32 %v6573, 7
        %v6575 = vsub.s32 %v6572, %v6574
        %v6576 = vrot.slane %v6568, %v6575
        %v6578 = vunpack.c.l.s4 1934713408
        %v6579 = vunpack.c.0.s8 %v6578
        %v6580 = vlaneseq
        %v6581 = vshrl.u32 %v6580, 7
        %v6582 = vsub.s32 %v6579, %v6581
        %v6583 = vrot.slane %v6569, %v6582
        %v6584 = vcombine.low %v6528, %v6560
        %v6585 = vcombine.high %v6528, %v6560
        %v6586 = vcombine.low %v6535, %v6567
        %v6587 = vcombine.high %v6535, %v6567
        %v6588 = vcombine.low %v6544, %v6576
        %v6589 = vcombine.high %v6544, %v6576
        %v6590 = vcombine.low %v6551, %v6583
        %v6591 = vcombine.high %v6551, %v6583
        %6592 = vrot.lane.b32.xlu0 %v5410, 96
        %v6593 = vpop.permute.xlu0 %6592
        %6594 = vrot.lane.b32.xlu0 %v5413, 96
        %v6595 = vpop.permute.xlu0 %6594
        %6596 = vrot.lane.b32.xlu0 %v6007, 96
        %v6597 = vpop.permute.xlu0 %6596
        %6598 = vrot.lane.b32.xlu0 %v6009, 96
        %v6599 = vpop.permute.xlu0 %6598
        %6600 = vrot.lane.b32.xlu0 %v6013, 96
        %v6601 = vpop.permute.xlu0 %6600
        %6602 = vrot.lane.b32.xlu0 %v6015, 96
        %v6603 = vpop.permute.xlu0 %6602
        %6604 = vrot.lane.b32.xlu0 %v6019, 96
        %v6605 = vpop.permute.xlu0 %6604
        %6606 = vrot.lane.b32.xlu0 %v6021, 96
        %v6607 = vpop.permute.xlu0 %6606
        %6608 = vrot.lane.b32.xlu0 %v6025, 96
        %v6609 = vpop.permute.xlu0 %6608
        %6610 = vrot.lane.b32.xlu0 %v6027, 96
        %v6611 = vpop.permute.xlu0 %6610
        %6612 = vrot.lane.b32.xlu0 %v6031, 96
        %v6613 = vpop.permute.xlu0 %6612
        %6614 = vrot.lane.b32.xlu0 %v6033, 96
        %v6615 = vpop.permute.xlu0 %6614
        %6616 = vrot.lane.b32.xlu0 %v6037, 96
        %v6617 = vpop.permute.xlu0 %6616
        %6618 = vrot.lane.b32.xlu0 %v6039, 96
        %v6619 = vpop.permute.xlu0 %6618
        %6620 = vrot.lane.b32.xlu0 %v6043, 96
        %v6621 = vpop.permute.xlu0 %6620
        %6622 = vrot.lane.b32.xlu0 %v6045, 96
        %v6623 = vpop.permute.xlu0 %6622
        %v6640 = vcombine.low %v6593, %v6601
        %v6641 = vcombine.high %v6593, %v6601
        %v6643 = vunpack.c.l.s4 1983009808
        %v6644 = vunpack.c.0.s8 %v6643
        %v6645 = vlaneseq
        %v6646 = vshrl.u32 %v6645, 7
        %v6647 = vsub.s32 %v6644, %v6646
        %v6648 = vrot.slane %v6640, %v6647
        %v6650 = vunpack.c.l.s4 1983009808
        %v6651 = vunpack.c.0.s8 %v6650
        %v6652 = vlaneseq
        %v6653 = vshrl.u32 %v6652, 7
        %v6654 = vsub.s32 %v6651, %v6653
        %v6655 = vrot.slane %v6641, %v6654
        %v6656 = vcombine.low %v6597, %v6605
        %v6657 = vcombine.high %v6597, %v6605
        %v6659 = vunpack.c.l.s4 1983009808
        %v6660 = vunpack.c.0.s8 %v6659
        %v6661 = vlaneseq
        %v6662 = vshrl.u32 %v6661, 7
        %v6663 = vsub.s32 %v6660, %v6662
        %v6664 = vrot.slane %v6656, %v6663
        %v6666 = vunpack.c.l.s4 1983009808
        %v6667 = vunpack.c.0.s8 %v6666
        %v6668 = vlaneseq
        %v6669 = vshrl.u32 %v6668, 7
        %v6670 = vsub.s32 %v6667, %v6669
        %v6671 = vrot.slane %v6657, %v6670
        %v6672 = vcombine.low %v6609, %v6617
        %v6673 = vcombine.high %v6609, %v6617
        %v6675 = vunpack.c.l.s4 1983009808
        %v6676 = vunpack.c.0.s8 %v6675
        %v6677 = vlaneseq
        %v6678 = vshrl.u32 %v6677, 7
        %v6679 = vsub.s32 %v6676, %v6678
        %v6680 = vrot.slane %v6672, %v6679
        %v6682 = vunpack.c.l.s4 1983009808
        %v6683 = vunpack.c.0.s8 %v6682
        %v6684 = vlaneseq
        %v6685 = vshrl.u32 %v6684, 7
        %v6686 = vsub.s32 %v6683, %v6685
        %v6687 = vrot.slane %v6673, %v6686
        %v6688 = vcombine.low %v6613, %v6621
        %v6689 = vcombine.high %v6613, %v6621
        %v6691 = vunpack.c.l.s4 1983009808
        %v6692 = vunpack.c.0.s8 %v6691
        %v6693 = vlaneseq
        %v6694 = vshrl.u32 %v6693, 7
        %v6695 = vsub.s32 %v6692, %v6694
        %v6696 = vrot.slane %v6688, %v6695
        %v6698 = vunpack.c.l.s4 1983009808
        %v6699 = vunpack.c.0.s8 %v6698
        %v6700 = vlaneseq
        %v6701 = vshrl.u32 %v6700, 7
        %v6702 = vsub.s32 %v6699, %v6701
        %v6703 = vrot.slane %v6689, %v6702
        %v6704 = vcombine.low %v6648, %v6664
        %v6705 = vcombine.high %v6648, %v6664
        %v6707 = vunpack.c.l.s4 1934713408
        %v6708 = vunpack.c.0.s8 %v6707
        %v6709 = vlaneseq
        %v6710 = vshrl.u32 %v6709, 7
        %v6711 = vsub.s32 %v6708, %v6710
        %v6712 = vrot.slane %v6704, %v6711
        %v6714 = vunpack.c.l.s4 1934713408
        %v6715 = vunpack.c.0.s8 %v6714
        %v6716 = vlaneseq
        %v6717 = vshrl.u32 %v6716, 7
        %v6718 = vsub.s32 %v6715, %v6717
        %v6719 = vrot.slane %v6705, %v6718
        %v6720 = vcombine.low %v6655, %v6671
        %v6721 = vcombine.high %v6655, %v6671
        %v6723 = vunpack.c.l.s4 1934713408
        %v6724 = vunpack.c.0.s8 %v6723
        %v6725 = vlaneseq
        %v6726 = vshrl.u32 %v6725, 7
        %v6727 = vsub.s32 %v6724, %v6726
        %v6728 = vrot.slane %v6720, %v6727
        %v6730 = vunpack.c.l.s4 1934713408
        %v6731 = vunpack.c.0.s8 %v6730
        %v6732 = vlaneseq
        %v6733 = vshrl.u32 %v6732, 7
        %v6734 = vsub.s32 %v6731, %v6733
        %v6735 = vrot.slane %v6721, %v6734
        %v6736 = vcombine.low %v6680, %v6696
        %v6737 = vcombine.high %v6680, %v6696
        %v6739 = vunpack.c.l.s4 1934713408
        %v6740 = vunpack.c.0.s8 %v6739
        %v6741 = vlaneseq
        %v6742 = vshrl.u32 %v6741, 7
        %v6743 = vsub.s32 %v6740, %v6742
        %v6744 = vrot.slane %v6736, %v6743
        %v6746 = vunpack.c.l.s4 1934713408
        %v6747 = vunpack.c.0.s8 %v6746
        %v6748 = vlaneseq
        %v6749 = vshrl.u32 %v6748, 7
        %v6750 = vsub.s32 %v6747, %v6749
        %v6751 = vrot.slane %v6737, %v6750
        %v6752 = vcombine.low %v6687, %v6703
        %v6753 = vcombine.high %v6687, %v6703
        %v6755 = vunpack.c.l.s4 1934713408
        %v6756 = vunpack.c.0.s8 %v6755
        %v6757 = vlaneseq
        %v6758 = vshrl.u32 %v6757, 7
        %v6759 = vsub.s32 %v6756, %v6758
        %v6760 = vrot.slane %v6752, %v6759
        %v6762 = vunpack.c.l.s4 1934713408
        %v6763 = vunpack.c.0.s8 %v6762
        %v6764 = vlaneseq
        %v6765 = vshrl.u32 %v6764, 7
        %v6766 = vsub.s32 %v6763, %v6765
        %v6767 = vrot.slane %v6753, %v6766
        %v6768 = vcombine.low %v6712, %v6744
        %v6769 = vcombine.high %v6712, %v6744
        %v6770 = vcombine.low %v6719, %v6751
        %v6771 = vcombine.high %v6719, %v6751
        %v6772 = vcombine.low %v6728, %v6760
        %v6773 = vcombine.high %v6728, %v6760
        %v6774 = vcombine.low %v6735, %v6767
        %v6775 = vcombine.high %v6735, %v6767
        %v6776 = vcombine.low %v6595, %v6603
        %v6777 = vcombine.high %v6595, %v6603
        %v6779 = vunpack.c.l.s4 1983009808
        %v6780 = vunpack.c.0.s8 %v6779
        %v6781 = vlaneseq
        %v6782 = vshrl.u32 %v6781, 7
        %v6783 = vsub.s32 %v6780, %v6782
        %v6784 = vrot.slane %v6776, %v6783
        %v6786 = vunpack.c.l.s4 1983009808
        %v6787 = vunpack.c.0.s8 %v6786
        %v6788 = vlaneseq
        %v6789 = vshrl.u32 %v6788, 7
        %v6790 = vsub.s32 %v6787, %v6789
        %v6791 = vrot.slane %v6777, %v6790
        %v6792 = vcombine.low %v6599, %v6607
        %v6793 = vcombine.high %v6599, %v6607
        %v6795 = vunpack.c.l.s4 1983009808
        %v6796 = vunpack.c.0.s8 %v6795
        %v6797 = vlaneseq
        %v6798 = vshrl.u32 %v6797, 7
        %v6799 = vsub.s32 %v6796, %v6798
        %v6800 = vrot.slane %v6792, %v6799
        %v6802 = vunpack.c.l.s4 1983009808
        %v6803 = vunpack.c.0.s8 %v6802
        %v6804 = vlaneseq
        %v6805 = vshrl.u32 %v6804, 7
        %v6806 = vsub.s32 %v6803, %v6805
        %v6807 = vrot.slane %v6793, %v6806
        %v6808 = vcombine.low %v6611, %v6619
        %v6809 = vcombine.high %v6611, %v6619
        %v6811 = vunpack.c.l.s4 1983009808
        %v6812 = vunpack.c.0.s8 %v6811
        %v6813 = vlaneseq
        %v6814 = vshrl.u32 %v6813, 7
        %v6815 = vsub.s32 %v6812, %v6814
        %v6816 = vrot.slane %v6808, %v6815
        %v6818 = vunpack.c.l.s4 1983009808
        %v6819 = vunpack.c.0.s8 %v6818
        %v6820 = vlaneseq
        %v6821 = vshrl.u32 %v6820, 7
        %v6822 = vsub.s32 %v6819, %v6821
        %v6823 = vrot.slane %v6809, %v6822
        %v6824 = vcombine.low %v6615, %v6623
        %v6825 = vcombine.high %v6615, %v6623
        %v6827 = vunpack.c.l.s4 1983009808
        %v6828 = vunpack.c.0.s8 %v6827
        %v6829 = vlaneseq
        %v6830 = vshrl.u32 %v6829, 7
        %v6831 = vsub.s32 %v6828, %v6830
        %v6832 = vrot.slane %v6824, %v6831
        %v6834 = vunpack.c.l.s4 1983009808
        %v6835 = vunpack.c.0.s8 %v6834
        %v6836 = vlaneseq
        %v6837 = vshrl.u32 %v6836, 7
        %v6838 = vsub.s32 %v6835, %v6837
        %v6839 = vrot.slane %v6825, %v6838
        %v6840 = vcombine.low %v6784, %v6800
        %v6841 = vcombine.high %v6784, %v6800
        %v6843 = vunpack.c.l.s4 1934713408
        %v6844 = vunpack.c.0.s8 %v6843
        %v6845 = vlaneseq
        %v6846 = vshrl.u32 %v6845, 7
        %v6847 = vsub.s32 %v6844, %v6846
        %v6848 = vrot.slane %v6840, %v6847
        %v6850 = vunpack.c.l.s4 1934713408
        %v6851 = vunpack.c.0.s8 %v6850
        %v6852 = vlaneseq
        %v6853 = vshrl.u32 %v6852, 7
        %v6854 = vsub.s32 %v6851, %v6853
        %v6855 = vrot.slane %v6841, %v6854
        %v6856 = vcombine.low %v6791, %v6807
        %v6857 = vcombine.high %v6791, %v6807
        %v6859 = vunpack.c.l.s4 1934713408
        %v6860 = vunpack.c.0.s8 %v6859
        %v6861 = vlaneseq
        %v6862 = vshrl.u32 %v6861, 7
        %v6863 = vsub.s32 %v6860, %v6862
        %v6864 = vrot.slane %v6856, %v6863
        %v6866 = vunpack.c.l.s4 1934713408
        %v6867 = vunpack.c.0.s8 %v6866
        %v6868 = vlaneseq
        %v6869 = vshrl.u32 %v6868, 7
        %v6870 = vsub.s32 %v6867, %v6869
        %v6871 = vrot.slane %v6857, %v6870
        %v6872 = vcombine.low %v6816, %v6832
        %v6873 = vcombine.high %v6816, %v6832
        %v6875 = vunpack.c.l.s4 1934713408
        %v6876 = vunpack.c.0.s8 %v6875
        %v6877 = vlaneseq
        %v6878 = vshrl.u32 %v6877, 7
        %v6879 = vsub.s32 %v6876, %v6878
        %v6880 = vrot.slane %v6872, %v6879
        %v6882 = vunpack.c.l.s4 1934713408
        %v6883 = vunpack.c.0.s8 %v6882
        %v6884 = vlaneseq
        %v6885 = vshrl.u32 %v6884, 7
        %v6886 = vsub.s32 %v6883, %v6885
        %v6887 = vrot.slane %v6873, %v6886
        %v6888 = vcombine.low %v6823, %v6839
        %v6889 = vcombine.high %v6823, %v6839
        %v6891 = vunpack.c.l.s4 1934713408
        %v6892 = vunpack.c.0.s8 %v6891
        %v6893 = vlaneseq
        %v6894 = vshrl.u32 %v6893, 7
        %v6895 = vsub.s32 %v6892, %v6894
        %v6896 = vrot.slane %v6888, %v6895
        %v6898 = vunpack.c.l.s4 1934713408
        %v6899 = vunpack.c.0.s8 %v6898
        %v6900 = vlaneseq
        %v6901 = vshrl.u32 %v6900, 7
        %v6902 = vsub.s32 %v6899, %v6901
        %v6903 = vrot.slane %v6889, %v6902
        %v6904 = vcombine.low %v6848, %v6880
        %v6905 = vcombine.high %v6848, %v6880
        %v6906 = vcombine.low %v6855, %v6887
        %v6907 = vcombine.high %v6855, %v6887
        %v6908 = vcombine.low %v6864, %v6896
        %v6909 = vcombine.high %v6864, %v6896
        %v6910 = vcombine.low %v6871, %v6903
        %v6911 = vcombine.high %v6871, %v6903
        %v6912 = vcombine.low %v6768, %v6770
        %v6913 = vcombine.high %v6768, %v6770
        %v6915 = vunpack.c.l.s4 1983009808
        %v6916 = vunpack.c.0.s8 %v6915
        %v6917 = vlaneseq
        %v6918 = vshrl.u32 %v6917, 7
        %v6919 = vsub.s32 %v6916, %v6918
        %v6920 = vrot.slane %v6912, %v6919
        %v6922 = vunpack.c.l.s4 1983009808
        %v6923 = vunpack.c.0.s8 %v6922
        %v6924 = vlaneseq
        %v6925 = vshrl.u32 %v6924, 7
        %v6926 = vsub.s32 %v6923, %v6925
        %v6927 = vrot.slane %v6913, %v6926
        %v6928 = vcombine.low %v6769, %v6771
        %v6929 = vcombine.high %v6769, %v6771
        %v6931 = vunpack.c.l.s4 1983009808
        %v6932 = vunpack.c.0.s8 %v6931
        %v6933 = vlaneseq
        %v6934 = vshrl.u32 %v6933, 7
        %v6935 = vsub.s32 %v6932, %v6934
        %v6936 = vrot.slane %v6928, %v6935
        %v6938 = vunpack.c.l.s4 1983009808
        %v6939 = vunpack.c.0.s8 %v6938
        %v6940 = vlaneseq
        %v6941 = vshrl.u32 %v6940, 7
        %v6942 = vsub.s32 %v6939, %v6941
        %v6943 = vrot.slane %v6929, %v6942
        %v6944 = vcombine.low %v6772, %v6774
        %v6945 = vcombine.high %v6772, %v6774
        %v6947 = vunpack.c.l.s4 1983009808
        %v6948 = vunpack.c.0.s8 %v6947
        %v6949 = vlaneseq
        %v6950 = vshrl.u32 %v6949, 7
        %v6951 = vsub.s32 %v6948, %v6950
        %v6952 = vrot.slane %v6944, %v6951
        %v6954 = vunpack.c.l.s4 1983009808
        %v6955 = vunpack.c.0.s8 %v6954
        %v6956 = vlaneseq
        %v6957 = vshrl.u32 %v6956, 7
        %v6958 = vsub.s32 %v6955, %v6957
        %v6959 = vrot.slane %v6945, %v6958
        %v6960 = vcombine.low %v6773, %v6775
        %v6961 = vcombine.high %v6773, %v6775
        %v6963 = vunpack.c.l.s4 1983009808
        %v6964 = vunpack.c.0.s8 %v6963
        %v6965 = vlaneseq
        %v6966 = vshrl.u32 %v6965, 7
        %v6967 = vsub.s32 %v6964, %v6966
        %v6968 = vrot.slane %v6960, %v6967
        %v6970 = vunpack.c.l.s4 1983009808
        %v6971 = vunpack.c.0.s8 %v6970
        %v6972 = vlaneseq
        %v6973 = vshrl.u32 %v6972, 7
        %v6974 = vsub.s32 %v6971, %v6973
        %v6975 = vrot.slane %v6961, %v6974
        %v6976 = vcombine.low %v6920, %v6936
        %v6977 = vcombine.high %v6920, %v6936
        %v6979 = vunpack.c.l.s4 1934713408
        %v6980 = vunpack.c.0.s8 %v6979
        %v6981 = vlaneseq
        %v6982 = vshrl.u32 %v6981, 7
        %v6983 = vsub.s32 %v6980, %v6982
        %v6984 = vrot.slane %v6976, %v6983
        %v6986 = vunpack.c.l.s4 1934713408
        %v6987 = vunpack.c.0.s8 %v6986
        %v6988 = vlaneseq
        %v6989 = vshrl.u32 %v6988, 7
        %v6990 = vsub.s32 %v6987, %v6989
        %v6991 = vrot.slane %v6977, %v6990
        %v6992 = vcombine.low %v6927, %v6943
        %v6993 = vcombine.high %v6927, %v6943
        %v6995 = vunpack.c.l.s4 1934713408
        %v6996 = vunpack.c.0.s8 %v6995
        %v6997 = vlaneseq
        %v6998 = vshrl.u32 %v6997, 7
        %v6999 = vsub.s32 %v6996, %v6998
        %v7000 = vrot.slane %v6992, %v6999
        %v7002 = vunpack.c.l.s4 1934713408
        %v7003 = vunpack.c.0.s8 %v7002
        %v7004 = vlaneseq
        %v7005 = vshrl.u32 %v7004, 7
        %v7006 = vsub.s32 %v7003, %v7005
        %v7007 = vrot.slane %v6993, %v7006
        %v7008 = vcombine.low %v6952, %v6968
        %v7009 = vcombine.high %v6952, %v6968
        %v7011 = vunpack.c.l.s4 1934713408
        %v7012 = vunpack.c.0.s8 %v7011
        %v7013 = vlaneseq
        %v7014 = vshrl.u32 %v7013, 7
        %v7015 = vsub.s32 %v7012, %v7014
        %v7016 = vrot.slane %v7008, %v7015
        %v7018 = vunpack.c.l.s4 1934713408
        %v7019 = vunpack.c.0.s8 %v7018
        %v7020 = vlaneseq
        %v7021 = vshrl.u32 %v7020, 7
        %v7022 = vsub.s32 %v7019, %v7021
        %v7023 = vrot.slane %v7009, %v7022
        %v7024 = vcombine.low %v6959, %v6975
        %v7025 = vcombine.high %v6959, %v6975
        %v7027 = vunpack.c.l.s4 1934713408
        %v7028 = vunpack.c.0.s8 %v7027
        %v7029 = vlaneseq
        %v7030 = vshrl.u32 %v7029, 7
        %v7031 = vsub.s32 %v7028, %v7030
        %v7032 = vrot.slane %v7024, %v7031
        %v7034 = vunpack.c.l.s4 1934713408
        %v7035 = vunpack.c.0.s8 %v7034
        %v7036 = vlaneseq
        %v7037 = vshrl.u32 %v7036, 7
        %v7038 = vsub.s32 %v7035, %v7037
        %v7039 = vrot.slane %v7025, %v7038
        %v7040 = vcombine.low %v6984, %v7016
        %v7041 = vcombine.high %v6984, %v7016
        %v7042 = vcombine.low %v6991, %v7023
        %v7043 = vcombine.high %v6991, %v7023
        %v7044 = vcombine.low %v7000, %v7032
        %v7045 = vcombine.high %v7000, %v7032
        %v7046 = vcombine.low %v7007, %v7039
        %v7047 = vcombine.high %v7007, %v7039
        %v7048 = vcombine.low %v6904, %v6906
        %v7049 = vcombine.high %v6904, %v6906
        %v7051 = vunpack.c.l.s4 1983009808
        %v7052 = vunpack.c.0.s8 %v7051
        %v7053 = vlaneseq
        %v7054 = vshrl.u32 %v7053, 7
        %v7055 = vsub.s32 %v7052, %v7054
        %v7056 = vrot.slane %v7048, %v7055
        %v7058 = vunpack.c.l.s4 1983009808
        %v7059 = vunpack.c.0.s8 %v7058
        %v7060 = vlaneseq
        %v7061 = vshrl.u32 %v7060, 7
        %v7062 = vsub.s32 %v7059, %v7061
        %v7063 = vrot.slane %v7049, %v7062
        %v7064 = vcombine.low %v6905, %v6907
        %v7065 = vcombine.high %v6905, %v6907
        %v7067 = vunpack.c.l.s4 1983009808
        %v7068 = vunpack.c.0.s8 %v7067
        %v7069 = vlaneseq
        %v7070 = vshrl.u32 %v7069, 7
        %v7071 = vsub.s32 %v7068, %v7070
        %v7072 = vrot.slane %v7064, %v7071
        %v7074 = vunpack.c.l.s4 1983009808
        %v7075 = vunpack.c.0.s8 %v7074
        %v7076 = vlaneseq
        %v7077 = vshrl.u32 %v7076, 7
        %v7078 = vsub.s32 %v7075, %v7077
        %v7079 = vrot.slane %v7065, %v7078
        %v7080 = vcombine.low %v6908, %v6910
        %v7081 = vcombine.high %v6908, %v6910
        %v7083 = vunpack.c.l.s4 1983009808
        %v7084 = vunpack.c.0.s8 %v7083
        %v7085 = vlaneseq
        %v7086 = vshrl.u32 %v7085, 7
        %v7087 = vsub.s32 %v7084, %v7086
        %v7088 = vrot.slane %v7080, %v7087
        %v7090 = vunpack.c.l.s4 1983009808
        %v7091 = vunpack.c.0.s8 %v7090
        %v7092 = vlaneseq
        %v7093 = vshrl.u32 %v7092, 7
        %v7094 = vsub.s32 %v7091, %v7093
        %v7095 = vrot.slane %v7081, %v7094
        %v7096 = vcombine.low %v6909, %v6911
        %v7097 = vcombine.high %v6909, %v6911
        %v7099 = vunpack.c.l.s4 1983009808
        %v7100 = vunpack.c.0.s8 %v7099
        %v7101 = vlaneseq
        %v7102 = vshrl.u32 %v7101, 7
        %v7103 = vsub.s32 %v7100, %v7102
        %v7104 = vrot.slane %v7096, %v7103
        %v7106 = vunpack.c.l.s4 1983009808
        %v7107 = vunpack.c.0.s8 %v7106
        %v7108 = vlaneseq
        %v7109 = vshrl.u32 %v7108, 7
        %v7110 = vsub.s32 %v7107, %v7109
        %v7111 = vrot.slane %v7097, %v7110
        %v7112 = vcombine.low %v7056, %v7072
        %v7113 = vcombine.high %v7056, %v7072
        %v7115 = vunpack.c.l.s4 1934713408
        %v7116 = vunpack.c.0.s8 %v7115
        %v7117 = vlaneseq
        %v7118 = vshrl.u32 %v7117, 7
        %v7119 = vsub.s32 %v7116, %v7118
        %v7120 = vrot.slane %v7112, %v7119
        %v7122 = vunpack.c.l.s4 1934713408
        %v7123 = vunpack.c.0.s8 %v7122
        %v7124 = vlaneseq
        %v7125 = vshrl.u32 %v7124, 7
        %v7126 = vsub.s32 %v7123, %v7125
        %v7127 = vrot.slane %v7113, %v7126
        %v7128 = vcombine.low %v7063, %v7079
        %v7129 = vcombine.high %v7063, %v7079
        %v7131 = vunpack.c.l.s4 1934713408
        %v7132 = vunpack.c.0.s8 %v7131
        %v7133 = vlaneseq
        %v7134 = vshrl.u32 %v7133, 7
        %v7135 = vsub.s32 %v7132, %v7134
        %v7136 = vrot.slane %v7128, %v7135
        %v7138 = vunpack.c.l.s4 1934713408
        %v7139 = vunpack.c.0.s8 %v7138
        %v7140 = vlaneseq
        %v7141 = vshrl.u32 %v7140, 7
        %v7142 = vsub.s32 %v7139, %v7141
        %v7143 = vrot.slane %v7129, %v7142
        %v7144 = vcombine.low %v7088, %v7104
        %v7145 = vcombine.high %v7088, %v7104
        %v7147 = vunpack.c.l.s4 1934713408
        %v7148 = vunpack.c.0.s8 %v7147
        %v7149 = vlaneseq
        %v7150 = vshrl.u32 %v7149, 7
        %v7151 = vsub.s32 %v7148, %v7150
        %v7152 = vrot.slane %v7144, %v7151
        %v7154 = vunpack.c.l.s4 1934713408
        %v7155 = vunpack.c.0.s8 %v7154
        %v7156 = vlaneseq
        %v7157 = vshrl.u32 %v7156, 7
        %v7158 = vsub.s32 %v7155, %v7157
        %v7159 = vrot.slane %v7145, %v7158
        %v7160 = vcombine.low %v7095, %v7111
        %v7161 = vcombine.high %v7095, %v7111
        %v7163 = vunpack.c.l.s4 1934713408
        %v7164 = vunpack.c.0.s8 %v7163
        %v7165 = vlaneseq
        %v7166 = vshrl.u32 %v7165, 7
        %v7167 = vsub.s32 %v7164, %v7166
        %v7168 = vrot.slane %v7160, %v7167
        %v7170 = vunpack.c.l.s4 1934713408
        %v7171 = vunpack.c.0.s8 %v7170
        %v7172 = vlaneseq
        %v7173 = vshrl.u32 %v7172, 7
        %v7174 = vsub.s32 %v7171, %v7173
        %v7175 = vrot.slane %v7161, %v7174
        %v7176 = vcombine.low %v7120, %v7152
        %v7177 = vcombine.high %v7120, %v7152
        %v7178 = vcombine.low %v7127, %v7159
        %v7179 = vcombine.high %v7127, %v7159
        %v7180 = vcombine.low %v7136, %v7168
        %v7181 = vcombine.high %v7136, %v7168
        %v7182 = vcombine.low %v7143, %v7175
        %v7183 = vcombine.high %v7143, %v7175
        %v7184 = vpack.c.bf16 %v5860, %v5860
        %v7185 = vpack.c.bf16 %v5996, %v5996
        %v7186 = vpack.c.bf16 %v5861, %v5861
        %v7187 = vpack.c.bf16 %v5997, %v5997
        %v7188 = vpack.c.bf16 %v5862, %v5862
        %v7189 = vpack.c.bf16 %v5998, %v5998
        %v7190 = vpack.c.bf16 %v5863, %v5863
        %v7191 = vpack.c.bf16 %v5999, %v5999
        %v7192 = vpack.c.bf16 %v5864, %v5864
        %v7193 = vpack.c.bf16 %v6000, %v6000
        %v7194 = vpack.c.bf16 %v5865, %v5865
        %v7195 = vpack.c.bf16 %v6001, %v6001
        %v7196 = vpack.c.bf16 %v5866, %v5866
        %v7197 = vpack.c.bf16 %v6002, %v6002
        %v7198 = vpack.c.bf16 %v5867, %v5867
        %v7199 = vpack.c.bf16 %v6003, %v6003
        %v7200 = vpack.c.bf16 %v6448, %v6448
        %v7201 = vpack.c.bf16 %v6584, %v6584
        %v7202 = vpack.c.bf16 %v6449, %v6449
        %v7203 = vpack.c.bf16 %v6585, %v6585
        %v7204 = vpack.c.bf16 %v6450, %v6450
        %v7205 = vpack.c.bf16 %v6586, %v6586
        %v7206 = vpack.c.bf16 %v6451, %v6451
        %v7207 = vpack.c.bf16 %v6587, %v6587
        %v7208 = vpack.c.bf16 %v6452, %v6452
        %v7209 = vpack.c.bf16 %v6588, %v6588
        %v7210 = vpack.c.bf16 %v6453, %v6453
        %v7211 = vpack.c.bf16 %v6589, %v6589
        %v7212 = vpack.c.bf16 %v6454, %v6454
        %v7213 = vpack.c.bf16 %v6590, %v6590
        %v7214 = vpack.c.bf16 %v6455, %v6455
        %v7215 = vpack.c.bf16 %v6591, %v6591
        %v7217 = vsel %vm2857, %v7184, 0
        %v7220 = vsel %vm2857, %v7200, 0
        %7222 = vmatprep.subr.bf16.mxu0 0
        %7223 = vmatpush1.bf16.xpose.msra.mxu0 %v7220
        %7224 = vmatprep.subr.bf16.mxu0 0
        %7225 = vmatpush1.bf16.xpose.msra.mxu0 0
        %7226 = vmatprep.subr.bf16.mxu0 0
        %7227 = vmatpush1.bf16.xpose.msra.mxu0 0
        %7228 = vmatprep.subr.bf16.mxu0 0
        %7229 = vmatpush1.bf16.xpose.msra.mxu0 0
        %7230 = vmatprep.subr.bf16.mxu0 0
        %7231 = vmatpush1.bf16.xpose.msra.mxu0 0
        %7232 = vmatprep.subr.bf16.mxu0 0
        %7233 = vmatpush1.bf16.xpose.msra.mxu0 0
        %7234 = vmatprep.subr.bf16.mxu0 0
        %7235 = vmatpush1.bf16.xpose.msra.mxu0 0
        %7236 = vmatprep.subr.bf16.mxu0 0
        %7237 = vmatpush1.bf16.xpose.msra.mxu0 0
        %7238 = vmatprep.subr.bf16.mxu0 0
        %7239 = vmatpush1.bf16.xpose.msra.mxu0 0
        %7240 = vmatprep.subr.bf16.mxu0 0
        %7241 = vmatpush1.bf16.xpose.msra.mxu0 0
        %7242 = vmatprep.subr.bf16.mxu0 0
        %7243 = vmatpush1.bf16.xpose.msra.mxu0 0
        %7244 = vmatprep.subr.bf16.mxu0 0
        %7245 = vmatpush1.bf16.xpose.msra.mxu0 0
        %7246 = vmatprep.subr.bf16.mxu0 0
        %7247 = vmatpush1.bf16.xpose.msra.mxu0 0
        %7248 = vmatprep.subr.bf16.mxu0 0
        %7249 = vmatpush1.bf16.xpose.msra.mxu0 0
        %7250 = vmatprep.subr.bf16.mxu0 0
        %7251 = vmatpush1.bf16.xpose.msra.mxu0 0
        %7252 = vmatprep.subr.bf16.mxu0 0
        %7253 = vmatpush1.bf16.xpose.msra.mxu0 0
        %7254 = vmatprep.mubr.bf16.mxu0 0
        %7255 = vmatmul.mubr.bf16.gmra.mrb[0].mxu0 %v7217
        %v7256 = vpop.f32.mrb[0].mxu0
        %v7257 = vadd.f32 0.0, %v7256
        %v7258 = vpop.f32.mrb[0].mxu0
        %v7259 = vpop.f32.mrb[0].mxu0
        %v7260 = vpop.f32.mrb[0].mxu0
        %7261 = vdwg.mxu0
        %v7263 = vsel %vm2857, %v7185, 0
        %v7266 = vsel %vm2857, %v7201, 0
        %7268 = vmatprep.subr.bf16.mxu0 0
        %7269 = vmatpush1.bf16.xpose.msra.mxu0 %v7266
        %7270 = vmatprep.subr.bf16.mxu0 0
        %7271 = vmatpush1.bf16.xpose.msra.mxu0 0
        %7272 = vmatprep.subr.bf16.mxu0 0
        %7273 = vmatpush1.bf16.xpose.msra.mxu0 0
        %7274 = vmatprep.subr.bf16.mxu0 0
        %7275 = vmatpush1.bf16.xpose.msra.mxu0 0
        %7276 = vmatprep.subr.bf16.mxu0 0
        %7277 = vmatpush1.bf16.xpose.msra.mxu0 0
        %7278 = vmatprep.subr.bf16.mxu0 0
        %7279 = vmatpush1.bf16.xpose.msra.mxu0 0
        %7280 = vmatprep.subr.bf16.mxu0 0
        %7281 = vmatpush1.bf16.xpose.msra.mxu0 0
        %7282 = vmatprep.subr.bf16.mxu0 0
        %7283 = vmatpush1.bf16.xpose.msra.mxu0 0
        %7284 = vmatprep.subr.bf16.mxu0 0
        %7285 = vmatpush1.bf16.xpose.msra.mxu0 0
        %7286 = vmatprep.subr.bf16.mxu0 0
        %7287 = vmatpush1.bf16.xpose.msra.mxu0 0
        %7288 = vmatprep.subr.bf16.mxu0 0
        %7289 = vmatpush1.bf16.xpose.msra.mxu0 0
        %7290 = vmatprep.subr.bf16.mxu0 0
        %7291 = vmatpush1.bf16.xpose.msra.mxu0 0
        %7292 = vmatprep.subr.bf16.mxu0 0
        %7293 = vmatpush1.bf16.xpose.msra.mxu0 0
        %7294 = vmatprep.subr.bf16.mxu0 0
        %7295 = vmatpush1.bf16.xpose.msra.mxu0 0
        %7296 = vmatprep.subr.bf16.mxu0 0
        %7297 = vmatpush1.bf16.xpose.msra.mxu0 0
        %7298 = vmatprep.subr.bf16.mxu0 0
        %7299 = vmatpush1.bf16.xpose.msra.mxu0 0
        %7300 = vmatprep.mubr.bf16.mxu0 0
        %7301 = vmatmul.mubr.bf16.gmra.mrb[0].mxu0 %v7263
        %v7302 = vpop.f32.mrb[0].mxu0
        %v7303 = vadd.f32 0.0, %v7302
        %v7304 = vpop.f32.mrb[0].mxu0
        %v7305 = vpop.f32.mrb[0].mxu0
        %v7306 = vpop.f32.mrb[0].mxu0
        %7307 = vdwg.mxu0
        %v7309 = vsel %vm2857, %v7186, 0
        %v7312 = vsel %vm2857, %v7202, 0
        %7314 = vmatprep.subr.bf16.mxu0 0
        %7315 = vmatpush1.bf16.xpose.msra.mxu0 %v7312
        %7316 = vmatprep.subr.bf16.mxu0 0
        %7317 = vmatpush1.bf16.xpose.msra.mxu0 0
        %7318 = vmatprep.subr.bf16.mxu0 0
        %7319 = vmatpush1.bf16.xpose.msra.mxu0 0
        %7320 = vmatprep.subr.bf16.mxu0 0
        %7321 = vmatpush1.bf16.xpose.msra.mxu0 0
        %7322 = vmatprep.subr.bf16.mxu0 0
        %7323 = vmatpush1.bf16.xpose.msra.mxu0 0
        %7324 = vmatprep.subr.bf16.mxu0 0
        %7325 = vmatpush1.bf16.xpose.msra.mxu0 0
        %7326 = vmatprep.subr.bf16.mxu0 0
        %7327 = vmatpush1.bf16.xpose.msra.mxu0 0
        %7328 = vmatprep.subr.bf16.mxu0 0
        %7329 = vmatpush1.bf16.xpose.msra.mxu0 0
        %7330 = vmatprep.subr.bf16.mxu0 0
        %7331 = vmatpush1.bf16.xpose.msra.mxu0 0
        %7332 = vmatprep.subr.bf16.mxu0 0
        %7333 = vmatpush1.bf16.xpose.msra.mxu0 0
        %7334 = vmatprep.subr.bf16.mxu0 0
        %7335 = vmatpush1.bf16.xpose.msra.mxu0 0
        %7336 = vmatprep.subr.bf16.mxu0 0
        %7337 = vmatpush1.bf16.xpose.msra.mxu0 0
        %7338 = vmatprep.subr.bf16.mxu0 0
        %7339 = vmatpush1.bf16.xpose.msra.mxu0 0
        %7340 = vmatprep.subr.bf16.mxu0 0
        %7341 = vmatpush1.bf16.xpose.msra.mxu0 0
        %7342 = vmatprep.subr.bf16.mxu0 0
        %7343 = vmatpush1.bf16.xpose.msra.mxu0 0
        %7344 = vmatprep.subr.bf16.mxu0 0
        %7345 = vmatpush1.bf16.xpose.msra.mxu0 0
        %7346 = vmatprep.mubr.bf16.mxu0 0
        %7347 = vmatmul.mubr.bf16.gmra.mrb[0].mxu0 %v7309
        %v7348 = vpop.f32.mrb[0].mxu0
        %v7349 = vadd.f32 0.0, %v7348
        %v7350 = vpop.f32.mrb[0].mxu0
        %v7351 = vpop.f32.mrb[0].mxu0
        %v7352 = vpop.f32.mrb[0].mxu0
        %7353 = vdwg.mxu0
        %v7355 = vsel %vm2857, %v7187, 0
        %v7358 = vsel %vm2857, %v7203, 0
        %7360 = vmatprep.subr.bf16.mxu0 0
        %7361 = vmatpush1.bf16.xpose.msra.mxu0 %v7358
        %7362 = vmatprep.subr.bf16.mxu0 0
        %7363 = vmatpush1.bf16.xpose.msra.mxu0 0
        %7364 = vmatprep.subr.bf16.mxu0 0
        %7365 = vmatpush1.bf16.xpose.msra.mxu0 0
        %7366 = vmatprep.subr.bf16.mxu0 0
        %7367 = vmatpush1.bf16.xpose.msra.mxu0 0
        %7368 = vmatprep.subr.bf16.mxu0 0
        %7369 = vmatpush1.bf16.xpose.msra.mxu0 0
        %7370 = vmatprep.subr.bf16.mxu0 0
        %7371 = vmatpush1.bf16.xpose.msra.mxu0 0
        %7372 = vmatprep.subr.bf16.mxu0 0
        %7373 = vmatpush1.bf16.xpose.msra.mxu0 0
        %7374 = vmatprep.subr.bf16.mxu0 0
        %7375 = vmatpush1.bf16.xpose.msra.mxu0 0
        %7376 = vmatprep.subr.bf16.mxu0 0
        %7377 = vmatpush1.bf16.xpose.msra.mxu0 0
        %7378 = vmatprep.subr.bf16.mxu0 0
        %7379 = vmatpush1.bf16.xpose.msra.mxu0 0
        %7380 = vmatprep.subr.bf16.mxu0 0
        %7381 = vmatpush1.bf16.xpose.msra.mxu0 0
        %7382 = vmatprep.subr.bf16.mxu0 0
        %7383 = vmatpush1.bf16.xpose.msra.mxu0 0
        %7384 = vmatprep.subr.bf16.mxu0 0
        %7385 = vmatpush1.bf16.xpose.msra.mxu0 0
        %7386 = vmatprep.subr.bf16.mxu0 0
        %7387 = vmatpush1.bf16.xpose.msra.mxu0 0
        %7388 = vmatprep.subr.bf16.mxu0 0
        %7389 = vmatpush1.bf16.xpose.msra.mxu0 0
        %7390 = vmatprep.subr.bf16.mxu0 0
        %7391 = vmatpush1.bf16.xpose.msra.mxu0 0
        %7392 = vmatprep.mubr.bf16.mxu0 0
        %7393 = vmatmul.mubr.bf16.gmra.mrb[0].mxu0 %v7355
        %v7394 = vpop.f32.mrb[0].mxu0
        %v7395 = vadd.f32 0.0, %v7394
        %v7396 = vpop.f32.mrb[0].mxu0
        %v7397 = vpop.f32.mrb[0].mxu0
        %v7398 = vpop.f32.mrb[0].mxu0
        %7399 = vdwg.mxu0
        %v7401 = vsel %vm2857, %v7188, 0
        %v7404 = vsel %vm2857, %v7204, 0
        %7406 = vmatprep.subr.bf16.mxu0 0
        %7407 = vmatpush1.bf16.xpose.msra.mxu0 %v7404
        %7408 = vmatprep.subr.bf16.mxu0 0
        %7409 = vmatpush1.bf16.xpose.msra.mxu0 0
        %7410 = vmatprep.subr.bf16.mxu0 0
        %7411 = vmatpush1.bf16.xpose.msra.mxu0 0
        %7412 = vmatprep.subr.bf16.mxu0 0
        %7413 = vmatpush1.bf16.xpose.msra.mxu0 0
        %7414 = vmatprep.subr.bf16.mxu0 0
        %7415 = vmatpush1.bf16.xpose.msra.mxu0 0
        %7416 = vmatprep.subr.bf16.mxu0 0
        %7417 = vmatpush1.bf16.xpose.msra.mxu0 0
        %7418 = vmatprep.subr.bf16.mxu0 0
        %7419 = vmatpush1.bf16.xpose.msra.mxu0 0
        %7420 = vmatprep.subr.bf16.mxu0 0
        %7421 = vmatpush1.bf16.xpose.msra.mxu0 0
        %7422 = vmatprep.subr.bf16.mxu0 0
        %7423 = vmatpush1.bf16.xpose.msra.mxu0 0
        %7424 = vmatprep.subr.bf16.mxu0 0
        %7425 = vmatpush1.bf16.xpose.msra.mxu0 0
        %7426 = vmatprep.subr.bf16.mxu0 0
        %7427 = vmatpush1.bf16.xpose.msra.mxu0 0
        %7428 = vmatprep.subr.bf16.mxu0 0
        %7429 = vmatpush1.bf16.xpose.msra.mxu0 0
        %7430 = vmatprep.subr.bf16.mxu0 0
        %7431 = vmatpush1.bf16.xpose.msra.mxu0 0
        %7432 = vmatprep.subr.bf16.mxu0 0
        %7433 = vmatpush1.bf16.xpose.msra.mxu0 0
        %7434 = vmatprep.subr.bf16.mxu0 0
        %7435 = vmatpush1.bf16.xpose.msra.mxu0 0
        %7436 = vmatprep.subr.bf16.mxu0 0
        %7437 = vmatpush1.bf16.xpose.msra.mxu0 0
        %7438 = vmatprep.mubr.bf16.mxu0 0
        %7439 = vmatmul.mubr.bf16.gmra.mrb[0].mxu0 %v7401
        %v7440 = vpop.f32.mrb[0].mxu0
        %v7441 = vadd.f32 0.0, %v7440
        %v7442 = vpop.f32.mrb[0].mxu0
        %v7443 = vpop.f32.mrb[0].mxu0
        %v7444 = vpop.f32.mrb[0].mxu0
        %7445 = vdwg.mxu0
        %v7447 = vsel %vm2857, %v7189, 0
        %v7450 = vsel %vm2857, %v7205, 0
        %7452 = vmatprep.subr.bf16.mxu0 0
        %7453 = vmatpush1.bf16.xpose.msra.mxu0 %v7450
        %7454 = vmatprep.subr.bf16.mxu0 0
        %7455 = vmatpush1.bf16.xpose.msra.mxu0 0
        %7456 = vmatprep.subr.bf16.mxu0 0
        %7457 = vmatpush1.bf16.xpose.msra.mxu0 0
        %7458 = vmatprep.subr.bf16.mxu0 0
        %7459 = vmatpush1.bf16.xpose.msra.mxu0 0
        %7460 = vmatprep.subr.bf16.mxu0 0
        %7461 = vmatpush1.bf16.xpose.msra.mxu0 0
        %7462 = vmatprep.subr.bf16.mxu0 0
        %7463 = vmatpush1.bf16.xpose.msra.mxu0 0
        %7464 = vmatprep.subr.bf16.mxu0 0
        %7465 = vmatpush1.bf16.xpose.msra.mxu0 0
        %7466 = vmatprep.subr.bf16.mxu0 0
        %7467 = vmatpush1.bf16.xpose.msra.mxu0 0
        %7468 = vmatprep.subr.bf16.mxu0 0
        %7469 = vmatpush1.bf16.xpose.msra.mxu0 0
        %7470 = vmatprep.subr.bf16.mxu0 0
        %7471 = vmatpush1.bf16.xpose.msra.mxu0 0
        %7472 = vmatprep.subr.bf16.mxu0 0
        %7473 = vmatpush1.bf16.xpose.msra.mxu0 0
        %7474 = vmatprep.subr.bf16.mxu0 0
        %7475 = vmatpush1.bf16.xpose.msra.mxu0 0
        %7476 = vmatprep.subr.bf16.mxu0 0
        %7477 = vmatpush1.bf16.xpose.msra.mxu0 0
        %7478 = vmatprep.subr.bf16.mxu0 0
        %7479 = vmatpush1.bf16.xpose.msra.mxu0 0
        %7480 = vmatprep.subr.bf16.mxu0 0
        %7481 = vmatpush1.bf16.xpose.msra.mxu0 0
        %7482 = vmatprep.subr.bf16.mxu0 0
        %7483 = vmatpush1.bf16.xpose.msra.mxu0 0
        %7484 = vmatprep.mubr.bf16.mxu0 0
        %7485 = vmatmul.mubr.bf16.gmra.mrb[0].mxu0 %v7447
        %v7486 = vpop.f32.mrb[0].mxu0
        %v7487 = vadd.f32 0.0, %v7486
        %v7488 = vpop.f32.mrb[0].mxu0
        %v7489 = vpop.f32.mrb[0].mxu0
        %v7490 = vpop.f32.mrb[0].mxu0
        %7491 = vdwg.mxu0
        %v7493 = vsel %vm2857, %v7190, 0
        %v7496 = vsel %vm2857, %v7206, 0
        %7498 = vmatprep.subr.bf16.mxu0 0
        %7499 = vmatpush1.bf16.xpose.msra.mxu0 %v7496
        %7500 = vmatprep.subr.bf16.mxu0 0
        %7501 = vmatpush1.bf16.xpose.msra.mxu0 0
        %7502 = vmatprep.subr.bf16.mxu0 0
        %7503 = vmatpush1.bf16.xpose.msra.mxu0 0
        %7504 = vmatprep.subr.bf16.mxu0 0
        %7505 = vmatpush1.bf16.xpose.msra.mxu0 0
        %7506 = vmatprep.subr.bf16.mxu0 0
        %7507 = vmatpush1.bf16.xpose.msra.mxu0 0
        %7508 = vmatprep.subr.bf16.mxu0 0
        %7509 = vmatpush1.bf16.xpose.msra.mxu0 0
        %7510 = vmatprep.subr.bf16.mxu0 0
        %7511 = vmatpush1.bf16.xpose.msra.mxu0 0
        %7512 = vmatprep.subr.bf16.mxu0 0
        %7513 = vmatpush1.bf16.xpose.msra.mxu0 0
        %7514 = vmatprep.subr.bf16.mxu0 0
        %7515 = vmatpush1.bf16.xpose.msra.mxu0 0
        %7516 = vmatprep.subr.bf16.mxu0 0
        %7517 = vmatpush1.bf16.xpose.msra.mxu0 0
        %7518 = vmatprep.subr.bf16.mxu0 0
        %7519 = vmatpush1.bf16.xpose.msra.mxu0 0
        %7520 = vmatprep.subr.bf16.mxu0 0
        %7521 = vmatpush1.bf16.xpose.msra.mxu0 0
        %7522 = vmatprep.subr.bf16.mxu0 0
        %7523 = vmatpush1.bf16.xpose.msra.mxu0 0
        %7524 = vmatprep.subr.bf16.mxu0 0
        %7525 = vmatpush1.bf16.xpose.msra.mxu0 0
        %7526 = vmatprep.subr.bf16.mxu0 0
        %7527 = vmatpush1.bf16.xpose.msra.mxu0 0
        %7528 = vmatprep.subr.bf16.mxu0 0
        %7529 = vmatpush1.bf16.xpose.msra.mxu0 0
        %7530 = vmatprep.mubr.bf16.mxu0 0
        %7531 = vmatmul.mubr.bf16.gmra.mrb[0].mxu0 %v7493
        %v7532 = vpop.f32.mrb[0].mxu0
        %v7533 = vadd.f32 0.0, %v7532
        %v7534 = vpop.f32.mrb[0].mxu0
        %v7535 = vpop.f32.mrb[0].mxu0
        %v7536 = vpop.f32.mrb[0].mxu0
        %7537 = vdwg.mxu0
        %v7539 = vsel %vm2857, %v7191, 0
        %v7542 = vsel %vm2857, %v7207, 0
        %7544 = vmatprep.subr.bf16.mxu0 0
        %7545 = vmatpush1.bf16.xpose.msra.mxu0 %v7542
        %7546 = vmatprep.subr.bf16.mxu0 0
        %7547 = vmatpush1.bf16.xpose.msra.mxu0 0
        %7548 = vmatprep.subr.bf16.mxu0 0
        %7549 = vmatpush1.bf16.xpose.msra.mxu0 0
        %7550 = vmatprep.subr.bf16.mxu0 0
        %7551 = vmatpush1.bf16.xpose.msra.mxu0 0
        %7552 = vmatprep.subr.bf16.mxu0 0
        %7553 = vmatpush1.bf16.xpose.msra.mxu0 0
        %7554 = vmatprep.subr.bf16.mxu0 0
        %7555 = vmatpush1.bf16.xpose.msra.mxu0 0
        %7556 = vmatprep.subr.bf16.mxu0 0
        %7557 = vmatpush1.bf16.xpose.msra.mxu0 0
        %7558 = vmatprep.subr.bf16.mxu0 0
        %7559 = vmatpush1.bf16.xpose.msra.mxu0 0
        %7560 = vmatprep.subr.bf16.mxu0 0
        %7561 = vmatpush1.bf16.xpose.msra.mxu0 0
        %7562 = vmatprep.subr.bf16.mxu0 0
        %7563 = vmatpush1.bf16.xpose.msra.mxu0 0
        %7564 = vmatprep.subr.bf16.mxu0 0
        %7565 = vmatpush1.bf16.xpose.msra.mxu0 0
        %7566 = vmatprep.subr.bf16.mxu0 0
        %7567 = vmatpush1.bf16.xpose.msra.mxu0 0
        %7568 = vmatprep.subr.bf16.mxu0 0
        %7569 = vmatpush1.bf16.xpose.msra.mxu0 0
        %7570 = vmatprep.subr.bf16.mxu0 0
        %7571 = vmatpush1.bf16.xpose.msra.mxu0 0
        %7572 = vmatprep.subr.bf16.mxu0 0
        %7573 = vmatpush1.bf16.xpose.msra.mxu0 0
        %7574 = vmatprep.subr.bf16.mxu0 0
        %7575 = vmatpush1.bf16.xpose.msra.mxu0 0
        %7576 = vmatprep.mubr.bf16.mxu0 0
        %7577 = vmatmul.mubr.bf16.gmra.mrb[0].mxu0 %v7539
        %v7578 = vpop.f32.mrb[0].mxu0
        %v7579 = vadd.f32 0.0, %v7578
        %v7580 = vpop.f32.mrb[0].mxu0
        %v7581 = vpop.f32.mrb[0].mxu0
        %v7582 = vpop.f32.mrb[0].mxu0
        %7583 = vdwg.mxu0
        %v7585 = vsel %vm2857, %v7192, 0
        %v7588 = vsel %vm2857, %v7208, 0
        %7590 = vmatprep.subr.bf16.mxu0 0
        %7591 = vmatpush1.bf16.xpose.msra.mxu0 %v7588
        %7592 = vmatprep.subr.bf16.mxu0 0
        %7593 = vmatpush1.bf16.xpose.msra.mxu0 0
        %7594 = vmatprep.subr.bf16.mxu0 0
        %7595 = vmatpush1.bf16.xpose.msra.mxu0 0
        %7596 = vmatprep.subr.bf16.mxu0 0
        %7597 = vmatpush1.bf16.xpose.msra.mxu0 0
        %7598 = vmatprep.subr.bf16.mxu0 0
        %7599 = vmatpush1.bf16.xpose.msra.mxu0 0
        %7600 = vmatprep.subr.bf16.mxu0 0
        %7601 = vmatpush1.bf16.xpose.msra.mxu0 0
        %7602 = vmatprep.subr.bf16.mxu0 0
        %7603 = vmatpush1.bf16.xpose.msra.mxu0 0
        %7604 = vmatprep.subr.bf16.mxu0 0
        %7605 = vmatpush1.bf16.xpose.msra.mxu0 0
        %7606 = vmatprep.subr.bf16.mxu0 0
        %7607 = vmatpush1.bf16.xpose.msra.mxu0 0
        %7608 = vmatprep.subr.bf16.mxu0 0
        %7609 = vmatpush1.bf16.xpose.msra.mxu0 0
        %7610 = vmatprep.subr.bf16.mxu0 0
        %7611 = vmatpush1.bf16.xpose.msra.mxu0 0
        %7612 = vmatprep.subr.bf16.mxu0 0
        %7613 = vmatpush1.bf16.xpose.msra.mxu0 0
        %7614 = vmatprep.subr.bf16.mxu0 0
        %7615 = vmatpush1.bf16.xpose.msra.mxu0 0
        %7616 = vmatprep.subr.bf16.mxu0 0
        %7617 = vmatpush1.bf16.xpose.msra.mxu0 0
        %7618 = vmatprep.subr.bf16.mxu0 0
        %7619 = vmatpush1.bf16.xpose.msra.mxu0 0
        %7620 = vmatprep.subr.bf16.mxu0 0
        %7621 = vmatpush1.bf16.xpose.msra.mxu0 0
        %7622 = vmatprep.mubr.bf16.mxu0 0
        %7623 = vmatmul.mubr.bf16.gmra.mrb[0].mxu0 %v7585
        %v7624 = vpop.f32.mrb[0].mxu0
        %v7625 = vadd.f32 0.0, %v7624
        %v7626 = vpop.f32.mrb[0].mxu0
        %v7627 = vpop.f32.mrb[0].mxu0
        %v7628 = vpop.f32.mrb[0].mxu0
        %7629 = vdwg.mxu0
        %v7631 = vsel %vm2857, %v7193, 0
        %v7634 = vsel %vm2857, %v7209, 0
        %7636 = vmatprep.subr.bf16.mxu0 0
        %7637 = vmatpush1.bf16.xpose.msra.mxu0 %v7634
        %7638 = vmatprep.subr.bf16.mxu0 0
        %7639 = vmatpush1.bf16.xpose.msra.mxu0 0
        %7640 = vmatprep.subr.bf16.mxu0 0
        %7641 = vmatpush1.bf16.xpose.msra.mxu0 0
        %7642 = vmatprep.subr.bf16.mxu0 0
        %7643 = vmatpush1.bf16.xpose.msra.mxu0 0
        %7644 = vmatprep.subr.bf16.mxu0 0
        %7645 = vmatpush1.bf16.xpose.msra.mxu0 0
        %7646 = vmatprep.subr.bf16.mxu0 0
        %7647 = vmatpush1.bf16.xpose.msra.mxu0 0
        %7648 = vmatprep.subr.bf16.mxu0 0
        %7649 = vmatpush1.bf16.xpose.msra.mxu0 0
        %7650 = vmatprep.subr.bf16.mxu0 0
        %7651 = vmatpush1.bf16.xpose.msra.mxu0 0
        %7652 = vmatprep.subr.bf16.mxu0 0
        %7653 = vmatpush1.bf16.xpose.msra.mxu0 0
        %7654 = vmatprep.subr.bf16.mxu0 0
        %7655 = vmatpush1.bf16.xpose.msra.mxu0 0
        %7656 = vmatprep.subr.bf16.mxu0 0
        %7657 = vmatpush1.bf16.xpose.msra.mxu0 0
        %7658 = vmatprep.subr.bf16.mxu0 0
        %7659 = vmatpush1.bf16.xpose.msra.mxu0 0
        %7660 = vmatprep.subr.bf16.mxu0 0
        %7661 = vmatpush1.bf16.xpose.msra.mxu0 0
        %7662 = vmatprep.subr.bf16.mxu0 0
        %7663 = vmatpush1.bf16.xpose.msra.mxu0 0
        %7664 = vmatprep.subr.bf16.mxu0 0
        %7665 = vmatpush1.bf16.xpose.msra.mxu0 0
        %7666 = vmatprep.subr.bf16.mxu0 0
        %7667 = vmatpush1.bf16.xpose.msra.mxu0 0
        %7668 = vmatprep.mubr.bf16.mxu0 0
        %7669 = vmatmul.mubr.bf16.gmra.mrb[0].mxu0 %v7631
        %v7670 = vpop.f32.mrb[0].mxu0
        %v7671 = vadd.f32 0.0, %v7670
        %v7672 = vpop.f32.mrb[0].mxu0
        %v7673 = vpop.f32.mrb[0].mxu0
        %v7674 = vpop.f32.mrb[0].mxu0
        %7675 = vdwg.mxu0
        %v7677 = vsel %vm2857, %v7194, 0
        %v7680 = vsel %vm2857, %v7210, 0
        %7682 = vmatprep.subr.bf16.mxu0 0
        %7683 = vmatpush1.bf16.xpose.msra.mxu0 %v7680
        %7684 = vmatprep.subr.bf16.mxu0 0
        %7685 = vmatpush1.bf16.xpose.msra.mxu0 0
        %7686 = vmatprep.subr.bf16.mxu0 0
        %7687 = vmatpush1.bf16.xpose.msra.mxu0 0
        %7688 = vmatprep.subr.bf16.mxu0 0
        %7689 = vmatpush1.bf16.xpose.msra.mxu0 0
        %7690 = vmatprep.subr.bf16.mxu0 0
        %7691 = vmatpush1.bf16.xpose.msra.mxu0 0
        %7692 = vmatprep.subr.bf16.mxu0 0
        %7693 = vmatpush1.bf16.xpose.msra.mxu0 0
        %7694 = vmatprep.subr.bf16.mxu0 0
        %7695 = vmatpush1.bf16.xpose.msra.mxu0 0
        %7696 = vmatprep.subr.bf16.mxu0 0
        %7697 = vmatpush1.bf16.xpose.msra.mxu0 0
        %7698 = vmatprep.subr.bf16.mxu0 0
        %7699 = vmatpush1.bf16.xpose.msra.mxu0 0
        %7700 = vmatprep.subr.bf16.mxu0 0
        %7701 = vmatpush1.bf16.xpose.msra.mxu0 0
        %7702 = vmatprep.subr.bf16.mxu0 0
        %7703 = vmatpush1.bf16.xpose.msra.mxu0 0
        %7704 = vmatprep.subr.bf16.mxu0 0
        %7705 = vmatpush1.bf16.xpose.msra.mxu0 0
        %7706 = vmatprep.subr.bf16.mxu0 0
        %7707 = vmatpush1.bf16.xpose.msra.mxu0 0
        %7708 = vmatprep.subr.bf16.mxu0 0
        %7709 = vmatpush1.bf16.xpose.msra.mxu0 0
        %7710 = vmatprep.subr.bf16.mxu0 0
        %7711 = vmatpush1.bf16.xpose.msra.mxu0 0
        %7712 = vmatprep.subr.bf16.mxu0 0
        %7713 = vmatpush1.bf16.xpose.msra.mxu0 0
        %7714 = vmatprep.mubr.bf16.mxu0 0
        %7715 = vmatmul.mubr.bf16.gmra.mrb[0].mxu0 %v7677
        %v7716 = vpop.f32.mrb[0].mxu0
        %v7717 = vadd.f32 0.0, %v7716
        %v7718 = vpop.f32.mrb[0].mxu0
        %v7719 = vpop.f32.mrb[0].mxu0
        %v7720 = vpop.f32.mrb[0].mxu0
        %7721 = vdwg.mxu0
        %v7723 = vsel %vm2857, %v7195, 0
        %v7726 = vsel %vm2857, %v7211, 0
        %7728 = vmatprep.subr.bf16.mxu0 0
        %7729 = vmatpush1.bf16.xpose.msra.mxu0 %v7726
        %7730 = vmatprep.subr.bf16.mxu0 0
        %7731 = vmatpush1.bf16.xpose.msra.mxu0 0
        %7732 = vmatprep.subr.bf16.mxu0 0
        %7733 = vmatpush1.bf16.xpose.msra.mxu0 0
        %7734 = vmatprep.subr.bf16.mxu0 0
        %7735 = vmatpush1.bf16.xpose.msra.mxu0 0
        %7736 = vmatprep.subr.bf16.mxu0 0
        %7737 = vmatpush1.bf16.xpose.msra.mxu0 0
        %7738 = vmatprep.subr.bf16.mxu0 0
        %7739 = vmatpush1.bf16.xpose.msra.mxu0 0
        %7740 = vmatprep.subr.bf16.mxu0 0
        %7741 = vmatpush1.bf16.xpose.msra.mxu0 0
        %7742 = vmatprep.subr.bf16.mxu0 0
        %7743 = vmatpush1.bf16.xpose.msra.mxu0 0
        %7744 = vmatprep.subr.bf16.mxu0 0
        %7745 = vmatpush1.bf16.xpose.msra.mxu0 0
        %7746 = vmatprep.subr.bf16.mxu0 0
        %7747 = vmatpush1.bf16.xpose.msra.mxu0 0
        %7748 = vmatprep.subr.bf16.mxu0 0
        %7749 = vmatpush1.bf16.xpose.msra.mxu0 0
        %7750 = vmatprep.subr.bf16.mxu0 0
        %7751 = vmatpush1.bf16.xpose.msra.mxu0 0
        %7752 = vmatprep.subr.bf16.mxu0 0
        %7753 = vmatpush1.bf16.xpose.msra.mxu0 0
        %7754 = vmatprep.subr.bf16.mxu0 0
        %7755 = vmatpush1.bf16.xpose.msra.mxu0 0
        %7756 = vmatprep.subr.bf16.mxu0 0
        %7757 = vmatpush1.bf16.xpose.msra.mxu0 0
        %7758 = vmatprep.subr.bf16.mxu0 0
        %7759 = vmatpush1.bf16.xpose.msra.mxu0 0
        %7760 = vmatprep.mubr.bf16.mxu0 0
        %7761 = vmatmul.mubr.bf16.gmra.mrb[0].mxu0 %v7723
        %v7762 = vpop.f32.mrb[0].mxu0
        %v7763 = vadd.f32 0.0, %v7762
        %v7764 = vpop.f32.mrb[0].mxu0
        %v7765 = vpop.f32.mrb[0].mxu0
        %v7766 = vpop.f32.mrb[0].mxu0
        %7767 = vdwg.mxu0
        %v7769 = vsel %vm2857, %v7196, 0
        %v7772 = vsel %vm2857, %v7212, 0
        %7774 = vmatprep.subr.bf16.mxu0 0
        %7775 = vmatpush1.bf16.xpose.msra.mxu0 %v7772
        %7776 = vmatprep.subr.bf16.mxu0 0
        %7777 = vmatpush1.bf16.xpose.msra.mxu0 0
        %7778 = vmatprep.subr.bf16.mxu0 0
        %7779 = vmatpush1.bf16.xpose.msra.mxu0 0
        %7780 = vmatprep.subr.bf16.mxu0 0
        %7781 = vmatpush1.bf16.xpose.msra.mxu0 0
        %7782 = vmatprep.subr.bf16.mxu0 0
        %7783 = vmatpush1.bf16.xpose.msra.mxu0 0
        %7784 = vmatprep.subr.bf16.mxu0 0
        %7785 = vmatpush1.bf16.xpose.msra.mxu0 0
        %7786 = vmatprep.subr.bf16.mxu0 0
        %7787 = vmatpush1.bf16.xpose.msra.mxu0 0
        %7788 = vmatprep.subr.bf16.mxu0 0
        %7789 = vmatpush1.bf16.xpose.msra.mxu0 0
        %7790 = vmatprep.subr.bf16.mxu0 0
        %7791 = vmatpush1.bf16.xpose.msra.mxu0 0
        %7792 = vmatprep.subr.bf16.mxu0 0
        %7793 = vmatpush1.bf16.xpose.msra.mxu0 0
        %7794 = vmatprep.subr.bf16.mxu0 0
        %7795 = vmatpush1.bf16.xpose.msra.mxu0 0
        %7796 = vmatprep.subr.bf16.mxu0 0
        %7797 = vmatpush1.bf16.xpose.msra.mxu0 0
        %7798 = vmatprep.subr.bf16.mxu0 0
        %7799 = vmatpush1.bf16.xpose.msra.mxu0 0
        %7800 = vmatprep.subr.bf16.mxu0 0
        %7801 = vmatpush1.bf16.xpose.msra.mxu0 0
        %7802 = vmatprep.subr.bf16.mxu0 0
        %7803 = vmatpush1.bf16.xpose.msra.mxu0 0
        %7804 = vmatprep.subr.bf16.mxu0 0
        %7805 = vmatpush1.bf16.xpose.msra.mxu0 0
        %7806 = vmatprep.mubr.bf16.mxu0 0
        %7807 = vmatmul.mubr.bf16.gmra.mrb[0].mxu0 %v7769
        %v7808 = vpop.f32.mrb[0].mxu0
        %v7809 = vadd.f32 0.0, %v7808
        %v7810 = vpop.f32.mrb[0].mxu0
        %v7811 = vpop.f32.mrb[0].mxu0
        %v7812 = vpop.f32.mrb[0].mxu0
        %7813 = vdwg.mxu0
        %v7815 = vsel %vm2857, %v7197, 0
        %v7818 = vsel %vm2857, %v7213, 0
        %7820 = vmatprep.subr.bf16.mxu0 0
        %7821 = vmatpush1.bf16.xpose.msra.mxu0 %v7818
        %7822 = vmatprep.subr.bf16.mxu0 0
        %7823 = vmatpush1.bf16.xpose.msra.mxu0 0
        %7824 = vmatprep.subr.bf16.mxu0 0
        %7825 = vmatpush1.bf16.xpose.msra.mxu0 0
        %7826 = vmatprep.subr.bf16.mxu0 0
        %7827 = vmatpush1.bf16.xpose.msra.mxu0 0
        %7828 = vmatprep.subr.bf16.mxu0 0
        %7829 = vmatpush1.bf16.xpose.msra.mxu0 0
        %7830 = vmatprep.subr.bf16.mxu0 0
        %7831 = vmatpush1.bf16.xpose.msra.mxu0 0
        %7832 = vmatprep.subr.bf16.mxu0 0
        %7833 = vmatpush1.bf16.xpose.msra.mxu0 0
        %7834 = vmatprep.subr.bf16.mxu0 0
        %7835 = vmatpush1.bf16.xpose.msra.mxu0 0
        %7836 = vmatprep.subr.bf16.mxu0 0
        %7837 = vmatpush1.bf16.xpose.msra.mxu0 0
        %7838 = vmatprep.subr.bf16.mxu0 0
        %7839 = vmatpush1.bf16.xpose.msra.mxu0 0
        %7840 = vmatprep.subr.bf16.mxu0 0
        %7841 = vmatpush1.bf16.xpose.msra.mxu0 0
        %7842 = vmatprep.subr.bf16.mxu0 0
        %7843 = vmatpush1.bf16.xpose.msra.mxu0 0
        %7844 = vmatprep.subr.bf16.mxu0 0
        %7845 = vmatpush1.bf16.xpose.msra.mxu0 0
        %7846 = vmatprep.subr.bf16.mxu0 0
        %7847 = vmatpush1.bf16.xpose.msra.mxu0 0
        %7848 = vmatprep.subr.bf16.mxu0 0
        %7849 = vmatpush1.bf16.xpose.msra.mxu0 0
        %7850 = vmatprep.subr.bf16.mxu0 0
        %7851 = vmatpush1.bf16.xpose.msra.mxu0 0
        %7852 = vmatprep.mubr.bf16.mxu0 0
        %7853 = vmatmul.mubr.bf16.gmra.mrb[0].mxu0 %v7815
        %v7854 = vpop.f32.mrb[0].mxu0
        %v7855 = vadd.f32 0.0, %v7854
        %v7856 = vpop.f32.mrb[0].mxu0
        %v7857 = vpop.f32.mrb[0].mxu0
        %v7858 = vpop.f32.mrb[0].mxu0
        %7859 = vdwg.mxu0
        %v7861 = vsel %vm2857, %v7198, 0
        %v7864 = vsel %vm2857, %v7214, 0
        %7866 = vmatprep.subr.bf16.mxu0 0
        %7867 = vmatpush1.bf16.xpose.msra.mxu0 %v7864
        %7868 = vmatprep.subr.bf16.mxu0 0
        %7869 = vmatpush1.bf16.xpose.msra.mxu0 0
        %7870 = vmatprep.subr.bf16.mxu0 0
        %7871 = vmatpush1.bf16.xpose.msra.mxu0 0
        %7872 = vmatprep.subr.bf16.mxu0 0
        %7873 = vmatpush1.bf16.xpose.msra.mxu0 0
        %7874 = vmatprep.subr.bf16.mxu0 0
        %7875 = vmatpush1.bf16.xpose.msra.mxu0 0
        %7876 = vmatprep.subr.bf16.mxu0 0
        %7877 = vmatpush1.bf16.xpose.msra.mxu0 0
        %7878 = vmatprep.subr.bf16.mxu0 0
        %7879 = vmatpush1.bf16.xpose.msra.mxu0 0
        %7880 = vmatprep.subr.bf16.mxu0 0
        %7881 = vmatpush1.bf16.xpose.msra.mxu0 0
        %7882 = vmatprep.subr.bf16.mxu0 0
        %7883 = vmatpush1.bf16.xpose.msra.mxu0 0
        %7884 = vmatprep.subr.bf16.mxu0 0
        %7885 = vmatpush1.bf16.xpose.msra.mxu0 0
        %7886 = vmatprep.subr.bf16.mxu0 0
        %7887 = vmatpush1.bf16.xpose.msra.mxu0 0
        %7888 = vmatprep.subr.bf16.mxu0 0
        %7889 = vmatpush1.bf16.xpose.msra.mxu0 0
        %7890 = vmatprep.subr.bf16.mxu0 0
        %7891 = vmatpush1.bf16.xpose.msra.mxu0 0
        %7892 = vmatprep.subr.bf16.mxu0 0
        %7893 = vmatpush1.bf16.xpose.msra.mxu0 0
        %7894 = vmatprep.subr.bf16.mxu0 0
        %7895 = vmatpush1.bf16.xpose.msra.mxu0 0
        %7896 = vmatprep.subr.bf16.mxu0 0
        %7897 = vmatpush1.bf16.xpose.msra.mxu0 0
        %7898 = vmatprep.mubr.bf16.mxu0 0
        %7899 = vmatmul.mubr.bf16.gmra.mrb[0].mxu0 %v7861
        %v7900 = vpop.f32.mrb[0].mxu0
        %v7901 = vadd.f32 0.0, %v7900
        %v7902 = vpop.f32.mrb[0].mxu0
        %v7903 = vpop.f32.mrb[0].mxu0
        %v7904 = vpop.f32.mrb[0].mxu0
        %7905 = vdwg.mxu0
        %v7907 = vsel %vm2857, %v7199, 0
        %v7910 = vsel %vm2857, %v7215, 0
        %7912 = vmatprep.subr.bf16.mxu0 0
        %7913 = vmatpush1.bf16.xpose.msra.mxu0 %v7910
        %7914 = vmatprep.subr.bf16.mxu0 0
        %7915 = vmatpush1.bf16.xpose.msra.mxu0 0
        %7916 = vmatprep.subr.bf16.mxu0 0
        %7917 = vmatpush1.bf16.xpose.msra.mxu0 0
        %7918 = vmatprep.subr.bf16.mxu0 0
        %7919 = vmatpush1.bf16.xpose.msra.mxu0 0
        %7920 = vmatprep.subr.bf16.mxu0 0
        %7921 = vmatpush1.bf16.xpose.msra.mxu0 0
        %7922 = vmatprep.subr.bf16.mxu0 0
        %7923 = vmatpush1.bf16.xpose.msra.mxu0 0
        %7924 = vmatprep.subr.bf16.mxu0 0
        %7925 = vmatpush1.bf16.xpose.msra.mxu0 0
        %7926 = vmatprep.subr.bf16.mxu0 0
        %7927 = vmatpush1.bf16.xpose.msra.mxu0 0
        %7928 = vmatprep.subr.bf16.mxu0 0
        %7929 = vmatpush1.bf16.xpose.msra.mxu0 0
        %7930 = vmatprep.subr.bf16.mxu0 0
        %7931 = vmatpush1.bf16.xpose.msra.mxu0 0
        %7932 = vmatprep.subr.bf16.mxu0 0
        %7933 = vmatpush1.bf16.xpose.msra.mxu0 0
        %7934 = vmatprep.subr.bf16.mxu0 0
        %7935 = vmatpush1.bf16.xpose.msra.mxu0 0
        %7936 = vmatprep.subr.bf16.mxu0 0
        %7937 = vmatpush1.bf16.xpose.msra.mxu0 0
        %7938 = vmatprep.subr.bf16.mxu0 0
        %7939 = vmatpush1.bf16.xpose.msra.mxu0 0
        %7940 = vmatprep.subr.bf16.mxu0 0
        %7941 = vmatpush1.bf16.xpose.msra.mxu0 0
        %7942 = vmatprep.subr.bf16.mxu0 0
        %7943 = vmatpush1.bf16.xpose.msra.mxu0 0
        %7944 = vmatprep.mubr.bf16.mxu0 0
        %7945 = vmatmul.mubr.bf16.gmra.mrb[0].mxu0 %v7907
        %v7946 = vpop.f32.mrb[0].mxu0
        %v7947 = vadd.f32 0.0, %v7946
        %v7948 = vpop.f32.mrb[0].mxu0
        %v7949 = vpop.f32.mrb[0].mxu0
        %v7950 = vpop.f32.mrb[0].mxu0
        %7951 = vdwg.mxu0
        %v7952 = vmul.f32 %v7257, 0.5
        %v7953 = vmul.f32 %v7303, 0.5
        %v7954 = vmul.f32 %v7349, 0.5
        %v7955 = vmul.f32 %v7395, 0.5
        %v7956 = vmul.f32 %v7441, 0.5
        %v7957 = vmul.f32 %v7487, 0.5
        %v7958 = vmul.f32 %v7533, 0.5
        %v7959 = vmul.f32 %v7579, 0.5
        %v7960 = vmul.f32 %v7625, 0.5
        %v7961 = vmul.f32 %v7671, 0.5
        %v7962 = vmul.f32 %v7717, 0.5
        %v7963 = vmul.f32 %v7763, 0.5
        %v7964 = vmul.f32 %v7809, 0.5
        %v7965 = vmul.f32 %v7855, 0.5
        %v7966 = vmul.f32 %v7901, 0.5
        %v7967 = vmul.f32 %v7947, 0.5
        %v7968 = vadd.f32 %v7952, %v952
        %v7969 = vadd.f32 %v7953, %v952
        %v7970 = vadd.f32 %v7954, %v952
        %v7971 = vadd.f32 %v7955, %v952
        %v7972 = vadd.f32 %v7956, %v952
        %v7973 = vadd.f32 %v7957, %v952
        %v7974 = vadd.f32 %v7958, %v952
        %v7975 = vadd.f32 %v7959, %v952
        %v7976 = vadd.f32 %v7960, %v952
        %v7977 = vadd.f32 %v7961, %v952
        %v7978 = vadd.f32 %v7962, %v952
        %v7979 = vadd.f32 %v7963, %v952
        %v7980 = vadd.f32 %v7964, %v952
        %v7981 = vadd.f32 %v7965, %v952
        %v7982 = vadd.f32 %v7966, %v952
        %v7983 = vadd.f32 %v7967, %v952
        %v7984 = vsel %vm3626, %v7968, -inf
        %7985 = vmax.xlane.f32.xlu0 %v7984
        %v7986 = vpop.xlane.xlu0 %7985
        %v7987 = vsel %vm3626, %v7969, -inf
        %7988 = vmax.xlane.f32.xlu0 %v7987
        %v7989 = vpop.xlane.xlu0 %7988
        %v7990 = vsel %vm3626, %v7970, -inf
        %7991 = vmax.xlane.f32.xlu0 %v7990
        %v7992 = vpop.xlane.xlu0 %7991
        %v7993 = vsel %vm3626, %v7971, -inf
        %7994 = vmax.xlane.f32.xlu0 %v7993
        %v7995 = vpop.xlane.xlu0 %7994
        %v7996 = vsel %vm3626, %v7972, -inf
        %7997 = vmax.xlane.f32.xlu0 %v7996
        %v7998 = vpop.xlane.xlu0 %7997
        %v7999 = vsel %vm3626, %v7973, -inf
        %8000 = vmax.xlane.f32.xlu0 %v7999
        %v8001 = vpop.xlane.xlu0 %8000
        %v8002 = vsel %vm3626, %v7974, -inf
        %8003 = vmax.xlane.f32.xlu0 %v8002
        %v8004 = vpop.xlane.xlu0 %8003
        %v8005 = vsel %vm3626, %v7975, -inf
        %8006 = vmax.xlane.f32.xlu0 %v8005
        %v8007 = vpop.xlane.xlu0 %8006
        %v8008 = vsel %vm3626, %v7976, -inf
        %8009 = vmax.xlane.f32.xlu0 %v8008
        %v8010 = vpop.xlane.xlu0 %8009
        %v8011 = vsel %vm3626, %v7977, -inf
        %8012 = vmax.xlane.f32.xlu0 %v8011
        %v8013 = vpop.xlane.xlu0 %8012
        %v8014 = vsel %vm3626, %v7978, -inf
        %8015 = vmax.xlane.f32.xlu0 %v8014
        %v8016 = vpop.xlane.xlu0 %8015
        %v8017 = vsel %vm3626, %v7979, -inf
        %8018 = vmax.xlane.f32.xlu0 %v8017
        %v8019 = vpop.xlane.xlu0 %8018
        %v8020 = vsel %vm3626, %v7980, -inf
        %8021 = vmax.xlane.f32.xlu0 %v8020
        %v8022 = vpop.xlane.xlu0 %8021
        %v8023 = vsel %vm3626, %v7981, -inf
        %8024 = vmax.xlane.f32.xlu0 %v8023
        %v8025 = vpop.xlane.xlu0 %8024
        %v8026 = vsel %vm3626, %v7982, -inf
        %8027 = vmax.xlane.f32.xlu0 %v8026
        %v8028 = vpop.xlane.xlu0 %8027
        %v8029 = vsel %vm3626, %v7983, -inf
        %8030 = vmax.xlane.f32.xlu0 %v8029
        %v8031 = vpop.xlane.xlu0 %8030
        %v8032 = vsub.f32 %v7968, %v7986
        %v8033 = vsub.f32 %v7969, %v7989
        %v8034 = vsub.f32 %v7970, %v7992
        %v8035 = vsub.f32 %v7971, %v7995
        %v8036 = vsub.f32 %v7972, %v7998
        %v8037 = vsub.f32 %v7973, %v8001
        %v8038 = vsub.f32 %v7974, %v8004
        %v8039 = vsub.f32 %v7975, %v8007
        %v8040 = vsub.f32 %v7976, %v8010
        %v8041 = vsub.f32 %v7977, %v8013
        %v8042 = vsub.f32 %v7978, %v8016
        %v8043 = vsub.f32 %v7979, %v8019
        %v8044 = vsub.f32 %v7980, %v8022
        %v8045 = vsub.f32 %v7981, %v8025
        %v8046 = vsub.f32 %v7982, %v8028
        %v8047 = vsub.f32 %v7983, %v8031
        %v8048 = vmul.f32 %v8032, 1.442695
        %v8049 = vpow.pop %v8048
        %v8050 = vmul.f32 %v8033, 1.442695
        %v8051 = vpow.pop %v8050
        %v8052 = vmul.f32 %v8034, 1.442695
        %v8053 = vpow.pop %v8052
        %v8054 = vmul.f32 %v8035, 1.442695
        %v8055 = vpow.pop %v8054
        %v8056 = vmul.f32 %v8036, 1.442695
        %v8057 = vpow.pop %v8056
        %v8058 = vmul.f32 %v8037, 1.442695
        %v8059 = vpow.pop %v8058
        %v8060 = vmul.f32 %v8038, 1.442695
        %v8061 = vpow.pop %v8060
        %v8062 = vmul.f32 %v8039, 1.442695
        %v8063 = vpow.pop %v8062
        %v8064 = vmul.f32 %v8040, 1.442695
        %v8065 = vpow.pop %v8064
        %v8066 = vmul.f32 %v8041, 1.442695
        %v8067 = vpow.pop %v8066
        %v8068 = vmul.f32 %v8042, 1.442695
        %v8069 = vpow.pop %v8068
        %v8070 = vmul.f32 %v8043, 1.442695
        %v8071 = vpow.pop %v8070
        %v8072 = vmul.f32 %v8044, 1.442695
        %v8073 = vpow.pop %v8072
        %v8074 = vmul.f32 %v8045, 1.442695
        %v8075 = vpow.pop %v8074
        %v8076 = vmul.f32 %v8046, 1.442695
        %v8077 = vpow.pop %v8076
        %v8078 = vmul.f32 %v8047, 1.442695
        %v8079 = vpow.pop %v8078
        %v8080 = vsel %vm3626, %v8049, 0.0
        %8081 = vadd.xlane.f32.xlu0 %v8080
        %v8082 = vpop.xlane.xlu0 %8081
        %v8083 = vsel %vm3626, %v8051, 0.0
        %8084 = vadd.xlane.f32.xlu0 %v8083
        %v8085 = vpop.xlane.xlu0 %8084
        %v8086 = vsel %vm3626, %v8053, 0.0
        %8087 = vadd.xlane.f32.xlu0 %v8086
        %v8088 = vpop.xlane.xlu0 %8087
        %v8089 = vsel %vm3626, %v8055, 0.0
        %8090 = vadd.xlane.f32.xlu0 %v8089
        %v8091 = vpop.xlane.xlu0 %8090
        %v8092 = vsel %vm3626, %v8057, 0.0
        %8093 = vadd.xlane.f32.xlu0 %v8092
        %v8094 = vpop.xlane.xlu0 %8093
        %v8095 = vsel %vm3626, %v8059, 0.0
        %8096 = vadd.xlane.f32.xlu0 %v8095
        %v8097 = vpop.xlane.xlu0 %8096
        %v8098 = vsel %vm3626, %v8061, 0.0
        %8099 = vadd.xlane.f32.xlu0 %v8098
        %v8100 = vpop.xlane.xlu0 %8099
        %v8101 = vsel %vm3626, %v8063, 0.0
        %8102 = vadd.xlane.f32.xlu0 %v8101
        %v8103 = vpop.xlane.xlu0 %8102
        %v8104 = vsel %vm3626, %v8065, 0.0
        %8105 = vadd.xlane.f32.xlu0 %v8104
        %v8106 = vpop.xlane.xlu0 %8105
        %v8107 = vsel %vm3626, %v8067, 0.0
        %8108 = vadd.xlane.f32.xlu0 %v8107
        %v8109 = vpop.xlane.xlu0 %8108
        %v8110 = vsel %vm3626, %v8069, 0.0
        %8111 = vadd.xlane.f32.xlu0 %v8110
        %v8112 = vpop.xlane.xlu0 %8111
        %v8113 = vsel %vm3626, %v8071, 0.0
        %8114 = vadd.xlane.f32.xlu0 %v8113
        %v8115 = vpop.xlane.xlu0 %8114
        %v8116 = vsel %vm3626, %v8073, 0.0
        %8117 = vadd.xlane.f32.xlu0 %v8116
        %v8118 = vpop.xlane.xlu0 %8117
        %v8119 = vsel %vm3626, %v8075, 0.0
        %8120 = vadd.xlane.f32.xlu0 %v8119
        %v8121 = vpop.xlane.xlu0 %8120
        %v8122 = vsel %vm3626, %v8077, 0.0
        %8123 = vadd.xlane.f32.xlu0 %v8122
        %v8124 = vpop.xlane.xlu0 %8123
        %v8125 = vsel %vm3626, %v8079, 0.0
        %8126 = vadd.xlane.f32.xlu0 %v8125
        %v8127 = vpop.xlane.xlu0 %8126
        %v8128 = vrcp.pop %v8082
        %v8129 = vrcp.pop %v8085
        %v8130 = vrcp.pop %v8088
        %v8131 = vrcp.pop %v8091
        %v8132 = vrcp.pop %v8094
        %v8133 = vrcp.pop %v8097
        %v8134 = vrcp.pop %v8100
        %v8135 = vrcp.pop %v8103
        %v8136 = vrcp.pop %v8106
        %v8137 = vrcp.pop %v8109
        %v8138 = vrcp.pop %v8112
        %v8139 = vrcp.pop %v8115
        %v8140 = vrcp.pop %v8118
        %v8141 = vrcp.pop %v8121
        %v8142 = vrcp.pop %v8124
        %v8143 = vrcp.pop %v8127
        %v8144 = vmul.f32 %v8049, %v8128
        %v8145 = vmul.f32 %v8051, %v8129
        %v8146 = vmul.f32 %v8053, %v8130
        %v8147 = vmul.f32 %v8055, %v8131
        %v8148 = vmul.f32 %v8057, %v8132
        %v8149 = vmul.f32 %v8059, %v8133
        %v8150 = vmul.f32 %v8061, %v8134
        %v8151 = vmul.f32 %v8063, %v8135
        %v8152 = vmul.f32 %v8065, %v8136
        %v8153 = vmul.f32 %v8067, %v8137
        %v8154 = vmul.f32 %v8069, %v8138
        %v8155 = vmul.f32 %v8071, %v8139
        %v8156 = vmul.f32 %v8073, %v8140
        %v8157 = vmul.f32 %v8075, %v8141
        %v8158 = vmul.f32 %v8077, %v8142
        %v8159 = vmul.f32 %v8079, %v8143
        %v8160 = vpack.c.bf16 %v8144, %v8144
        %v8161 = vpack.c.bf16 %v8145, %v8145
        %v8162 = vpack.c.bf16 %v8146, %v8146
        %v8163 = vpack.c.bf16 %v8147, %v8147
        %v8164 = vpack.c.bf16 %v8148, %v8148
        %v8165 = vpack.c.bf16 %v8149, %v8149
        %v8166 = vpack.c.bf16 %v8150, %v8150
        %v8167 = vpack.c.bf16 %v8151, %v8151
        %v8168 = vpack.c.bf16 %v8152, %v8152
        %v8169 = vpack.c.bf16 %v8153, %v8153
        %v8170 = vpack.c.bf16 %v8154, %v8154
        %v8171 = vpack.c.bf16 %v8155, %v8155
        %v8172 = vpack.c.bf16 %v8156, %v8156
        %v8173 = vpack.c.bf16 %v8157, %v8157
        %v8174 = vpack.c.bf16 %v8158, %v8158
        %v8175 = vpack.c.bf16 %v8159, %v8159
        %v8176 = vpack.c.bf16 %v7040, %v7040
        %v8177 = vpack.c.bf16 %v7176, %v7176
        %v8178 = vpack.c.bf16 %v7041, %v7041
        %v8179 = vpack.c.bf16 %v7177, %v7177
        %v8180 = vpack.c.bf16 %v7042, %v7042
        %v8181 = vpack.c.bf16 %v7178, %v7178
        %v8182 = vpack.c.bf16 %v7043, %v7043
        %v8183 = vpack.c.bf16 %v7179, %v7179
        %v8184 = vpack.c.bf16 %v7044, %v7044
        %v8185 = vpack.c.bf16 %v7180, %v7180
        %v8186 = vpack.c.bf16 %v7045, %v7045
        %v8187 = vpack.c.bf16 %v7181, %v7181
        %v8188 = vpack.c.bf16 %v7046, %v7046
        %v8189 = vpack.c.bf16 %v7182, %v7182
        %v8190 = vpack.c.bf16 %v7047, %v7047
        %v8191 = vpack.c.bf16 %v7183, %v7183
        %v8193 = vsel %vm3626, %v8160, 0
        %v8196 = vsel %vm3838, %v8176, 0
        %8198 = vmatprep.subr.bf16.mxu0 0
        %8199 = vmatpush1.bf16.msra.mxu0 %v8196
        %8200 = vmatprep.subr.bf16.mxu0 0
        %8201 = vmatpush1.bf16.msra.mxu0 0
        %8202 = vmatprep.subr.bf16.mxu0 0
        %8203 = vmatpush1.bf16.msra.mxu0 0
        %8204 = vmatprep.subr.bf16.mxu0 0
        %8205 = vmatpush1.bf16.msra.mxu0 0
        %8206 = vmatprep.subr.bf16.mxu0 0
        %8207 = vmatpush1.bf16.msra.mxu0 0
        %8208 = vmatprep.subr.bf16.mxu0 0
        %8209 = vmatpush1.bf16.msra.mxu0 0
        %8210 = vmatprep.subr.bf16.mxu0 0
        %8211 = vmatpush1.bf16.msra.mxu0 0
        %8212 = vmatprep.subr.bf16.mxu0 0
        %8213 = vmatpush1.bf16.msra.mxu0 0
        %8214 = vmatprep.subr.bf16.mxu0 0
        %8215 = vmatpush1.bf16.msra.mxu0 0
        %8216 = vmatprep.subr.bf16.mxu0 0
        %8217 = vmatpush1.bf16.msra.mxu0 0
        %8218 = vmatprep.subr.bf16.mxu0 0
        %8219 = vmatpush1.bf16.msra.mxu0 0
        %8220 = vmatprep.subr.bf16.mxu0 0
        %8221 = vmatpush1.bf16.msra.mxu0 0
        %8222 = vmatprep.subr.bf16.mxu0 0
        %8223 = vmatpush1.bf16.msra.mxu0 0
        %8224 = vmatprep.subr.bf16.mxu0 0
        %8225 = vmatpush1.bf16.msra.mxu0 0
        %8226 = vmatprep.subr.bf16.mxu0 0
        %8227 = vmatpush1.bf16.msra.mxu0 0
        %8228 = vmatprep.subr.bf16.mxu0 0
        %8229 = vmatpush1.bf16.msra.mxu0 0
        %8230 = vmatprep.mubr.bf16.mxu0 0
        %8231 = vmatmul.mubr.bf16.gmra.mrb[0].mxu0 %v8193
        %v8232 = vpop.f32.mrb[0].mxu0
        %v8233 = vadd.f32 0.0, %v8232
        %v8234 = vpop.f32.mrb[0].mxu0
        %v8235 = vpop.f32.mrb[0].mxu0
        %v8236 = vpop.f32.mrb[0].mxu0
        %8237 = vdwg.mxu0
        %v8239 = vsel %vm3626, %v8161, 0
        %v8242 = vsel %vm3838, %v8177, 0
        %8244 = vmatprep.subr.bf16.mxu0 0
        %8245 = vmatpush1.bf16.msra.mxu0 %v8242
        %8246 = vmatprep.subr.bf16.mxu0 0
        %8247 = vmatpush1.bf16.msra.mxu0 0
        %8248 = vmatprep.subr.bf16.mxu0 0
        %8249 = vmatpush1.bf16.msra.mxu0 0
        %8250 = vmatprep.subr.bf16.mxu0 0
        %8251 = vmatpush1.bf16.msra.mxu0 0
        %8252 = vmatprep.subr.bf16.mxu0 0
        %8253 = vmatpush1.bf16.msra.mxu0 0
        %8254 = vmatprep.subr.bf16.mxu0 0
        %8255 = vmatpush1.bf16.msra.mxu0 0
        %8256 = vmatprep.subr.bf16.mxu0 0
        %8257 = vmatpush1.bf16.msra.mxu0 0
        %8258 = vmatprep.subr.bf16.mxu0 0
        %8259 = vmatpush1.bf16.msra.mxu0 0
        %8260 = vmatprep.subr.bf16.mxu0 0
        %8261 = vmatpush1.bf16.msra.mxu0 0
        %8262 = vmatprep.subr.bf16.mxu0 0
        %8263 = vmatpush1.bf16.msra.mxu0 0
        %8264 = vmatprep.subr.bf16.mxu0 0
        %8265 = vmatpush1.bf16.msra.mxu0 0
        %8266 = vmatprep.subr.bf16.mxu0 0
        %8267 = vmatpush1.bf16.msra.mxu0 0
        %8268 = vmatprep.subr.bf16.mxu0 0
        %8269 = vmatpush1.bf16.msra.mxu0 0
        %8270 = vmatprep.subr.bf16.mxu0 0
        %8271 = vmatpush1.bf16.msra.mxu0 0
        %8272 = vmatprep.subr.bf16.mxu0 0
        %8273 = vmatpush1.bf16.msra.mxu0 0
        %8274 = vmatprep.subr.bf16.mxu0 0
        %8275 = vmatpush1.bf16.msra.mxu0 0
        %8276 = vmatprep.mubr.bf16.mxu0 0
        %8277 = vmatmul.mubr.bf16.gmra.mrb[0].mxu0 %v8239
        %v8278 = vpop.f32.mrb[0].mxu0
        %v8279 = vadd.f32 0.0, %v8278
        %v8280 = vpop.f32.mrb[0].mxu0
        %v8281 = vpop.f32.mrb[0].mxu0
        %v8282 = vpop.f32.mrb[0].mxu0
        %8283 = vdwg.mxu0
        %v8285 = vsel %vm3626, %v8162, 0
        %v8288 = vsel %vm3838, %v8178, 0
        %8290 = vmatprep.subr.bf16.mxu0 0
        %8291 = vmatpush1.bf16.msra.mxu0 %v8288
        %8292 = vmatprep.subr.bf16.mxu0 0
        %8293 = vmatpush1.bf16.msra.mxu0 0
        %8294 = vmatprep.subr.bf16.mxu0 0
        %8295 = vmatpush1.bf16.msra.mxu0 0
        %8296 = vmatprep.subr.bf16.mxu0 0
        %8297 = vmatpush1.bf16.msra.mxu0 0
        %8298 = vmatprep.subr.bf16.mxu0 0
        %8299 = vmatpush1.bf16.msra.mxu0 0
        %8300 = vmatprep.subr.bf16.mxu0 0
        %8301 = vmatpush1.bf16.msra.mxu0 0
        %8302 = vmatprep.subr.bf16.mxu0 0
        %8303 = vmatpush1.bf16.msra.mxu0 0
        %8304 = vmatprep.subr.bf16.mxu0 0
        %8305 = vmatpush1.bf16.msra.mxu0 0
        %8306 = vmatprep.subr.bf16.mxu0 0
        %8307 = vmatpush1.bf16.msra.mxu0 0
        %8308 = vmatprep.subr.bf16.mxu0 0
        %8309 = vmatpush1.bf16.msra.mxu0 0
        %8310 = vmatprep.subr.bf16.mxu0 0
        %8311 = vmatpush1.bf16.msra.mxu0 0
        %8312 = vmatprep.subr.bf16.mxu0 0
        %8313 = vmatpush1.bf16.msra.mxu0 0
        %8314 = vmatprep.subr.bf16.mxu0 0
        %8315 = vmatpush1.bf16.msra.mxu0 0
        %8316 = vmatprep.subr.bf16.mxu0 0
        %8317 = vmatpush1.bf16.msra.mxu0 0
        %8318 = vmatprep.subr.bf16.mxu0 0
        %8319 = vmatpush1.bf16.msra.mxu0 0
        %8320 = vmatprep.subr.bf16.mxu0 0
        %8321 = vmatpush1.bf16.msra.mxu0 0
        %8322 = vmatprep.mubr.bf16.mxu0 0
        %8323 = vmatmul.mubr.bf16.gmra.mrb[0].mxu0 %v8285
        %v8324 = vpop.f32.mrb[0].mxu0
        %v8325 = vadd.f32 0.0, %v8324
        %v8326 = vpop.f32.mrb[0].mxu0
        %v8327 = vpop.f32.mrb[0].mxu0
        %v8328 = vpop.f32.mrb[0].mxu0
        %8329 = vdwg.mxu0
        %v8331 = vsel %vm3626, %v8163, 0
        %v8334 = vsel %vm3838, %v8179, 0
        %8336 = vmatprep.subr.bf16.mxu0 0
        %8337 = vmatpush1.bf16.msra.mxu0 %v8334
        %8338 = vmatprep.subr.bf16.mxu0 0
        %8339 = vmatpush1.bf16.msra.mxu0 0
        %8340 = vmatprep.subr.bf16.mxu0 0
        %8341 = vmatpush1.bf16.msra.mxu0 0
        %8342 = vmatprep.subr.bf16.mxu0 0
        %8343 = vmatpush1.bf16.msra.mxu0 0
        %8344 = vmatprep.subr.bf16.mxu0 0
        %8345 = vmatpush1.bf16.msra.mxu0 0
        %8346 = vmatprep.subr.bf16.mxu0 0
        %8347 = vmatpush1.bf16.msra.mxu0 0
        %8348 = vmatprep.subr.bf16.mxu0 0
        %8349 = vmatpush1.bf16.msra.mxu0 0
        %8350 = vmatprep.subr.bf16.mxu0 0
        %8351 = vmatpush1.bf16.msra.mxu0 0
        %8352 = vmatprep.subr.bf16.mxu0 0
        %8353 = vmatpush1.bf16.msra.mxu0 0
        %8354 = vmatprep.subr.bf16.mxu0 0
        %8355 = vmatpush1.bf16.msra.mxu0 0
        %8356 = vmatprep.subr.bf16.mxu0 0
        %8357 = vmatpush1.bf16.msra.mxu0 0
        %8358 = vmatprep.subr.bf16.mxu0 0
        %8359 = vmatpush1.bf16.msra.mxu0 0
        %8360 = vmatprep.subr.bf16.mxu0 0
        %8361 = vmatpush1.bf16.msra.mxu0 0
        %8362 = vmatprep.subr.bf16.mxu0 0
        %8363 = vmatpush1.bf16.msra.mxu0 0
        %8364 = vmatprep.subr.bf16.mxu0 0
        %8365 = vmatpush1.bf16.msra.mxu0 0
        %8366 = vmatprep.subr.bf16.mxu0 0
        %8367 = vmatpush1.bf16.msra.mxu0 0
        %8368 = vmatprep.mubr.bf16.mxu0 0
        %8369 = vmatmul.mubr.bf16.gmra.mrb[0].mxu0 %v8331
        %v8370 = vpop.f32.mrb[0].mxu0
        %v8371 = vadd.f32 0.0, %v8370
        %v8372 = vpop.f32.mrb[0].mxu0
        %v8373 = vpop.f32.mrb[0].mxu0
        %v8374 = vpop.f32.mrb[0].mxu0
        %8375 = vdwg.mxu0
        %v8377 = vsel %vm3626, %v8164, 0
        %v8380 = vsel %vm3838, %v8180, 0
        %8382 = vmatprep.subr.bf16.mxu0 0
        %8383 = vmatpush1.bf16.msra.mxu0 %v8380
        %8384 = vmatprep.subr.bf16.mxu0 0
        %8385 = vmatpush1.bf16.msra.mxu0 0
        %8386 = vmatprep.subr.bf16.mxu0 0
        %8387 = vmatpush1.bf16.msra.mxu0 0
        %8388 = vmatprep.subr.bf16.mxu0 0
        %8389 = vmatpush1.bf16.msra.mxu0 0
        %8390 = vmatprep.subr.bf16.mxu0 0
        %8391 = vmatpush1.bf16.msra.mxu0 0
        %8392 = vmatprep.subr.bf16.mxu0 0
        %8393 = vmatpush1.bf16.msra.mxu0 0
        %8394 = vmatprep.subr.bf16.mxu0 0
        %8395 = vmatpush1.bf16.msra.mxu0 0
        %8396 = vmatprep.subr.bf16.mxu0 0
        %8397 = vmatpush1.bf16.msra.mxu0 0
        %8398 = vmatprep.subr.bf16.mxu0 0
        %8399 = vmatpush1.bf16.msra.mxu0 0
        %8400 = vmatprep.subr.bf16.mxu0 0
        %8401 = vmatpush1.bf16.msra.mxu0 0
        %8402 = vmatprep.subr.bf16.mxu0 0
        %8403 = vmatpush1.bf16.msra.mxu0 0
        %8404 = vmatprep.subr.bf16.mxu0 0
        %8405 = vmatpush1.bf16.msra.mxu0 0
        %8406 = vmatprep.subr.bf16.mxu0 0
        %8407 = vmatpush1.bf16.msra.mxu0 0
        %8408 = vmatprep.subr.bf16.mxu0 0
        %8409 = vmatpush1.bf16.msra.mxu0 0
        %8410 = vmatprep.subr.bf16.mxu0 0
        %8411 = vmatpush1.bf16.msra.mxu0 0
        %8412 = vmatprep.subr.bf16.mxu0 0
        %8413 = vmatpush1.bf16.msra.mxu0 0
        %8414 = vmatprep.mubr.bf16.mxu0 0
        %8415 = vmatmul.mubr.bf16.gmra.mrb[0].mxu0 %v8377
        %v8416 = vpop.f32.mrb[0].mxu0
        %v8417 = vadd.f32 0.0, %v8416
        %v8418 = vpop.f32.mrb[0].mxu0
        %v8419 = vpop.f32.mrb[0].mxu0
        %v8420 = vpop.f32.mrb[0].mxu0
        %8421 = vdwg.mxu0
        %v8423 = vsel %vm3626, %v8165, 0
        %v8426 = vsel %vm3838, %v8181, 0
        %8428 = vmatprep.subr.bf16.mxu0 0
        %8429 = vmatpush1.bf16.msra.mxu0 %v8426
        %8430 = vmatprep.subr.bf16.mxu0 0
        %8431 = vmatpush1.bf16.msra.mxu0 0
        %8432 = vmatprep.subr.bf16.mxu0 0
        %8433 = vmatpush1.bf16.msra.mxu0 0
        %8434 = vmatprep.subr.bf16.mxu0 0
        %8435 = vmatpush1.bf16.msra.mxu0 0
        %8436 = vmatprep.subr.bf16.mxu0 0
        %8437 = vmatpush1.bf16.msra.mxu0 0
        %8438 = vmatprep.subr.bf16.mxu0 0
        %8439 = vmatpush1.bf16.msra.mxu0 0
        %8440 = vmatprep.subr.bf16.mxu0 0
        %8441 = vmatpush1.bf16.msra.mxu0 0
        %8442 = vmatprep.subr.bf16.mxu0 0
        %8443 = vmatpush1.bf16.msra.mxu0 0
        %8444 = vmatprep.subr.bf16.mxu0 0
        %8445 = vmatpush1.bf16.msra.mxu0 0
        %8446 = vmatprep.subr.bf16.mxu0 0
        %8447 = vmatpush1.bf16.msra.mxu0 0
        %8448 = vmatprep.subr.bf16.mxu0 0
        %8449 = vmatpush1.bf16.msra.mxu0 0
        %8450 = vmatprep.subr.bf16.mxu0 0
        %8451 = vmatpush1.bf16.msra.mxu0 0
        %8452 = vmatprep.subr.bf16.mxu0 0
        %8453 = vmatpush1.bf16.msra.mxu0 0
        %8454 = vmatprep.subr.bf16.mxu0 0
        %8455 = vmatpush1.bf16.msra.mxu0 0
        %8456 = vmatprep.subr.bf16.mxu0 0
        %8457 = vmatpush1.bf16.msra.mxu0 0
        %8458 = vmatprep.subr.bf16.mxu0 0
        %8459 = vmatpush1.bf16.msra.mxu0 0
        %8460 = vmatprep.mubr.bf16.mxu0 0
        %8461 = vmatmul.mubr.bf16.gmra.mrb[0].mxu0 %v8423
        %v8462 = vpop.f32.mrb[0].mxu0
        %v8463 = vadd.f32 0.0, %v8462
        %v8464 = vpop.f32.mrb[0].mxu0
        %v8465 = vpop.f32.mrb[0].mxu0
        %v8466 = vpop.f32.mrb[0].mxu0
        %8467 = vdwg.mxu0
        %v8469 = vsel %vm3626, %v8166, 0
        %v8472 = vsel %vm3838, %v8182, 0
        %8474 = vmatprep.subr.bf16.mxu0 0
        %8475 = vmatpush1.bf16.msra.mxu0 %v8472
        %8476 = vmatprep.subr.bf16.mxu0 0
        %8477 = vmatpush1.bf16.msra.mxu0 0
        %8478 = vmatprep.subr.bf16.mxu0 0
        %8479 = vmatpush1.bf16.msra.mxu0 0
        %8480 = vmatprep.subr.bf16.mxu0 0
        %8481 = vmatpush1.bf16.msra.mxu0 0
        %8482 = vmatprep.subr.bf16.mxu0 0
        %8483 = vmatpush1.bf16.msra.mxu0 0
        %8484 = vmatprep.subr.bf16.mxu0 0
        %8485 = vmatpush1.bf16.msra.mxu0 0
        %8486 = vmatprep.subr.bf16.mxu0 0
        %8487 = vmatpush1.bf16.msra.mxu0 0
        %8488 = vmatprep.subr.bf16.mxu0 0
        %8489 = vmatpush1.bf16.msra.mxu0 0
        %8490 = vmatprep.subr.bf16.mxu0 0
        %8491 = vmatpush1.bf16.msra.mxu0 0
        %8492 = vmatprep.subr.bf16.mxu0 0
        %8493 = vmatpush1.bf16.msra.mxu0 0
        %8494 = vmatprep.subr.bf16.mxu0 0
        %8495 = vmatpush1.bf16.msra.mxu0 0
        %8496 = vmatprep.subr.bf16.mxu0 0
        %8497 = vmatpush1.bf16.msra.mxu0 0
        %8498 = vmatprep.subr.bf16.mxu0 0
        %8499 = vmatpush1.bf16.msra.mxu0 0
        %8500 = vmatprep.subr.bf16.mxu0 0
        %8501 = vmatpush1.bf16.msra.mxu0 0
        %8502 = vmatprep.subr.bf16.mxu0 0
        %8503 = vmatpush1.bf16.msra.mxu0 0
        %8504 = vmatprep.subr.bf16.mxu0 0
        %8505 = vmatpush1.bf16.msra.mxu0 0
        %8506 = vmatprep.mubr.bf16.mxu0 0
        %8507 = vmatmul.mubr.bf16.gmra.mrb[0].mxu0 %v8469
        %v8508 = vpop.f32.mrb[0].mxu0
        %v8509 = vadd.f32 0.0, %v8508
        %v8510 = vpop.f32.mrb[0].mxu0
        %v8511 = vpop.f32.mrb[0].mxu0
        %v8512 = vpop.f32.mrb[0].mxu0
        %8513 = vdwg.mxu0
        %v8515 = vsel %vm3626, %v8167, 0
        %v8518 = vsel %vm3838, %v8183, 0
        %8520 = vmatprep.subr.bf16.mxu0 0
        %8521 = vmatpush1.bf16.msra.mxu0 %v8518
        %8522 = vmatprep.subr.bf16.mxu0 0
        %8523 = vmatpush1.bf16.msra.mxu0 0
        %8524 = vmatprep.subr.bf16.mxu0 0
        %8525 = vmatpush1.bf16.msra.mxu0 0
        %8526 = vmatprep.subr.bf16.mxu0 0
        %8527 = vmatpush1.bf16.msra.mxu0 0
        %8528 = vmatprep.subr.bf16.mxu0 0
        %8529 = vmatpush1.bf16.msra.mxu0 0
        %8530 = vmatprep.subr.bf16.mxu0 0
        %8531 = vmatpush1.bf16.msra.mxu0 0
        %8532 = vmatprep.subr.bf16.mxu0 0
        %8533 = vmatpush1.bf16.msra.mxu0 0
        %8534 = vmatprep.subr.bf16.mxu0 0
        %8535 = vmatpush1.bf16.msra.mxu0 0
        %8536 = vmatprep.subr.bf16.mxu0 0
        %8537 = vmatpush1.bf16.msra.mxu0 0
        %8538 = vmatprep.subr.bf16.mxu0 0
        %8539 = vmatpush1.bf16.msra.mxu0 0
        %8540 = vmatprep.subr.bf16.mxu0 0
        %8541 = vmatpush1.bf16.msra.mxu0 0
        %8542 = vmatprep.subr.bf16.mxu0 0
        %8543 = vmatpush1.bf16.msra.mxu0 0
        %8544 = vmatprep.subr.bf16.mxu0 0
        %8545 = vmatpush1.bf16.msra.mxu0 0
        %8546 = vmatprep.subr.bf16.mxu0 0
        %8547 = vmatpush1.bf16.msra.mxu0 0
        %8548 = vmatprep.subr.bf16.mxu0 0
        %8549 = vmatpush1.bf16.msra.mxu0 0
        %8550 = vmatprep.subr.bf16.mxu0 0
        %8551 = vmatpush1.bf16.msra.mxu0 0
        %8552 = vmatprep.mubr.bf16.mxu0 0
        %8553 = vmatmul.mubr.bf16.gmra.mrb[0].mxu0 %v8515
        %v8554 = vpop.f32.mrb[0].mxu0
        %v8555 = vadd.f32 0.0, %v8554
        %v8556 = vpop.f32.mrb[0].mxu0
        %v8557 = vpop.f32.mrb[0].mxu0
        %v8558 = vpop.f32.mrb[0].mxu0
        %8559 = vdwg.mxu0
        %v8561 = vsel %vm3626, %v8168, 0
        %v8564 = vsel %vm3838, %v8184, 0
        %8566 = vmatprep.subr.bf16.mxu0 0
        %8567 = vmatpush1.bf16.msra.mxu0 %v8564
        %8568 = vmatprep.subr.bf16.mxu0 0
        %8569 = vmatpush1.bf16.msra.mxu0 0
        %8570 = vmatprep.subr.bf16.mxu0 0
        %8571 = vmatpush1.bf16.msra.mxu0 0
        %8572 = vmatprep.subr.bf16.mxu0 0
        %8573 = vmatpush1.bf16.msra.mxu0 0
        %8574 = vmatprep.subr.bf16.mxu0 0
        %8575 = vmatpush1.bf16.msra.mxu0 0
        %8576 = vmatprep.subr.bf16.mxu0 0
        %8577 = vmatpush1.bf16.msra.mxu0 0
        %8578 = vmatprep.subr.bf16.mxu0 0
        %8579 = vmatpush1.bf16.msra.mxu0 0
        %8580 = vmatprep.subr.bf16.mxu0 0
        %8581 = vmatpush1.bf16.msra.mxu0 0
        %8582 = vmatprep.subr.bf16.mxu0 0
        %8583 = vmatpush1.bf16.msra.mxu0 0
        %8584 = vmatprep.subr.bf16.mxu0 0
        %8585 = vmatpush1.bf16.msra.mxu0 0
        %8586 = vmatprep.subr.bf16.mxu0 0
        %8587 = vmatpush1.bf16.msra.mxu0 0
        %8588 = vmatprep.subr.bf16.mxu0 0
        %8589 = vmatpush1.bf16.msra.mxu0 0
        %8590 = vmatprep.subr.bf16.mxu0 0
        %8591 = vmatpush1.bf16.msra.mxu0 0
        %8592 = vmatprep.subr.bf16.mxu0 0
        %8593 = vmatpush1.bf16.msra.mxu0 0
        %8594 = vmatprep.subr.bf16.mxu0 0
        %8595 = vmatpush1.bf16.msra.mxu0 0
        %8596 = vmatprep.subr.bf16.mxu0 0
        %8597 = vmatpush1.bf16.msra.mxu0 0
        %8598 = vmatprep.mubr.bf16.mxu0 0
        %8599 = vmatmul.mubr.bf16.gmra.mrb[0].mxu0 %v8561
        %v8600 = vpop.f32.mrb[0].mxu0
        %v8601 = vadd.f32 0.0, %v8600
        %v8602 = vpop.f32.mrb[0].mxu0
        %v8603 = vpop.f32.mrb[0].mxu0
        %v8604 = vpop.f32.mrb[0].mxu0
        %8605 = vdwg.mxu0
        %v8607 = vsel %vm3626, %v8169, 0
        %v8610 = vsel %vm3838, %v8185, 0
        %8612 = vmatprep.subr.bf16.mxu0 0
        %8613 = vmatpush1.bf16.msra.mxu0 %v8610
        %8614 = vmatprep.subr.bf16.mxu0 0
        %8615 = vmatpush1.bf16.msra.mxu0 0
        %8616 = vmatprep.subr.bf16.mxu0 0
        %8617 = vmatpush1.bf16.msra.mxu0 0
        %8618 = vmatprep.subr.bf16.mxu0 0
        %8619 = vmatpush1.bf16.msra.mxu0 0
        %8620 = vmatprep.subr.bf16.mxu0 0
        %8621 = vmatpush1.bf16.msra.mxu0 0
        %8622 = vmatprep.subr.bf16.mxu0 0
        %8623 = vmatpush1.bf16.msra.mxu0 0
        %8624 = vmatprep.subr.bf16.mxu0 0
        %8625 = vmatpush1.bf16.msra.mxu0 0
        %8626 = vmatprep.subr.bf16.mxu0 0
        %8627 = vmatpush1.bf16.msra.mxu0 0
        %8628 = vmatprep.subr.bf16.mxu0 0
        %8629 = vmatpush1.bf16.msra.mxu0 0
        %8630 = vmatprep.subr.bf16.mxu0 0
        %8631 = vmatpush1.bf16.msra.mxu0 0
        %8632 = vmatprep.subr.bf16.mxu0 0
        %8633 = vmatpush1.bf16.msra.mxu0 0
        %8634 = vmatprep.subr.bf16.mxu0 0
        %8635 = vmatpush1.bf16.msra.mxu0 0
        %8636 = vmatprep.subr.bf16.mxu0 0
        %8637 = vmatpush1.bf16.msra.mxu0 0
        %8638 = vmatprep.subr.bf16.mxu0 0
        %8639 = vmatpush1.bf16.msra.mxu0 0
        %8640 = vmatprep.subr.bf16.mxu0 0
        %8641 = vmatpush1.bf16.msra.mxu0 0
        %8642 = vmatprep.subr.bf16.mxu0 0
        %8643 = vmatpush1.bf16.msra.mxu0 0
        %8644 = vmatprep.mubr.bf16.mxu0 0
        %8645 = vmatmul.mubr.bf16.gmra.mrb[0].mxu0 %v8607
        %v8646 = vpop.f32.mrb[0].mxu0
        %v8647 = vadd.f32 0.0, %v8646
        %v8648 = vpop.f32.mrb[0].mxu0
        %v8649 = vpop.f32.mrb[0].mxu0
        %v8650 = vpop.f32.mrb[0].mxu0
        %8651 = vdwg.mxu0
        %v8653 = vsel %vm3626, %v8170, 0
        %v8656 = vsel %vm3838, %v8186, 0
        %8658 = vmatprep.subr.bf16.mxu0 0
        %8659 = vmatpush1.bf16.msra.mxu0 %v8656
        %8660 = vmatprep.subr.bf16.mxu0 0
        %8661 = vmatpush1.bf16.msra.mxu0 0
        %8662 = vmatprep.subr.bf16.mxu0 0
        %8663 = vmatpush1.bf16.msra.mxu0 0
        %8664 = vmatprep.subr.bf16.mxu0 0
        %8665 = vmatpush1.bf16.msra.mxu0 0
        %8666 = vmatprep.subr.bf16.mxu0 0
        %8667 = vmatpush1.bf16.msra.mxu0 0
        %8668 = vmatprep.subr.bf16.mxu0 0
        %8669 = vmatpush1.bf16.msra.mxu0 0
        %8670 = vmatprep.subr.bf16.mxu0 0
        %8671 = vmatpush1.bf16.msra.mxu0 0
        %8672 = vmatprep.subr.bf16.mxu0 0
        %8673 = vmatpush1.bf16.msra.mxu0 0
        %8674 = vmatprep.subr.bf16.mxu0 0
        %8675 = vmatpush1.bf16.msra.mxu0 0
        %8676 = vmatprep.subr.bf16.mxu0 0
        %8677 = vmatpush1.bf16.msra.mxu0 0
        %8678 = vmatprep.subr.bf16.mxu0 0
        %8679 = vmatpush1.bf16.msra.mxu0 0
        %8680 = vmatprep.subr.bf16.mxu0 0
        %8681 = vmatpush1.bf16.msra.mxu0 0
        %8682 = vmatprep.subr.bf16.mxu0 0
        %8683 = vmatpush1.bf16.msra.mxu0 0
        %8684 = vmatprep.subr.bf16.mxu0 0
        %8685 = vmatpush1.bf16.msra.mxu0 0
        %8686 = vmatprep.subr.bf16.mxu0 0
        %8687 = vmatpush1.bf16.msra.mxu0 0
        %8688 = vmatprep.subr.bf16.mxu0 0
        %8689 = vmatpush1.bf16.msra.mxu0 0
        %8690 = vmatprep.mubr.bf16.mxu0 0
        %8691 = vmatmul.mubr.bf16.gmra.mrb[0].mxu0 %v8653
        %v8692 = vpop.f32.mrb[0].mxu0
        %v8693 = vadd.f32 0.0, %v8692
        %v8694 = vpop.f32.mrb[0].mxu0
        %v8695 = vpop.f32.mrb[0].mxu0
        %v8696 = vpop.f32.mrb[0].mxu0
        %8697 = vdwg.mxu0
        %v8699 = vsel %vm3626, %v8171, 0
        %v8702 = vsel %vm3838, %v8187, 0
        %8704 = vmatprep.subr.bf16.mxu0 0
        %8705 = vmatpush1.bf16.msra.mxu0 %v8702
        %8706 = vmatprep.subr.bf16.mxu0 0
        %8707 = vmatpush1.bf16.msra.mxu0 0
        %8708 = vmatprep.subr.bf16.mxu0 0
        %8709 = vmatpush1.bf16.msra.mxu0 0
        %8710 = vmatprep.subr.bf16.mxu0 0
        %8711 = vmatpush1.bf16.msra.mxu0 0
        %8712 = vmatprep.subr.bf16.mxu0 0
        %8713 = vmatpush1.bf16.msra.mxu0 0
        %8714 = vmatprep.subr.bf16.mxu0 0
        %8715 = vmatpush1.bf16.msra.mxu0 0
        %8716 = vmatprep.subr.bf16.mxu0 0
        %8717 = vmatpush1.bf16.msra.mxu0 0
        %8718 = vmatprep.subr.bf16.mxu0 0
        %8719 = vmatpush1.bf16.msra.mxu0 0
        %8720 = vmatprep.subr.bf16.mxu0 0
        %8721 = vmatpush1.bf16.msra.mxu0 0
        %8722 = vmatprep.subr.bf16.mxu0 0
        %8723 = vmatpush1.bf16.msra.mxu0 0
        %8724 = vmatprep.subr.bf16.mxu0 0
        %8725 = vmatpush1.bf16.msra.mxu0 0
        %8726 = vmatprep.subr.bf16.mxu0 0
        %8727 = vmatpush1.bf16.msra.mxu0 0
        %8728 = vmatprep.subr.bf16.mxu0 0
        %8729 = vmatpush1.bf16.msra.mxu0 0
        %8730 = vmatprep.subr.bf16.mxu0 0
        %8731 = vmatpush1.bf16.msra.mxu0 0
        %8732 = vmatprep.subr.bf16.mxu0 0
        %8733 = vmatpush1.bf16.msra.mxu0 0
        %8734 = vmatprep.subr.bf16.mxu0 0
        %8735 = vmatpush1.bf16.msra.mxu0 0
        %8736 = vmatprep.mubr.bf16.mxu0 0
        %8737 = vmatmul.mubr.bf16.gmra.mrb[0].mxu0 %v8699
        %v8738 = vpop.f32.mrb[0].mxu0
        %v8739 = vadd.f32 0.0, %v8738
        %v8740 = vpop.f32.mrb[0].mxu0
        %v8741 = vpop.f32.mrb[0].mxu0
        %v8742 = vpop.f32.mrb[0].mxu0
        %8743 = vdwg.mxu0
        %v8745 = vsel %vm3626, %v8172, 0
        %v8748 = vsel %vm3838, %v8188, 0
        %8750 = vmatprep.subr.bf16.mxu0 0
        %8751 = vmatpush1.bf16.msra.mxu0 %v8748
        %8752 = vmatprep.subr.bf16.mxu0 0
        %8753 = vmatpush1.bf16.msra.mxu0 0
        %8754 = vmatprep.subr.bf16.mxu0 0
        %8755 = vmatpush1.bf16.msra.mxu0 0
        %8756 = vmatprep.subr.bf16.mxu0 0
        %8757 = vmatpush1.bf16.msra.mxu0 0
        %8758 = vmatprep.subr.bf16.mxu0 0
        %8759 = vmatpush1.bf16.msra.mxu0 0
        %8760 = vmatprep.subr.bf16.mxu0 0
        %8761 = vmatpush1.bf16.msra.mxu0 0
        %8762 = vmatprep.subr.bf16.mxu0 0
        %8763 = vmatpush1.bf16.msra.mxu0 0
        %8764 = vmatprep.subr.bf16.mxu0 0
        %8765 = vmatpush1.bf16.msra.mxu0 0
        %8766 = vmatprep.subr.bf16.mxu0 0
        %8767 = vmatpush1.bf16.msra.mxu0 0
        %8768 = vmatprep.subr.bf16.mxu0 0
        %8769 = vmatpush1.bf16.msra.mxu0 0
        %8770 = vmatprep.subr.bf16.mxu0 0
        %8771 = vmatpush1.bf16.msra.mxu0 0
        %8772 = vmatprep.subr.bf16.mxu0 0
        %8773 = vmatpush1.bf16.msra.mxu0 0
        %8774 = vmatprep.subr.bf16.mxu0 0
        %8775 = vmatpush1.bf16.msra.mxu0 0
        %8776 = vmatprep.subr.bf16.mxu0 0
        %8777 = vmatpush1.bf16.msra.mxu0 0
        %8778 = vmatprep.subr.bf16.mxu0 0
        %8779 = vmatpush1.bf16.msra.mxu0 0
        %8780 = vmatprep.subr.bf16.mxu0 0
        %8781 = vmatpush1.bf16.msra.mxu0 0
        %8782 = vmatprep.mubr.bf16.mxu0 0
        %8783 = vmatmul.mubr.bf16.gmra.mrb[0].mxu0 %v8745
        %v8784 = vpop.f32.mrb[0].mxu0
        %v8785 = vadd.f32 0.0, %v8784
        %v8786 = vpop.f32.mrb[0].mxu0
        %v8787 = vpop.f32.mrb[0].mxu0
        %v8788 = vpop.f32.mrb[0].mxu0
        %8789 = vdwg.mxu0
        %v8791 = vsel %vm3626, %v8173, 0
        %v8794 = vsel %vm3838, %v8189, 0
        %8796 = vmatprep.subr.bf16.mxu0 0
        %8797 = vmatpush1.bf16.msra.mxu0 %v8794
        %8798 = vmatprep.subr.bf16.mxu0 0
        %8799 = vmatpush1.bf16.msra.mxu0 0
        %8800 = vmatprep.subr.bf16.mxu0 0
        %8801 = vmatpush1.bf16.msra.mxu0 0
        %8802 = vmatprep.subr.bf16.mxu0 0
        %8803 = vmatpush1.bf16.msra.mxu0 0
        %8804 = vmatprep.subr.bf16.mxu0 0
        %8805 = vmatpush1.bf16.msra.mxu0 0
        %8806 = vmatprep.subr.bf16.mxu0 0
        %8807 = vmatpush1.bf16.msra.mxu0 0
        %8808 = vmatprep.subr.bf16.mxu0 0
        %8809 = vmatpush1.bf16.msra.mxu0 0
        %8810 = vmatprep.subr.bf16.mxu0 0
        %8811 = vmatpush1.bf16.msra.mxu0 0
        %8812 = vmatprep.subr.bf16.mxu0 0
        %8813 = vmatpush1.bf16.msra.mxu0 0
        %8814 = vmatprep.subr.bf16.mxu0 0
        %8815 = vmatpush1.bf16.msra.mxu0 0
        %8816 = vmatprep.subr.bf16.mxu0 0
        %8817 = vmatpush1.bf16.msra.mxu0 0
        %8818 = vmatprep.subr.bf16.mxu0 0
        %8819 = vmatpush1.bf16.msra.mxu0 0
        %8820 = vmatprep.subr.bf16.mxu0 0
        %8821 = vmatpush1.bf16.msra.mxu0 0
        %8822 = vmatprep.subr.bf16.mxu0 0
        %8823 = vmatpush1.bf16.msra.mxu0 0
        %8824 = vmatprep.subr.bf16.mxu0 0
        %8825 = vmatpush1.bf16.msra.mxu0 0
        %8826 = vmatprep.subr.bf16.mxu0 0
        %8827 = vmatpush1.bf16.msra.mxu0 0
        %8828 = vmatprep.mubr.bf16.mxu0 0
        %8829 = vmatmul.mubr.bf16.gmra.mrb[0].mxu0 %v8791
        %v8830 = vpop.f32.mrb[0].mxu0
        %v8831 = vadd.f32 0.0, %v8830
        %v8832 = vpop.f32.mrb[0].mxu0
        %v8833 = vpop.f32.mrb[0].mxu0
        %v8834 = vpop.f32.mrb[0].mxu0
        %8835 = vdwg.mxu0
        %v8837 = vsel %vm3626, %v8174, 0
        %v8840 = vsel %vm3838, %v8190, 0
        %8842 = vmatprep.subr.bf16.mxu0 0
        %8843 = vmatpush1.bf16.msra.mxu0 %v8840
        %8844 = vmatprep.subr.bf16.mxu0 0
        %8845 = vmatpush1.bf16.msra.mxu0 0
        %8846 = vmatprep.subr.bf16.mxu0 0
        %8847 = vmatpush1.bf16.msra.mxu0 0
        %8848 = vmatprep.subr.bf16.mxu0 0
        %8849 = vmatpush1.bf16.msra.mxu0 0
        %8850 = vmatprep.subr.bf16.mxu0 0
        %8851 = vmatpush1.bf16.msra.mxu0 0
        %8852 = vmatprep.subr.bf16.mxu0 0
        %8853 = vmatpush1.bf16.msra.mxu0 0
        %8854 = vmatprep.subr.bf16.mxu0 0
        %8855 = vmatpush1.bf16.msra.mxu0 0
        %8856 = vmatprep.subr.bf16.mxu0 0
        %8857 = vmatpush1.bf16.msra.mxu0 0
        %8858 = vmatprep.subr.bf16.mxu0 0
        %8859 = vmatpush1.bf16.msra.mxu0 0
        %8860 = vmatprep.subr.bf16.mxu0 0
        %8861 = vmatpush1.bf16.msra.mxu0 0
        %8862 = vmatprep.subr.bf16.mxu0 0
        %8863 = vmatpush1.bf16.msra.mxu0 0
        %8864 = vmatprep.subr.bf16.mxu0 0
        %8865 = vmatpush1.bf16.msra.mxu0 0
        %8866 = vmatprep.subr.bf16.mxu0 0
        %8867 = vmatpush1.bf16.msra.mxu0 0
        %8868 = vmatprep.subr.bf16.mxu0 0
        %8869 = vmatpush1.bf16.msra.mxu0 0
        %8870 = vmatprep.subr.bf16.mxu0 0
        %8871 = vmatpush1.bf16.msra.mxu0 0
        %8872 = vmatprep.subr.bf16.mxu0 0
        %8873 = vmatpush1.bf16.msra.mxu0 0
        %8874 = vmatprep.mubr.bf16.mxu0 0
        %8875 = vmatmul.mubr.bf16.gmra.mrb[0].mxu0 %v8837
        %v8876 = vpop.f32.mrb[0].mxu0
        %v8877 = vadd.f32 0.0, %v8876
        %v8878 = vpop.f32.mrb[0].mxu0
        %v8879 = vpop.f32.mrb[0].mxu0
        %v8880 = vpop.f32.mrb[0].mxu0
        %8881 = vdwg.mxu0
        %v8883 = vsel %vm3626, %v8175, 0
        %v8886 = vsel %vm3838, %v8191, 0
        %8888 = vmatprep.subr.bf16.mxu0 0
        %8889 = vmatpush1.bf16.msra.mxu0 %v8886
        %8890 = vmatprep.subr.bf16.mxu0 0
        %8891 = vmatpush1.bf16.msra.mxu0 0
        %8892 = vmatprep.subr.bf16.mxu0 0
        %8893 = vmatpush1.bf16.msra.mxu0 0
        %8894 = vmatprep.subr.bf16.mxu0 0
        %8895 = vmatpush1.bf16.msra.mxu0 0
        %8896 = vmatprep.subr.bf16.mxu0 0
        %8897 = vmatpush1.bf16.msra.mxu0 0
        %8898 = vmatprep.subr.bf16.mxu0 0
        %8899 = vmatpush1.bf16.msra.mxu0 0
        %8900 = vmatprep.subr.bf16.mxu0 0
        %8901 = vmatpush1.bf16.msra.mxu0 0
        %8902 = vmatprep.subr.bf16.mxu0 0
        %8903 = vmatpush1.bf16.msra.mxu0 0
        %8904 = vmatprep.subr.bf16.mxu0 0
        %8905 = vmatpush1.bf16.msra.mxu0 0
        %8906 = vmatprep.subr.bf16.mxu0 0
        %8907 = vmatpush1.bf16.msra.mxu0 0
        %8908 = vmatprep.subr.bf16.mxu0 0
        %8909 = vmatpush1.bf16.msra.mxu0 0
        %8910 = vmatprep.subr.bf16.mxu0 0
        %8911 = vmatpush1.bf16.msra.mxu0 0
        %8912 = vmatprep.subr.bf16.mxu0 0
        %8913 = vmatpush1.bf16.msra.mxu0 0
        %8914 = vmatprep.subr.bf16.mxu0 0
        %8915 = vmatpush1.bf16.msra.mxu0 0
        %8916 = vmatprep.subr.bf16.mxu0 0
        %8917 = vmatpush1.bf16.msra.mxu0 0
        %8918 = vmatprep.subr.bf16.mxu0 0
        %8919 = vmatpush1.bf16.msra.mxu0 0
        %8920 = vmatprep.mubr.bf16.mxu0 0
        %8921 = vmatmul.mubr.bf16.gmra.mrb[0].mxu0 %v8883
        %v8922 = vpop.f32.mrb[0].mxu0
        %v8923 = vadd.f32 0.0, %v8922
        %v8924 = vpop.f32.mrb[0].mxu0
        %v8925 = vpop.f32.mrb[0].mxu0
        %v8926 = vpop.f32.mrb[0].mxu0
        %8927 = vdwg.mxu0
        %v8928 = vcombine.low %v8233, %v8417
        %v8929 = vcombine.high %v8233, %v8417
        %v8931 = vunpack.c.l.s4 1983009808
        %v8932 = vunpack.c.0.s8 %v8931
        %v8933 = vlaneseq
        %v8934 = vshrl.u32 %v8933, 7
        %v8935 = vsub.s32 %v8932, %v8934
        %v8936 = vrot.slane %v8928, %v8935
        %v8938 = vunpack.c.l.s4 1983009808
        %v8939 = vunpack.c.0.s8 %v8938
        %v8940 = vlaneseq
        %v8941 = vshrl.u32 %v8940, 7
        %v8942 = vsub.s32 %v8939, %v8941
        %v8943 = vrot.slane %v8929, %v8942
        %v8944 = vcombine.low %v8325, %v8509
        %v8945 = vcombine.high %v8325, %v8509
        %v8947 = vunpack.c.l.s4 1983009808
        %v8948 = vunpack.c.0.s8 %v8947
        %v8949 = vlaneseq
        %v8950 = vshrl.u32 %v8949, 7
        %v8951 = vsub.s32 %v8948, %v8950
        %v8952 = vrot.slane %v8944, %v8951
        %v8954 = vunpack.c.l.s4 1983009808
        %v8955 = vunpack.c.0.s8 %v8954
        %v8956 = vlaneseq
        %v8957 = vshrl.u32 %v8956, 7
        %v8958 = vsub.s32 %v8955, %v8957
        %v8959 = vrot.slane %v8945, %v8958
        %v8960 = vcombine.low %v8601, %v8785
        %v8961 = vcombine.high %v8601, %v8785
        %v8963 = vunpack.c.l.s4 1983009808
        %v8964 = vunpack.c.0.s8 %v8963
        %v8965 = vlaneseq
        %v8966 = vshrl.u32 %v8965, 7
        %v8967 = vsub.s32 %v8964, %v8966
        %v8968 = vrot.slane %v8960, %v8967
        %v8970 = vunpack.c.l.s4 1983009808
        %v8971 = vunpack.c.0.s8 %v8970
        %v8972 = vlaneseq
        %v8973 = vshrl.u32 %v8972, 7
        %v8974 = vsub.s32 %v8971, %v8973
        %v8975 = vrot.slane %v8961, %v8974
        %v8976 = vcombine.low %v8693, %v8877
        %v8977 = vcombine.high %v8693, %v8877
        %v8979 = vunpack.c.l.s4 1983009808
        %v8980 = vunpack.c.0.s8 %v8979
        %v8981 = vlaneseq
        %v8982 = vshrl.u32 %v8981, 7
        %v8983 = vsub.s32 %v8980, %v8982
        %v8984 = vrot.slane %v8976, %v8983
        %v8986 = vunpack.c.l.s4 1983009808
        %v8987 = vunpack.c.0.s8 %v8986
        %v8988 = vlaneseq
        %v8989 = vshrl.u32 %v8988, 7
        %v8990 = vsub.s32 %v8987, %v8989
        %v8991 = vrot.slane %v8977, %v8990
        %v8992 = vcombine.low %v8936, %v8952
        %v8993 = vcombine.high %v8936, %v8952
        %v8995 = vunpack.c.l.s4 1934713408
        %v8996 = vunpack.c.0.s8 %v8995
        %v8997 = vlaneseq
        %v8998 = vshrl.u32 %v8997, 7
        %v8999 = vsub.s32 %v8996, %v8998
        %v9000 = vrot.slane %v8992, %v8999
        %v9002 = vunpack.c.l.s4 1934713408
        %v9003 = vunpack.c.0.s8 %v9002
        %v9004 = vlaneseq
        %v9005 = vshrl.u32 %v9004, 7
        %v9006 = vsub.s32 %v9003, %v9005
        %v9007 = vrot.slane %v8993, %v9006
        %v9008 = vcombine.low %v8943, %v8959
        %v9009 = vcombine.high %v8943, %v8959
        %v9011 = vunpack.c.l.s4 1934713408
        %v9012 = vunpack.c.0.s8 %v9011
        %v9013 = vlaneseq
        %v9014 = vshrl.u32 %v9013, 7
        %v9015 = vsub.s32 %v9012, %v9014
        %v9016 = vrot.slane %v9008, %v9015
        %v9018 = vunpack.c.l.s4 1934713408
        %v9019 = vunpack.c.0.s8 %v9018
        %v9020 = vlaneseq
        %v9021 = vshrl.u32 %v9020, 7
        %v9022 = vsub.s32 %v9019, %v9021
        %v9023 = vrot.slane %v9009, %v9022
        %v9024 = vcombine.low %v8968, %v8984
        %v9025 = vcombine.high %v8968, %v8984
        %v9027 = vunpack.c.l.s4 1934713408
        %v9028 = vunpack.c.0.s8 %v9027
        %v9029 = vlaneseq
        %v9030 = vshrl.u32 %v9029, 7
        %v9031 = vsub.s32 %v9028, %v9030
        %v9032 = vrot.slane %v9024, %v9031
        %v9034 = vunpack.c.l.s4 1934713408
        %v9035 = vunpack.c.0.s8 %v9034
        %v9036 = vlaneseq
        %v9037 = vshrl.u32 %v9036, 7
        %v9038 = vsub.s32 %v9035, %v9037
        %v9039 = vrot.slane %v9025, %v9038
        %v9040 = vcombine.low %v8975, %v8991
        %v9041 = vcombine.high %v8975, %v8991
        %v9043 = vunpack.c.l.s4 1934713408
        %v9044 = vunpack.c.0.s8 %v9043
        %v9045 = vlaneseq
        %v9046 = vshrl.u32 %v9045, 7
        %v9047 = vsub.s32 %v9044, %v9046
        %v9048 = vrot.slane %v9040, %v9047
        %v9050 = vunpack.c.l.s4 1934713408
        %v9051 = vunpack.c.0.s8 %v9050
        %v9052 = vlaneseq
        %v9053 = vshrl.u32 %v9052, 7
        %v9054 = vsub.s32 %v9051, %v9053
        %v9055 = vrot.slane %v9041, %v9054
        %v9056 = vcombine.low %v9000, %v9032
        %v9057 = vcombine.high %v9000, %v9032
        %v9058 = vcombine.low %v9007, %v9039
        %v9059 = vcombine.high %v9007, %v9039
        %v9060 = vcombine.low %v9016, %v9048
        %v9061 = vcombine.high %v9016, %v9048
        %v9062 = vcombine.low %v9023, %v9055
        %v9063 = vcombine.high %v9023, %v9055
        %v9064 = vcombine.low %v8279, %v8463
        %v9065 = vcombine.high %v8279, %v8463
        %v9067 = vunpack.c.l.s4 1983009808
        %v9068 = vunpack.c.0.s8 %v9067
        %v9069 = vlaneseq
        %v9070 = vshrl.u32 %v9069, 7
        %v9071 = vsub.s32 %v9068, %v9070
        %v9072 = vrot.slane %v9064, %v9071
        %v9074 = vunpack.c.l.s4 1983009808
        %v9075 = vunpack.c.0.s8 %v9074
        %v9076 = vlaneseq
        %v9077 = vshrl.u32 %v9076, 7
        %v9078 = vsub.s32 %v9075, %v9077
        %v9079 = vrot.slane %v9065, %v9078
        %v9080 = vcombine.low %v8371, %v8555
        %v9081 = vcombine.high %v8371, %v8555
        %v9083 = vunpack.c.l.s4 1983009808
        %v9084 = vunpack.c.0.s8 %v9083
        %v9085 = vlaneseq
        %v9086 = vshrl.u32 %v9085, 7
        %v9087 = vsub.s32 %v9084, %v9086
        %v9088 = vrot.slane %v9080, %v9087
        %v9090 = vunpack.c.l.s4 1983009808
        %v9091 = vunpack.c.0.s8 %v9090
        %v9092 = vlaneseq
        %v9093 = vshrl.u32 %v9092, 7
        %v9094 = vsub.s32 %v9091, %v9093
        %v9095 = vrot.slane %v9081, %v9094
        %v9096 = vcombine.low %v8647, %v8831
        %v9097 = vcombine.high %v8647, %v8831
        %v9099 = vunpack.c.l.s4 1983009808
        %v9100 = vunpack.c.0.s8 %v9099
        %v9101 = vlaneseq
        %v9102 = vshrl.u32 %v9101, 7
        %v9103 = vsub.s32 %v9100, %v9102
        %v9104 = vrot.slane %v9096, %v9103
        %v9106 = vunpack.c.l.s4 1983009808
        %v9107 = vunpack.c.0.s8 %v9106
        %v9108 = vlaneseq
        %v9109 = vshrl.u32 %v9108, 7
        %v9110 = vsub.s32 %v9107, %v9109
        %v9111 = vrot.slane %v9097, %v9110
        %v9112 = vcombine.low %v8739, %v8923
        %v9113 = vcombine.high %v8739, %v8923
        %v9115 = vunpack.c.l.s4 1983009808
        %v9116 = vunpack.c.0.s8 %v9115
        %v9117 = vlaneseq
        %v9118 = vshrl.u32 %v9117, 7
        %v9119 = vsub.s32 %v9116, %v9118
        %v9120 = vrot.slane %v9112, %v9119
        %v9122 = vunpack.c.l.s4 1983009808
        %v9123 = vunpack.c.0.s8 %v9122
        %v9124 = vlaneseq
        %v9125 = vshrl.u32 %v9124, 7
        %v9126 = vsub.s32 %v9123, %v9125
        %v9127 = vrot.slane %v9113, %v9126
        %v9128 = vcombine.low %v9072, %v9088
        %v9129 = vcombine.high %v9072, %v9088
        %v9131 = vunpack.c.l.s4 1934713408
        %v9132 = vunpack.c.0.s8 %v9131
        %v9133 = vlaneseq
        %v9134 = vshrl.u32 %v9133, 7
        %v9135 = vsub.s32 %v9132, %v9134
        %v9136 = vrot.slane %v9128, %v9135
        %v9138 = vunpack.c.l.s4 1934713408
        %v9139 = vunpack.c.0.s8 %v9138
        %v9140 = vlaneseq
        %v9141 = vshrl.u32 %v9140, 7
        %v9142 = vsub.s32 %v9139, %v9141
        %v9143 = vrot.slane %v9129, %v9142
        %v9144 = vcombine.low %v9079, %v9095
        %v9145 = vcombine.high %v9079, %v9095
        %v9147 = vunpack.c.l.s4 1934713408
        %v9148 = vunpack.c.0.s8 %v9147
        %v9149 = vlaneseq
        %v9150 = vshrl.u32 %v9149, 7
        %v9151 = vsub.s32 %v9148, %v9150
        %v9152 = vrot.slane %v9144, %v9151
        %v9154 = vunpack.c.l.s4 1934713408
        %v9155 = vunpack.c.0.s8 %v9154
        %v9156 = vlaneseq
        %v9157 = vshrl.u32 %v9156, 7
        %v9158 = vsub.s32 %v9155, %v9157
        %v9159 = vrot.slane %v9145, %v9158
        %v9160 = vcombine.low %v9104, %v9120
        %v9161 = vcombine.high %v9104, %v9120
        %v9163 = vunpack.c.l.s4 1934713408
        %v9164 = vunpack.c.0.s8 %v9163
        %v9165 = vlaneseq
        %v9166 = vshrl.u32 %v9165, 7
        %v9167 = vsub.s32 %v9164, %v9166
        %v9168 = vrot.slane %v9160, %v9167
        %v9170 = vunpack.c.l.s4 1934713408
        %v9171 = vunpack.c.0.s8 %v9170
        %v9172 = vlaneseq
        %v9173 = vshrl.u32 %v9172, 7
        %v9174 = vsub.s32 %v9171, %v9173
        %v9175 = vrot.slane %v9161, %v9174
        %v9176 = vcombine.low %v9111, %v9127
        %v9177 = vcombine.high %v9111, %v9127
        %v9179 = vunpack.c.l.s4 1934713408
        %v9180 = vunpack.c.0.s8 %v9179
        %v9181 = vlaneseq
        %v9182 = vshrl.u32 %v9181, 7
        %v9183 = vsub.s32 %v9180, %v9182
        %v9184 = vrot.slane %v9176, %v9183
        %v9186 = vunpack.c.l.s4 1934713408
        %v9187 = vunpack.c.0.s8 %v9186
        %v9188 = vlaneseq
        %v9189 = vshrl.u32 %v9188, 7
        %v9190 = vsub.s32 %v9187, %v9189
        %v9191 = vrot.slane %v9177, %v9190
        %v9192 = vcombine.low %v9136, %v9168
        %v9193 = vcombine.high %v9136, %v9168
        %v9194 = vcombine.low %v9143, %v9175
        %v9195 = vcombine.high %v9143, %v9175
        %v9196 = vcombine.low %v9152, %v9184
        %v9197 = vcombine.high %v9152, %v9184
        %v9198 = vcombine.low %v9159, %v9191
        %v9199 = vcombine.high %v9159, %v9191
        %v9200 = vcombine.low %v9056, %v9058
        %v9201 = vcombine.high %v9056, %v9058
        %v9203 = vunpack.c.l.s4 1983009808
        %v9204 = vunpack.c.0.s8 %v9203
        %v9205 = vlaneseq
        %v9206 = vshrl.u32 %v9205, 7
        %v9207 = vsub.s32 %v9204, %v9206
        %v9208 = vrot.slane %v9200, %v9207
        %v9210 = vunpack.c.l.s4 1983009808
        %v9211 = vunpack.c.0.s8 %v9210
        %v9212 = vlaneseq
        %v9213 = vshrl.u32 %v9212, 7
        %v9214 = vsub.s32 %v9211, %v9213
        %v9215 = vrot.slane %v9201, %v9214
        %v9216 = vcombine.low %v9057, %v9059
        %v9217 = vcombine.high %v9057, %v9059
        %v9219 = vunpack.c.l.s4 1983009808
        %v9220 = vunpack.c.0.s8 %v9219
        %v9221 = vlaneseq
        %v9222 = vshrl.u32 %v9221, 7
        %v9223 = vsub.s32 %v9220, %v9222
        %v9224 = vrot.slane %v9216, %v9223
        %v9226 = vunpack.c.l.s4 1983009808
        %v9227 = vunpack.c.0.s8 %v9226
        %v9228 = vlaneseq
        %v9229 = vshrl.u32 %v9228, 7
        %v9230 = vsub.s32 %v9227, %v9229
        %v9231 = vrot.slane %v9217, %v9230
        %v9232 = vcombine.low %v9060, %v9062
        %v9233 = vcombine.high %v9060, %v9062
        %v9235 = vunpack.c.l.s4 1983009808
        %v9236 = vunpack.c.0.s8 %v9235
        %v9237 = vlaneseq
        %v9238 = vshrl.u32 %v9237, 7
        %v9239 = vsub.s32 %v9236, %v9238
        %v9240 = vrot.slane %v9232, %v9239
        %v9242 = vunpack.c.l.s4 1983009808
        %v9243 = vunpack.c.0.s8 %v9242
        %v9244 = vlaneseq
        %v9245 = vshrl.u32 %v9244, 7
        %v9246 = vsub.s32 %v9243, %v9245
        %v9247 = vrot.slane %v9233, %v9246
        %v9248 = vcombine.low %v9061, %v9063
        %v9249 = vcombine.high %v9061, %v9063
        %v9251 = vunpack.c.l.s4 1983009808
        %v9252 = vunpack.c.0.s8 %v9251
        %v9253 = vlaneseq
        %v9254 = vshrl.u32 %v9253, 7
        %v9255 = vsub.s32 %v9252, %v9254
        %v9256 = vrot.slane %v9248, %v9255
        %v9258 = vunpack.c.l.s4 1983009808
        %v9259 = vunpack.c.0.s8 %v9258
        %v9260 = vlaneseq
        %v9261 = vshrl.u32 %v9260, 7
        %v9262 = vsub.s32 %v9259, %v9261
        %v9263 = vrot.slane %v9249, %v9262
        %v9264 = vcombine.low %v9208, %v9224
        %v9265 = vcombine.high %v9208, %v9224
        %v9267 = vunpack.c.l.s4 1934713408
        %v9268 = vunpack.c.0.s8 %v9267
        %v9269 = vlaneseq
        %v9270 = vshrl.u32 %v9269, 7
        %v9271 = vsub.s32 %v9268, %v9270
        %v9272 = vrot.slane %v9264, %v9271
        %v9274 = vunpack.c.l.s4 1934713408
        %v9275 = vunpack.c.0.s8 %v9274
        %v9276 = vlaneseq
        %v9277 = vshrl.u32 %v9276, 7
        %v9278 = vsub.s32 %v9275, %v9277
        %v9279 = vrot.slane %v9265, %v9278
        %v9280 = vcombine.low %v9215, %v9231
        %v9281 = vcombine.high %v9215, %v9231
        %v9283 = vunpack.c.l.s4 1934713408
        %v9284 = vunpack.c.0.s8 %v9283
        %v9285 = vlaneseq
        %v9286 = vshrl.u32 %v9285, 7
        %v9287 = vsub.s32 %v9284, %v9286
        %v9288 = vrot.slane %v9280, %v9287
        %v9290 = vunpack.c.l.s4 1934713408
        %v9291 = vunpack.c.0.s8 %v9290
        %v9292 = vlaneseq
        %v9293 = vshrl.u32 %v9292, 7
        %v9294 = vsub.s32 %v9291, %v9293
        %v9295 = vrot.slane %v9281, %v9294
        %v9296 = vcombine.low %v9240, %v9256
        %v9297 = vcombine.high %v9240, %v9256
        %v9299 = vunpack.c.l.s4 1934713408
        %v9300 = vunpack.c.0.s8 %v9299
        %v9301 = vlaneseq
        %v9302 = vshrl.u32 %v9301, 7
        %v9303 = vsub.s32 %v9300, %v9302
        %v9304 = vrot.slane %v9296, %v9303
        %v9306 = vunpack.c.l.s4 1934713408
        %v9307 = vunpack.c.0.s8 %v9306
        %v9308 = vlaneseq
        %v9309 = vshrl.u32 %v9308, 7
        %v9310 = vsub.s32 %v9307, %v9309
        %v9311 = vrot.slane %v9297, %v9310
        %v9312 = vcombine.low %v9247, %v9263
        %v9313 = vcombine.high %v9247, %v9263
        %v9315 = vunpack.c.l.s4 1934713408
        %v9316 = vunpack.c.0.s8 %v9315
        %v9317 = vlaneseq
        %v9318 = vshrl.u32 %v9317, 7
        %v9319 = vsub.s32 %v9316, %v9318
        %v9320 = vrot.slane %v9312, %v9319
        %v9322 = vunpack.c.l.s4 1934713408
        %v9323 = vunpack.c.0.s8 %v9322
        %v9324 = vlaneseq
        %v9325 = vshrl.u32 %v9324, 7
        %v9326 = vsub.s32 %v9323, %v9325
        %v9327 = vrot.slane %v9313, %v9326
        %v9328 = vcombine.low %v9272, %v9304
        %v9329 = vcombine.high %v9272, %v9304
        %v9330 = vcombine.low %v9279, %v9311
        %v9331 = vcombine.high %v9279, %v9311
        %v9332 = vcombine.low %v9288, %v9320
        %v9333 = vcombine.high %v9288, %v9320
        %v9334 = vcombine.low %v9295, %v9327
        %v9335 = vcombine.high %v9295, %v9327
        %v9336 = vcombine.low %v9192, %v9194
        %v9337 = vcombine.high %v9192, %v9194
        %v9339 = vunpack.c.l.s4 1983009808
        %v9340 = vunpack.c.0.s8 %v9339
        %v9341 = vlaneseq
        %v9342 = vshrl.u32 %v9341, 7
        %v9343 = vsub.s32 %v9340, %v9342
        %v9344 = vrot.slane %v9336, %v9343
        %v9346 = vunpack.c.l.s4 1983009808
        %v9347 = vunpack.c.0.s8 %v9346
        %v9348 = vlaneseq
        %v9349 = vshrl.u32 %v9348, 7
        %v9350 = vsub.s32 %v9347, %v9349
        %v9351 = vrot.slane %v9337, %v9350
        %v9352 = vcombine.low %v9193, %v9195
        %v9353 = vcombine.high %v9193, %v9195
        %v9355 = vunpack.c.l.s4 1983009808
        %v9356 = vunpack.c.0.s8 %v9355
        %v9357 = vlaneseq
        %v9358 = vshrl.u32 %v9357, 7
        %v9359 = vsub.s32 %v9356, %v9358
        %v9360 = vrot.slane %v9352, %v9359
        %v9362 = vunpack.c.l.s4 1983009808
        %v9363 = vunpack.c.0.s8 %v9362
        %v9364 = vlaneseq
        %v9365 = vshrl.u32 %v9364, 7
        %v9366 = vsub.s32 %v9363, %v9365
        %v9367 = vrot.slane %v9353, %v9366
        %v9368 = vcombine.low %v9196, %v9198
        %v9369 = vcombine.high %v9196, %v9198
        %v9371 = vunpack.c.l.s4 1983009808
        %v9372 = vunpack.c.0.s8 %v9371
        %v9373 = vlaneseq
        %v9374 = vshrl.u32 %v9373, 7
        %v9375 = vsub.s32 %v9372, %v9374
        %v9376 = vrot.slane %v9368, %v9375
        %v9378 = vunpack.c.l.s4 1983009808
        %v9379 = vunpack.c.0.s8 %v9378
        %v9380 = vlaneseq
        %v9381 = vshrl.u32 %v9380, 7
        %v9382 = vsub.s32 %v9379, %v9381
        %v9383 = vrot.slane %v9369, %v9382
        %v9384 = vcombine.low %v9197, %v9199
        %v9385 = vcombine.high %v9197, %v9199
        %v9387 = vunpack.c.l.s4 1983009808
        %v9388 = vunpack.c.0.s8 %v9387
        %v9389 = vlaneseq
        %v9390 = vshrl.u32 %v9389, 7
        %v9391 = vsub.s32 %v9388, %v9390
        %v9392 = vrot.slane %v9384, %v9391
        %v9394 = vunpack.c.l.s4 1983009808
        %v9395 = vunpack.c.0.s8 %v9394
        %v9396 = vlaneseq
        %v9397 = vshrl.u32 %v9396, 7
        %v9398 = vsub.s32 %v9395, %v9397
        %v9399 = vrot.slane %v9385, %v9398
        %v9400 = vcombine.low %v9344, %v9360
        %v9401 = vcombine.high %v9344, %v9360
        %v9403 = vunpack.c.l.s4 1934713408
        %v9404 = vunpack.c.0.s8 %v9403
        %v9405 = vlaneseq
        %v9406 = vshrl.u32 %v9405, 7
        %v9407 = vsub.s32 %v9404, %v9406
        %v9408 = vrot.slane %v9400, %v9407
        %v9410 = vunpack.c.l.s4 1934713408
        %v9411 = vunpack.c.0.s8 %v9410
        %v9412 = vlaneseq
        %v9413 = vshrl.u32 %v9412, 7
        %v9414 = vsub.s32 %v9411, %v9413
        %v9415 = vrot.slane %v9401, %v9414
        %v9416 = vcombine.low %v9351, %v9367
        %v9417 = vcombine.high %v9351, %v9367
        %v9419 = vunpack.c.l.s4 1934713408
        %v9420 = vunpack.c.0.s8 %v9419
        %v9421 = vlaneseq
        %v9422 = vshrl.u32 %v9421, 7
        %v9423 = vsub.s32 %v9420, %v9422
        %v9424 = vrot.slane %v9416, %v9423
        %v9426 = vunpack.c.l.s4 1934713408
        %v9427 = vunpack.c.0.s8 %v9426
        %v9428 = vlaneseq
        %v9429 = vshrl.u32 %v9428, 7
        %v9430 = vsub.s32 %v9427, %v9429
        %v9431 = vrot.slane %v9417, %v9430
        %v9432 = vcombine.low %v9376, %v9392
        %v9433 = vcombine.high %v9376, %v9392
        %v9435 = vunpack.c.l.s4 1934713408
        %v9436 = vunpack.c.0.s8 %v9435
        %v9437 = vlaneseq
        %v9438 = vshrl.u32 %v9437, 7
        %v9439 = vsub.s32 %v9436, %v9438
        %v9440 = vrot.slane %v9432, %v9439
        %v9442 = vunpack.c.l.s4 1934713408
        %v9443 = vunpack.c.0.s8 %v9442
        %v9444 = vlaneseq
        %v9445 = vshrl.u32 %v9444, 7
        %v9446 = vsub.s32 %v9443, %v9445
        %v9447 = vrot.slane %v9433, %v9446
        %v9448 = vcombine.low %v9383, %v9399
        %v9449 = vcombine.high %v9383, %v9399
        %v9451 = vunpack.c.l.s4 1934713408
        %v9452 = vunpack.c.0.s8 %v9451
        %v9453 = vlaneseq
        %v9454 = vshrl.u32 %v9453, 7
        %v9455 = vsub.s32 %v9452, %v9454
        %v9456 = vrot.slane %v9448, %v9455
        %v9458 = vunpack.c.l.s4 1934713408
        %v9459 = vunpack.c.0.s8 %v9458
        %v9460 = vlaneseq
        %v9461 = vshrl.u32 %v9460, 7
        %v9462 = vsub.s32 %v9459, %v9461
        %v9463 = vrot.slane %v9449, %v9462
        %v9464 = vcombine.low %v9408, %v9440
        %v9465 = vcombine.high %v9408, %v9440
        %v9466 = vcombine.low %v9415, %v9447
        %v9467 = vcombine.high %v9415, %v9447
        %v9468 = vcombine.low %v9424, %v9456
        %v9469 = vcombine.high %v9424, %v9456
        %v9470 = vcombine.low %v9431, %v9463
        %v9471 = vcombine.high %v9431, %v9463
        %9474 = vrot.lane.b32.xlu0 %v9329, 4
        %v9475 = vpop.permute.xlu0 %9474
        %9476 = vrot.lane.b32.xlu0 %v9465, 4
        %v9477 = vpop.permute.xlu0 %9476
        %9482 = vrot.lane.b32.xlu0 %v9330, 8
        %v9483 = vpop.permute.xlu0 %9482
        %9484 = vrot.lane.b32.xlu0 %v9466, 8
        %v9485 = vpop.permute.xlu0 %9484
        %9490 = vrot.lane.b32.xlu0 %v9331, 12
        %v9491 = vpop.permute.xlu0 %9490
        %9492 = vrot.lane.b32.xlu0 %v9467, 12
        %v9493 = vpop.permute.xlu0 %9492
        %9498 = vrot.lane.b32.xlu0 %v9332, 16
        %v9499 = vpop.permute.xlu0 %9498
        %9500 = vrot.lane.b32.xlu0 %v9468, 16
        %v9501 = vpop.permute.xlu0 %9500
        %9506 = vrot.lane.b32.xlu0 %v9333, 20
        %v9507 = vpop.permute.xlu0 %9506
        %9508 = vrot.lane.b32.xlu0 %v9469, 20
        %v9509 = vpop.permute.xlu0 %9508
        %9514 = vrot.lane.b32.xlu0 %v9334, 24
        %v9515 = vpop.permute.xlu0 %9514
        %9516 = vrot.lane.b32.xlu0 %v9470, 24
        %v9517 = vpop.permute.xlu0 %9516
        %9522 = vrot.lane.b32.xlu0 %v9335, 28
        %v9523 = vpop.permute.xlu0 %9522
        %9524 = vrot.lane.b32.xlu0 %v9471, 28
        %v9525 = vpop.permute.xlu0 %9524
        %v9528 = vsel %vm2857, %v9328, %v9475
        %v9529 = vsel %vm2857, %v9464, %v9477
        %v9530 = vsel %vm3626, %v9528, %v9483
        %v9531 = vsel %vm3626, %v9529, %v9485
        %v9532 = vsel %vm5176, %v9530, %v9491
        %v9533 = vsel %vm5176, %v9531, %v9493
        %v9534 = vsel %vm5179, %v9532, %v9499
        %v9535 = vsel %vm5179, %v9533, %v9501
        %v9536 = vsel %vm5182, %v9534, %v9507
        %v9537 = vsel %vm5182, %v9535, %v9509
        %v9538 = vsel %vm5185, %v9536, %v9515
        %v9539 = vsel %vm5185, %v9537, %v9517
        %v9540 = vsel %vm5188, %v9538, %v9523
        %v9541 = vsel %vm5188, %v9539, %v9525
        %v9542 = vpack.c.bf16 %v9541, %v9540
        %v9544 = vlaneseq
        %v9545 = vshrl.u32 %v9544, 7
        %v9546 = vsub.s32 0, %v9545
        %v9547 = vrot.slane %v972, %v9546
        %v9553 = vunpack.c.l.b16 %v968
        %v9554 = vunpack.c.l.b16 %v969
        %v9555 = vunpack.c.l.b16 %v970
        %v9556 = vunpack.c.l.b16 %v971
        %v9557 = vpack.c.b16 %v9554, %v9553
        %v9558 = vpack.c.b16 %v9556, %v9555
        %v9562 = vsel %vm1008, %v9542, 0
        %9564 = vmatprep.subr.bf16.mxu0 0
        %9565 = vmatpush1.bf16.msra.mxu0 %v9557
        %9566 = vmatprep.subr.bf16.mxu0 0
        %9567 = vmatpush1.bf16.msra.mxu0 %v9558
        %9568 = vmatprep.subr.bf16.mxu0 0
        %9569 = vmatpush1.bf16.msra.mxu0 0
        %9570 = vmatprep.subr.bf16.mxu0 0
        %9571 = vmatpush1.bf16.msra.mxu0 0
        %9572 = vmatprep.subr.bf16.mxu0 0
        %9573 = vmatpush1.bf16.msra.mxu0 0
        %9574 = vmatprep.subr.bf16.mxu0 0
        %9575 = vmatpush1.bf16.msra.mxu0 0
        %9576 = vmatprep.subr.bf16.mxu0 0
        %9577 = vmatpush1.bf16.msra.mxu0 0
        %9578 = vmatprep.subr.bf16.mxu0 0
        %9579 = vmatpush1.bf16.msra.mxu0 0
        %9580 = vmatprep.subr.bf16.mxu0 0
        %9581 = vmatpush1.bf16.msra.mxu0 0
        %9582 = vmatprep.subr.bf16.mxu0 0
        %9583 = vmatpush1.bf16.msra.mxu0 0
        %9584 = vmatprep.subr.bf16.mxu0 0
        %9585 = vmatpush1.bf16.msra.mxu0 0
        %9586 = vmatprep.subr.bf16.mxu0 0
        %9587 = vmatpush1.bf16.msra.mxu0 0
        %9588 = vmatprep.subr.bf16.mxu0 0
        %9589 = vmatpush1.bf16.msra.mxu0 0
        %9590 = vmatprep.subr.bf16.mxu0 0
        %9591 = vmatpush1.bf16.msra.mxu0 0
        %9592 = vmatprep.subr.bf16.mxu0 0
        %9593 = vmatpush1.bf16.msra.mxu0 0
        %9594 = vmatprep.subr.bf16.mxu0 0
        %9595 = vmatpush1.bf16.msra.mxu0 0
        %9596 = vmatprep.mubr.bf16.mxu0 0
        %9597 = vmatmul.mubr.bf16.gmra.mrb[0].mxu0 %v9562
        %v9598 = vpop.f32.mrb[0].mxu0
        %v9599 = vadd.f32 %v9547, %v9598
        %v9600 = vpop.f32.mrb[0].mxu0
        %v9601 = vpop.f32.mrb[0].mxu0
        %v9602 = vadd.f32 %v9547, %v9601
        %v9603 = vpop.f32.mrb[0].mxu0
        %9604 = vdwg.mxu0
        %v9605 = vadd.f32 %v9599, %v5293
        %v9606 = vadd.f32 %v9602, %v5294
        %v9607 = vsel %vm1008, %v9605, 0.0
        %9608 = vadd.xlane.f32.xlu0 %v9607
        %v9609 = vpop.xlane.xlu0 %9608
        %v9610 = vsel %vm1008, %v9606, 0.0
        %9611 = vadd.xlane.f32.xlu0 %v9610
        %v9612 = vpop.xlane.xlu0 %9611
        %v9613 = vmul.f32 %v9609, %v5262
        %v9614 = vmul.f32 %v9612, %v5262
        %v9615 = vsub.f32 %v9605, %v9613
        %v9616 = vsub.f32 %v9606, %v9614
        %v9617 = vmul.f32 %v9615, %v9615
        %v9618 = vmul.f32 %v9616, %v9616
        %v9619 = vsel %vm1008, %v9617, 0.0
        %9620 = vadd.xlane.f32.xlu0 %v9619
        %v9621 = vpop.xlane.xlu0 %9620
        %v9622 = vsel %vm1008, %v9618, 0.0
        %9623 = vadd.xlane.f32.xlu0 %v9622
        %v9624 = vpop.xlane.xlu0 %9623
        %v9625 = vmul.f32 %v9621, %v5262
        %v9626 = vmul.f32 %v9624, %v5262
        %v9627 = vadd.f32 %v9625, 1e-05
        %v9628 = vadd.f32 %v9626, 1e-05
        %v9629 = vrsqrt.pop %v9627
        %v9630 = vrsqrt.pop %v9628
        %v9631 = vmul.f32 %v9615, %v9629
        %v9632 = vmul.f32 %v9616, %v9630
        %v9633 = vlaneseq
        %v9634 = vshrl.u32 %v9633, 7
        %v9635 = vsub.s32 1, %v9634
        %v9636 = vrot.slane %v987, %v9635
        %v9637 = vmul.f32 %v9631, %v9636
        %v9638 = vmul.f32 %v9632, %v9636
        %v9639 = vlaneseq
        %v9640 = vshrl.u32 %v9639, 7
        %v9641 = vsub.s32 1, %v9640
        %v9642 = vrot.slane %v988, %v9641
        %v9643 = vadd.f32 %v9637, %v9642
        %v9644 = vadd.f32 %v9638, %v9642
        %v9645 = vpack.c.bf16 %v9644, %v9643
        %v9647 = vlaneseq
        %v9648 = vshrl.u32 %v9647, 7
        %v9649 = vsub.s32 0, %v9648
        %v9650 = vrot.slane %v977, %v9649
        %v9656 = vunpack.c.l.b16 %v973
        %v9657 = vunpack.c.l.b16 %v974
        %v9658 = vunpack.c.l.b16 %v975
        %v9659 = vunpack.c.l.b16 %v976
        %v9660 = vpack.c.b16 %v9657, %v9656
        %v9661 = vpack.c.b16 %v9659, %v9658
        %v9665 = vsel %vm1008, %v9645, 0
        %9667 = vmatprep.subr.bf16.mxu0 0
        %9668 = vmatpush1.bf16.msra.mxu0 %v9660
        %9669 = vmatprep.subr.bf16.mxu0 0
        %9670 = vmatpush1.bf16.msra.mxu0 %v9661
        %9671 = vmatprep.subr.bf16.mxu0 0
        %9672 = vmatpush1.bf16.msra.mxu0 0
        %9673 = vmatprep.subr.bf16.mxu0 0
        %9674 = vmatpush1.bf16.msra.mxu0 0
        %9675 = vmatprep.subr.bf16.mxu0 0
        %9676 = vmatpush1.bf16.msra.mxu0 0
        %9677 = vmatprep.subr.bf16.mxu0 0
        %9678 = vmatpush1.bf16.msra.mxu0 0
        %9679 = vmatprep.subr.bf16.mxu0 0
        %9680 = vmatpush1.bf16.msra.mxu0 0
        %9681 = vmatprep.subr.bf16.mxu0 0
        %9682 = vmatpush1.bf16.msra.mxu0 0
        %9683 = vmatprep.subr.bf16.mxu0 0
        %9684 = vmatpush1.bf16.msra.mxu0 0
        %9685 = vmatprep.subr.bf16.mxu0 0
        %9686 = vmatpush1.bf16.msra.mxu0 0
        %9687 = vmatprep.subr.bf16.mxu0 0
        %9688 = vmatpush1.bf16.msra.mxu0 0
        %9689 = vmatprep.subr.bf16.mxu0 0
        %9690 = vmatpush1.bf16.msra.mxu0 0
        %9691 = vmatprep.subr.bf16.mxu0 0
        %9692 = vmatpush1.bf16.msra.mxu0 0
        %9693 = vmatprep.subr.bf16.mxu0 0
        %9694 = vmatpush1.bf16.msra.mxu0 0
        %9695 = vmatprep.subr.bf16.mxu0 0
        %9696 = vmatpush1.bf16.msra.mxu0 0
        %9697 = vmatprep.subr.bf16.mxu0 0
        %9698 = vmatpush1.bf16.msra.mxu0 0
        %9699 = vmatprep.mubr.bf16.mxu0 0
        %9700 = vmatmul.mubr.bf16.gmra.mrb[0].mxu0 %v9665
        %v9701 = vpop.f32.mrb[0].mxu0
        %v9702 = vadd.f32 %v9650, %v9701
        %v9703 = vpop.f32.mrb[0].mxu0
        %v9704 = vpop.f32.mrb[0].mxu0
        %v9705 = vadd.f32 %v9650, %v9704
        %v9706 = vpop.f32.mrb[0].mxu0
        %9707 = vdwg.mxu0
        %v9708 = vmul.f32 %v9702, 0.5
        %v9709 = vmul.f32 %v9705, 0.5
        %v9710 = vmul.f32 %v9702, 0.70710677
        %v9711 = vmul.f32 %v9705, 0.70710677
        %v9712 = verf.f32.pop %v9710
        %v9713 = verf.f32.pop %v9711
        %v9714 = vadd.f32 %v9712, 1.0
        %v9715 = vadd.f32 %v9713, 1.0
        %v9716 = vmul.f32 %v9708, %v9714
        %v9717 = vmul.f32 %v9709, %v9715
        %v9718 = vpack.c.bf16 %v9717, %v9716
        %v9720 = vlaneseq
        %v9721 = vshrl.u32 %v9720, 7
        %v9722 = vsub.s32 0, %v9721
        %v9723 = vrot.slane %v986, %v9722
        %v9733 = vunpack.c.l.b16 %v978
        %v9734 = vunpack.c.l.b16 %v979
        %v9735 = vunpack.c.l.b16 %v980
        %v9736 = vunpack.c.l.b16 %v981
        %v9737 = vunpack.c.l.b16 %v982
        %v9738 = vunpack.c.l.b16 %v983
        %v9739 = vunpack.c.l.b16 %v984
        %v9740 = vunpack.c.l.b16 %v985
        %v9741 = vpack.c.b16 %v9734, %v9733
        %v9742 = vpack.c.b16 %v9736, %v9735
        %v9743 = vpack.c.b16 %v9738, %v9737
        %v9744 = vpack.c.b16 %v9740, %v9739
        %vm9749 = vcmask 523264
        %v9751 = vsel %vm9749, %v9718, 0
        %9753 = vmatprep.subr.bf16.mxu0 0
        %9754 = vmatpush1.bf16.msra.mxu0 %v9741
        %9755 = vmatprep.subr.bf16.mxu0 0
        %9756 = vmatpush1.bf16.msra.mxu0 %v9742
        %9757 = vmatprep.subr.bf16.mxu0 0
        %9758 = vmatpush1.bf16.msra.mxu0 %v9743
        %9759 = vmatprep.subr.bf16.mxu0 0
        %9760 = vmatpush1.bf16.msra.mxu0 %v9744
        %9761 = vmatprep.subr.bf16.mxu0 0
        %9762 = vmatpush1.bf16.msra.mxu0 0
        %9763 = vmatprep.subr.bf16.mxu0 0
        %9764 = vmatpush1.bf16.msra.mxu0 0
        %9765 = vmatprep.subr.bf16.mxu0 0
        %9766 = vmatpush1.bf16.msra.mxu0 0
        %9767 = vmatprep.subr.bf16.mxu0 0
        %9768 = vmatpush1.bf16.msra.mxu0 0
        %9769 = vmatprep.subr.bf16.mxu0 0
        %9770 = vmatpush1.bf16.msra.mxu0 0
        %9771 = vmatprep.subr.bf16.mxu0 0
        %9772 = vmatpush1.bf16.msra.mxu0 0
        %9773 = vmatprep.subr.bf16.mxu0 0
        %9774 = vmatpush1.bf16.msra.mxu0 0
        %9775 = vmatprep.subr.bf16.mxu0 0
        %9776 = vmatpush1.bf16.msra.mxu0 0
        %9777 = vmatprep.subr.bf16.mxu0 0
        %9778 = vmatpush1.bf16.msra.mxu0 0
        %9779 = vmatprep.subr.bf16.mxu0 0
        %9780 = vmatpush1.bf16.msra.mxu0 0
        %9781 = vmatprep.subr.bf16.mxu0 0
        %9782 = vmatpush1.bf16.msra.mxu0 0
        %9783 = vmatprep.subr.bf16.mxu0 0
        %9784 = vmatpush1.bf16.msra.mxu0 0
        %9785 = vmatprep.mubr.bf16.mxu0 0
        %9786 = vmatmul.mubr.bf16.gmra.mrb[0].mxu0 %v9751
        %v9787 = vpop.f32.mrb[0].mxu0
        %v9788 = vadd.f32 %v9723, %v9787
        %v9789 = vpop.f32.mrb[0].mxu0
        %v9790 = vpop.f32.mrb[0].mxu0
        %v9791 = vadd.f32 %v9723, %v9790
        %v9792 = vpop.f32.mrb[0].mxu0
        %9793 = vdwg.mxu0
        %v9794 = vmul.f32 %v9788, 0.5
        %v9795 = vmul.f32 %v9791, 0.5
        %v9796 = vmul.f32 %v9788, 0.70710677
        %v9797 = vmul.f32 %v9791, 0.70710677
        %v9798 = verf.f32.pop %v9796
        %v9799 = verf.f32.pop %v9797
        %v9800 = vadd.f32 %v9798, 1.0
        %v9801 = vadd.f32 %v9799, 1.0
        %v9802 = vmul.f32 %v9794, %v9800
        %v9803 = vmul.f32 %v9795, %v9801
        %v9804 = vadd.f32 %v9802, %v9643
        %v9805 = vadd.f32 %v9803, %v9644
        %v9806 = vsel %vm1008, %v9804, 0.0
        %9807 = vadd.xlane.f32.xlu0 %v9806
        %v9808 = vpop.xlane.xlu0 %9807
        %v9809 = vsel %vm1008, %v9805, 0.0
        %9810 = vadd.xlane.f32.xlu0 %v9809
        %v9811 = vpop.xlane.xlu0 %9810
        %v9812 = vmul.f32 %v9808, %v5262
        %v9813 = vmul.f32 %v9811, %v5262
        %v9814 = vsub.f32 %v9804, %v9812
        %v9815 = vsub.f32 %v9805, %v9813
        %v9816 = vmul.f32 %v9814, %v9814
        %v9817 = vmul.f32 %v9815, %v9815
        %v9818 = vsel %vm1008, %v9816, 0.0
        %9819 = vadd.xlane.f32.xlu0 %v9818
        %v9820 = vpop.xlane.xlu0 %9819
        %v9821 = vsel %vm1008, %v9817, 0.0
        %9822 = vadd.xlane.f32.xlu0 %v9821
        %v9823 = vpop.xlane.xlu0 %9822
        %v9824 = vmul.f32 %v9820, %v5262
        %v9825 = vmul.f32 %v9823, %v5262
        %v9826 = vadd.f32 %v9824, 1e-05
        %v9827 = vadd.f32 %v9825, 1e-05
        %v9828 = vrsqrt.pop %v9826
        %v9829 = vrsqrt.pop %v9827
        %v9830 = vmul.f32 %v9814, %v9828
        %v9831 = vmul.f32 %v9815, %v9829
        %v9832 = vlaneseq
        %v9833 = vshrl.u32 %v9832, 7
        %v9834 = vsub.s32 2, %v9833
        %v9835 = vrot.slane %v987, %v9834
        %v9836 = vmul.f32 %v9830, %v9835
        %v9837 = vmul.f32 %v9831, %v9835
        %v9838 = vlaneseq
        %v9839 = vshrl.u32 %v9838, 7
        %v9840 = vsub.s32 2, %v9839
        %v9841 = vrot.slane %v988, %v9840
        %v9842 = vadd.f32 %v9836, %v9841
        %v9843 = vadd.f32 %v9837, %v9841
        %9844 = vst.msk [vmem:[#allocation2] sm:$0xff] %vm1008, %v9842
        %9845 = vst.msk [vmem:[#allocation2 + $0x8] sm:$0xff] %vm1008, %v9843
        %p9846 = scmp.eq.s32.totalorder %s33, 1
        // Predicated region
        $region137: #{tpu_custom_call.1} parent=91 // pred_check
          %p9847 = pneg %p9846
        $region138: #{tpu_custom_call.1} parent=91 // pred_check_branch
          %9849 = sbr.rel (%p9847) target = $region140
        $region139: #{tpu_custom_call.1} parent=91 // pred_region
          %9850 = vst.msk [vmem:[#allocation17] sm:$0xff] %vm1008, %v9842
          %9851 = vst.msk [vmem:[#allocation17 + $0x8] sm:$0xff] %vm1008, %v9843
        $region140: #{tpu_custom_call.1} parent=91 // pred_fallthru
          _
        // Predicated region
        $region141: #{tpu_custom_call.1} parent=91 // pred_check
          %p9852 = pneg %p494
        $region142: #{tpu_custom_call.1} parent=91 // pred_check_branch
          %9854 = sbr.rel (%p9852) target = $region144
        $region143: #{tpu_custom_call.1} parent=91 // pred_region
          %s9856 = ssub.s32 256, 256
          %9857 = vsyncadd [#allocation5], %s9856
          %s9858 = sshll.u32 [#allocation17], 4
          %s9859 = int_to_ptr.vmem [resolvable:$true] %s9858
          %9864 = dma.vmem_to_hbm [thread:$0]  %s9859, 256, %s18, [#allocation5], 128, 128, 8
        $region144: #{tpu_custom_call.1} parent=91 // pred_fallthru
          _
        // Predicated region
        $region145: #{tpu_custom_call.1} parent=91 // pred_check
          %p9865 = pneg %p494
        $region146: #{tpu_custom_call.1} parent=91 // pred_check_branch
          %9867 = sbr.rel (%p9865) target = $region148
        $region147: #{tpu_custom_call.1} parent=91 // pred_region
          %9868 = dma.done [#allocation5], 256
        $region148: #{tpu_custom_call.1} parent=91 // pred_fallthru
          _
      $region92: #{tpu_custom_call.1} parent=5 // pred_fallthru
        _
      %p9869 = scmp.le.s32.totalorder 2, %s28
      // Predicated region
      $region149: #{tpu_custom_call.1} parent=5 // pred_check
        %p9870 = pneg %p9869
      $region150: #{tpu_custom_call.1} parent=5 // pred_check_branch
        %9872 = sbr.rel (%p9870) target = $region152
      $region151: #{tpu_custom_call.1} parent=5 // pred_region
        %s9873 = ssub.s32 %s28, 2
      $region152: #{tpu_custom_call.1} parent=5 // pred_fallthru
        _
    $region6: #{tpu_custom_call.1} parent=1 // loop_footer
      %s32 = sadd.s32 1, %s28
    $region7: #{tpu_custom_call.1} parent=1 // loop_footer_branch
      %27 = sbr.rel target = $region3
    $region8: #{tpu_custom_call.1} parent=1 // loop_exit
      _
    %9874 = vsyncpa [#allocation4], 1
    %s9875 = scalar_lea.sflag [#allocation4], 1
    %9876 = vsyncpa %s9875, 1
    %9877 = vsyncpa [#allocation7], 1
    %9878 = vsyncpa [#allocation10], 1
    %9879 = vsyncpa [#allocation5], 1
    %s9880 = scalar_lea.sflag [#allocation5], 1
    %9881 = vsyncpa %s9880, 1

</llo_original>
